<compile_context>
chip_gen: v7x
topology: tpu7x:2x2x1
jax: 0.10.0
libtpu: 0.0.40
codegen_flags: <defaults>
</compile_context>

<pallas_src>
import math
import numpy as np
import jax
import jax.numpy as jnp
from jax import lax
from jax.experimental import pallas as pl
from jax.experimental.pallas import tpu as pltpu


# ----------------------------------------------------------------------------
# Pallas kernel: one grid step = one batch tile of BT samples.
# ----------------------------------------------------------------------------
def _gsynth_block_kernel(d0_ref, d1_ref, d2_ref, x_ref, y_ref, n0_ref, n1_ref,
                         ns_ref,
                         mod0_w_ref, mod0_b_ref, mod1_w_ref, mod1_b_ref,
                         mod2_w_ref, mod2_b_ref,
                         w0c_ref, wsq0_ref, w1c_ref, wsq1_ref,
                         rcomb_ref, ucomb_ref,
                         tin_ref, toq_ref, eq_ref,
                         b0t_ref, b1t_ref, rgbbt_ref,
                         xo_ref, yo_ref):
    f32 = jnp.float32
    sqrt2 = jnp.float32(math.sqrt(2.0))

    d0 = d0_ref[0]                      # (BT, D)
    d1 = d1_ref[0]
    d2 = d2_ref[0]

    # --- per-sample styles (EqualizedLinear; lr scale folded into weights) ------
    s0 = jnp.dot(d0, mod0_w_ref[...], preferred_element_type=f32) + mod0_b_ref[...]   # (BT, IN)
    s1 = jnp.dot(d1, mod1_w_ref[...], preferred_element_type=f32) + mod1_b_ref[...]   # (BT, OUT)
    s2 = jnp.dot(d2, mod2_w_ref[...], preferred_element_type=f32) + mod2_b_ref[...]   # (BT, OUT)

    # --- demodulation factors: rsqrt(style^2 @ sum_k w^2 + eps) ------------------
    dem0 = lax.rsqrt(jnp.dot(s0 * s0, wsq0_ref[...], preferred_element_type=f32) + 1e-8)
    dem1 = lax.rsqrt(jnp.dot(s1 * s1, wsq1_ref[...], preferred_element_type=f32) + 1e-8)

    # --- expand per-channel vectors to the flat (spatial*channel) layout ---------
    # (0/1-matrix matmuls on the MXU; avoids in-kernel reshapes / relayouts)
    s0_t   = jnp.dot(s0,   tin_ref[...], preferred_element_type=f32)   # (BT, HWi*IN)
    s1_t   = jnp.dot(s1,   toq_ref[...], preferred_element_type=f32)   # (BT, HWo*OUT)
    s2_t   = jnp.dot(s2,   toq_ref[...], preferred_element_type=f32)
    dem0_t = jnp.dot(dem0, toq_ref[...], preferred_element_type=f32)
    dem1_t = jnp.dot(dem1, toq_ref[...], preferred_element_type=f32)

    # --- conv0_up: modulated 3x3 transposed conv (stride 2) + blur, ONE matmul ---
    u = jnp.dot(x_ref[0] * s0_t, w0c_ref[...], preferred_element_type=f32) * dem0_t
    n0e = jnp.dot(n0_ref[0] * ns_ref[0], eq_ref[...], preferred_element_type=f32)
    u = u + n0e + b0t_ref[...]
    u = jnp.where(u >= 0.0, u, 0.2 * u) * sqrt2            # fused_leaky_relu

    # --- conv1: modulated 3x3 conv (pad 1), ONE matmul ---------------------------
    v = jnp.dot(u * s1_t, w1c_ref[...], preferred_element_type=f32) * dem1_t
    n1e = jnp.dot(n1_ref[0] * ns_ref[1], eq_ref[...], preferred_element_type=f32)
    v = v + n1e + b1t_ref[...]
    v = jnp.where(v >= 0.0, v, 0.2 * v) * sqrt2
    xo_ref[0] = v.astype(xo_ref.dtype)

    # --- ToRGB: modulated 1x1 conv (no demod) + bias + upsampled skip ------------
    rgb = jnp.dot(v * s2_t, rcomb_ref[...], preferred_element_type=f32) + rgbbt_ref[...]
    yup = jnp.dot(y_ref[0], ucomb_ref[...], preferred_element_type=f32)
    yo_ref[0] = (rgb + yup).astype(yo_ref.dtype)


# ----------------------------------------------------------------------------
# Static spatial linear operators for the [1,3,3,1] resample kernel (factor 2).
# ----------------------------------------------------------------------------
def _build_spatial_operators(H1, W1):
    H2, W2 = 2 * H1, 2 * W1
    Hp, Wp = 2 * H1 + 1, 2 * W1 + 1
    HWi, HWo = H1 * W1, H2 * W2

    k1 = np.array([1.0, 3.0, 3.0, 1.0])
    k2 = np.outer(k1, k1)
    k2 = k2 / k2.sum()
    kb = k2 * 4.0                 # upfirdn kernel scaled by factor**2
    kbf = kb[::-1, ::-1]          # upfirdn convolves with the flipped kernel

    # Blur after the transposed conv: pre-blur (Hp,Wp) -> (H2,W2), pad=(1,1)
    Bm = np.zeros((Hp * Wp, HWo))
    for qy in range(H2):
        for qx in range(W2):
            for a in range(4):
                for b in range(4):
                    uu, vv = qy + a - 1, qx + b - 1
                    if 0 <= uu < Hp and 0 <= vv < Wp:
                        Bm[uu * Wp + vv, qy * W2 + qx] += kbf[a, b]

    # A0[ky,kx,p,q]: stride-2 transposed-conv tap placement followed by the blur
    A0 = np.zeros((3, 3, HWi, HWo))
    for dy in range(3):
        for dx in range(3):
            for iy in range(H1):
                for ix in range(W1):
                    A0[dy, dx, iy * W1 + ix, :] = Bm[(2 * iy + dy) * Wp + (2 * ix + dx), :]

    # S1[ky,kx,p,q]: plain 3x3 'same' conv gather pattern on the (H2,W2) grid
    S1 = np.zeros((3, 3, HWo, HWo))
    for dy in range(3):
        for dx in range(3):
            for qy in range(H2):
                for qx in range(W2):
                    py, px = qy + dy - 1, qx + dx - 1
                    if 0 <= py < H2 and 0 <= px < W2:
                        S1[dy, dx, py * W2 + px, qy * W2 + qx] = 1.0

    # U[p,q]: factor-2 upsample of the skip (upfirdn up=2, pad=(2,1))
    U = np.zeros((HWi, HWo))
    for qy in range(H2):
        for qx in range(W2):
            for a in range(4):
                for b in range(4):
                    s, t = qy + a - 2, qx + b - 2
                    if 0 <= s < 2 * H1 and 0 <= t < 2 * W1 and s % 2 == 0 and t % 2 == 0:
                        U[(s // 2) * W1 + (t // 2), qy * W2 + qx] += kbf[a, b]

    return A0, S1, U


# ----------------------------------------------------------------------------
# Wrapper: parameter preprocessing (combined operators, lane-dense layouts) is glue;
# the per-sample modulate/conv/demod/noise/activation/ToRGB hot path is in the kernel.
# ----------------------------------------------------------------------------
def gsynthesis_block_forward(x, dlatents_in, y, noise0, noise1, params, res):
    B, IN, H1, W1 = x.shape
    OUT = params["conv0_weight"].shape[1]
    NC = params["rgb_weight"].shape[1]
    D = dlatents_in.shape[-1]
    H2, W2 = 2 * H1, 2 * W1
    HWi, HWo = H1 * W1, H2 * W2

    # lane-dense padded RGB channel count (HWo * NCp must be a multiple of 128)
    NCp = NC
    while (HWo * NCp) % 128 != 0:
        NCp += 1

    A0, S1, U = _build_spatial_operators(H1, W1)
    A0 = jnp.asarray(A0, jnp.float32)
    S1 = jnp.asarray(S1, jnp.float32)
    U = jnp.asarray(U, jnp.float32)

    scale0 = 1.0 / math.sqrt(IN * 9)
    scale1 = 1.0 / math.sqrt(OUT * 9)
    scale_rgb = 1.0 / math.sqrt(OUT)
    scale_mod = 1.0 / math.sqrt(D)

    w0s = (scale0 * params["conv0_weight"][0]).astype(jnp.float32)              # (OUT, IN, 3, 3)
    w1s = (scale1 * params["conv1_weight"][0]).astype(jnp.float32)              # (OUT, OUT, 3, 3)
    wr = (scale_rgb * params["rgb_weight"][0, :, :, 0, 0]).astype(jnp.float32)  # (NC, OUT)

    # combined (spatial x channel) operators -> one matmul per conv in the kernel
    W0comb = jnp.einsum("yxpq,oiyx->piqo", A0, w0s).reshape(HWi * IN, HWo * OUT)
    W1comb = jnp.einsum("yxpq,ocyx->pcqo", S1, w1s).reshape(HWo * OUT, HWo * OUT)

    wr_p = jnp.zeros((OUT, NCp), jnp.float32).at[:, :NC].set(wr.T)
    Rcomb = jnp.einsum("qr,oc->qorc", jnp.eye(HWo, dtype=jnp.float32),
                       wr_p).reshape(HWo * OUT, HWo * NCp)
    Ucomb = jnp.einsum("pq,cd->pcqd", U,
                       jnp.eye(NCp, dtype=jnp.float32)).reshape(HWi * NCp, HWo * NCp)

    wsq0 = jnp.sum(w0s * w0s, axis=(2, 3)).T                                    # (IN, OUT)
    wsq1 = jnp.sum(w1s * w1s, axis=(2, 3)).T                                    # (OUT, OUT)

    # 0/1 expansion matrices: per-channel vector -> flat (spatial*channel) row
    T_IN = jnp.asarray(np.tile(np.eye(IN, dtype=np.float32), (1, HWi)))         # (IN, HWi*IN)
    T_OQ = jnp.asarray(np.tile(np.eye(OUT, dtype=np.float32), (1, HWo)))        # (OUT, HWo*OUT)
    E_Q = jnp.asarray(np.kron(np.eye(HWo, dtype=np.float32),
                              np.ones((1, OUT), np.float32)))                   # (HWo, HWo*OUT)

    mod0_w = (scale_mod * params["mod0_weight"]).T.astype(jnp.float32)          # (D, IN)
    mod1_w = (scale_mod * params["mod1_weight"]).T.astype(jnp.float32)          # (D, OUT)
    mod2_w = (scale_mod * params["mod2_weight"]).T.astype(jnp.float32)          # (D, OUT)
    mod0_b = params["mod0_bias"].reshape(1, IN).astype(jnp.float32)
    mod1_b = params["mod1_bias"].reshape(1, OUT).astype(jnp.float32)
    mod2_b = params["mod2_bias"].reshape(1, OUT).astype(jnp.float32)

    b0t = jnp.tile(params["conv0_bias"].astype(jnp.float32), HWo).reshape(1, HWo * OUT)
    b1t = jnp.tile(params["conv1_bias"].astype(jnp.float32), HWo).reshape(1, HWo * OUT)
    rgbb = jnp.zeros((NCp,), jnp.float32).at[:NC].set(
        params["rgb_bias"].reshape(NC).astype(jnp.float32))
    rgbbt = jnp.tile(rgbb, HWo).reshape(1, HWo * NCp)

    ns = jnp.concatenate([params["noise_strength0"].reshape(1),
                          params["noise_strength1"].reshape(1)]).astype(jnp.float32)

    # activations -> lane-dense flattened NHWC layouts
    d0 = dlatents_in[:, res * 2 - 5, :].astype(jnp.float32)
    d1 = dlatents_in[:, res * 2 - 4, :].astype(jnp.float32)
    d2 = dlatents_in[:, res * 2 - 3, :].astype(jnp.float32)
    x_flat = x.astype(jnp.float32).transpose(0, 2, 3, 1).reshape(B, HWi * IN)
    y_p = y.astype(jnp.float32)
    if NCp > NC:
        y_p = jnp.concatenate([y_p, jnp.zeros((B, NCp - NC, H1, W1), jnp.float32)], axis=1)
    y_flat = y_p.transpose(0, 2, 3, 1).reshape(B, HWi * NCp)
    n0_flat = noise0.astype(jnp.float32).reshape(B, HWo)
    n1_flat = noise1.astype(jnp.float32).reshape(B, HWo)

    # batch tiling: amortize per-step overhead but keep >=2 steps for v7x megacore
    if B >= 16:
        BT = 8
    elif B >= 2:
        BT = max(1, B // 2)
    else:
        BT = 1
    G = -(-B // BT)
    Bp = G * BT

    def _prep(a):
        if Bp != B:
            a = jnp.pad(a, [(0, Bp - B)] + [(0, 0)] * (a.ndim - 1))
        return a.reshape((G, BT) + a.shape[1:])

    d0_r, d1_r, d2_r = _prep(d0), _prep(d1), _prep(d2)
    x_r, y_r = _prep(x_flat), _prep(y_flat)
    n0_r, n1_r = _prep(n0_flat), _prep(n1_flat)

    bmap = lambda g: (g, 0, 0)
    cmap = lambda g: (0, 0)

    in_specs = [
        pl.BlockSpec((1, BT, D), bmap),                 # d0
        pl.BlockSpec((1, BT, D), bmap),                 # d1
        pl.BlockSpec((1, BT, D), bmap),                 # d2
        pl.BlockSpec((1, BT, HWi * IN), bmap),          # x_flat
        pl.BlockSpec((1, BT, HWi * NCp), bmap),         # y_flat (padded skip)
        pl.BlockSpec((1, BT, HWo), bmap),               # noise0
        pl.BlockSpec((1, BT, HWo), bmap),               # noise1
        pl.BlockSpec(memory_space=pltpu.MemorySpace.SMEM),   # noise strengths (2,)
        pl.BlockSpec((D, IN), cmap),                    # mod0_w
        pl.BlockSpec((1, IN), cmap),                    # mod0_b
        pl.BlockSpec((D, OUT), cmap),                   # mod1_w
        pl.BlockSpec((1, OUT), cmap),                   # mod1_b
        pl.BlockSpec((D, OUT), cmap),                   # mod2_w
        pl.BlockSpec((1, OUT), cmap),                   # mod2_b
        pl.BlockSpec((HWi * IN, HWo * OUT), cmap),      # W0comb
        pl.BlockSpec((IN, OUT), cmap),                  # wsq0
        pl.BlockSpec((HWo * OUT, HWo * OUT), cmap),     # W1comb
        pl.BlockSpec((OUT, OUT), cmap),                 # wsq1
        pl.BlockSpec((HWo * OUT, HWo * NCp), cmap),     # Rcomb
        pl.BlockSpec((HWi * NCp, HWo * NCp), cmap),     # Ucomb
        pl.BlockSpec((IN, HWi * IN), cmap),             # T_IN
        pl.BlockSpec((OUT, HWo * OUT), cmap),           # T_OQ
        pl.BlockSpec((HWo, HWo * OUT), cmap),           # E_Q
        pl.BlockSpec((1, HWo * OUT), cmap),             # b0 tiled
        pl.BlockSpec((1, HWo * OUT), cmap),             # b1 tiled
        pl.BlockSpec((1, HWo * NCp), cmap),             # rgb bias tiled
    ]
    out_specs = [
        pl.BlockSpec((1, BT, HWo * OUT), bmap),
        pl.BlockSpec((1, BT, HWo * NCp), bmap),
    ]

    x_out, y_out = pl.pallas_call(
        _gsynth_block_kernel,
        out_shape=(jax.ShapeDtypeStruct((G, BT, HWo * OUT), jnp.float32),
                   jax.ShapeDtypeStruct((G, BT, HWo * NCp), jnp.float32)),
        grid_spec=pltpu.PrefetchScalarGridSpec(
            num_scalar_prefetch=0,
            grid=(G,),
            in_specs=in_specs,
            out_specs=out_specs,
        ),
        compiler_params=pltpu.CompilerParams(
            dimension_semantics=("parallel",),
            vmem_limit_bytes=48 * 1024 * 1024,
        ),
    )(d0_r, d1_r, d2_r, x_r, y_r, n0_r, n1_r, ns,
      mod0_w, mod0_b, mod1_w, mod1_b, mod2_w, mod2_b,
      W0comb, wsq0, W1comb, wsq1, Rcomb, Ucomb,
      T_IN, T_OQ, E_Q, b0t, b1t, rgbbt)

    x_out = x_out.reshape(Bp, HWo * OUT)[:B]
    y_out = y_out.reshape(Bp, HWo * NCp)[:B]
    x_nchw = x_out.reshape(B, H2, W2, OUT).transpose(0, 3, 1, 2)
    y_nchw = y_out.reshape(B, H2, W2, NCp).transpose(0, 3, 1, 2)[:, :NC]
    return x_nchw, y_nchw


# ----------------------------------------------------------------------------
# Pure-JAX reference (mirrors the PyTorch StyleGAN2 forward) for correctness check.
# ----------------------------------------------------------------------------
def _upfirdn2d_ref(x, kernel, up, pad):
    B, C, H, W = x.shape
    if up > 1:
        x = x.reshape(B, C, H, 1, W, 1)
        x = jnp.pad(x, ((0, 0), (0, 0), (0, 0), (0, up - 1), (0, 0), (0, up - 1)))
        x = x.reshape(B, C, H * up, W * up)
    p0, p1 = pad
    x = jnp.pad(x, ((0, 0), (0, 0), (p0, p1), (p0, p1)))
    kflip = kernel[::-1, ::-1]
    w = jnp.tile(kflip[None, None, :, :], (C, 1, 1, 1))
    return lax.conv_general_dilated(
        x, w, (1, 1), "VALID",
        dimension_numbers=("NCHW", "OIHW", "NCHW"),
        feature_group_count=C)


def reference_forward(x, dlatents_in, y, noise0, noise1, params, res):
    B, IN, H1, W1 = x.shape
    OUT = params["conv0_weight"].shape[1]
    D = dlatents_in.shape[-1]

    k1 = jnp.array([1.0, 3.0, 3.0, 1.0], jnp.float32)
    k2 = jnp.outer(k1, k1)
    k2 = k2 / jnp.sum(k2)

    def eq_linear(z, wmat, bias):
        return z @ (wmat.astype(jnp.float32) / math.sqrt(D)).T + bias

    d0 = dlatents_in[:, res * 2 - 5]
    d1 = dlatents_in[:, res * 2 - 4]
    d2 = dlatents_in[:, res * 2 - 3]

    # --- conv0_up: modulated transposed conv (stride 2) + blur + noise + act ----
    s0 = eq_linear(d0, params["mod0_weight"], params["mod0_bias"])               # (B, IN)
    w0 = params["conv0_weight"][0] / math.sqrt(IN * 9)
    wmod0 = w0[None] * s0[:, None, :, None, None]
    demod0 = lax.rsqrt(jnp.sum(wmod0 ** 2, axis=(2, 3, 4)) + 1e-8)
    wmod0 = wmod0 * demod0[:, :, None, None, None]

    def convT_one(xi, wi):
        wflip = wi[:, :, ::-1, ::-1]
        return lax.conv_general_dilated(
            xi[None], wflip, (1, 1), ((2, 2), (2, 2)), lhs_dilation=(2, 2),
            dimension_numbers=("NCHW", "OIHW", "NCHW"))[0]

    xt = jax.vmap(convT_one)(x, wmod0)                                           # (B, OUT, 2H+1, 2W+1)
    x1 = _upfirdn2d_ref(xt, k2 * 4.0, up=1, pad=(1, 1))                          # (B, OUT, 2H, 2W)
    x1 = x1 + params["noise_strength0"] * noise0
    x1 = x1 + params["conv0_bias"][None, :, None, None]
    x1 = jnp.where(x1 >= 0, x1, 0.2 * x1) * math.sqrt(2.0)

    # --- conv1: modulated 3x3 conv + noise + act --------------------------------
    s1 = eq_linear(d1, params["mod1_weight"], params["mod1_bias"])               # (B, OUT)
    w1 = params["conv1_weight"][0] / math.sqrt(OUT * 9)
    wmod1 = w1[None] * s1[:, None, :, None, None]
    demod1 = lax.rsqrt(jnp.sum(wmod1 ** 2, axis=(2, 3, 4)) + 1e-8)
    wmod1 = wmod1 * demod1[:, :, None, None, None]

    def conv_one(xi, wi):
        return lax.conv_general_dilated(
            xi[None], wi, (1, 1), ((1, 1), (1, 1)),
            dimension_numbers=("NCHW", "OIHW", "NCHW"))[0]

    x2 = jax.vmap(conv_one)(x1, wmod1)
    x2 = x2 + params["noise_strength1"] * noise1
    x2 = x2 + params["conv1_bias"][None, :, None, None]
    x2 = jnp.where(x2 >= 0, x2, 0.2 * x2) * math.sqrt(2.0)

    # --- ToRGB: modulated 1x1 conv (no demod) + bias + upsampled skip -----------
    s2 = eq_linear(d2, params["mod2_weight"], params["mod2_bias"])               # (B, OUT)
    wr = params["rgb_weight"][0, :, :, 0, 0] / math.sqrt(OUT)                    # (NC, OUT)
    wrmod = wr[None] * s2[:, None, :]
    rgb = jnp.einsum("bohw,bco->bchw", x2, wrmod) + params["rgb_bias"]
    skip = _upfirdn2d_ref(y, k2 * 4.0, up=2, pad=(2, 1))
    return x2, rgb + skip


if __name__ == "__main__":
    # small deterministic config: res=3 block maps 4x4 -> 8x8
    B = 2
    D = 32            # dlatent_size
    NC = 3            # num_channels
    RES = 3
    IN_F, OUT_F = 16, 16
    H1 = W1 = 4
    H2 = W2 = 8

    key = jax.random.PRNGKey(0)
    ks = jax.random.split(key, 16)

    params = {
        "conv0_weight":    jax.random.normal(ks[0], (1, OUT_F, IN_F, 3, 3), jnp.float32),
        "mod0_weight":     jax.random.normal(ks[1], (IN_F, D), jnp.float32),
        "mod0_bias":       jnp.ones((IN_F,), jnp.float32),      # EqualizedLinear bias_init=1
        "conv0_bias":      0.1 * jax.random.normal(ks[2], (OUT_F,), jnp.float32),
        "noise_strength0": 0.3 * jax.random.normal(ks[3], (1,), jnp.float32),
        "conv1_weight":    jax.random.normal(ks[4], (1, OUT_F, OUT_F, 3, 3), jnp.float32),
        "mod1_weight":     jax.random.normal(ks[5], (OUT_F, D), jnp.float32),
        "mod1_bias":       jnp.ones((OUT_F,), jnp.float32),
        "conv1_bias":      0.1 * jax.random.normal(ks[6], (OUT_F,), jnp.float32),
        "noise_strength1": 0.3 * jax.random.normal(ks[7], (1,), jnp.float32),
        "rgb_weight":      jax.random.normal(ks[8], (1, NC, OUT_F, 1, 1), jnp.float32),
        "mod2_weight":     jax.random.normal(ks[9], (OUT_F, D), jnp.float32),
        "mod2_bias":       jnp.ones((OUT_F,), jnp.float32),
        "rgb_bias":        0.1 * jax.random.normal(ks[10], (1, NC, 1, 1), jnp.float32),
    }

    x = jax.random.normal(ks[11], (B, IN_F, H1, W1), jnp.float32)
    y = jax.random.normal(ks[12], (B, NC, H1, W1), jnp.float32)
    dlatents_in = jax.random.normal(ks[13], (B, 2 * RES - 2, D), jnp.float32)
    # TODO(synk): the module draws noise internally when noise_input is None; here the
    # noise maps are passed explicitly so kernel and reference see identical values.
    noise0 = jax.random.normal(ks[14], (B, 1, H2, W2), jnp.float32)
    noise1 = jax.random.normal(ks[15], (B, 1, H2, W2), jnp.float32)

    x_out, y_out = gsynthesis_block_forward(x, dlatents_in, y, noise0, noise1, params, res=RES)
    jax.block_until_ready((x_out, y_out))

    x_ref, y_ref = reference_forward(x, dlatents_in, y, noise0, noise1, params, res=RES)
    np.testing.assert_allclose(np.asarray(x_out), np.asarray(x_ref), rtol=2e-2, atol=2e-2)
    np.testing.assert_allclose(np.asarray(y_out), np.asarray(y_ref), rtol=2e-2, atol=2e-2)

    print("KERNEL_OK")
</pallas_src>

<mosaic_0001>
module attributes {stable_mosaic.version = 11 : i64} {
  func.func @_gsynth_block_kernel(%arg0: i32, %arg1: memref<1x1x32xf32, #tpu.memory_space<vmem>>, %arg2: memref<1x1x32xf32, #tpu.memory_space<vmem>>, %arg3: memref<1x1x32xf32, #tpu.memory_space<vmem>>, %arg4: memref<1x1x256xf32, #tpu.memory_space<vmem>>, %arg5: memref<1x1x64xf32, #tpu.memory_space<vmem>>, %arg6: memref<1x1x64xf32, #tpu.memory_space<vmem>>, %arg7: memref<1x1x64xf32, #tpu.memory_space<vmem>>, %arg8: memref<2xf32, #tpu.memory_space<smem>>, %arg9: memref<32x16xf32, #tpu.memory_space<vmem>>, %arg10: memref<1x16xf32, #tpu.memory_space<vmem>>, %arg11: memref<32x16xf32, #tpu.memory_space<vmem>>, %arg12: memref<1x16xf32, #tpu.memory_space<vmem>>, %arg13: memref<32x16xf32, #tpu.memory_space<vmem>>, %arg14: memref<1x16xf32, #tpu.memory_space<vmem>>, %arg15: memref<256x1024xf32, #tpu.memory_space<vmem>>, %arg16: memref<16x16xf32, #tpu.memory_space<vmem>>, %arg17: memref<1024x1024xf32, #tpu.memory_space<vmem>>, %arg18: memref<16x16xf32, #tpu.memory_space<vmem>>, %arg19: memref<1024x256xf32, #tpu.memory_space<vmem>>, %arg20: memref<64x256xf32, #tpu.memory_space<vmem>>, %arg21: memref<16x256xf32, #tpu.memory_space<vmem>>, %arg22: memref<16x1024xf32, #tpu.memory_space<vmem>>, %arg23: memref<64x1024xf32, #tpu.memory_space<vmem>>, %arg24: memref<1x1024xf32, #tpu.memory_space<vmem>>, %arg25: memref<1x1024xf32, #tpu.memory_space<vmem>>, %arg26: memref<1x256xf32, #tpu.memory_space<vmem>>, %arg27: memref<1x1x1024xf32, #tpu.memory_space<vmem>>, %arg28: memref<1x1x256xf32, #tpu.memory_space<vmem>>) attributes {dimension_semantics = [#tpu.dimension_semantics<parallel>], iteration_bounds = array<i64: 2>, scalar_prefetch = 0 : i64, scratch_operands = 0 : i64, tpu.core_type = #tpu.core_type<tc>, window_params = [{transform_indices = @transform_0, window_bounds = array<i64: 1, 1, 32>}, {transform_indices = @transform_1, window_bounds = array<i64: 1, 1, 32>}, {transform_indices = @transform_2, window_bounds = array<i64: 1, 1, 32>}, {transform_indices = @transform_3, window_bounds = array<i64: 1, 1, 256>}, {transform_indices = @transform_4, window_bounds = array<i64: 1, 1, 64>}, {transform_indices = @transform_5, window_bounds = array<i64: 1, 1, 64>}, {transform_indices = @transform_6, window_bounds = array<i64: 1, 1, 64>}, {transform_indices = @transform_7, window_bounds = array<i64: 2>}, {pipeline_mode = #tpu.pipeline_mode<synchronous>, transform_indices = @transform_8, window_bounds = array<i64: 32, 16>}, {pipeline_mode = #tpu.pipeline_mode<synchronous>, transform_indices = @transform_9, window_bounds = array<i64: 1, 16>}, {pipeline_mode = #tpu.pipeline_mode<synchronous>, transform_indices = @transform_10, window_bounds = array<i64: 32, 16>}, {pipeline_mode = #tpu.pipeline_mode<synchronous>, transform_indices = @transform_11, window_bounds = array<i64: 1, 16>}, {pipeline_mode = #tpu.pipeline_mode<synchronous>, transform_indices = @transform_12, window_bounds = array<i64: 32, 16>}, {pipeline_mode = #tpu.pipeline_mode<synchronous>, transform_indices = @transform_13, window_bounds = array<i64: 1, 16>}, {pipeline_mode = #tpu.pipeline_mode<synchronous>, transform_indices = @transform_14, window_bounds = array<i64: 256, 1024>}, {pipeline_mode = #tpu.pipeline_mode<synchronous>, transform_indices = @transform_15, window_bounds = array<i64: 16, 16>}, {pipeline_mode = #tpu.pipeline_mode<synchronous>, transform_indices = @transform_16, window_bounds = array<i64: 1024, 1024>}, {pipeline_mode = #tpu.pipeline_mode<synchronous>, transform_indices = @transform_17, window_bounds = array<i64: 16, 16>}, {pipeline_mode = #tpu.pipeline_mode<synchronous>, transform_indices = @transform_18, window_bounds = array<i64: 1024, 256>}, {pipeline_mode = #tpu.pipeline_mode<synchronous>, transform_indices = @transform_19, window_bounds = array<i64: 64, 256>}, {pipeline_mode = #tpu.pipeline_mode<synchronous>, transform_indices = @transform_20, window_bounds = array<i64: 16, 256>}, {pipeline_mode = #tpu.pipeline_mode<synchronous>, transform_indices = @transform_21, window_bounds = array<i64: 16, 1024>}, {pipeline_mode = #tpu.pipeline_mode<synchronous>, transform_indices = @transform_22, window_bounds = array<i64: 64, 1024>}, {pipeline_mode = #tpu.pipeline_mode<synchronous>, transform_indices = @transform_23, window_bounds = array<i64: 1, 1024>}, {pipeline_mode = #tpu.pipeline_mode<synchronous>, transform_indices = @transform_24, window_bounds = array<i64: 1, 1024>}, {pipeline_mode = #tpu.pipeline_mode<synchronous>, transform_indices = @transform_25, window_bounds = array<i64: 1, 256>}, {transform_indices = @transform_26, window_bounds = array<i64: 1, 1, 1024>}, {transform_indices = @transform_27, window_bounds = array<i64: 1, 1, 256>}]} {
    %c0 = arith.constant 0 : index
    %c0_0 = arith.constant 0 : index
    %c0_1 = arith.constant 0 : index
    %0 = vector.load %arg1[%c0, %c0_0, %c0_1] : memref<1x1x32xf32, #tpu.memory_space<vmem>>, vector<1x1x32xf32>
    %1 = vector.shape_cast %0 : vector<1x1x32xf32> to vector<1x32xf32>
    %c0_2 = arith.constant 0 : index
    %c0_3 = arith.constant 0 : index
    %c0_4 = arith.constant 0 : index
    %2 = vector.load %arg2[%c0_2, %c0_3, %c0_4] : memref<1x1x32xf32, #tpu.memory_space<vmem>>, vector<1x1x32xf32>
    %3 = vector.shape_cast %2 : vector<1x1x32xf32> to vector<1x32xf32>
    %c0_5 = arith.constant 0 : index
    %c0_6 = arith.constant 0 : index
    %c0_7 = arith.constant 0 : index
    %4 = vector.load %arg3[%c0_5, %c0_6, %c0_7] : memref<1x1x32xf32, #tpu.memory_space<vmem>>, vector<1x1x32xf32>
    %5 = vector.shape_cast %4 : vector<1x1x32xf32> to vector<1x32xf32>
    %c0_8 = arith.constant 0 : index
    %c0_9 = arith.constant 0 : index
    %6 = vector.load %arg9[%c0_8, %c0_9] : memref<32x16xf32, #tpu.memory_space<vmem>>, vector<32x16xf32>
    %cst = arith.constant dense<0.000000e+00> : vector<1x16xf32>
    %7 = tpu.matmul %1, %6, %cst {dimension_numbers = #tpu.dot_dimension_numbers<[1], [0], [0], [1], [0, 0, 1, 1], [], []>} : vector<1x32xf32>, vector<32x16xf32>, vector<1x16xf32> -> vector<1x16xf32>
    %c0_10 = arith.constant 0 : index
    %c0_11 = arith.constant 0 : index
    %8 = vector.load %arg10[%c0_10, %c0_11] : memref<1x16xf32, #tpu.memory_space<vmem>>, vector<1x16xf32>
    %9 = arith.addf %7, %8 : vector<1x16xf32>
    %c0_12 = arith.constant 0 : index
    %c0_13 = arith.constant 0 : index
    %10 = vector.load %arg11[%c0_12, %c0_13] : memref<32x16xf32, #tpu.memory_space<vmem>>, vector<32x16xf32>
    %cst_14 = arith.constant dense<0.000000e+00> : vector<1x16xf32>
    %11 = tpu.matmul %3, %10, %cst_14 {dimension_numbers = #tpu.dot_dimension_numbers<[1], [0], [0], [1], [0, 0, 1, 1], [], []>} : vector<1x32xf32>, vector<32x16xf32>, vector<1x16xf32> -> vector<1x16xf32>
    %c0_15 = arith.constant 0 : index
    %c0_16 = arith.constant 0 : index
    %12 = vector.load %arg12[%c0_15, %c0_16] : memref<1x16xf32, #tpu.memory_space<vmem>>, vector<1x16xf32>
    %13 = arith.addf %11, %12 : vector<1x16xf32>
    %c0_17 = arith.constant 0 : index
    %c0_18 = arith.constant 0 : index
    %14 = vector.load %arg13[%c0_17, %c0_18] : memref<32x16xf32, #tpu.memory_space<vmem>>, vector<32x16xf32>
    %cst_19 = arith.constant dense<0.000000e+00> : vector<1x16xf32>
    %15 = tpu.matmul %5, %14, %cst_19 {dimension_numbers = #tpu.dot_dimension_numbers<[1], [0], [0], [1], [0, 0, 1, 1], [], []>} : vector<1x32xf32>, vector<32x16xf32>, vector<1x16xf32> -> vector<1x16xf32>
    %c0_20 = arith.constant 0 : index
    %c0_21 = arith.constant 0 : index
    %16 = vector.load %arg14[%c0_20, %c0_21] : memref<1x16xf32, #tpu.memory_space<vmem>>, vector<1x16xf32>
    %17 = arith.addf %15, %16 : vector<1x16xf32>
    %18 = arith.mulf %9, %9 : vector<1x16xf32>
    %c0_22 = arith.constant 0 : index
    %c0_23 = arith.constant 0 : index
    %19 = vector.load %arg16[%c0_22, %c0_23] : memref<16x16xf32, #tpu.memory_space<vmem>>, vector<16x16xf32>
    %cst_24 = arith.constant dense<0.000000e+00> : vector<1x16xf32>
    %20 = tpu.matmul %18, %19, %cst_24 {dimension_numbers = #tpu.dot_dimension_numbers<[1], [0], [0], [1], [0, 0, 1, 1], [], []>} : vector<1x16xf32>, vector<16x16xf32>, vector<1x16xf32> -> vector<1x16xf32>
    %cst_25 = arith.constant 9.99999993E-9 : f32
    %21 = vector.broadcast %cst_25 : f32 to vector<1x16xf32>
    %22 = arith.addf %20, %21 : vector<1x16xf32>
    %23 = math.rsqrt %22 : vector<1x16xf32>
    %24 = arith.mulf %13, %13 : vector<1x16xf32>
    %c0_26 = arith.constant 0 : index
    %c0_27 = arith.constant 0 : index
    %25 = vector.load %arg18[%c0_26, %c0_27] : memref<16x16xf32, #tpu.memory_space<vmem>>, vector<16x16xf32>
    %cst_28 = arith.constant dense<0.000000e+00> : vector<1x16xf32>
    %26 = tpu.matmul %24, %25, %cst_28 {dimension_numbers = #tpu.dot_dimension_numbers<[1], [0], [0], [1], [0, 0, 1, 1], [], []>} : vector<1x16xf32>, vector<16x16xf32>, vector<1x16xf32> -> vector<1x16xf32>
    %cst_29 = arith.constant 9.99999993E-9 : f32
    %27 = vector.broadcast %cst_29 : f32 to vector<1x16xf32>
    %28 = arith.addf %26, %27 : vector<1x16xf32>
    %29 = math.rsqrt %28 : vector<1x16xf32>
    %c0_30 = arith.constant 0 : index
    %c0_31 = arith.constant 0 : index
    %30 = vector.load %arg21[%c0_30, %c0_31] : memref<16x256xf32, #tpu.memory_space<vmem>>, vector<16x256xf32>
    %cst_32 = arith.constant dense<0.000000e+00> : vector<1x256xf32>
    %31 = tpu.matmul %9, %30, %cst_32 {dimension_numbers = #tpu.dot_dimension_numbers<[1], [0], [0], [1], [0, 0, 1, 1], [], []>} : vector<1x16xf32>, vector<16x256xf32>, vector<1x256xf32> -> vector<1x256xf32>
    %c0_33 = arith.constant 0 : index
    %c0_34 = arith.constant 0 : index
    %32 = vector.load %arg22[%c0_33, %c0_34] : memref<16x1024xf32, #tpu.memory_space<vmem>>, vector<16x1024xf32>
    %cst_35 = arith.constant dense<0.000000e+00> : vector<1x1024xf32>
    %33 = tpu.matmul %13, %32, %cst_35 {dimension_numbers = #tpu.dot_dimension_numbers<[1], [0], [0], [1], [0, 0, 1, 1], [], []>} : vector<1x16xf32>, vector<16x1024xf32>, vector<1x1024xf32> -> vector<1x1024xf32>
    %c0_36 = arith.constant 0 : index
    %c0_37 = arith.constant 0 : index
    %34 = vector.load %arg22[%c0_36, %c0_37] : memref<16x1024xf32, #tpu.memory_space<vmem>>, vector<16x1024xf32>
    %cst_38 = arith.constant dense<0.000000e+00> : vector<1x1024xf32>
    %35 = tpu.matmul %17, %34, %cst_38 {dimension_numbers = #tpu.dot_dimension_numbers<[1], [0], [0], [1], [0, 0, 1, 1], [], []>} : vector<1x16xf32>, vector<16x1024xf32>, vector<1x1024xf32> -> vector<1x1024xf32>
    %c0_39 = arith.constant 0 : index
    %c0_40 = arith.constant 0 : index
    %36 = vector.load %arg22[%c0_39, %c0_40] : memref<16x1024xf32, #tpu.memory_space<vmem>>, vector<16x1024xf32>
    %cst_41 = arith.constant dense<0.000000e+00> : vector<1x1024xf32>
    %37 = tpu.matmul %23, %36, %cst_41 {dimension_numbers = #tpu.dot_dimension_numbers<[1], [0], [0], [1], [0, 0, 1, 1], [], []>} : vector<1x16xf32>, vector<16x1024xf32>, vector<1x1024xf32> -> vector<1x1024xf32>
    %c0_42 = arith.constant 0 : index
    %c0_43 = arith.constant 0 : index
    %38 = vector.load %arg22[%c0_42, %c0_43] : memref<16x1024xf32, #tpu.memory_space<vmem>>, vector<16x1024xf32>
    %cst_44 = arith.constant dense<0.000000e+00> : vector<1x1024xf32>
    %39 = tpu.matmul %29, %38, %cst_44 {dimension_numbers = #tpu.dot_dimension_numbers<[1], [0], [0], [1], [0, 0, 1, 1], [], []>} : vector<1x16xf32>, vector<16x1024xf32>, vector<1x1024xf32> -> vector<1x1024xf32>
    %c0_45 = arith.constant 0 : index
    %c0_46 = arith.constant 0 : index
    %c0_47 = arith.constant 0 : index
    %40 = vector.load %arg4[%c0_45, %c0_46, %c0_47] : memref<1x1x256xf32, #tpu.memory_space<vmem>>, vector<1x1x256xf32>
    %41 = vector.shape_cast %40 : vector<1x1x256xf32> to vector<1x256xf32>
    %42 = arith.mulf %41, %31 : vector<1x256xf32>
    %c0_48 = arith.constant 0 : index
    %c0_49 = arith.constant 0 : index
    %43 = vector.load %arg15[%c0_48, %c0_49] : memref<256x1024xf32, #tpu.memory_space<vmem>>, vector<256x1024xf32>
    %cst_50 = arith.constant dense<0.000000e+00> : vector<1x1024xf32>
    %44 = tpu.matmul %42, %43, %cst_50 {dimension_numbers = #tpu.dot_dimension_numbers<[1], [0], [0], [1], [0, 0, 1, 1], [], []>} : vector<1x256xf32>, vector<256x1024xf32>, vector<1x1024xf32> -> vector<1x1024xf32>
    %45 = arith.mulf %44, %37 : vector<1x1024xf32>
    %c0_51 = arith.constant 0 : index
    %c0_52 = arith.constant 0 : index
    %c0_53 = arith.constant 0 : index
    %46 = vector.load %arg6[%c0_51, %c0_52, %c0_53] : memref<1x1x64xf32, #tpu.memory_space<vmem>>, vector<1x1x64xf32>
    %47 = vector.shape_cast %46 : vector<1x1x64xf32> to vector<1x64xf32>
    %c0_54 = arith.constant 0 : index
    %48 = memref.load %arg8[%c0_54] : memref<2xf32, #tpu.memory_space<smem>>
    %49 = vector.broadcast %48 : f32 to vector<1x64xf32>
    %50 = arith.mulf %47, %49 : vector<1x64xf32>
    %c0_55 = arith.constant 0 : index
    %c0_56 = arith.constant 0 : index
    %51 = vector.load %arg23[%c0_55, %c0_56] : memref<64x1024xf32, #tpu.memory_space<vmem>>, vector<64x1024xf32>
    %cst_57 = arith.constant dense<0.000000e+00> : vector<1x1024xf32>
    %52 = tpu.matmul %50, %51, %cst_57 {dimension_numbers = #tpu.dot_dimension_numbers<[1], [0], [0], [1], [0, 0, 1, 1], [], []>} : vector<1x64xf32>, vector<64x1024xf32>, vector<1x1024xf32> -> vector<1x1024xf32>
    %53 = arith.addf %45, %52 : vector<1x1024xf32>
    %c0_58 = arith.constant 0 : index
    %c0_59 = arith.constant 0 : index
    %54 = vector.load %arg24[%c0_58, %c0_59] : memref<1x1024xf32, #tpu.memory_space<vmem>>, vector<1x1024xf32>
    %55 = arith.addf %53, %54 : vector<1x1024xf32>
    %cst_60 = arith.constant 0.000000e+00 : f32
    %56 = vector.broadcast %cst_60 : f32 to vector<1x1024xf32>
    %57 = arith.cmpf oge, %55, %56 : vector<1x1024xf32>
    %cst_61 = arith.constant 2.000000e-01 : f32
    %58 = vector.broadcast %cst_61 : f32 to vector<1x1024xf32>
    %59 = arith.mulf %58, %55 : vector<1x1024xf32>
    %60 = arith.select %57, %55, %59 : vector<1x1024xi1>, vector<1x1024xf32>
    %cst_62 = arith.constant 1.41421354 : f32
    %61 = vector.broadcast %cst_62 : f32 to vector<1x1024xf32>
    %62 = arith.mulf %60, %61 : vector<1x1024xf32>
    %63 = arith.mulf %62, %33 : vector<1x1024xf32>
    %c0_63 = arith.constant 0 : index
    %c0_64 = arith.constant 0 : index
    %64 = vector.load %arg17[%c0_63, %c0_64] : memref<1024x1024xf32, #tpu.memory_space<vmem>>, vector<1024x1024xf32>
    %cst_65 = arith.constant dense<0.000000e+00> : vector<1x1024xf32>
    %65 = tpu.matmul %63, %64, %cst_65 {dimension_numbers = #tpu.dot_dimension_numbers<[1], [0], [0], [1], [0, 0, 1, 1], [], []>} : vector<1x1024xf32>, vector<1024x1024xf32>, vector<1x1024xf32> -> vector<1x1024xf32>
    %66 = arith.mulf %65, %39 : vector<1x1024xf32>
    %c0_66 = arith.constant 0 : index
    %c0_67 = arith.constant 0 : index
    %c0_68 = arith.constant 0 : index
    %67 = vector.load %arg7[%c0_66, %c0_67, %c0_68] : memref<1x1x64xf32, #tpu.memory_space<vmem>>, vector<1x1x64xf32>
    %68 = vector.shape_cast %67 : vector<1x1x64xf32> to vector<1x64xf32>
    %c1 = arith.constant 1 : index
    %69 = memref.load %arg8[%c1] : memref<2xf32, #tpu.memory_space<smem>>
    %70 = vector.broadcast %69 : f32 to vector<1x64xf32>
    %71 = arith.mulf %68, %70 : vector<1x64xf32>
    %c0_69 = arith.constant 0 : index
    %c0_70 = arith.constant 0 : index
    %72 = vector.load %arg23[%c0_69, %c0_70] : memref<64x1024xf32, #tpu.memory_space<vmem>>, vector<64x1024xf32>
    %cst_71 = arith.constant dense<0.000000e+00> : vector<1x1024xf32>
    %73 = tpu.matmul %71, %72, %cst_71 {dimension_numbers = #tpu.dot_dimension_numbers<[1], [0], [0], [1], [0, 0, 1, 1], [], []>} : vector<1x64xf32>, vector<64x1024xf32>, vector<1x1024xf32> -> vector<1x1024xf32>
    %74 = arith.addf %66, %73 : vector<1x1024xf32>
    %c0_72 = arith.constant 0 : index
    %c0_73 = arith.constant 0 : index
    %75 = vector.load %arg25[%c0_72, %c0_73] : memref<1x1024xf32, #tpu.memory_space<vmem>>, vector<1x1024xf32>
    %76 = arith.addf %74, %75 : vector<1x1024xf32>
    %cst_74 = arith.constant 0.000000e+00 : f32
    %77 = vector.broadcast %cst_74 : f32 to vector<1x1024xf32>
    %78 = arith.cmpf oge, %76, %77 : vector<1x1024xf32>
    %cst_75 = arith.constant 2.000000e-01 : f32
    %79 = vector.broadcast %cst_75 : f32 to vector<1x1024xf32>
    %80 = arith.mulf %79, %76 : vector<1x1024xf32>
    %81 = arith.select %78, %76, %80 : vector<1x1024xi1>, vector<1x1024xf32>
    %cst_76 = arith.constant 1.41421354 : f32
    %82 = vector.broadcast %cst_76 : f32 to vector<1x1024xf32>
    %83 = arith.mulf %81, %82 : vector<1x1024xf32>
    %c0_77 = arith.constant 0 : index
    %c0_78 = arith.constant 0 : index
    %c0_79 = arith.constant 0 : index
    %84 = vector.load %arg27[%c0_77, %c0_78, %c0_79] : memref<1x1x1024xf32, #tpu.memory_space<vmem>>, vector<1x1x1024xf32>
    %85 = vector.shape_cast %84 : vector<1x1x1024xf32> to vector<1x1024xf32>
    %86 = vector.shape_cast %83 : vector<1x1024xf32> to vector<1x1x1024xf32>
    tpu.vector_store %arg27[%c0_77, %c0_78, %c0_79], %86 {strides = array<i32>} : memref<1x1x1024xf32, #tpu.memory_space<vmem>>, vector<1x1x1024xf32>,
    %87 = arith.mulf %83, %35 : vector<1x1024xf32>
    %c0_80 = arith.constant 0 : index
    %c0_81 = arith.constant 0 : index
    %88 = vector.load %arg19[%c0_80, %c0_81] : memref<1024x256xf32, #tpu.memory_space<vmem>>, vector<1024x256xf32>
    %cst_82 = arith.constant dense<0.000000e+00> : vector<1x256xf32>
    %89 = tpu.matmul %87, %88, %cst_82 {dimension_numbers = #tpu.dot_dimension_numbers<[1], [0], [0], [1], [0, 0, 1, 1], [], []>} : vector<1x1024xf32>, vector<1024x256xf32>, vector<1x256xf32> -> vector<1x256xf32>
    %c0_83 = arith.constant 0 : index
    %c0_84 = arith.constant 0 : index
    %90 = vector.load %arg26[%c0_83, %c0_84] : memref<1x256xf32, #tpu.memory_space<vmem>>, vector<1x256xf32>
    %91 = arith.addf %89, %90 : vector<1x256xf32>
    %c0_85 = arith.constant 0 : index
    %c0_86 = arith.constant 0 : index
    %c0_87 = arith.constant 0 : index
    %92 = vector.load %arg5[%c0_85, %c0_86, %c0_87] : memref<1x1x64xf32, #tpu.memory_space<vmem>>, vector<1x1x64xf32>
    %93 = vector.shape_cast %92 : vector<1x1x64xf32> to vector<1x64xf32>
    %c0_88 = arith.constant 0 : index
    %c0_89 = arith.constant 0 : index
    %94 = vector.load %arg20[%c0_88, %c0_89] : memref<64x256xf32, #tpu.memory_space<vmem>>, vector<64x256xf32>
    %cst_90 = arith.constant dense<0.000000e+00> : vector<1x256xf32>
    %95 = tpu.matmul %93, %94, %cst_90 {dimension_numbers = #tpu.dot_dimension_numbers<[1], [0], [0], [1], [0, 0, 1, 1], [], []>} : vector<1x64xf32>, vector<64x256xf32>, vector<1x256xf32> -> vector<1x256xf32>
    %96 = arith.addf %91, %95 : vector<1x256xf32>
    %c0_91 = arith.constant 0 : index
    %c0_92 = arith.constant 0 : index
    %c0_93 = arith.constant 0 : index
    %97 = vector.load %arg28[%c0_91, %c0_92, %c0_93] : memref<1x1x256xf32, #tpu.memory_space<vmem>>, vector<1x1x256xf32>
    %98 = vector.shape_cast %97 : vector<1x1x256xf32> to vector<1x256xf32>
    %99 = vector.shape_cast %96 : vector<1x256xf32> to vector<1x1x256xf32>
    tpu.vector_store %arg28[%c0_91, %c0_92, %c0_93], %99 {strides = array<i32>} : memref<1x1x256xf32, #tpu.memory_space<vmem>>, vector<1x1x256xf32>,
    return
  }
  func.func @transform_0(%arg0: i32) -> (i32, i32, i32) {
    %c0_i32 = arith.constant 0 : i32
    %c0_i32_0 = arith.constant 0 : i32
    %c0_i32_1 = arith.constant 0 : i32
    return %arg0, %c0_i32, %c0_i32_0 : i32, i32, i32
  }
  func.func @transform_1(%arg0: i32) -> (i32, i32, i32) {
    %c0_i32 = arith.constant 0 : i32
    %c0_i32_0 = arith.constant 0 : i32
    %c0_i32_1 = arith.constant 0 : i32
    return %arg0, %c0_i32, %c0_i32_0 : i32, i32, i32
  }
  func.func @transform_2(%arg0: i32) -> (i32, i32, i32) {
    %c0_i32 = arith.constant 0 : i32
    %c0_i32_0 = arith.constant 0 : i32
    %c0_i32_1 = arith.constant 0 : i32
    return %arg0, %c0_i32, %c0_i32_0 : i32, i32, i32
  }
  func.func @transform_3(%arg0: i32) -> (i32, i32, i32) {
    %c0_i32 = arith.constant 0 : i32
    %c0_i32_0 = arith.constant 0 : i32
    %c0_i32_1 = arith.constant 0 : i32
    return %arg0, %c0_i32, %c0_i32_0 : i32, i32, i32
  }
  func.func @transform_4(%arg0: i32) -> (i32, i32, i32) {
    %c0_i32 = arith.constant 0 : i32
    %c0_i32_0 = arith.constant 0 : i32
    %c0_i32_1 = arith.constant 0 : i32
    return %arg0, %c0_i32, %c0_i32_0 : i32, i32, i32
  }
  func.func @transform_5(%arg0: i32) -> (i32, i32, i32) {
    %c0_i32 = arith.constant 0 : i32
    %c0_i32_0 = arith.constant 0 : i32
    %c0_i32_1 = arith.constant 0 : i32
    return %arg0, %c0_i32, %c0_i32_0 : i32, i32, i32
  }
  func.func @transform_6(%arg0: i32) -> (i32, i32, i32) {
    %c0_i32 = arith.constant 0 : i32
    %c0_i32_0 = arith.constant 0 : i32
    %c0_i32_1 = arith.constant 0 : i32
    return %arg0, %c0_i32, %c0_i32_0 : i32, i32, i32
  }
  func.func @transform_7(%arg0: i32) -> i32 {
    %c0_i32 = arith.constant 0 : i32
    %c0_i32_0 = arith.constant 0 : i32
    return %c0_i32 : i32
  }
  func.func @transform_8(%arg0: i32) -> (i32, i32) {
    %c0_i32 = arith.constant 0 : i32
    %c0_i32_0 = arith.constant 0 : i32
    %c0_i32_1 = arith.constant 0 : i32
    return %c0_i32, %c0_i32_0 : i32, i32
  }
  func.func @transform_9(%arg0: i32) -> (i32, i32) {
    %c0_i32 = arith.constant 0 : i32
    %c0_i32_0 = arith.constant 0 : i32
    %c0_i32_1 = arith.constant 0 : i32
    return %c0_i32, %c0_i32_0 : i32, i32
  }
  func.func @transform_10(%arg0: i32) -> (i32, i32) {
    %c0_i32 = arith.constant 0 : i32
    %c0_i32_0 = arith.constant 0 : i32
    %c0_i32_1 = arith.constant 0 : i32
    return %c0_i32, %c0_i32_0 : i32, i32
  }
  func.func @transform_11(%arg0: i32) -> (i32, i32) {
    %c0_i32 = arith.constant 0 : i32
    %c0_i32_0 = arith.constant 0 : i32
    %c0_i32_1 = arith.constant 0 : i32
    return %c0_i32, %c0_i32_0 : i32, i32
  }
  func.func @transform_12(%arg0: i32) -> (i32, i32) {
    %c0_i32 = arith.constant 0 : i32
    %c0_i32_0 = arith.constant 0 : i32
    %c0_i32_1 = arith.constant 0 : i32
    return %c0_i32, %c0_i32_0 : i32, i32
  }
  func.func @transform_13(%arg0: i32) -> (i32, i32) {
    %c0_i32 = arith.constant 0 : i32
    %c0_i32_0 = arith.constant 0 : i32
    %c0_i32_1 = arith.constant 0 : i32
    return %c0_i32, %c0_i32_0 : i32, i32
  }
  func.func @transform_14(%arg0: i32) -> (i32, i32) {
    %c0_i32 = arith.constant 0 : i32
    %c0_i32_0 = arith.constant 0 : i32
    %c0_i32_1 = arith.constant 0 : i32
    return %c0_i32, %c0_i32_0 : i32, i32
  }
  func.func @transform_15(%arg0: i32) -> (i32, i32) {
    %c0_i32 = arith.constant 0 : i32
    %c0_i32_0 = arith.constant 0 : i32
    %c0_i32_1 = arith.constant 0 : i32
    return %c0_i32, %c0_i32_0 : i32, i32
  }
  func.func @transform_16(%arg0: i32) -> (i32, i32) {
    %c0_i32 = arith.constant 0 : i32
    %c0_i32_0 = arith.constant 0 : i32
    %c0_i32_1 = arith.constant 0 : i32
    return %c0_i32, %c0_i32_0 : i32, i32
  }
  func.func @transform_17(%arg0: i32) -> (i32, i32) {
    %c0_i32 = arith.constant 0 : i32
    %c0_i32_0 = arith.constant 0 : i32
    %c0_i32_1 = arith.constant 0 : i32
    return %c0_i32, %c0_i32_0 : i32, i32
  }
  func.func @transform_18(%arg0: i32) -> (i32, i32) {
    %c0_i32 = arith.constant 0 : i32
    %c0_i32_0 = arith.constant 0 : i32
    %c0_i32_1 = arith.constant 0 : i32
    return %c0_i32, %c0_i32_0 : i32, i32
  }
  func.func @transform_19(%arg0: i32) -> (i32, i32) {
    %c0_i32 = arith.constant 0 : i32
    %c0_i32_0 = arith.constant 0 : i32
    %c0_i32_1 = arith.constant 0 : i32
    return %c0_i32, %c0_i32_0 : i32, i32
  }
  func.func @transform_20(%arg0: i32) -> (i32, i32) {
    %c0_i32 = arith.constant 0 : i32
    %c0_i32_0 = arith.constant 0 : i32
    %c0_i32_1 = arith.constant 0 : i32
    return %c0_i32, %c0_i32_0 : i32, i32
  }
  func.func @transform_21(%arg0: i32) -> (i32, i32) {
    %c0_i32 = arith.constant 0 : i32
    %c0_i32_0 = arith.constant 0 : i32
    %c0_i32_1 = arith.constant 0 : i32
    return %c0_i32, %c0_i32_0 : i32, i32
  }
  func.func @transform_22(%arg0: i32) -> (i32, i32) {
    %c0_i32 = arith.constant 0 : i32
    %c0_i32_0 = arith.constant 0 : i32
    %c0_i32_1 = arith.constant 0 : i32
    return %c0_i32, %c0_i32_0 : i32, i32
  }
  func.func @transform_23(%arg0: i32) -> (i32, i32) {
    %c0_i32 = arith.constant 0 : i32
    %c0_i32_0 = arith.constant 0 : i32
    %c0_i32_1 = arith.constant 0 : i32
    return %c0_i32, %c0_i32_0 : i32, i32
  }
  func.func @transform_24(%arg0: i32) -> (i32, i32) {
    %c0_i32 = arith.constant 0 : i32
    %c0_i32_0 = arith.constant 0 : i32
    %c0_i32_1 = arith.constant 0 : i32
    return %c0_i32, %c0_i32_0 : i32, i32
  }
  func.func @transform_25(%arg0: i32) -> (i32, i32) {
    %c0_i32 = arith.constant 0 : i32
    %c0_i32_0 = arith.constant 0 : i32
    %c0_i32_1 = arith.constant 0 : i32
    return %c0_i32, %c0_i32_0 : i32, i32
  }
  func.func @transform_26(%arg0: i32) -> (i32, i32, i32) {
    %c0_i32 = arith.constant 0 : i32
    %c0_i32_0 = arith.constant 0 : i32
    %c0_i32_1 = arith.constant 0 : i32
    return %arg0, %c0_i32, %c0_i32_0 : i32, i32, i32
  }
  func.func @transform_27(%arg0: i32) -> (i32, i32, i32) {
    %c0_i32 = arith.constant 0 : i32
    %c0_i32_0 = arith.constant 0 : i32
    %c0_i32_1 = arith.constant 0 : i32
    return %arg0, %c0_i32, %c0_i32_0 : i32, i32, i32
  }
}

</mosaic_0001>

<llo_original>
// kernel: tpu_custom_call.1
$region0: #{tpu_custom_call.1}
  #allocation0 [shape = 'u32[]', space=smem, size = 0x4, offset = 0x4, fixed_abs, tag = 'smem constant byte address 0x4 - core index']
  #allocation1 [shape = 'u32[144,128]{1,0:T(1,128)}', space=vmem, size = 0x12000, scoped, tag = 'internal scratch']
  %s0 = inlined_call_operand.hbm [shape: f32[2,1,32], index: 0, kind: input, shape index: {}]
  %s1 = inlined_call_operand.hbm [shape: f32[2,1,32], index: 1, kind: input, shape index: {}]
  %s2 = inlined_call_operand.hbm [shape: f32[2,1,32], index: 2, kind: input, shape index: {}]
  %s3 = inlined_call_operand.hbm [shape: f32[2,1,256], index: 3, kind: input, shape index: {}]
  %s4 = inlined_call_operand.hbm [shape: f32[2,1,64], index: 4, kind: input, shape index: {}]
  %s5 = inlined_call_operand.hbm [shape: f32[2,1,64], index: 5, kind: input, shape index: {}]
  %s6 = inlined_call_operand.hbm [shape: f32[2,1,64], index: 6, kind: input, shape index: {}]
  %s7 = inlined_call_operand.hbm [shape: f32[2], index: 7, kind: input, shape index: {}]
  %s8 = inlined_call_operand.vmem [shape: f32[32,16], index: 8, kind: input, shape index: {}]
  %s9 = inlined_call_operand.hbm [shape: f32[1,16], index: 9, kind: input, shape index: {}]
  %s10 = inlined_call_operand.vmem [shape: f32[32,16], index: 10, kind: input, shape index: {}]
  %s11 = inlined_call_operand.hbm [shape: f32[1,16], index: 11, kind: input, shape index: {}]
  %s12 = inlined_call_operand.vmem [shape: f32[32,16], index: 12, kind: input, shape index: {}]
  %s13 = inlined_call_operand.hbm [shape: f32[1,16], index: 13, kind: input, shape index: {}]
  %s14 = inlined_call_operand.hbm [shape: f32[256,1024], index: 14, kind: input, shape index: {}]
  %s15 = inlined_call_operand.hbm [shape: f32[16,16], index: 15, kind: input, shape index: {}]
  %s16 = inlined_call_operand.hbm [shape: f32[1024,1024], index: 16, kind: input, shape index: {}]
  %s17 = inlined_call_operand.hbm [shape: f32[16,16], index: 17, kind: input, shape index: {}]
  %s18 = inlined_call_operand.hbm [shape: f32[1024,256], index: 18, kind: input, shape index: {}]
  %s19 = inlined_call_operand.hbm [shape: f32[64,256], index: 19, kind: input, shape index: {}]
  %s20 = inlined_call_operand.hbm [shape: f32[16,256], index: 20, kind: input, shape index: {}]
  %s21 = inlined_call_operand.hbm [shape: f32[16,1024], index: 21, kind: input, shape index: {}]
  %s22 = inlined_call_operand.hbm [shape: f32[64,1024], index: 22, kind: input, shape index: {}]
  %s23 = inlined_call_operand.hbm [shape: f32[1,1024], index: 23, kind: input, shape index: {}]
  %s24 = inlined_call_operand.hbm [shape: f32[1,1024], index: 24, kind: input, shape index: {}]
  %s25 = inlined_call_operand.hbm [shape: f32[1,256], index: 25, kind: input, shape index: {}]
  %s26 = inlined_call_operand.hbm [shape: f32[2,1,1024], index: 26, kind: output, shape index: {0}]
  %s27 = inlined_call_operand.hbm [shape: f32[2,1,256], index: 27, kind: output, shape index: {1}]
  %28 = xla_tuple %s26, %s27
  %s29 = sld [smem:[#allocation0]]
  $region237: #{tpu_custom_call.1} parent=0
    _
  %s31 = ssub.s32 1, %s29
  %s32 = scalar_select 0, %s31, %s29
  $region1: #{tpu_custom_call.1} parent=0
    #allocation2 [shape = 'u8[1024]{0}', space=vmem, size = 0x400, scoped, tag = 'input window, operand 0']
    #allocation3 [shape = 's32[2]{0}', space=sflag, size = 0x8, scoped, tag = 'scoped memory for tpu_custom_call.1']
    #allocation4 [shape = 's32[2]{0}', space=sflag, size = 0x8, scoped, tag = 'scoped memory for tpu_custom_call.1']
    #allocation5 [shape = 's32[2]{0}', space=sflag, size = 0x8, scoped, tag = 'scoped memory for tpu_custom_call.1']
    #allocation6 [shape = 'u8[1024]{0}', space=vmem, size = 0x400, scoped, tag = 'input window, operand 1']
    #allocation7 [shape = 's32[2]{0}', space=sflag, size = 0x8, scoped, tag = 'scoped memory for tpu_custom_call.1']
    #allocation8 [shape = 'u8[1024]{0}', space=vmem, size = 0x400, scoped, tag = 'input window, operand 2']
    #allocation9 [shape = 'u8[2048]{0}', space=vmem, size = 0x800, scoped, tag = 'input window, operand 3']
    #allocation10 [shape = 's32[2]{0}', space=sflag, size = 0x8, scoped, tag = 'scoped memory for tpu_custom_call.1']
    #allocation11 [shape = 'u8[1024]{0}', space=vmem, size = 0x400, scoped, tag = 'input window, operand 4']
    #allocation12 [shape = 'u8[1024]{0}', space=vmem, size = 0x400, scoped, tag = 'input window, operand 5']
    #allocation13 [shape = 's32[2]{0}', space=sflag, size = 0x8, scoped, tag = 'scoped memory for tpu_custom_call.1']
    #allocation14 [shape = 'u8[1024]{0}', space=vmem, size = 0x400, scoped, tag = 'input window, operand 6']
    #allocation15 [shape = 'u8[512]{0}', space=smem, size = 0x200, scoped, tag = 'input window, operand 7, single buffered']
    #allocation16 [shape = 'u8[512]{0}', space=vmem, size = 0x400, scoped, tag = 'input window, operand 9, single buffered']
    #allocation17 [shape = 's32[1]{0}', space=sflag, size = 0x4, scoped, tag = 'scoped memory for tpu_custom_call.1']
    #allocation18 [shape = 'u8[512]{0}', space=vmem, size = 0x400, scoped, tag = 'input window, operand 11, single buffered']
    #allocation19 [shape = 'u8[512]{0}', space=vmem, size = 0x400, scoped, tag = 'input window, operand 13, single buffered']
    #allocation20 [shape = 's32[1]{0}', space=sflag, size = 0x4, scoped, tag = 'scoped memory for tpu_custom_call.1']
    #allocation21 [shape = 'u8[1048576]{0}', space=vmem, size = 0x100000, scoped, tag = 'input window, operand 14, single buffered']
    #allocation22 [shape = 'u8[8192]{0}', space=vmem, size = 0x2000, scoped, tag = 'input window, operand 15, single buffered']
    #allocation23 [shape = 's32[1]{0}', space=sflag, size = 0x4, scoped, tag = 'scoped memory for tpu_custom_call.1']
    #allocation24 [shape = 'u8[4194304]{0}', space=vmem, size = 0x400000, scoped, tag = 'input window, operand 16, single buffered']
    #allocation25 [shape = 'u8[8192]{0}', space=vmem, size = 0x2000, scoped, tag = 'input window, operand 17, single buffered']
    #allocation26 [shape = 's32[1]{0}', space=sflag, size = 0x4, scoped, tag = 'scoped memory for tpu_custom_call.1']
    #allocation27 [shape = 'u8[1048576]{0}', space=vmem, size = 0x100000, scoped, tag = 'input window, operand 18, single buffered']
    #allocation28 [shape = 'u8[65536]{0}', space=vmem, size = 0x10000, scoped, tag = 'input window, operand 19, single buffered']
    #allocation29 [shape = 's32[1]{0}', space=sflag, size = 0x4, scoped, tag = 'scoped memory for tpu_custom_call.1']
    #allocation30 [shape = 'u8[16384]{0}', space=vmem, size = 0x4000, scoped, tag = 'input window, operand 20, single buffered']
    #allocation31 [shape = 'u8[65536]{0}', space=vmem, size = 0x10000, scoped, tag = 'input window, operand 21, single buffered']
    #allocation32 [shape = 's32[1]{0}', space=sflag, size = 0x4, scoped, tag = 'scoped memory for tpu_custom_call.1']
    #allocation33 [shape = 'u8[262144]{0}', space=vmem, size = 0x40000, scoped, tag = 'input window, operand 22, single buffered']
    #allocation34 [shape = 'u8[4096]{0}', space=vmem, size = 0x1000, scoped, tag = 'input window, operand 23, single buffered']
    #allocation35 [shape = 's32[1]{0}', space=sflag, size = 0x4, scoped, tag = 'scoped memory for tpu_custom_call.1']
    #allocation36 [shape = 'u8[4096]{0}', space=vmem, size = 0x1000, scoped, tag = 'input window, operand 24, single buffered']
    #allocation37 [shape = 'u8[1024]{0}', space=vmem, size = 0x400, scoped, tag = 'input window, operand 25, single buffered']
    #allocation38 [shape = 's32[1]{0}', space=sflag, size = 0x4, scoped, tag = 'scoped memory for tpu_custom_call.1']
    #allocation39 [shape = 'u8[8192]{0}', space=vmem, size = 0x2000, scoped, tag = 'output window, operand 0']
    #allocation40 [shape = 'u8[2048]{0}', space=vmem, size = 0x800, scoped, tag = 'output window, operand 1']
    #allocation41 [shape = 's32[2]{0}', space=sflag, size = 0x8, scoped, tag = 'scoped memory for tpu_custom_call.1']
    %33 = vsyncpa [#allocation3], 0
    %s34 = scalar_lea.sflag [#allocation3], 1
    %35 = vsyncpa %s34, 0
    %36 = vsyncpa [#allocation7], 0
    %s37 = scalar_lea.sflag [#allocation7], 1
    %38 = vsyncpa %s37, 0
    %39 = vsyncpa [#allocation10], 0
    %s40 = scalar_lea.sflag [#allocation10], 1
    %41 = vsyncpa %s40, 0
    %42 = vsyncpa [#allocation13], 0
    %s43 = scalar_lea.sflag [#allocation13], 1
    %44 = vsyncpa %s43, 0
    %45 = vsyncpa [#allocation5], 0
    %46 = vsyncpa [#allocation17], 0
    %47 = vsyncpa [#allocation20], 0
    %48 = vsyncpa [#allocation23], 0
    %49 = vsyncpa [#allocation26], 0
    %50 = vsyncpa [#allocation29], 0
    %51 = vsyncpa [#allocation32], 0
    %52 = vsyncpa [#allocation35], 0
    %53 = vsyncpa [#allocation38], 0
    %54 = vsyncpa [#allocation4], 0
    %s55 = scalar_lea.sflag [#allocation4], 1
    %56 = vsyncpa %s55, 0
    %57 = vsyncpa [#allocation41], 0
    %s58 = scalar_lea.sflag [#allocation41], 1
    %59 = vsyncpa %s58, 0
    loop: start=0, step=1, limit=4
    $region2: #{tpu_custom_call.1} parent=1 // loop_pre_header
      _
    $region3: #{tpu_custom_call.1} parent=1 // loop_header
      %s61 = sphi 0, %s65
      %p62 = scmp.ge.s32.totalorder %s61, 4
      %s71 = sphi 0, %s73
      %s74 = sphi 0, %s71
      %s75 = sphi 0, %s74
      %s91 = sphi 0, %s75
      %s97 = sphi 0, %s99
      %s100 = sphi 0, %s97
      %s101 = sphi 0, %s100
      %s117 = sphi 0, %s101
      %s123 = sphi 0, %s125
      %s126 = sphi 0, %s123
      %s127 = sphi 0, %s126
      %s143 = sphi 0, %s127
      %s149 = sphi 0, %s151
      %s152 = sphi 0, %s149
      %s153 = sphi 0, %s152
      %s169 = sphi 0, %s153
      %s175 = sphi 0, %s177
      %s178 = sphi 0, %s175
      %s179 = sphi 0, %s178
      %s195 = sphi 0, %s179
      %s201 = sphi 0, %s203
      %s204 = sphi 0, %s201
      %s205 = sphi 0, %s204
      %s221 = sphi 0, %s205
      %s227 = sphi 0, %s229
      %s230 = sphi 0, %s227
      %s231 = sphi 0, %s230
      %s247 = sphi 0, %s231
      %s251 = sphi 0, %s251
      %s253 = sphi 0, %s251
      %s254 = sphi 0, %s253
      %s268 = sphi 0, %s254
      %s272 = sphi 0, %s272
      %s274 = sphi 0, %s272
      %s275 = sphi 0, %s274
      %s289 = sphi 0, %s275
      %s293 = sphi 0, %s293
      %s295 = sphi 0, %s293
      %s296 = sphi 0, %s295
      %s310 = sphi 0, %s296
      %s314 = sphi 0, %s314
      %s316 = sphi 0, %s314
      %s317 = sphi 0, %s316
      %s331 = sphi 0, %s317
      %s335 = sphi 0, %s335
      %s337 = sphi 0, %s335
      %s338 = sphi 0, %s337
      %s352 = sphi 0, %s338
      %s356 = sphi 0, %s356
      %s358 = sphi 0, %s356
      %s359 = sphi 0, %s358
      %s373 = sphi 0, %s359
      %s377 = sphi 0, %s377
      %s379 = sphi 0, %s377
      %s380 = sphi 0, %s379
      %s394 = sphi 0, %s380
      %s398 = sphi 0, %s398
      %s400 = sphi 0, %s398
      %s401 = sphi 0, %s400
      %s415 = sphi 0, %s401
      %s419 = sphi 0, %s419
      %s421 = sphi 0, %s419
      %s422 = sphi 0, %s421
      %s436 = sphi 0, %s422
      %s440 = sphi 0, %s440
      %s442 = sphi 0, %s440
      %s443 = sphi 0, %s442
      %s457 = sphi 0, %s443
      %s461 = sphi 0, %s461
      %s463 = sphi 0, %s461
      %s464 = sphi 0, %s463
      %s478 = sphi 0, %s464
      %s482 = sphi 0, %s482
      %s484 = sphi 0, %s482
      %s485 = sphi 0, %s484
      %s499 = sphi 0, %s485
      %s503 = sphi 0, %s503
      %s505 = sphi 0, %s503
      %s506 = sphi 0, %s505
      %s520 = sphi 0, %s506
      %s524 = sphi 0, %s524
      %s526 = sphi 0, %s524
      %s527 = sphi 0, %s526
      %s541 = sphi 0, %s527
      %s545 = sphi 0, %s545
      %s547 = sphi 0, %s545
      %s548 = sphi 0, %s547
      %s562 = sphi 0, %s548
      %s566 = sphi 0, %s566
      %s568 = sphi 0, %s566
      %s569 = sphi 0, %s568
      %s583 = sphi 0, %s569
      %s587 = sphi 0, %s587
      %s589 = sphi 0, %s587
      %s590 = sphi 0, %s589
      %s604 = sphi 0, %s590
      %s608 = sphi 0, %s608
      %s610 = sphi 0, %s608
      %s611 = sphi 0, %s610
      %s625 = sphi 0, %s611
      %s629 = sphi 0, %s629
      %s631 = sphi 0, %s629
      %s632 = sphi 0, %s631
      %s646 = sphi 0, %s632
      %s652 = sphi 0, %s654
      %s655 = sphi 0, %s652
      %s656 = sphi 0, %s655
      %s672 = sphi 0, %s656
      %s678 = sphi 0, %s680
      %s681 = sphi 0, %s678
      %s682 = sphi 0, %s681
      %s698 = sphi 0, %s682
    $region4: #{tpu_custom_call.1} parent=1 // loop_header_branch
      %64 = sbr.rel (%p62) target = $region8
    $region5: #{tpu_custom_call.1} parent=1 // loop_body
      %s66 = ssub.s32 %s61, 1
      %s67 = ssub.s32 %s61, 2
      %s68 = sadd.s32 %s61, 1
      %s69 = ssub.s32 %s61, %s68
      %p70 = scmp.eq.s32.totalorder %s69, 0
      %s72 = sadd.s32 %s71, 1
      %s73 = scalar_select %p70, %s71, %s72
      %p76 = pneg %p70
      %p77 = scmp.eq.s32.totalorder %s61, 1
      %p78 = por %p76, %p77
      %p79 = scmp.ne.s32.totalorder %s71, %s74
      %p80 = scmp.eq.s32.totalorder %s61, 0
      %p81 = por %p79, %p80
      %p82 = scmp.ne.s32.totalorder %s71, %s74
      %p83 = scmp.eq.s32.totalorder %s66, 1
      %p84 = por %p82, %p83
      %p85 = scmp.ne.s32.totalorder %s74, %s75
      %p86 = scmp.eq.s32.totalorder %s66, 0
      %p87 = por %p85, %p86
      %p88 = scmp.ne.s32.totalorder %s74, %s75
      %p89 = scmp.eq.s32.totalorder %s67, 1
      %p90 = por %p88, %p89
      %p92 = scmp.ne.s32.totalorder %s75, %s91
      %p93 = scmp.eq.s32.totalorder %s67, 0
      %p94 = por %p92, %p93
      %s95 = ssub.s32 %s61, %s68
      %p96 = scmp.eq.s32.totalorder %s95, 0
      %s98 = sadd.s32 %s97, 1
      %s99 = scalar_select %p96, %s97, %s98
      %p102 = pneg %p96
      %p103 = scmp.eq.s32.totalorder %s61, 1
      %p104 = por %p102, %p103
      %p105 = scmp.ne.s32.totalorder %s97, %s100
      %p106 = scmp.eq.s32.totalorder %s61, 0
      %p107 = por %p105, %p106
      %p108 = scmp.ne.s32.totalorder %s97, %s100
      %p109 = scmp.eq.s32.totalorder %s66, 1
      %p110 = por %p108, %p109
      %p111 = scmp.ne.s32.totalorder %s100, %s101
      %p112 = scmp.eq.s32.totalorder %s66, 0
      %p113 = por %p111, %p112
      %p114 = scmp.ne.s32.totalorder %s100, %s101
      %p115 = scmp.eq.s32.totalorder %s67, 1
      %p116 = por %p114, %p115
      %p118 = scmp.ne.s32.totalorder %s101, %s117
      %p119 = scmp.eq.s32.totalorder %s67, 0
      %p120 = por %p118, %p119
      %s121 = ssub.s32 %s61, %s68
      %p122 = scmp.eq.s32.totalorder %s121, 0
      %s124 = sadd.s32 %s123, 1
      %s125 = scalar_select %p122, %s123, %s124
      %p128 = pneg %p122
      %p129 = scmp.eq.s32.totalorder %s61, 1
      %p130 = por %p128, %p129
      %p131 = scmp.ne.s32.totalorder %s123, %s126
      %p132 = scmp.eq.s32.totalorder %s61, 0
      %p133 = por %p131, %p132
      %p134 = scmp.ne.s32.totalorder %s123, %s126
      %p135 = scmp.eq.s32.totalorder %s66, 1
      %p136 = por %p134, %p135
      %p137 = scmp.ne.s32.totalorder %s126, %s127
      %p138 = scmp.eq.s32.totalorder %s66, 0
      %p139 = por %p137, %p138
      %p140 = scmp.ne.s32.totalorder %s126, %s127
      %p141 = scmp.eq.s32.totalorder %s67, 1
      %p142 = por %p140, %p141
      %p144 = scmp.ne.s32.totalorder %s127, %s143
      %p145 = scmp.eq.s32.totalorder %s67, 0
      %p146 = por %p144, %p145
      %s147 = ssub.s32 %s61, %s68
      %p148 = scmp.eq.s32.totalorder %s147, 0
      %s150 = sadd.s32 %s149, 1
      %s151 = scalar_select %p148, %s149, %s150
      %p154 = pneg %p148
      %p155 = scmp.eq.s32.totalorder %s61, 1
      %p156 = por %p154, %p155
      %p157 = scmp.ne.s32.totalorder %s149, %s152
      %p158 = scmp.eq.s32.totalorder %s61, 0
      %p159 = por %p157, %p158
      %p160 = scmp.ne.s32.totalorder %s149, %s152
      %p161 = scmp.eq.s32.totalorder %s66, 1
      %p162 = por %p160, %p161
      %p163 = scmp.ne.s32.totalorder %s152, %s153
      %p164 = scmp.eq.s32.totalorder %s66, 0
      %p165 = por %p163, %p164
      %p166 = scmp.ne.s32.totalorder %s152, %s153
      %p167 = scmp.eq.s32.totalorder %s67, 1
      %p168 = por %p166, %p167
      %p170 = scmp.ne.s32.totalorder %s153, %s169
      %p171 = scmp.eq.s32.totalorder %s67, 0
      %p172 = por %p170, %p171
      %s173 = ssub.s32 %s61, %s68
      %p174 = scmp.eq.s32.totalorder %s173, 0
      %s176 = sadd.s32 %s175, 1
      %s177 = scalar_select %p174, %s175, %s176
      %p180 = pneg %p174
      %p181 = scmp.eq.s32.totalorder %s61, 1
      %p182 = por %p180, %p181
      %p183 = scmp.ne.s32.totalorder %s175, %s178
      %p184 = scmp.eq.s32.totalorder %s61, 0
      %p185 = por %p183, %p184
      %p186 = scmp.ne.s32.totalorder %s175, %s178
      %p187 = scmp.eq.s32.totalorder %s66, 1
      %p188 = por %p186, %p187
      %p189 = scmp.ne.s32.totalorder %s178, %s179
      %p190 = scmp.eq.s32.totalorder %s66, 0
      %p191 = por %p189, %p190
      %p192 = scmp.ne.s32.totalorder %s178, %s179
      %p193 = scmp.eq.s32.totalorder %s67, 1
      %p194 = por %p192, %p193
      %p196 = scmp.ne.s32.totalorder %s179, %s195
      %p197 = scmp.eq.s32.totalorder %s67, 0
      %p198 = por %p196, %p197
      %s199 = ssub.s32 %s61, %s68
      %p200 = scmp.eq.s32.totalorder %s199, 0
      %s202 = sadd.s32 %s201, 1
      %s203 = scalar_select %p200, %s201, %s202
      %p206 = pneg %p200
      %p207 = scmp.eq.s32.totalorder %s61, 1
      %p208 = por %p206, %p207
      %p209 = scmp.ne.s32.totalorder %s201, %s204
      %p210 = scmp.eq.s32.totalorder %s61, 0
      %p211 = por %p209, %p210
      %p212 = scmp.ne.s32.totalorder %s201, %s204
      %p213 = scmp.eq.s32.totalorder %s66, 1
      %p214 = por %p212, %p213
      %p215 = scmp.ne.s32.totalorder %s204, %s205
      %p216 = scmp.eq.s32.totalorder %s66, 0
      %p217 = por %p215, %p216
      %p218 = scmp.ne.s32.totalorder %s204, %s205
      %p219 = scmp.eq.s32.totalorder %s67, 1
      %p220 = por %p218, %p219
      %p222 = scmp.ne.s32.totalorder %s205, %s221
      %p223 = scmp.eq.s32.totalorder %s67, 0
      %p224 = por %p222, %p223
      %s225 = ssub.s32 %s61, %s68
      %p226 = scmp.eq.s32.totalorder %s225, 0
      %s228 = sadd.s32 %s227, 1
      %s229 = scalar_select %p226, %s227, %s228
      %p232 = pneg %p226
      %p233 = scmp.eq.s32.totalorder %s61, 1
      %p234 = por %p232, %p233
      %p235 = scmp.ne.s32.totalorder %s227, %s230
      %p236 = scmp.eq.s32.totalorder %s61, 0
      %p237 = por %p235, %p236
      %p238 = scmp.ne.s32.totalorder %s227, %s230
      %p239 = scmp.eq.s32.totalorder %s66, 1
      %p240 = por %p238, %p239
      %p241 = scmp.ne.s32.totalorder %s230, %s231
      %p242 = scmp.eq.s32.totalorder %s66, 0
      %p243 = por %p241, %p242
      %p244 = scmp.ne.s32.totalorder %s230, %s231
      %p245 = scmp.eq.s32.totalorder %s67, 1
      %p246 = por %p244, %p245
      %p248 = scmp.ne.s32.totalorder %s231, %s247
      %p249 = scmp.eq.s32.totalorder %s67, 0
      %p250 = por %p248, %p249
      %s252 = sadd.s32 %s251, 1
      %p255 = scmp.eq.s32.totalorder %s61, 1
      %p256 = scmp.ne.s32.totalorder %s251, %s253
      %p257 = scmp.eq.s32.totalorder %s61, 0
      %p258 = por %p256, %p257
      %p259 = scmp.ne.s32.totalorder %s251, %s253
      %p260 = scmp.eq.s32.totalorder %s66, 1
      %p261 = por %p259, %p260
      %p262 = scmp.ne.s32.totalorder %s253, %s254
      %p263 = scmp.eq.s32.totalorder %s66, 0
      %p264 = por %p262, %p263
      %p265 = scmp.ne.s32.totalorder %s253, %s254
      %p266 = scmp.eq.s32.totalorder %s67, 1
      %p267 = por %p265, %p266
      %p269 = scmp.ne.s32.totalorder %s254, %s268
      %p270 = scmp.eq.s32.totalorder %s67, 0
      %p271 = por %p269, %p270
      %s273 = sadd.s32 %s272, 1
      %p276 = scmp.eq.s32.totalorder %s61, 1
      %p277 = scmp.ne.s32.totalorder %s272, %s274
      %p278 = scmp.eq.s32.totalorder %s61, 0
      %p279 = por %p277, %p278
      %p280 = scmp.ne.s32.totalorder %s272, %s274
      %p281 = scmp.eq.s32.totalorder %s66, 1
      %p282 = por %p280, %p281
      %p283 = scmp.ne.s32.totalorder %s274, %s275
      %p284 = scmp.eq.s32.totalorder %s66, 0
      %p285 = por %p283, %p284
      %p286 = scmp.ne.s32.totalorder %s274, %s275
      %p287 = scmp.eq.s32.totalorder %s67, 1
      %p288 = por %p286, %p287
      %p290 = scmp.ne.s32.totalorder %s275, %s289
      %p291 = scmp.eq.s32.totalorder %s67, 0
      %p292 = por %p290, %p291
      %s294 = sadd.s32 %s293, 1
      %p297 = scmp.eq.s32.totalorder %s61, 1
      %p298 = scmp.ne.s32.totalorder %s293, %s295
      %p299 = scmp.eq.s32.totalorder %s61, 0
      %p300 = por %p298, %p299
      %p301 = scmp.ne.s32.totalorder %s293, %s295
      %p302 = scmp.eq.s32.totalorder %s66, 1
      %p303 = por %p301, %p302
      %p304 = scmp.ne.s32.totalorder %s295, %s296
      %p305 = scmp.eq.s32.totalorder %s66, 0
      %p306 = por %p304, %p305
      %p307 = scmp.ne.s32.totalorder %s295, %s296
      %p308 = scmp.eq.s32.totalorder %s67, 1
      %p309 = por %p307, %p308
      %p311 = scmp.ne.s32.totalorder %s296, %s310
      %p312 = scmp.eq.s32.totalorder %s67, 0
      %p313 = por %p311, %p312
      %s315 = sadd.s32 %s314, 1
      %p318 = scmp.eq.s32.totalorder %s61, 1
      %p319 = scmp.ne.s32.totalorder %s314, %s316
      %p320 = scmp.eq.s32.totalorder %s61, 0
      %p321 = por %p319, %p320
      %p322 = scmp.ne.s32.totalorder %s314, %s316
      %p323 = scmp.eq.s32.totalorder %s66, 1
      %p324 = por %p322, %p323
      %p325 = scmp.ne.s32.totalorder %s316, %s317
      %p326 = scmp.eq.s32.totalorder %s66, 0
      %p327 = por %p325, %p326
      %p328 = scmp.ne.s32.totalorder %s316, %s317
      %p329 = scmp.eq.s32.totalorder %s67, 1
      %p330 = por %p328, %p329
      %p332 = scmp.ne.s32.totalorder %s317, %s331
      %p333 = scmp.eq.s32.totalorder %s67, 0
      %p334 = por %p332, %p333
      %s336 = sadd.s32 %s335, 1
      %p339 = scmp.eq.s32.totalorder %s61, 1
      %p340 = scmp.ne.s32.totalorder %s335, %s337
      %p341 = scmp.eq.s32.totalorder %s61, 0
      %p342 = por %p340, %p341
      %p343 = scmp.ne.s32.totalorder %s335, %s337
      %p344 = scmp.eq.s32.totalorder %s66, 1
      %p345 = por %p343, %p344
      %p346 = scmp.ne.s32.totalorder %s337, %s338
      %p347 = scmp.eq.s32.totalorder %s66, 0
      %p348 = por %p346, %p347
      %p349 = scmp.ne.s32.totalorder %s337, %s338
      %p350 = scmp.eq.s32.totalorder %s67, 1
      %p351 = por %p349, %p350
      %p353 = scmp.ne.s32.totalorder %s338, %s352
      %p354 = scmp.eq.s32.totalorder %s67, 0
      %p355 = por %p353, %p354
      %s357 = sadd.s32 %s356, 1
      %p360 = scmp.eq.s32.totalorder %s61, 1
      %p361 = scmp.ne.s32.totalorder %s356, %s358
      %p362 = scmp.eq.s32.totalorder %s61, 0
      %p363 = por %p361, %p362
      %p364 = scmp.ne.s32.totalorder %s356, %s358
      %p365 = scmp.eq.s32.totalorder %s66, 1
      %p366 = por %p364, %p365
      %p367 = scmp.ne.s32.totalorder %s358, %s359
      %p368 = scmp.eq.s32.totalorder %s66, 0
      %p369 = por %p367, %p368
      %p370 = scmp.ne.s32.totalorder %s358, %s359
      %p371 = scmp.eq.s32.totalorder %s67, 1
      %p372 = por %p370, %p371
      %p374 = scmp.ne.s32.totalorder %s359, %s373
      %p375 = scmp.eq.s32.totalorder %s67, 0
      %p376 = por %p374, %p375
      %s378 = sadd.s32 %s377, 1
      %p381 = scmp.eq.s32.totalorder %s61, 1
      %p382 = scmp.ne.s32.totalorder %s377, %s379
      %p383 = scmp.eq.s32.totalorder %s61, 0
      %p384 = por %p382, %p383
      %p385 = scmp.ne.s32.totalorder %s377, %s379
      %p386 = scmp.eq.s32.totalorder %s66, 1
      %p387 = por %p385, %p386
      %p388 = scmp.ne.s32.totalorder %s379, %s380
      %p389 = scmp.eq.s32.totalorder %s66, 0
      %p390 = por %p388, %p389
      %p391 = scmp.ne.s32.totalorder %s379, %s380
      %p392 = scmp.eq.s32.totalorder %s67, 1
      %p393 = por %p391, %p392
      %p395 = scmp.ne.s32.totalorder %s380, %s394
      %p396 = scmp.eq.s32.totalorder %s67, 0
      %p397 = por %p395, %p396
      %s399 = sadd.s32 %s398, 1
      %p402 = scmp.eq.s32.totalorder %s61, 1
      %p403 = scmp.ne.s32.totalorder %s398, %s400
      %p404 = scmp.eq.s32.totalorder %s61, 0
      %p405 = por %p403, %p404
      %p406 = scmp.ne.s32.totalorder %s398, %s400
      %p407 = scmp.eq.s32.totalorder %s66, 1
      %p408 = por %p406, %p407
      %p409 = scmp.ne.s32.totalorder %s400, %s401
      %p410 = scmp.eq.s32.totalorder %s66, 0
      %p411 = por %p409, %p410
      %p412 = scmp.ne.s32.totalorder %s400, %s401
      %p413 = scmp.eq.s32.totalorder %s67, 1
      %p414 = por %p412, %p413
      %p416 = scmp.ne.s32.totalorder %s401, %s415
      %p417 = scmp.eq.s32.totalorder %s67, 0
      %p418 = por %p416, %p417
      %s420 = sadd.s32 %s419, 1
      %p423 = scmp.eq.s32.totalorder %s61, 1
      %p424 = scmp.ne.s32.totalorder %s419, %s421
      %p425 = scmp.eq.s32.totalorder %s61, 0
      %p426 = por %p424, %p425
      %p427 = scmp.ne.s32.totalorder %s419, %s421
      %p428 = scmp.eq.s32.totalorder %s66, 1
      %p429 = por %p427, %p428
      %p430 = scmp.ne.s32.totalorder %s421, %s422
      %p431 = scmp.eq.s32.totalorder %s66, 0
      %p432 = por %p430, %p431
      %p433 = scmp.ne.s32.totalorder %s421, %s422
      %p434 = scmp.eq.s32.totalorder %s67, 1
      %p435 = por %p433, %p434
      %p437 = scmp.ne.s32.totalorder %s422, %s436
      %p438 = scmp.eq.s32.totalorder %s67, 0
      %p439 = por %p437, %p438
      %s441 = sadd.s32 %s440, 1
      %p444 = scmp.eq.s32.totalorder %s61, 1
      %p445 = scmp.ne.s32.totalorder %s440, %s442
      %p446 = scmp.eq.s32.totalorder %s61, 0
      %p447 = por %p445, %p446
      %p448 = scmp.ne.s32.totalorder %s440, %s442
      %p449 = scmp.eq.s32.totalorder %s66, 1
      %p450 = por %p448, %p449
      %p451 = scmp.ne.s32.totalorder %s442, %s443
      %p452 = scmp.eq.s32.totalorder %s66, 0
      %p453 = por %p451, %p452
      %p454 = scmp.ne.s32.totalorder %s442, %s443
      %p455 = scmp.eq.s32.totalorder %s67, 1
      %p456 = por %p454, %p455
      %p458 = scmp.ne.s32.totalorder %s443, %s457
      %p459 = scmp.eq.s32.totalorder %s67, 0
      %p460 = por %p458, %p459
      %s462 = sadd.s32 %s461, 1
      %p465 = scmp.eq.s32.totalorder %s61, 1
      %p466 = scmp.ne.s32.totalorder %s461, %s463
      %p467 = scmp.eq.s32.totalorder %s61, 0
      %p468 = por %p466, %p467
      %p469 = scmp.ne.s32.totalorder %s461, %s463
      %p470 = scmp.eq.s32.totalorder %s66, 1
      %p471 = por %p469, %p470
      %p472 = scmp.ne.s32.totalorder %s463, %s464
      %p473 = scmp.eq.s32.totalorder %s66, 0
      %p474 = por %p472, %p473
      %p475 = scmp.ne.s32.totalorder %s463, %s464
      %p476 = scmp.eq.s32.totalorder %s67, 1
      %p477 = por %p475, %p476
      %p479 = scmp.ne.s32.totalorder %s464, %s478
      %p480 = scmp.eq.s32.totalorder %s67, 0
      %p481 = por %p479, %p480
      %s483 = sadd.s32 %s482, 1
      %p486 = scmp.eq.s32.totalorder %s61, 1
      %p487 = scmp.ne.s32.totalorder %s482, %s484
      %p488 = scmp.eq.s32.totalorder %s61, 0
      %p489 = por %p487, %p488
      %p490 = scmp.ne.s32.totalorder %s482, %s484
      %p491 = scmp.eq.s32.totalorder %s66, 1
      %p492 = por %p490, %p491
      %p493 = scmp.ne.s32.totalorder %s484, %s485
      %p494 = scmp.eq.s32.totalorder %s66, 0
      %p495 = por %p493, %p494
      %p496 = scmp.ne.s32.totalorder %s484, %s485
      %p497 = scmp.eq.s32.totalorder %s67, 1
      %p498 = por %p496, %p497
      %p500 = scmp.ne.s32.totalorder %s485, %s499
      %p501 = scmp.eq.s32.totalorder %s67, 0
      %p502 = por %p500, %p501
      %s504 = sadd.s32 %s503, 1
      %p507 = scmp.eq.s32.totalorder %s61, 1
      %p508 = scmp.ne.s32.totalorder %s503, %s505
      %p509 = scmp.eq.s32.totalorder %s61, 0
      %p510 = por %p508, %p509
      %p511 = scmp.ne.s32.totalorder %s503, %s505
      %p512 = scmp.eq.s32.totalorder %s66, 1
      %p513 = por %p511, %p512
      %p514 = scmp.ne.s32.totalorder %s505, %s506
      %p515 = scmp.eq.s32.totalorder %s66, 0
      %p516 = por %p514, %p515
      %p517 = scmp.ne.s32.totalorder %s505, %s506
      %p518 = scmp.eq.s32.totalorder %s67, 1
      %p519 = por %p517, %p518
      %p521 = scmp.ne.s32.totalorder %s506, %s520
      %p522 = scmp.eq.s32.totalorder %s67, 0
      %p523 = por %p521, %p522
      %s525 = sadd.s32 %s524, 1
      %p528 = scmp.eq.s32.totalorder %s61, 1
      %p529 = scmp.ne.s32.totalorder %s524, %s526
      %p530 = scmp.eq.s32.totalorder %s61, 0
      %p531 = por %p529, %p530
      %p532 = scmp.ne.s32.totalorder %s524, %s526
      %p533 = scmp.eq.s32.totalorder %s66, 1
      %p534 = por %p532, %p533
      %p535 = scmp.ne.s32.totalorder %s526, %s527
      %p536 = scmp.eq.s32.totalorder %s66, 0
      %p537 = por %p535, %p536
      %p538 = scmp.ne.s32.totalorder %s526, %s527
      %p539 = scmp.eq.s32.totalorder %s67, 1
      %p540 = por %p538, %p539
      %p542 = scmp.ne.s32.totalorder %s527, %s541
      %p543 = scmp.eq.s32.totalorder %s67, 0
      %p544 = por %p542, %p543
      %s546 = sadd.s32 %s545, 1
      %p549 = scmp.eq.s32.totalorder %s61, 1
      %p550 = scmp.ne.s32.totalorder %s545, %s547
      %p551 = scmp.eq.s32.totalorder %s61, 0
      %p552 = por %p550, %p551
      %p553 = scmp.ne.s32.totalorder %s545, %s547
      %p554 = scmp.eq.s32.totalorder %s66, 1
      %p555 = por %p553, %p554
      %p556 = scmp.ne.s32.totalorder %s547, %s548
      %p557 = scmp.eq.s32.totalorder %s66, 0
      %p558 = por %p556, %p557
      %p559 = scmp.ne.s32.totalorder %s547, %s548
      %p560 = scmp.eq.s32.totalorder %s67, 1
      %p561 = por %p559, %p560
      %p563 = scmp.ne.s32.totalorder %s548, %s562
      %p564 = scmp.eq.s32.totalorder %s67, 0
      %p565 = por %p563, %p564
      %s567 = sadd.s32 %s566, 1
      %p570 = scmp.eq.s32.totalorder %s61, 1
      %p571 = scmp.ne.s32.totalorder %s566, %s568
      %p572 = scmp.eq.s32.totalorder %s61, 0
      %p573 = por %p571, %p572
      %p574 = scmp.ne.s32.totalorder %s566, %s568
      %p575 = scmp.eq.s32.totalorder %s66, 1
      %p576 = por %p574, %p575
      %p577 = scmp.ne.s32.totalorder %s568, %s569
      %p578 = scmp.eq.s32.totalorder %s66, 0
      %p579 = por %p577, %p578
      %p580 = scmp.ne.s32.totalorder %s568, %s569
      %p581 = scmp.eq.s32.totalorder %s67, 1
      %p582 = por %p580, %p581
      %p584 = scmp.ne.s32.totalorder %s569, %s583
      %p585 = scmp.eq.s32.totalorder %s67, 0
      %p586 = por %p584, %p585
      %s588 = sadd.s32 %s587, 1
      %p591 = scmp.eq.s32.totalorder %s61, 1
      %p592 = scmp.ne.s32.totalorder %s587, %s589
      %p593 = scmp.eq.s32.totalorder %s61, 0
      %p594 = por %p592, %p593
      %p595 = scmp.ne.s32.totalorder %s587, %s589
      %p596 = scmp.eq.s32.totalorder %s66, 1
      %p597 = por %p595, %p596
      %p598 = scmp.ne.s32.totalorder %s589, %s590
      %p599 = scmp.eq.s32.totalorder %s66, 0
      %p600 = por %p598, %p599
      %p601 = scmp.ne.s32.totalorder %s589, %s590
      %p602 = scmp.eq.s32.totalorder %s67, 1
      %p603 = por %p601, %p602
      %p605 = scmp.ne.s32.totalorder %s590, %s604
      %p606 = scmp.eq.s32.totalorder %s67, 0
      %p607 = por %p605, %p606
      %s609 = sadd.s32 %s608, 1
      %p612 = scmp.eq.s32.totalorder %s61, 1
      %p613 = scmp.ne.s32.totalorder %s608, %s610
      %p614 = scmp.eq.s32.totalorder %s61, 0
      %p615 = por %p613, %p614
      %p616 = scmp.ne.s32.totalorder %s608, %s610
      %p617 = scmp.eq.s32.totalorder %s66, 1
      %p618 = por %p616, %p617
      %p619 = scmp.ne.s32.totalorder %s610, %s611
      %p620 = scmp.eq.s32.totalorder %s66, 0
      %p621 = por %p619, %p620
      %p622 = scmp.ne.s32.totalorder %s610, %s611
      %p623 = scmp.eq.s32.totalorder %s67, 1
      %p624 = por %p622, %p623
      %p626 = scmp.ne.s32.totalorder %s611, %s625
      %p627 = scmp.eq.s32.totalorder %s67, 0
      %p628 = por %p626, %p627
      %s630 = sadd.s32 %s629, 1
      %p633 = scmp.eq.s32.totalorder %s61, 1
      %p634 = scmp.ne.s32.totalorder %s629, %s631
      %p635 = scmp.eq.s32.totalorder %s61, 0
      %p636 = por %p634, %p635
      %p637 = scmp.ne.s32.totalorder %s629, %s631
      %p638 = scmp.eq.s32.totalorder %s66, 1
      %p639 = por %p637, %p638
      %p640 = scmp.ne.s32.totalorder %s631, %s632
      %p641 = scmp.eq.s32.totalorder %s66, 0
      %p642 = por %p640, %p641
      %p643 = scmp.ne.s32.totalorder %s631, %s632
      %p644 = scmp.eq.s32.totalorder %s67, 1
      %p645 = por %p643, %p644
      %p647 = scmp.ne.s32.totalorder %s632, %s646
      %p648 = scmp.eq.s32.totalorder %s67, 0
      %p649 = por %p647, %p648
      %s650 = ssub.s32 %s61, %s68
      %p651 = scmp.eq.s32.totalorder %s650, 0
      %s653 = sadd.s32 %s652, 1
      %s654 = scalar_select %p651, %s652, %s653
      %p657 = pneg %p651
      %p658 = scmp.eq.s32.totalorder %s61, 1
      %p659 = por %p657, %p658
      %p660 = scmp.ne.s32.totalorder %s652, %s655
      %p661 = scmp.eq.s32.totalorder %s61, 0
      %p662 = por %p660, %p661
      %p663 = scmp.ne.s32.totalorder %s652, %s655
      %p664 = scmp.eq.s32.totalorder %s66, 1
      %p665 = por %p663, %p664
      %p666 = scmp.ne.s32.totalorder %s655, %s656
      %p667 = scmp.eq.s32.totalorder %s66, 0
      %p668 = por %p666, %p667
      %p669 = scmp.ne.s32.totalorder %s655, %s656
      %p670 = scmp.eq.s32.totalorder %s67, 1
      %p671 = por %p669, %p670
      %p673 = scmp.ne.s32.totalorder %s656, %s672
      %p674 = scmp.eq.s32.totalorder %s67, 0
      %p675 = por %p673, %p674
      %s676 = ssub.s32 %s61, %s68
      %p677 = scmp.eq.s32.totalorder %s676, 0
      %s679 = sadd.s32 %s678, 1
      %s680 = scalar_select %p677, %s678, %s679
      %p683 = pneg %p677
      %p684 = scmp.eq.s32.totalorder %s61, 1
      %p685 = por %p683, %p684
      %p686 = scmp.ne.s32.totalorder %s678, %s681
      %p687 = scmp.eq.s32.totalorder %s61, 0
      %p688 = por %p686, %p687
      %p689 = scmp.ne.s32.totalorder %s678, %s681
      %p690 = scmp.eq.s32.totalorder %s66, 1
      %p691 = por %p689, %p690
      %p692 = scmp.ne.s32.totalorder %s681, %s682
      %p693 = scmp.eq.s32.totalorder %s66, 0
      %p694 = por %p692, %p693
      %p695 = scmp.ne.s32.totalorder %s681, %s682
      %p696 = scmp.eq.s32.totalorder %s67, 1
      %p697 = por %p695, %p696
      %p699 = scmp.ne.s32.totalorder %s682, %s698
      %p700 = scmp.eq.s32.totalorder %s67, 0
      %p701 = por %p699, %p700
      %p702 = scmp.le.s32.totalorder 1, %s61
      %p703 = scmp.lt.s32.totalorder %s61, 3
      %p704 = pnand %p702, %p703
      %p705 = pneg %p704
      // Predicated region
      $region9: #{tpu_custom_call.1} parent=5 // pred_check
        _
      $region10: #{tpu_custom_call.1} parent=5 // pred_check_branch
        %707 = sbr.rel (%p704) target = $region12
      $region11: #{tpu_custom_call.1} parent=5 // pred_region
        %s708 = ssub.s32 %s61, 1
        // Predicated region
        $region13: #{tpu_custom_call.1} parent=11 // pred_check
          %p709 = pneg %p264
        $region14: #{tpu_custom_call.1} parent=11 // pred_check_branch
          %711 = sbr.rel (%p709) target = $region16
        $region15: #{tpu_custom_call.1} parent=11 // pred_region
          %s713 = ssub.s32 16, 16
          %714 = vsyncadd [#allocation5], %s713
          %717 = dma.hbm_to_smem %s7, 16, [#allocation15], [#allocation5]
        $region16: #{tpu_custom_call.1} parent=11 // pred_fallthru
          _
        // Predicated region
        $region17: #{tpu_custom_call.1} parent=11 // pred_check
          %p718 = pneg %p285
        $region18: #{tpu_custom_call.1} parent=11 // pred_check_branch
          %720 = sbr.rel (%p718) target = $region20
        $region19: #{tpu_custom_call.1} parent=11 // pred_region
          _
        $region20: #{tpu_custom_call.1} parent=11 // pred_fallthru
          _
        // Predicated region
        $region21: #{tpu_custom_call.1} parent=11 // pred_check
          %p721 = pneg %p306
        $region22: #{tpu_custom_call.1} parent=11 // pred_check_branch
          %723 = sbr.rel (%p721) target = $region24
        $region23: #{tpu_custom_call.1} parent=11 // pred_region
          %s725 = ssub.s32 16, 16
          %726 = vsyncadd [#allocation17], %s725
          %s728 = sshll.u32 [#allocation16], 4
          %s729 = int_to_ptr.vmem [resolvable:$true] %s728
          %731 = dma.hbm_to_vmem [thread:$0]  %s9, 16, %s729, [#allocation17]
        $region24: #{tpu_custom_call.1} parent=11 // pred_fallthru
          _
        // Predicated region
        $region25: #{tpu_custom_call.1} parent=11 // pred_check
          %p732 = pneg %p327
        $region26: #{tpu_custom_call.1} parent=11 // pred_check_branch
          %734 = sbr.rel (%p732) target = $region28
        $region27: #{tpu_custom_call.1} parent=11 // pred_region
          _
        $region28: #{tpu_custom_call.1} parent=11 // pred_fallthru
          _
        // Predicated region
        $region29: #{tpu_custom_call.1} parent=11 // pred_check
          %p735 = pneg %p348
        $region30: #{tpu_custom_call.1} parent=11 // pred_check_branch
          %737 = sbr.rel (%p735) target = $region32
        $region31: #{tpu_custom_call.1} parent=11 // pred_region
          %s739 = ssub.s32 16, 16
          %740 = vsyncadd [#allocation17], %s739
          %s742 = sshll.u32 [#allocation18], 4
          %s743 = int_to_ptr.vmem [resolvable:$true] %s742
          %745 = dma.hbm_to_vmem [thread:$0]  %s11, 16, %s743, [#allocation17]
        $region32: #{tpu_custom_call.1} parent=11 // pred_fallthru
          _
        // Predicated region
        $region33: #{tpu_custom_call.1} parent=11 // pred_check
          %p746 = pneg %p369
        $region34: #{tpu_custom_call.1} parent=11 // pred_check_branch
          %748 = sbr.rel (%p746) target = $region36
        $region35: #{tpu_custom_call.1} parent=11 // pred_region
          _
        $region36: #{tpu_custom_call.1} parent=11 // pred_fallthru
          _
        // Predicated region
        $region37: #{tpu_custom_call.1} parent=11 // pred_check
          %p749 = pneg %p390
        $region38: #{tpu_custom_call.1} parent=11 // pred_check_branch
          %751 = sbr.rel (%p749) target = $region40
        $region39: #{tpu_custom_call.1} parent=11 // pred_region
          %s753 = ssub.s32 16, 16
          %754 = vsyncadd [#allocation20], %s753
          %s756 = sshll.u32 [#allocation19], 4
          %s757 = int_to_ptr.vmem [resolvable:$true] %s756
          %759 = dma.hbm_to_vmem [thread:$0]  %s13, 16, %s757, [#allocation20]
        $region40: #{tpu_custom_call.1} parent=11 // pred_fallthru
          _
        // Predicated region
        $region41: #{tpu_custom_call.1} parent=11 // pred_check
          %p760 = pneg %p411
        $region42: #{tpu_custom_call.1} parent=11 // pred_check_branch
          %762 = sbr.rel (%p760) target = $region44
        $region43: #{tpu_custom_call.1} parent=11 // pred_region
          %s764 = ssub.s32 32768, 32768
          %765 = vsyncadd [#allocation20], %s764
          %s766 = sshll.u32 [#allocation21], 4
          %s767 = int_to_ptr.vmem [resolvable:$true] %s766
          %772 = dma.hbm_to_vmem [thread:$0]  %s14, 32768, %s767, [#allocation20], 1024, 1024, 64
        $region44: #{tpu_custom_call.1} parent=11 // pred_fallthru
          _
        // Predicated region
        $region45: #{tpu_custom_call.1} parent=11 // pred_check
          %p773 = pneg %p432
        $region46: #{tpu_custom_call.1} parent=11 // pred_check_branch
          %775 = sbr.rel (%p773) target = $region48
        $region47: #{tpu_custom_call.1} parent=11 // pred_region
          %s777 = ssub.s32 256, 256
          %778 = vsyncadd [#allocation23], %s777
          %s779 = sshll.u32 [#allocation22], 4
          %s780 = int_to_ptr.vmem [resolvable:$true] %s779
          %785 = dma.hbm_to_vmem [thread:$0]  %s15, 256, %s780, [#allocation23], 128, 128, 8
        $region48: #{tpu_custom_call.1} parent=11 // pred_fallthru
          _
        // Predicated region
        $region49: #{tpu_custom_call.1} parent=11 // pred_check
          %p786 = pneg %p453
        $region50: #{tpu_custom_call.1} parent=11 // pred_check_branch
          %788 = sbr.rel (%p786) target = $region52
        $region51: #{tpu_custom_call.1} parent=11 // pred_region
          %s790 = ssub.s32 131072, 131072
          %791 = vsyncadd [#allocation23], %s790
          %s792 = sshll.u32 [#allocation24], 4
          %s793 = int_to_ptr.vmem [resolvable:$true] %s792
          %798 = dma.hbm_to_vmem [thread:$0]  %s16, 131072, %s793, [#allocation23], 1024, 1024, 64
        $region52: #{tpu_custom_call.1} parent=11 // pred_fallthru
          _
        // Predicated region
        $region53: #{tpu_custom_call.1} parent=11 // pred_check
          %p799 = pneg %p474
        $region54: #{tpu_custom_call.1} parent=11 // pred_check_branch
          %801 = sbr.rel (%p799) target = $region56
        $region55: #{tpu_custom_call.1} parent=11 // pred_region
          %s803 = ssub.s32 256, 256
          %804 = vsyncadd [#allocation26], %s803
          %s805 = sshll.u32 [#allocation25], 4
          %s806 = int_to_ptr.vmem [resolvable:$true] %s805
          %811 = dma.hbm_to_vmem [thread:$0]  %s17, 256, %s806, [#allocation26], 128, 128, 8
        $region56: #{tpu_custom_call.1} parent=11 // pred_fallthru
          _
        // Predicated region
        $region57: #{tpu_custom_call.1} parent=11 // pred_check
          %p812 = pneg %p495
        $region58: #{tpu_custom_call.1} parent=11 // pred_check_branch
          %814 = sbr.rel (%p812) target = $region60
        $region59: #{tpu_custom_call.1} parent=11 // pred_region
          %s816 = ssub.s32 32768, 32768
          %817 = vsyncadd [#allocation26], %s816
          %s818 = sshll.u32 [#allocation27], 4
          %s819 = int_to_ptr.vmem [resolvable:$true] %s818
          %824 = dma.hbm_to_vmem [thread:$0]  %s18, 32768, %s819, [#allocation26], 256, 256, 16
        $region60: #{tpu_custom_call.1} parent=11 // pred_fallthru
          _
        // Predicated region
        $region61: #{tpu_custom_call.1} parent=11 // pred_check
          %p825 = pneg %p516
        $region62: #{tpu_custom_call.1} parent=11 // pred_check_branch
          %827 = sbr.rel (%p825) target = $region64
        $region63: #{tpu_custom_call.1} parent=11 // pred_region
          %s829 = ssub.s32 2048, 2048
          %830 = vsyncadd [#allocation29], %s829
          %s831 = sshll.u32 [#allocation28], 4
          %s832 = int_to_ptr.vmem [resolvable:$true] %s831
          %837 = dma.hbm_to_vmem [thread:$0]  %s19, 2048, %s832, [#allocation29], 256, 256, 16
        $region64: #{tpu_custom_call.1} parent=11 // pred_fallthru
          _
        // Predicated region
        $region65: #{tpu_custom_call.1} parent=11 // pred_check
          %p838 = pneg %p537
        $region66: #{tpu_custom_call.1} parent=11 // pred_check_branch
          %840 = sbr.rel (%p838) target = $region68
        $region67: #{tpu_custom_call.1} parent=11 // pred_region
          %s842 = ssub.s32 512, 512
          %843 = vsyncadd [#allocation29], %s842
          %s844 = sshll.u32 [#allocation30], 4
          %s845 = int_to_ptr.vmem [resolvable:$true] %s844
          %850 = dma.hbm_to_vmem [thread:$0]  %s20, 512, %s845, [#allocation29], 256, 256, 16
        $region68: #{tpu_custom_call.1} parent=11 // pred_fallthru
          _
        // Predicated region
        $region69: #{tpu_custom_call.1} parent=11 // pred_check
          %p851 = pneg %p558
        $region70: #{tpu_custom_call.1} parent=11 // pred_check_branch
          %853 = sbr.rel (%p851) target = $region72
        $region71: #{tpu_custom_call.1} parent=11 // pred_region
          %s855 = ssub.s32 2048, 2048
          %856 = vsyncadd [#allocation32], %s855
          %s857 = sshll.u32 [#allocation31], 4
          %s858 = int_to_ptr.vmem [resolvable:$true] %s857
          %863 = dma.hbm_to_vmem [thread:$0]  %s21, 2048, %s858, [#allocation32], 1024, 1024, 64
        $region72: #{tpu_custom_call.1} parent=11 // pred_fallthru
          _
        // Predicated region
        $region73: #{tpu_custom_call.1} parent=11 // pred_check
          %p864 = pneg %p579
        $region74: #{tpu_custom_call.1} parent=11 // pred_check_branch
          %866 = sbr.rel (%p864) target = $region76
        $region75: #{tpu_custom_call.1} parent=11 // pred_region
          %s868 = ssub.s32 8192, 8192
          %869 = vsyncadd [#allocation32], %s868
          %s870 = sshll.u32 [#allocation33], 4
          %s871 = int_to_ptr.vmem [resolvable:$true] %s870
          %876 = dma.hbm_to_vmem [thread:$0]  %s22, 8192, %s871, [#allocation32], 1024, 1024, 64
        $region76: #{tpu_custom_call.1} parent=11 // pred_fallthru
          _
        // Predicated region
        $region77: #{tpu_custom_call.1} parent=11 // pred_check
          %p877 = pneg %p600
        $region78: #{tpu_custom_call.1} parent=11 // pred_check_branch
          %879 = sbr.rel (%p877) target = $region80
        $region79: #{tpu_custom_call.1} parent=11 // pred_region
          %s881 = ssub.s32 128, 128
          %882 = vsyncadd [#allocation35], %s881
          %s884 = sshll.u32 [#allocation34], 4
          %s885 = int_to_ptr.vmem [resolvable:$true] %s884
          %887 = dma.hbm_to_vmem [thread:$0]  %s23, 128, %s885, [#allocation35]
        $region80: #{tpu_custom_call.1} parent=11 // pred_fallthru
          _
        // Predicated region
        $region81: #{tpu_custom_call.1} parent=11 // pred_check
          %p888 = pneg %p621
        $region82: #{tpu_custom_call.1} parent=11 // pred_check_branch
          %890 = sbr.rel (%p888) target = $region84
        $region83: #{tpu_custom_call.1} parent=11 // pred_region
          %s892 = ssub.s32 128, 128
          %893 = vsyncadd [#allocation35], %s892
          %s895 = sshll.u32 [#allocation36], 4
          %s896 = int_to_ptr.vmem [resolvable:$true] %s895
          %898 = dma.hbm_to_vmem [thread:$0]  %s24, 128, %s896, [#allocation35]
        $region84: #{tpu_custom_call.1} parent=11 // pred_fallthru
          _
        // Predicated region
        $region85: #{tpu_custom_call.1} parent=11 // pred_check
          %p899 = pneg %p642
        $region86: #{tpu_custom_call.1} parent=11 // pred_check_branch
          %901 = sbr.rel (%p899) target = $region88
        $region87: #{tpu_custom_call.1} parent=11 // pred_region
          %s903 = ssub.s32 32, 32
          %904 = vsyncadd [#allocation38], %s903
          %s906 = sshll.u32 [#allocation37], 4
          %s907 = int_to_ptr.vmem [resolvable:$true] %s906
          %909 = dma.hbm_to_vmem [thread:$0]  %s25, 32, %s907, [#allocation38]
        $region88: #{tpu_custom_call.1} parent=11 // pred_fallthru
          _
      $region12: #{tpu_custom_call.1} parent=5 // pred_fallthru
        _
      %p910 = scmp.lt.s32.totalorder %s61, 2
      // Predicated region
      $region89: #{tpu_custom_call.1} parent=5 // pred_check
        %p911 = pneg %p910
      $region90: #{tpu_custom_call.1} parent=5 // pred_check_branch
        %913 = sbr.rel (%p911) target = $region92
      $region91: #{tpu_custom_call.1} parent=5 // pred_region
        // Predicated region
        $region93: #{tpu_custom_call.1} parent=91 // pred_check
          %p914 = pneg %p81
        $region94: #{tpu_custom_call.1} parent=91 // pred_check_branch
          %916 = sbr.rel (%p914) target = $region96
        $region95: #{tpu_custom_call.1} parent=91 // pred_region
          %s917 = sand.u32 %s71, 1
          %s918 = scalar_lea.sflag [#allocation3], %s917
          %s919 = sand.u32 %s71, 1
          %s920 = scalar_lea.vmem [#allocation2], %s919
          %s922 = ssub.s32 16, 16
          %923 = vsyncadd %s918, %s922
          %s924 = smul.addr %s61, 16
          %s925 = scalar_lea.hbm %s0, %s924
          %s927 = sshll.u32 %s920, 4
          %s928 = int_to_ptr.vmem [resolvable:$true] %s927
          %930 = dma.hbm_to_vmem [thread:$0]  %s925, 16, %s928, %s918
        $region96: #{tpu_custom_call.1} parent=91 // pred_fallthru
          _
        // Predicated region
        $region97: #{tpu_custom_call.1} parent=91 // pred_check
          %p931 = pneg %p107
        $region98: #{tpu_custom_call.1} parent=91 // pred_check_branch
          %933 = sbr.rel (%p931) target = $region100
        $region99: #{tpu_custom_call.1} parent=91 // pred_region
          %s934 = sand.u32 %s61, 1
          %s935 = scalar_lea.sflag [#allocation7], %s934
          %s936 = sand.u32 %s97, 1
          %s937 = scalar_lea.vmem [#allocation6], %s936
          %s939 = ssub.s32 16, 16
          %940 = vsyncadd %s935, %s939
          %s941 = smul.addr %s61, 16
          %s942 = scalar_lea.hbm %s1, %s941
          %s944 = sshll.u32 %s937, 4
          %s945 = int_to_ptr.vmem [resolvable:$true] %s944
          %947 = dma.hbm_to_vmem [thread:$0]  %s942, 16, %s945, %s935
        $region100: #{tpu_custom_call.1} parent=91 // pred_fallthru
          _
        // Predicated region
        $region101: #{tpu_custom_call.1} parent=91 // pred_check
          %p948 = pneg %p133
        $region102: #{tpu_custom_call.1} parent=91 // pred_check_branch
          %950 = sbr.rel (%p948) target = $region104
        $region103: #{tpu_custom_call.1} parent=91 // pred_region
          %s951 = sand.u32 %s61, 1
          %s952 = scalar_lea.sflag [#allocation7], %s951
          %s953 = sand.u32 %s123, 1
          %s954 = scalar_lea.vmem [#allocation8], %s953
          %s956 = ssub.s32 16, 16
          %957 = vsyncadd %s952, %s956
          %s958 = smul.addr %s61, 16
          %s959 = scalar_lea.hbm %s2, %s958
          %s961 = sshll.u32 %s954, 4
          %s962 = int_to_ptr.vmem [resolvable:$true] %s961
          %964 = dma.hbm_to_vmem [thread:$0]  %s959, 16, %s962, %s952
        $region104: #{tpu_custom_call.1} parent=91 // pred_fallthru
          _
        // Predicated region
        $region105: #{tpu_custom_call.1} parent=91 // pred_check
          %p965 = pneg %p159
        $region106: #{tpu_custom_call.1} parent=91 // pred_check_branch
          %967 = sbr.rel (%p965) target = $region108
        $region107: #{tpu_custom_call.1} parent=91 // pred_region
          %s968 = sand.u32 %s61, 1
          %s969 = scalar_lea.sflag [#allocation10], %s968
          %s970 = sand.u32 %s149, 1
          %s971 = smul.addr %s970, 2
          %s972 = scalar_lea.vmem [#allocation9], %s971
          %s974 = ssub.s32 32, 32
          %975 = vsyncadd %s969, %s974
          %s976 = smul.addr %s61, 2
          %s977 = smul.addr %s976, 16
          %s978 = scalar_lea.hbm %s3, %s977
          %s980 = sshll.u32 %s972, 4
          %s981 = int_to_ptr.vmem [resolvable:$true] %s980
          %983 = dma.hbm_to_vmem [thread:$0]  %s978, 32, %s981, %s969
        $region108: #{tpu_custom_call.1} parent=91 // pred_fallthru
          _
        // Predicated region
        $region109: #{tpu_custom_call.1} parent=91 // pred_check
          %p984 = pneg %p185
        $region110: #{tpu_custom_call.1} parent=91 // pred_check_branch
          %986 = sbr.rel (%p984) target = $region112
        $region111: #{tpu_custom_call.1} parent=91 // pred_region
          %s987 = sand.u32 %s61, 1
          %s988 = scalar_lea.sflag [#allocation10], %s987
          %s989 = sand.u32 %s175, 1
          %s990 = scalar_lea.vmem [#allocation11], %s989
          %s992 = ssub.s32 16, 16
          %993 = vsyncadd %s988, %s992
          %s994 = smul.addr %s61, 16
          %s995 = scalar_lea.hbm %s4, %s994
          %s997 = sshll.u32 %s990, 4
          %s998 = int_to_ptr.vmem [resolvable:$true] %s997
          %1000 = dma.hbm_to_vmem [thread:$0]  %s995, 16, %s998, %s988
        $region112: #{tpu_custom_call.1} parent=91 // pred_fallthru
          _
        // Predicated region
        $region113: #{tpu_custom_call.1} parent=91 // pred_check
          %p1001 = pneg %p211
        $region114: #{tpu_custom_call.1} parent=91 // pred_check_branch
          %1003 = sbr.rel (%p1001) target = $region116
        $region115: #{tpu_custom_call.1} parent=91 // pred_region
          %s1004 = sand.u32 %s61, 1
          %s1005 = scalar_lea.sflag [#allocation13], %s1004
          %s1006 = sand.u32 %s201, 1
          %s1007 = scalar_lea.vmem [#allocation12], %s1006
          %s1009 = ssub.s32 16, 16
          %1010 = vsyncadd %s1005, %s1009
          %s1011 = smul.addr %s61, 16
          %s1012 = scalar_lea.hbm %s5, %s1011
          %s1014 = sshll.u32 %s1007, 4
          %s1015 = int_to_ptr.vmem [resolvable:$true] %s1014
          %1017 = dma.hbm_to_vmem [thread:$0]  %s1012, 16, %s1015, %s1005
        $region116: #{tpu_custom_call.1} parent=91 // pred_fallthru
          _
        // Predicated region
        $region117: #{tpu_custom_call.1} parent=91 // pred_check
          %p1018 = pneg %p237
        $region118: #{tpu_custom_call.1} parent=91 // pred_check_branch
          %1020 = sbr.rel (%p1018) target = $region120
        $region119: #{tpu_custom_call.1} parent=91 // pred_region
          %s1021 = sand.u32 %s61, 1
          %s1022 = scalar_lea.sflag [#allocation13], %s1021
          %s1023 = sand.u32 %s227, 1
          %s1024 = scalar_lea.vmem [#allocation14], %s1023
          %s1026 = ssub.s32 16, 16
          %1027 = vsyncadd %s1022, %s1026
          %s1028 = smul.addr %s61, 16
          %s1029 = scalar_lea.hbm %s6, %s1028
          %s1031 = sshll.u32 %s1024, 4
          %s1032 = int_to_ptr.vmem [resolvable:$true] %s1031
          %1034 = dma.hbm_to_vmem [thread:$0]  %s1029, 16, %s1032, %s1022
        $region120: #{tpu_custom_call.1} parent=91 // pred_fallthru
          _
      $region92: #{tpu_custom_call.1} parent=5 // pred_fallthru
        _
      %p1035 = scmp.le.s32.totalorder 1, %s61
      %p1036 = scmp.lt.s32.totalorder %s61, 3
      %p1037 = pnand %p1035, %p1036
      %p1038 = pneg %p1037
      // Predicated region
      $region121: #{tpu_custom_call.1} parent=5 // pred_check
        _
      $region122: #{tpu_custom_call.1} parent=5 // pred_check_branch
        %1040 = sbr.rel (%p1037) target = $region124
      $region123: #{tpu_custom_call.1} parent=5 // pred_region
        %s1041 = ssub.s32 %s61, 1
        %s1042 = sand.u32 %s74, 1
        %s1043 = scalar_lea.sflag [#allocation3], %s1042
        %s1044 = sand.u32 %s74, 1
        %s1045 = scalar_lea.vmem [#allocation2], %s1044
        // Predicated region
        $region125: #{tpu_custom_call.1} parent=123 // pred_check
          %p1046 = pneg %p87
        $region126: #{tpu_custom_call.1} parent=123 // pred_check_branch
          %1048 = sbr.rel (%p1046) target = $region128
        $region127: #{tpu_custom_call.1} parent=123 // pred_region
          %1049 = dma.done %s1043, 16
        $region128: #{tpu_custom_call.1} parent=123 // pred_fallthru
          _
        %s1050 = sand.u32 %s66, 1
        %s1051 = scalar_lea.sflag [#allocation7], %s1050
        %s1052 = sand.u32 %s100, 1
        %s1053 = scalar_lea.vmem [#allocation6], %s1052
        // Predicated region
        $region129: #{tpu_custom_call.1} parent=123 // pred_check
          %p1054 = pneg %p113
        $region130: #{tpu_custom_call.1} parent=123 // pred_check_branch
          %1056 = sbr.rel (%p1054) target = $region132
        $region131: #{tpu_custom_call.1} parent=123 // pred_region
          %1057 = dma.done %s1051, 16
        $region132: #{tpu_custom_call.1} parent=123 // pred_fallthru
          _
        %s1058 = sand.u32 %s66, 1
        %s1059 = scalar_lea.sflag [#allocation7], %s1058
        %s1060 = sand.u32 %s126, 1
        %s1061 = scalar_lea.vmem [#allocation8], %s1060
        // Predicated region
        $region133: #{tpu_custom_call.1} parent=123 // pred_check
          %p1062 = pneg %p139
        $region134: #{tpu_custom_call.1} parent=123 // pred_check_branch
          %1064 = sbr.rel (%p1062) target = $region136
        $region135: #{tpu_custom_call.1} parent=123 // pred_region
          %1065 = dma.done %s1059, 16
        $region136: #{tpu_custom_call.1} parent=123 // pred_fallthru
          _
        %s1066 = sand.u32 %s66, 1
        %s1067 = scalar_lea.sflag [#allocation10], %s1066
        %s1068 = sand.u32 %s152, 1
        %s1069 = smul.addr %s1068, 2
        %s1070 = scalar_lea.vmem [#allocation9], %s1069
        // Predicated region
        $region137: #{tpu_custom_call.1} parent=123 // pred_check
          %p1071 = pneg %p165
        $region138: #{tpu_custom_call.1} parent=123 // pred_check_branch
          %1073 = sbr.rel (%p1071) target = $region140
        $region139: #{tpu_custom_call.1} parent=123 // pred_region
          %1074 = dma.done %s1067, 32
        $region140: #{tpu_custom_call.1} parent=123 // pred_fallthru
          _
        %s1075 = sand.u32 %s66, 1
        %s1076 = scalar_lea.sflag [#allocation10], %s1075
        %s1077 = sand.u32 %s178, 1
        %s1078 = scalar_lea.vmem [#allocation11], %s1077
        // Predicated region
        $region141: #{tpu_custom_call.1} parent=123 // pred_check
          %p1079 = pneg %p191
        $region142: #{tpu_custom_call.1} parent=123 // pred_check_branch
          %1081 = sbr.rel (%p1079) target = $region144
        $region143: #{tpu_custom_call.1} parent=123 // pred_region
          %1082 = dma.done %s1076, 16
        $region144: #{tpu_custom_call.1} parent=123 // pred_fallthru
          _
        %s1083 = sand.u32 %s66, 1
        %s1084 = scalar_lea.sflag [#allocation13], %s1083
        %s1085 = sand.u32 %s204, 1
        %s1086 = scalar_lea.vmem [#allocation12], %s1085
        // Predicated region
        $region145: #{tpu_custom_call.1} parent=123 // pred_check
          %p1087 = pneg %p217
        $region146: #{tpu_custom_call.1} parent=123 // pred_check_branch
          %1089 = sbr.rel (%p1087) target = $region148
        $region147: #{tpu_custom_call.1} parent=123 // pred_region
          %1090 = dma.done %s1084, 16
        $region148: #{tpu_custom_call.1} parent=123 // pred_fallthru
          _
        %s1091 = sand.u32 %s66, 1
        %s1092 = scalar_lea.sflag [#allocation13], %s1091
        %s1093 = sand.u32 %s230, 1
        %s1094 = scalar_lea.vmem [#allocation14], %s1093
        // Predicated region
        $region149: #{tpu_custom_call.1} parent=123 // pred_check
          %p1095 = pneg %p243
        $region150: #{tpu_custom_call.1} parent=123 // pred_check_branch
          %1097 = sbr.rel (%p1095) target = $region152
        $region151: #{tpu_custom_call.1} parent=123 // pred_region
          %1098 = dma.done %s1092, 16
        $region152: #{tpu_custom_call.1} parent=123 // pred_fallthru
          _
        // Predicated region
        $region153: #{tpu_custom_call.1} parent=123 // pred_check
          %p1099 = pneg %p264
        $region154: #{tpu_custom_call.1} parent=123 // pred_check_branch
          %1101 = sbr.rel (%p1099) target = $region156
        $region155: #{tpu_custom_call.1} parent=123 // pred_region
          %1102 = dma.done [#allocation5], 16
        $region156: #{tpu_custom_call.1} parent=123 // pred_fallthru
          _
        // Predicated region
        $region157: #{tpu_custom_call.1} parent=123 // pred_check
          %p1103 = pneg %p306
        $region158: #{tpu_custom_call.1} parent=123 // pred_check_branch
          %1105 = sbr.rel (%p1103) target = $region160
        $region159: #{tpu_custom_call.1} parent=123 // pred_region
          %1106 = dma.done [#allocation17], 16
        $region160: #{tpu_custom_call.1} parent=123 // pred_fallthru
          _
        // Predicated region
        $region161: #{tpu_custom_call.1} parent=123 // pred_check
          %p1107 = pneg %p348
        $region162: #{tpu_custom_call.1} parent=123 // pred_check_branch
          %1109 = sbr.rel (%p1107) target = $region164
        $region163: #{tpu_custom_call.1} parent=123 // pred_region
          %1110 = dma.done [#allocation17], 16
        $region164: #{tpu_custom_call.1} parent=123 // pred_fallthru
          _
        // Predicated region
        $region165: #{tpu_custom_call.1} parent=123 // pred_check
          %p1111 = pneg %p390
        $region166: #{tpu_custom_call.1} parent=123 // pred_check_branch
          %1113 = sbr.rel (%p1111) target = $region168
        $region167: #{tpu_custom_call.1} parent=123 // pred_region
          %1114 = dma.done [#allocation20], 16
        $region168: #{tpu_custom_call.1} parent=123 // pred_fallthru
          _
        // Predicated region
        $region169: #{tpu_custom_call.1} parent=123 // pred_check
          %p1115 = pneg %p411
        $region170: #{tpu_custom_call.1} parent=123 // pred_check_branch
          %1117 = sbr.rel (%p1115) target = $region172
        $region171: #{tpu_custom_call.1} parent=123 // pred_region
          %1118 = dma.done [#allocation20], 32768
        $region172: #{tpu_custom_call.1} parent=123 // pred_fallthru
          _
        // Predicated region
        $region173: #{tpu_custom_call.1} parent=123 // pred_check
          %p1119 = pneg %p432
        $region174: #{tpu_custom_call.1} parent=123 // pred_check_branch
          %1121 = sbr.rel (%p1119) target = $region176
        $region175: #{tpu_custom_call.1} parent=123 // pred_region
          %1122 = dma.done [#allocation23], 256
        $region176: #{tpu_custom_call.1} parent=123 // pred_fallthru
          _
        // Predicated region
        $region177: #{tpu_custom_call.1} parent=123 // pred_check
          %p1123 = pneg %p453
        $region178: #{tpu_custom_call.1} parent=123 // pred_check_branch
          %1125 = sbr.rel (%p1123) target = $region180
        $region179: #{tpu_custom_call.1} parent=123 // pred_region
          %1126 = dma.done [#allocation23], 131072
        $region180: #{tpu_custom_call.1} parent=123 // pred_fallthru
          _
        // Predicated region
        $region181: #{tpu_custom_call.1} parent=123 // pred_check
          %p1127 = pneg %p474
        $region182: #{tpu_custom_call.1} parent=123 // pred_check_branch
          %1129 = sbr.rel (%p1127) target = $region184
        $region183: #{tpu_custom_call.1} parent=123 // pred_region
          %1130 = dma.done [#allocation26], 256
        $region184: #{tpu_custom_call.1} parent=123 // pred_fallthru
          _
        // Predicated region
        $region185: #{tpu_custom_call.1} parent=123 // pred_check
          %p1131 = pneg %p495
        $region186: #{tpu_custom_call.1} parent=123 // pred_check_branch
          %1133 = sbr.rel (%p1131) target = $region188
        $region187: #{tpu_custom_call.1} parent=123 // pred_region
          %1134 = dma.done [#allocation26], 32768
        $region188: #{tpu_custom_call.1} parent=123 // pred_fallthru
          _
        // Predicated region
        $region189: #{tpu_custom_call.1} parent=123 // pred_check
          %p1135 = pneg %p516
        $region190: #{tpu_custom_call.1} parent=123 // pred_check_branch
          %1137 = sbr.rel (%p1135) target = $region192
        $region191: #{tpu_custom_call.1} parent=123 // pred_region
          %1138 = dma.done [#allocation29], 2048
        $region192: #{tpu_custom_call.1} parent=123 // pred_fallthru
          _
        // Predicated region
        $region193: #{tpu_custom_call.1} parent=123 // pred_check
          %p1139 = pneg %p537
        $region194: #{tpu_custom_call.1} parent=123 // pred_check_branch
          %1141 = sbr.rel (%p1139) target = $region196
        $region195: #{tpu_custom_call.1} parent=123 // pred_region
          %1142 = dma.done [#allocation29], 512
        $region196: #{tpu_custom_call.1} parent=123 // pred_fallthru
          _
        // Predicated region
        $region197: #{tpu_custom_call.1} parent=123 // pred_check
          %p1143 = pneg %p558
        $region198: #{tpu_custom_call.1} parent=123 // pred_check_branch
          %1145 = sbr.rel (%p1143) target = $region200
        $region199: #{tpu_custom_call.1} parent=123 // pred_region
          %1146 = dma.done [#allocation32], 2048
        $region200: #{tpu_custom_call.1} parent=123 // pred_fallthru
          _
        // Predicated region
        $region201: #{tpu_custom_call.1} parent=123 // pred_check
          %p1147 = pneg %p579
        $region202: #{tpu_custom_call.1} parent=123 // pred_check_branch
          %1149 = sbr.rel (%p1147) target = $region204
        $region203: #{tpu_custom_call.1} parent=123 // pred_region
          %1150 = dma.done [#allocation32], 8192
        $region204: #{tpu_custom_call.1} parent=123 // pred_fallthru
          _
        // Predicated region
        $region205: #{tpu_custom_call.1} parent=123 // pred_check
          %p1151 = pneg %p600
        $region206: #{tpu_custom_call.1} parent=123 // pred_check_branch
          %1153 = sbr.rel (%p1151) target = $region208
        $region207: #{tpu_custom_call.1} parent=123 // pred_region
          %1154 = dma.done [#allocation35], 128
        $region208: #{tpu_custom_call.1} parent=123 // pred_fallthru
          _
        // Predicated region
        $region209: #{tpu_custom_call.1} parent=123 // pred_check
          %p1155 = pneg %p621
        $region210: #{tpu_custom_call.1} parent=123 // pred_check_branch
          %1157 = sbr.rel (%p1155) target = $region212
        $region211: #{tpu_custom_call.1} parent=123 // pred_region
          %1158 = dma.done [#allocation35], 128
        $region212: #{tpu_custom_call.1} parent=123 // pred_fallthru
          _
        // Predicated region
        $region213: #{tpu_custom_call.1} parent=123 // pred_check
          %p1159 = pneg %p642
        $region214: #{tpu_custom_call.1} parent=123 // pred_check_branch
          %1161 = sbr.rel (%p1159) target = $region216
        $region215: #{tpu_custom_call.1} parent=123 // pred_region
          %1162 = dma.done [#allocation38], 32
        $region216: #{tpu_custom_call.1} parent=123 // pred_fallthru
          _
        %1163 = sfence
        %s1164 = sand.u32 %s74, 1
        %s1165 = scalar_lea.sflag [#allocation3], %s1164
        %s1166 = sand.u32 %s74, 1
        %s1167 = scalar_lea.vmem [#allocation2], %s1166
        %p1168 = pneg %p87
        %p1169 = pneg %p84
        %s1170 = sand.u32 %s66, 1
        %s1171 = scalar_lea.sflag [#allocation7], %s1170
        %s1172 = sand.u32 %s100, 1
        %s1173 = scalar_lea.vmem [#allocation6], %s1172
        %p1174 = pneg %p113
        %p1175 = pneg %p110
        %s1176 = sand.u32 %s66, 1
        %s1177 = scalar_lea.sflag [#allocation7], %s1176
        %s1178 = sand.u32 %s126, 1
        %s1179 = scalar_lea.vmem [#allocation8], %s1178
        %p1180 = pneg %p139
        %p1181 = pneg %p136
        %s1182 = sand.u32 %s66, 1
        %s1183 = scalar_lea.sflag [#allocation10], %s1182
        %s1184 = sand.u32 %s152, 1
        %s1185 = smul.addr %s1184, 2
        %s1186 = scalar_lea.vmem [#allocation9], %s1185
        %p1187 = pneg %p165
        %p1188 = pneg %p162
        %s1189 = sand.u32 %s66, 1
        %s1190 = scalar_lea.sflag [#allocation10], %s1189
        %s1191 = sand.u32 %s178, 1
        %s1192 = scalar_lea.vmem [#allocation11], %s1191
        %p1193 = pneg %p191
        %p1194 = pneg %p188
        %s1195 = sand.u32 %s66, 1
        %s1196 = scalar_lea.sflag [#allocation13], %s1195
        %s1197 = sand.u32 %s204, 1
        %s1198 = scalar_lea.vmem [#allocation12], %s1197
        %p1199 = pneg %p217
        %p1200 = pneg %p214
        %s1201 = sand.u32 %s66, 1
        %s1202 = scalar_lea.sflag [#allocation13], %s1201
        %s1203 = sand.u32 %s230, 1
        %s1204 = scalar_lea.vmem [#allocation14], %s1203
        %p1205 = pneg %p243
        %p1206 = pneg %p240
        %p1207 = pneg %p264
        %p1208 = pneg %p261
        %p1209 = pneg %p285
        %p1210 = pneg %p282
        %p1211 = pneg %p306
        %p1212 = pneg %p303
        %p1213 = pneg %p327
        %p1214 = pneg %p324
        %p1215 = pneg %p348
        %p1216 = pneg %p345
        %p1217 = pneg %p369
        %p1218 = pneg %p366
        %p1219 = pneg %p390
        %p1220 = pneg %p387
        %p1221 = pneg %p411
        %p1222 = pneg %p408
        %p1223 = pneg %p432
        %p1224 = pneg %p429
        %p1225 = pneg %p453
        %p1226 = pneg %p450
        %p1227 = pneg %p474
        %p1228 = pneg %p471
        %p1229 = pneg %p495
        %p1230 = pneg %p492
        %p1231 = pneg %p516
        %p1232 = pneg %p513
        %p1233 = pneg %p537
        %p1234 = pneg %p534
        %p1235 = pneg %p558
        %p1236 = pneg %p555
        %p1237 = pneg %p579
        %p1238 = pneg %p576
        %p1239 = pneg %p600
        %p1240 = pneg %p597
        %p1241 = pneg %p621
        %p1242 = pneg %p618
        %p1243 = pneg %p642
        %p1244 = pneg %p639
        %p1245 = pneg %p668
        %p1246 = pneg %p665
        %s1247 = sand.u32 %s655, 1
        %s1248 = scalar_lea.sflag [#allocation4], %s1247
        %s1249 = sand.u32 %s655, 1
        %s1250 = smul.addr %s1249, 8
        %s1251 = scalar_lea.vmem [#allocation39], %s1250
        %p1252 = pneg %p694
        %p1253 = pneg %p691
        %s1254 = sand.u32 %s681, 1
        %s1255 = scalar_lea.sflag [#allocation41], %s1254
        %s1256 = sand.u32 %s681, 1
        %s1257 = smul.addr %s1256, 2
        %s1258 = scalar_lea.vmem [#allocation40], %s1257
        %v1259 = vld [vmem:[%s1045] sm:$0x1]
        %v1260 = vld [vmem:[%s1053] sm:$0x1]
        %v1261 = vld [vmem:[%s1061] sm:$0x1]
        %v1262 = vld [vmem:[%s8] sm:$0xff]
        %v1263 = vld [vmem:[%s8 + $0x8] sm:$0xff]
        %v1264 = vld [vmem:[%s8 + $0x10] sm:$0xff]
        %v1265 = vld [vmem:[%s8 + $0x18] sm:$0xff]
        %v1266 = vld [vmem:[#allocation16] sm:$0x1]
        %vm1267 = vcmask 261120
        %v1269 = vsel %vm1267, %v1259, 0
        %1271 = vmatprep.subr.mxu0 0.0
        %1272 = vmatpush1.msra.mxu0 %v1262
        %1273 = vmatprep.subr.mxu0 0.0
        %1274 = vmatpush1.msra.mxu0 %v1263
        %1275 = vmatprep.subr.mxu0 0.0
        %1276 = vmatpush1.msra.mxu0 %v1264
        %1277 = vmatprep.subr.mxu0 0.0
        %1278 = vmatpush1.msra.mxu0 %v1265
        %1279 = vmatprep.subr.mxu0 0.0
        %1280 = vmatpush1.msra.mxu0 0.0
        %1281 = vmatprep.subr.mxu0 0.0
        %1282 = vmatpush1.msra.mxu0 0.0
        %1283 = vmatprep.subr.mxu0 0.0
        %1284 = vmatpush1.msra.mxu0 0.0
        %1285 = vmatprep.subr.mxu0 0.0
        %1286 = vmatpush1.msra.mxu0 0.0
        %1287 = vmatprep.subr.mxu0 0.0
        %1288 = vmatpush1.msra.mxu0 0.0
        %1289 = vmatprep.subr.mxu0 0.0
        %1290 = vmatpush1.msra.mxu0 0.0
        %1291 = vmatprep.subr.mxu0 0.0
        %1292 = vmatpush1.msra.mxu0 0.0
        %1293 = vmatprep.subr.mxu0 0.0
        %1294 = vmatpush1.msra.mxu0 0.0
        %1295 = vmatprep.subr.mxu0 0.0
        %1296 = vmatpush1.msra.mxu0 0.0
        %1297 = vmatprep.subr.mxu0 0.0
        %1298 = vmatpush1.msra.mxu0 0.0
        %1299 = vmatprep.subr.mxu0 0.0
        %1300 = vmatpush1.msra.mxu0 0.0
        %1301 = vmatprep.subr.mxu0 0.0
        %1302 = vmatpush1.msra.mxu0 0.0
        %1303 = vmatprep.subr.mxu0 0.0
        %1304 = vmatpush1.msra.mxu0 0.0
        %1305 = vmatprep.subr.mxu0 0.0
        %1306 = vmatpush1.msra.mxu0 0.0
        %1307 = vmatprep.subr.mxu0 0.0
        %1308 = vmatpush1.msra.mxu0 0.0
        %1309 = vmatprep.subr.mxu0 0.0
        %1310 = vmatpush1.msra.mxu0 0.0
        %1311 = vmatprep.subr.mxu0 0.0
        %1312 = vmatpush1.msra.mxu0 0.0
        %1313 = vmatprep.subr.mxu0 0.0
        %1314 = vmatpush1.msra.mxu0 0.0
        %1315 = vmatprep.subr.mxu0 0.0
        %1316 = vmatpush1.msra.mxu0 0.0
        %1317 = vmatprep.subr.mxu0 0.0
        %1318 = vmatpush1.msra.mxu0 0.0
        %1319 = vmatprep.subr.mxu0 0.0
        %1320 = vmatpush1.msra.mxu0 0.0
        %1321 = vmatprep.subr.mxu0 0.0
        %1322 = vmatpush1.msra.mxu0 0.0
        %1323 = vmatprep.subr.mxu0 0.0
        %1324 = vmatpush1.msra.mxu0 0.0
        %1325 = vmatprep.subr.mxu0 0.0
        %1326 = vmatpush1.msra.mxu0 0.0
        %1327 = vmatprep.subr.mxu0 0.0
        %1328 = vmatpush1.msra.mxu0 0.0
        %1329 = vmatprep.subr.mxu0 0.0
        %1330 = vmatpush1.msra.mxu0 0.0
        %1331 = vmatprep.subr.mxu0 0.0
        %1332 = vmatpush1.msra.mxu0 0.0
        %1333 = vmatprep.subr.mxu0 0.0
        %1334 = vmatpush1.msra.mxu0 0.0
        %1335 = vmatprep.mubr.f32.mxu0 0.0
        %1336 = vmatmul.mubr.f32.gmra.mrb[0].mxu0 %v1269
        %v1337 = vpop.f32.mrb[0].mxu0
        %v1338 = vadd.f32 %v1266, %v1337
        %v1339 = vpop.f32.mrb[0].mxu0
        %1340 = vdwg.mxu0
        %v1341 = vld [vmem:[%s10] sm:$0xff]
        %v1342 = vld [vmem:[%s10 + $0x8] sm:$0xff]
        %v1343 = vld [vmem:[%s10 + $0x10] sm:$0xff]
        %v1344 = vld [vmem:[%s10 + $0x18] sm:$0xff]
        %v1345 = vld [vmem:[#allocation18] sm:$0x1]
        %v1347 = vsel %vm1267, %v1260, 0
        %1349 = vmatprep.subr.mxu0 0.0
        %1350 = vmatpush1.msra.mxu0 %v1341
        %1351 = vmatprep.subr.mxu0 0.0
        %1352 = vmatpush1.msra.mxu0 %v1342
        %1353 = vmatprep.subr.mxu0 0.0
        %1354 = vmatpush1.msra.mxu0 %v1343
        %1355 = vmatprep.subr.mxu0 0.0
        %1356 = vmatpush1.msra.mxu0 %v1344
        %1357 = vmatprep.subr.mxu0 0.0
        %1358 = vmatpush1.msra.mxu0 0.0
        %1359 = vmatprep.subr.mxu0 0.0
        %1360 = vmatpush1.msra.mxu0 0.0
        %1361 = vmatprep.subr.mxu0 0.0
        %1362 = vmatpush1.msra.mxu0 0.0
        %1363 = vmatprep.subr.mxu0 0.0
        %1364 = vmatpush1.msra.mxu0 0.0
        %1365 = vmatprep.subr.mxu0 0.0
        %1366 = vmatpush1.msra.mxu0 0.0
        %1367 = vmatprep.subr.mxu0 0.0
        %1368 = vmatpush1.msra.mxu0 0.0
        %1369 = vmatprep.subr.mxu0 0.0
        %1370 = vmatpush1.msra.mxu0 0.0
        %1371 = vmatprep.subr.mxu0 0.0
        %1372 = vmatpush1.msra.mxu0 0.0
        %1373 = vmatprep.subr.mxu0 0.0
        %1374 = vmatpush1.msra.mxu0 0.0
        %1375 = vmatprep.subr.mxu0 0.0
        %1376 = vmatpush1.msra.mxu0 0.0
        %1377 = vmatprep.subr.mxu0 0.0
        %1378 = vmatpush1.msra.mxu0 0.0
        %1379 = vmatprep.subr.mxu0 0.0
        %1380 = vmatpush1.msra.mxu0 0.0
        %1381 = vmatprep.subr.mxu0 0.0
        %1382 = vmatpush1.msra.mxu0 0.0
        %1383 = vmatprep.subr.mxu0 0.0
        %1384 = vmatpush1.msra.mxu0 0.0
        %1385 = vmatprep.subr.mxu0 0.0
        %1386 = vmatpush1.msra.mxu0 0.0
        %1387 = vmatprep.subr.mxu0 0.0
        %1388 = vmatpush1.msra.mxu0 0.0
        %1389 = vmatprep.subr.mxu0 0.0
        %1390 = vmatpush1.msra.mxu0 0.0
        %1391 = vmatprep.subr.mxu0 0.0
        %1392 = vmatpush1.msra.mxu0 0.0
        %1393 = vmatprep.subr.mxu0 0.0
        %1394 = vmatpush1.msra.mxu0 0.0
        %1395 = vmatprep.subr.mxu0 0.0
        %1396 = vmatpush1.msra.mxu0 0.0
        %1397 = vmatprep.subr.mxu0 0.0
        %1398 = vmatpush1.msra.mxu0 0.0
        %1399 = vmatprep.subr.mxu0 0.0
        %1400 = vmatpush1.msra.mxu0 0.0
        %1401 = vmatprep.subr.mxu0 0.0
        %1402 = vmatpush1.msra.mxu0 0.0
        %1403 = vmatprep.subr.mxu0 0.0
        %1404 = vmatpush1.msra.mxu0 0.0
        %1405 = vmatprep.subr.mxu0 0.0
        %1406 = vmatpush1.msra.mxu0 0.0
        %1407 = vmatprep.subr.mxu0 0.0
        %1408 = vmatpush1.msra.mxu0 0.0
        %1409 = vmatprep.subr.mxu0 0.0
        %1410 = vmatpush1.msra.mxu0 0.0
        %1411 = vmatprep.subr.mxu0 0.0
        %1412 = vmatpush1.msra.mxu0 0.0
        %1413 = vmatprep.mubr.f32.mxu0 0.0
        %1414 = vmatmul.mubr.f32.gmra.mrb[0].mxu0 %v1347
        %v1415 = vpop.f32.mrb[0].mxu0
        %v1416 = vadd.f32 %v1345, %v1415
        %v1417 = vpop.f32.mrb[0].mxu0
        %1418 = vdwg.mxu0
        %v1419 = vld [vmem:[%s12] sm:$0xff]
        %v1420 = vld [vmem:[%s12 + $0x8] sm:$0xff]
        %v1421 = vld [vmem:[%s12 + $0x10] sm:$0xff]
        %v1422 = vld [vmem:[%s12 + $0x18] sm:$0xff]
        %v1423 = vld [vmem:[#allocation19] sm:$0x1]
        %v1425 = vsel %vm1267, %v1261, 0
        %1427 = vmatprep.subr.mxu0 0.0
        %1428 = vmatpush1.msra.mxu0 %v1419
        %1429 = vmatprep.subr.mxu0 0.0
        %1430 = vmatpush1.msra.mxu0 %v1420
        %1431 = vmatprep.subr.mxu0 0.0
        %1432 = vmatpush1.msra.mxu0 %v1421
        %1433 = vmatprep.subr.mxu0 0.0
        %1434 = vmatpush1.msra.mxu0 %v1422
        %1435 = vmatprep.subr.mxu0 0.0
        %1436 = vmatpush1.msra.mxu0 0.0
        %1437 = vmatprep.subr.mxu0 0.0
        %1438 = vmatpush1.msra.mxu0 0.0
        %1439 = vmatprep.subr.mxu0 0.0
        %1440 = vmatpush1.msra.mxu0 0.0
        %1441 = vmatprep.subr.mxu0 0.0
        %1442 = vmatpush1.msra.mxu0 0.0
        %1443 = vmatprep.subr.mxu0 0.0
        %1444 = vmatpush1.msra.mxu0 0.0
        %1445 = vmatprep.subr.mxu0 0.0
        %1446 = vmatpush1.msra.mxu0 0.0
        %1447 = vmatprep.subr.mxu0 0.0
        %1448 = vmatpush1.msra.mxu0 0.0
        %1449 = vmatprep.subr.mxu0 0.0
        %1450 = vmatpush1.msra.mxu0 0.0
        %1451 = vmatprep.subr.mxu0 0.0
        %1452 = vmatpush1.msra.mxu0 0.0
        %1453 = vmatprep.subr.mxu0 0.0
        %1454 = vmatpush1.msra.mxu0 0.0
        %1455 = vmatprep.subr.mxu0 0.0
        %1456 = vmatpush1.msra.mxu0 0.0
        %1457 = vmatprep.subr.mxu0 0.0
        %1458 = vmatpush1.msra.mxu0 0.0
        %1459 = vmatprep.subr.mxu0 0.0
        %1460 = vmatpush1.msra.mxu0 0.0
        %1461 = vmatprep.subr.mxu0 0.0
        %1462 = vmatpush1.msra.mxu0 0.0
        %1463 = vmatprep.subr.mxu0 0.0
        %1464 = vmatpush1.msra.mxu0 0.0
        %1465 = vmatprep.subr.mxu0 0.0
        %1466 = vmatpush1.msra.mxu0 0.0
        %1467 = vmatprep.subr.mxu0 0.0
        %1468 = vmatpush1.msra.mxu0 0.0
        %1469 = vmatprep.subr.mxu0 0.0
        %1470 = vmatpush1.msra.mxu0 0.0
        %1471 = vmatprep.subr.mxu0 0.0
        %1472 = vmatpush1.msra.mxu0 0.0
        %1473 = vmatprep.subr.mxu0 0.0
        %1474 = vmatpush1.msra.mxu0 0.0
        %1475 = vmatprep.subr.mxu0 0.0
        %1476 = vmatpush1.msra.mxu0 0.0
        %1477 = vmatprep.subr.mxu0 0.0
        %1478 = vmatpush1.msra.mxu0 0.0
        %1479 = vmatprep.subr.mxu0 0.0
        %1480 = vmatpush1.msra.mxu0 0.0
        %1481 = vmatprep.subr.mxu0 0.0
        %1482 = vmatpush1.msra.mxu0 0.0
        %1483 = vmatprep.subr.mxu0 0.0
        %1484 = vmatpush1.msra.mxu0 0.0
        %1485 = vmatprep.subr.mxu0 0.0
        %1486 = vmatpush1.msra.mxu0 0.0
        %1487 = vmatprep.subr.mxu0 0.0
        %1488 = vmatpush1.msra.mxu0 0.0
        %1489 = vmatprep.subr.mxu0 0.0
        %1490 = vmatpush1.msra.mxu0 0.0
        %1491 = vmatprep.mubr.f32.mxu0 0.0
        %1492 = vmatmul.mubr.f32.gmra.mrb[0].mxu0 %v1425
        %v1493 = vpop.f32.mrb[0].mxu0
        %v1494 = vadd.f32 %v1423, %v1493
        %v1495 = vpop.f32.mrb[0].mxu0
        %1496 = vdwg.mxu0
        %v1497 = vmul.f32 %v1338, %v1338
        %v1498 = vld [vmem:[#allocation22] sm:$0xff]
        %v1499 = vld [vmem:[#allocation22 + $0x8] sm:$0xff]
        %vm1500 = vcmask 130048
        %v1502 = vsel %vm1500, %v1497, 0
        %1504 = vmatprep.subr.mxu0 0.0
        %1505 = vmatpush1.msra.mxu0 %v1498
        %1506 = vmatprep.subr.mxu0 0.0
        %1507 = vmatpush1.msra.mxu0 %v1499
        %1508 = vmatprep.subr.mxu0 0.0
        %1509 = vmatpush1.msra.mxu0 0.0
        %1510 = vmatprep.subr.mxu0 0.0
        %1511 = vmatpush1.msra.mxu0 0.0
        %1512 = vmatprep.subr.mxu0 0.0
        %1513 = vmatpush1.msra.mxu0 0.0
        %1514 = vmatprep.subr.mxu0 0.0
        %1515 = vmatpush1.msra.mxu0 0.0
        %1516 = vmatprep.subr.mxu0 0.0
        %1517 = vmatpush1.msra.mxu0 0.0
        %1518 = vmatprep.subr.mxu0 0.0
        %1519 = vmatpush1.msra.mxu0 0.0
        %1520 = vmatprep.subr.mxu0 0.0
        %1521 = vmatpush1.msra.mxu0 0.0
        %1522 = vmatprep.subr.mxu0 0.0
        %1523 = vmatpush1.msra.mxu0 0.0
        %1524 = vmatprep.subr.mxu0 0.0
        %1525 = vmatpush1.msra.mxu0 0.0
        %1526 = vmatprep.subr.mxu0 0.0
        %1527 = vmatpush1.msra.mxu0 0.0
        %1528 = vmatprep.subr.mxu0 0.0
        %1529 = vmatpush1.msra.mxu0 0.0
        %1530 = vmatprep.subr.mxu0 0.0
        %1531 = vmatpush1.msra.mxu0 0.0
        %1532 = vmatprep.subr.mxu0 0.0
        %1533 = vmatpush1.msra.mxu0 0.0
        %1534 = vmatprep.subr.mxu0 0.0
        %1535 = vmatpush1.msra.mxu0 0.0
        %1536 = vmatprep.subr.mxu0 0.0
        %1537 = vmatpush1.msra.mxu0 0.0
        %1538 = vmatprep.subr.mxu0 0.0
        %1539 = vmatpush1.msra.mxu0 0.0
        %1540 = vmatprep.subr.mxu0 0.0
        %1541 = vmatpush1.msra.mxu0 0.0
        %1542 = vmatprep.subr.mxu0 0.0
        %1543 = vmatpush1.msra.mxu0 0.0
        %1544 = vmatprep.subr.mxu0 0.0
        %1545 = vmatpush1.msra.mxu0 0.0
        %1546 = vmatprep.subr.mxu0 0.0
        %1547 = vmatpush1.msra.mxu0 0.0
        %1548 = vmatprep.subr.mxu0 0.0
        %1549 = vmatpush1.msra.mxu0 0.0
        %1550 = vmatprep.subr.mxu0 0.0
        %1551 = vmatpush1.msra.mxu0 0.0
        %1552 = vmatprep.subr.mxu0 0.0
        %1553 = vmatpush1.msra.mxu0 0.0
        %1554 = vmatprep.subr.mxu0 0.0
        %1555 = vmatpush1.msra.mxu0 0.0
        %1556 = vmatprep.subr.mxu0 0.0
        %1557 = vmatpush1.msra.mxu0 0.0
        %1558 = vmatprep.subr.mxu0 0.0
        %1559 = vmatpush1.msra.mxu0 0.0
        %1560 = vmatprep.subr.mxu0 0.0
        %1561 = vmatpush1.msra.mxu0 0.0
        %1562 = vmatprep.subr.mxu0 0.0
        %1563 = vmatpush1.msra.mxu0 0.0
        %1564 = vmatprep.subr.mxu0 0.0
        %1565 = vmatpush1.msra.mxu0 0.0
        %1566 = vmatprep.subr.mxu0 0.0
        %1567 = vmatpush1.msra.mxu0 0.0
        %1568 = vmatprep.mubr.f32.mxu0 0.0
        %1569 = vmatmul.mubr.f32.gmra.mrb[0].mxu0 %v1502
        %v1570 = vpop.f32.mrb[0].mxu0
        %v1571 = vadd.f32 1e-08, %v1570
        %v1572 = vpop.f32.mrb[0].mxu0
        %1573 = vdwg.mxu0
        %v1574 = vrsqrt.pop %v1571
        %v1575 = vmul.f32 %v1416, %v1416
        %v1576 = vld [vmem:[#allocation25] sm:$0xff]
        %v1577 = vld [vmem:[#allocation25 + $0x8] sm:$0xff]
        %v1579 = vsel %vm1500, %v1575, 0
        %1581 = vmatprep.subr.mxu0 0.0
        %1582 = vmatpush1.msra.mxu0 %v1576
        %1583 = vmatprep.subr.mxu0 0.0
        %1584 = vmatpush1.msra.mxu0 %v1577
        %1585 = vmatprep.subr.mxu0 0.0
        %1586 = vmatpush1.msra.mxu0 0.0
        %1587 = vmatprep.subr.mxu0 0.0
        %1588 = vmatpush1.msra.mxu0 0.0
        %1589 = vmatprep.subr.mxu0 0.0
        %1590 = vmatpush1.msra.mxu0 0.0
        %1591 = vmatprep.subr.mxu0 0.0
        %1592 = vmatpush1.msra.mxu0 0.0
        %1593 = vmatprep.subr.mxu0 0.0
        %1594 = vmatpush1.msra.mxu0 0.0
        %1595 = vmatprep.subr.mxu0 0.0
        %1596 = vmatpush1.msra.mxu0 0.0
        %1597 = vmatprep.subr.mxu0 0.0
        %1598 = vmatpush1.msra.mxu0 0.0
        %1599 = vmatprep.subr.mxu0 0.0
        %1600 = vmatpush1.msra.mxu0 0.0
        %1601 = vmatprep.subr.mxu0 0.0
        %1602 = vmatpush1.msra.mxu0 0.0
        %1603 = vmatprep.subr.mxu0 0.0
        %1604 = vmatpush1.msra.mxu0 0.0
        %1605 = vmatprep.subr.mxu0 0.0
        %1606 = vmatpush1.msra.mxu0 0.0
        %1607 = vmatprep.subr.mxu0 0.0
        %1608 = vmatpush1.msra.mxu0 0.0
        %1609 = vmatprep.subr.mxu0 0.0
        %1610 = vmatpush1.msra.mxu0 0.0
        %1611 = vmatprep.subr.mxu0 0.0
        %1612 = vmatpush1.msra.mxu0 0.0
        %1613 = vmatprep.subr.mxu0 0.0
        %1614 = vmatpush1.msra.mxu0 0.0
        %1615 = vmatprep.subr.mxu0 0.0
        %1616 = vmatpush1.msra.mxu0 0.0
        %1617 = vmatprep.subr.mxu0 0.0
        %1618 = vmatpush1.msra.mxu0 0.0
        %1619 = vmatprep.subr.mxu0 0.0
        %1620 = vmatpush1.msra.mxu0 0.0
        %1621 = vmatprep.subr.mxu0 0.0
        %1622 = vmatpush1.msra.mxu0 0.0
        %1623 = vmatprep.subr.mxu0 0.0
        %1624 = vmatpush1.msra.mxu0 0.0
        %1625 = vmatprep.subr.mxu0 0.0
        %1626 = vmatpush1.msra.mxu0 0.0
        %1627 = vmatprep.subr.mxu0 0.0
        %1628 = vmatpush1.msra.mxu0 0.0
        %1629 = vmatprep.subr.mxu0 0.0
        %1630 = vmatpush1.msra.mxu0 0.0
        %1631 = vmatprep.subr.mxu0 0.0
        %1632 = vmatpush1.msra.mxu0 0.0
        %1633 = vmatprep.subr.mxu0 0.0
        %1634 = vmatpush1.msra.mxu0 0.0
        %1635 = vmatprep.subr.mxu0 0.0
        %1636 = vmatpush1.msra.mxu0 0.0
        %1637 = vmatprep.subr.mxu0 0.0
        %1638 = vmatpush1.msra.mxu0 0.0
        %1639 = vmatprep.subr.mxu0 0.0
        %1640 = vmatpush1.msra.mxu0 0.0
        %1641 = vmatprep.subr.mxu0 0.0
        %1642 = vmatpush1.msra.mxu0 0.0
        %1643 = vmatprep.subr.mxu0 0.0
        %1644 = vmatpush1.msra.mxu0 0.0
        %1645 = vmatprep.mubr.f32.mxu0 0.0
        %1646 = vmatmul.mubr.f32.gmra.mrb[0].mxu0 %v1579
        %v1647 = vpop.f32.mrb[0].mxu0
        %v1648 = vadd.f32 1e-08, %v1647
        %v1649 = vpop.f32.mrb[0].mxu0
        %1650 = vdwg.mxu0
        %v1651 = vrsqrt.pop %v1648
        %v1652 = vld [vmem:[#allocation30] sm:$0xff]
        %v1653 = vld [vmem:[#allocation30 + $0x8] sm:$0xff]
        %v1654 = vld [vmem:[#allocation30 + $0x10] sm:$0xff]
        %v1655 = vld [vmem:[#allocation30 + $0x18] sm:$0xff]
        %v1657 = vsel %vm1500, %v1338, 0
        %1659 = vmatprep.subr.mxu0 %v1653
        %1660 = vmatpush1.msra.mxu0 %v1652
        %1661 = vmatprep.subr.mxu0 %v1655
        %1662 = vmatpush1.msra.mxu0 %v1654
        %1663 = vmatprep.subr.mxu0 0.0
        %1664 = vmatpush1.msra.mxu0 0.0
        %1665 = vmatprep.subr.mxu0 0.0
        %1666 = vmatpush1.msra.mxu0 0.0
        %1667 = vmatprep.subr.mxu0 0.0
        %1668 = vmatpush1.msra.mxu0 0.0
        %1669 = vmatprep.subr.mxu0 0.0
        %1670 = vmatpush1.msra.mxu0 0.0
        %1671 = vmatprep.subr.mxu0 0.0
        %1672 = vmatpush1.msra.mxu0 0.0
        %1673 = vmatprep.subr.mxu0 0.0
        %1674 = vmatpush1.msra.mxu0 0.0
        %1675 = vmatprep.subr.mxu0 0.0
        %1676 = vmatpush1.msra.mxu0 0.0
        %1677 = vmatprep.subr.mxu0 0.0
        %1678 = vmatpush1.msra.mxu0 0.0
        %1679 = vmatprep.subr.mxu0 0.0
        %1680 = vmatpush1.msra.mxu0 0.0
        %1681 = vmatprep.subr.mxu0 0.0
        %1682 = vmatpush1.msra.mxu0 0.0
        %1683 = vmatprep.subr.mxu0 0.0
        %1684 = vmatpush1.msra.mxu0 0.0
        %1685 = vmatprep.subr.mxu0 0.0
        %1686 = vmatpush1.msra.mxu0 0.0
        %1687 = vmatprep.subr.mxu0 0.0
        %1688 = vmatpush1.msra.mxu0 0.0
        %1689 = vmatprep.subr.mxu0 0.0
        %1690 = vmatpush1.msra.mxu0 0.0
        %1691 = vmatprep.subr.mxu0 0.0
        %1692 = vmatpush1.msra.mxu0 0.0
        %1693 = vmatprep.subr.mxu0 0.0
        %1694 = vmatpush1.msra.mxu0 0.0
        %1695 = vmatprep.subr.mxu0 0.0
        %1696 = vmatpush1.msra.mxu0 0.0
        %1697 = vmatprep.subr.mxu0 0.0
        %1698 = vmatpush1.msra.mxu0 0.0
        %1699 = vmatprep.subr.mxu0 0.0
        %1700 = vmatpush1.msra.mxu0 0.0
        %1701 = vmatprep.subr.mxu0 0.0
        %1702 = vmatpush1.msra.mxu0 0.0
        %1703 = vmatprep.subr.mxu0 0.0
        %1704 = vmatpush1.msra.mxu0 0.0
        %1705 = vmatprep.subr.mxu0 0.0
        %1706 = vmatpush1.msra.mxu0 0.0
        %1707 = vmatprep.subr.mxu0 0.0
        %1708 = vmatpush1.msra.mxu0 0.0
        %1709 = vmatprep.subr.mxu0 0.0
        %1710 = vmatpush1.msra.mxu0 0.0
        %1711 = vmatprep.subr.mxu0 0.0
        %1712 = vmatpush1.msra.mxu0 0.0
        %1713 = vmatprep.subr.mxu0 0.0
        %1714 = vmatpush1.msra.mxu0 0.0
        %1715 = vmatprep.subr.mxu0 0.0
        %1716 = vmatpush1.msra.mxu0 0.0
        %1717 = vmatprep.subr.mxu0 0.0
        %1718 = vmatpush1.msra.mxu0 0.0
        %1719 = vmatprep.subr.mxu0 0.0
        %1720 = vmatpush1.msra.mxu0 0.0
        %1721 = vmatprep.subr.mxu0 0.0
        %1722 = vmatpush1.msra.mxu0 0.0
        %1723 = vmatprep.mubr.f32.mxu0 0.0
        %1724 = vmatmul.mubr.f32.gmra.mrb[0].mxu0 %v1657
        %v1725 = vpop.f32.mrb[0].mxu0
        %v1726 = vadd.f32 0.0, %v1725
        %v1727 = vpop.f32.mrb[0].mxu0
        %v1728 = vadd.f32 0.0, %v1727
        %1729 = vdwg.mxu0
        %v1730 = vld [vmem:[#allocation31] sm:$0xff]
        %v1731 = vld [vmem:[#allocation31 + $0x8] sm:$0xff]
        %v1732 = vld [vmem:[#allocation31 + $0x10] sm:$0xff]
        %v1733 = vld [vmem:[#allocation31 + $0x18] sm:$0xff]
        %v1734 = vld [vmem:[#allocation31 + $0x20] sm:$0xff]
        %v1735 = vld [vmem:[#allocation31 + $0x28] sm:$0xff]
        %v1736 = vld [vmem:[#allocation31 + $0x30] sm:$0xff]
        %v1737 = vld [vmem:[#allocation31 + $0x38] sm:$0xff]
        %v1738 = vld [vmem:[#allocation31 + $0x40] sm:$0xff]
        %v1739 = vld [vmem:[#allocation31 + $0x48] sm:$0xff]
        %v1740 = vld [vmem:[#allocation31 + $0x50] sm:$0xff]
        %v1741 = vld [vmem:[#allocation31 + $0x58] sm:$0xff]
        %v1742 = vld [vmem:[#allocation31 + $0x60] sm:$0xff]
        %v1743 = vld [vmem:[#allocation31 + $0x68] sm:$0xff]
        %v1744 = vld [vmem:[#allocation31 + $0x70] sm:$0xff]
        %v1745 = vld [vmem:[#allocation31 + $0x78] sm:$0xff]
        %v1747 = vsel %vm1500, %v1416, 0
        %1749 = vmatprep.subr.mxu0 %v1731
        %1750 = vmatpush1.msra.mxu0 %v1730
        %1751 = vmatprep.subr.mxu0 %v1739
        %1752 = vmatpush1.msra.mxu0 %v1738
        %1753 = vmatprep.subr.mxu0 0.0
        %1754 = vmatpush1.msra.mxu0 0.0
        %1755 = vmatprep.subr.mxu0 0.0
        %1756 = vmatpush1.msra.mxu0 0.0
        %1757 = vmatprep.subr.mxu0 0.0
        %1758 = vmatpush1.msra.mxu0 0.0
        %1759 = vmatprep.subr.mxu0 0.0
        %1760 = vmatpush1.msra.mxu0 0.0
        %1761 = vmatprep.subr.mxu0 0.0
        %1762 = vmatpush1.msra.mxu0 0.0
        %1763 = vmatprep.subr.mxu0 0.0
        %1764 = vmatpush1.msra.mxu0 0.0
        %1765 = vmatprep.subr.mxu0 0.0
        %1766 = vmatpush1.msra.mxu0 0.0
        %1767 = vmatprep.subr.mxu0 0.0
        %1768 = vmatpush1.msra.mxu0 0.0
        %1769 = vmatprep.subr.mxu0 0.0
        %1770 = vmatpush1.msra.mxu0 0.0
        %1771 = vmatprep.subr.mxu0 0.0
        %1772 = vmatpush1.msra.mxu0 0.0
        %1773 = vmatprep.subr.mxu0 0.0
        %1774 = vmatpush1.msra.mxu0 0.0
        %1775 = vmatprep.subr.mxu0 0.0
        %1776 = vmatpush1.msra.mxu0 0.0
        %1777 = vmatprep.subr.mxu0 0.0
        %1778 = vmatpush1.msra.mxu0 0.0
        %1779 = vmatprep.subr.mxu0 0.0
        %1780 = vmatpush1.msra.mxu0 0.0
        %1781 = vmatprep.subr.mxu0 0.0
        %1782 = vmatpush1.msra.mxu0 0.0
        %1783 = vmatprep.subr.mxu0 0.0
        %1784 = vmatpush1.msra.mxu0 0.0
        %1785 = vmatprep.subr.mxu0 0.0
        %1786 = vmatpush1.msra.mxu0 0.0
        %1787 = vmatprep.subr.mxu0 0.0
        %1788 = vmatpush1.msra.mxu0 0.0
        %1789 = vmatprep.subr.mxu0 0.0
        %1790 = vmatpush1.msra.mxu0 0.0
        %1791 = vmatprep.subr.mxu0 0.0
        %1792 = vmatpush1.msra.mxu0 0.0
        %1793 = vmatprep.subr.mxu0 0.0
        %1794 = vmatpush1.msra.mxu0 0.0
        %1795 = vmatprep.subr.mxu0 0.0
        %1796 = vmatpush1.msra.mxu0 0.0
        %1797 = vmatprep.subr.mxu0 0.0
        %1798 = vmatpush1.msra.mxu0 0.0
        %1799 = vmatprep.subr.mxu0 0.0
        %1800 = vmatpush1.msra.mxu0 0.0
        %1801 = vmatprep.subr.mxu0 0.0
        %1802 = vmatpush1.msra.mxu0 0.0
        %1803 = vmatprep.subr.mxu0 0.0
        %1804 = vmatpush1.msra.mxu0 0.0
        %1805 = vmatprep.subr.mxu0 0.0
        %1806 = vmatpush1.msra.mxu0 0.0
        %1807 = vmatprep.subr.mxu0 0.0
        %1808 = vmatpush1.msra.mxu0 0.0
        %1809 = vmatprep.subr.mxu0 0.0
        %1810 = vmatpush1.msra.mxu0 0.0
        %1811 = vmatprep.subr.mxu0 0.0
        %1812 = vmatpush1.msra.mxu0 0.0
        %1813 = vmatprep.mubr.f32.mxu0 0.0
        %1814 = vmatmul.mubr.f32.gmra.mrb[0].mxu0 %v1747
        %v1815 = vpop.f32.mrb[0].mxu0
        %v1816 = vadd.f32 0.0, %v1815
        %v1817 = vpop.f32.mrb[0].mxu0
        %v1818 = vadd.f32 0.0, %v1817
        %1819 = vdwg.mxu0
        %1820 = vmatprep.subr.mxu0 %v1733
        %1821 = vmatpush1.msra.mxu0 %v1732
        %1822 = vmatprep.subr.mxu0 %v1741
        %1823 = vmatpush1.msra.mxu0 %v1740
        %1824 = vmatprep.subr.mxu0 0.0
        %1825 = vmatpush1.msra.mxu0 0.0
        %1826 = vmatprep.subr.mxu0 0.0
        %1827 = vmatpush1.msra.mxu0 0.0
        %1828 = vmatprep.subr.mxu0 0.0
        %1829 = vmatpush1.msra.mxu0 0.0
        %1830 = vmatprep.subr.mxu0 0.0
        %1831 = vmatpush1.msra.mxu0 0.0
        %1832 = vmatprep.subr.mxu0 0.0
        %1833 = vmatpush1.msra.mxu0 0.0
        %1834 = vmatprep.subr.mxu0 0.0
        %1835 = vmatpush1.msra.mxu0 0.0
        %1836 = vmatprep.subr.mxu0 0.0
        %1837 = vmatpush1.msra.mxu0 0.0
        %1838 = vmatprep.subr.mxu0 0.0
        %1839 = vmatpush1.msra.mxu0 0.0
        %1840 = vmatprep.subr.mxu0 0.0
        %1841 = vmatpush1.msra.mxu0 0.0
        %1842 = vmatprep.subr.mxu0 0.0
        %1843 = vmatpush1.msra.mxu0 0.0
        %1844 = vmatprep.subr.mxu0 0.0
        %1845 = vmatpush1.msra.mxu0 0.0
        %1846 = vmatprep.subr.mxu0 0.0
        %1847 = vmatpush1.msra.mxu0 0.0
        %1848 = vmatprep.subr.mxu0 0.0
        %1849 = vmatpush1.msra.mxu0 0.0
        %1850 = vmatprep.subr.mxu0 0.0
        %1851 = vmatpush1.msra.mxu0 0.0
        %1852 = vmatprep.subr.mxu0 0.0
        %1853 = vmatpush1.msra.mxu0 0.0
        %1854 = vmatprep.subr.mxu0 0.0
        %1855 = vmatpush1.msra.mxu0 0.0
        %1856 = vmatprep.subr.mxu0 0.0
        %1857 = vmatpush1.msra.mxu0 0.0
        %1858 = vmatprep.subr.mxu0 0.0
        %1859 = vmatpush1.msra.mxu0 0.0
        %1860 = vmatprep.subr.mxu0 0.0
        %1861 = vmatpush1.msra.mxu0 0.0
        %1862 = vmatprep.subr.mxu0 0.0
        %1863 = vmatpush1.msra.mxu0 0.0
        %1864 = vmatprep.subr.mxu0 0.0
        %1865 = vmatpush1.msra.mxu0 0.0
        %1866 = vmatprep.subr.mxu0 0.0
        %1867 = vmatpush1.msra.mxu0 0.0
        %1868 = vmatprep.subr.mxu0 0.0
        %1869 = vmatpush1.msra.mxu0 0.0
        %1870 = vmatprep.subr.mxu0 0.0
        %1871 = vmatpush1.msra.mxu0 0.0
        %1872 = vmatprep.subr.mxu0 0.0
        %1873 = vmatpush1.msra.mxu0 0.0
        %1874 = vmatprep.subr.mxu0 0.0
        %1875 = vmatpush1.msra.mxu0 0.0
        %1876 = vmatprep.subr.mxu0 0.0
        %1877 = vmatpush1.msra.mxu0 0.0
        %1878 = vmatprep.subr.mxu0 0.0
        %1879 = vmatpush1.msra.mxu0 0.0
        %1880 = vmatprep.subr.mxu0 0.0
        %1881 = vmatpush1.msra.mxu0 0.0
        %1882 = vmatprep.subr.mxu0 0.0
        %1883 = vmatpush1.msra.mxu0 0.0
        %1884 = vmatprep.mubr.f32.mxu0 0.0
        %1885 = vmatmul.mubr.f32.gmra.mrb[0].mxu0 %v1747
        %v1886 = vpop.f32.mrb[0].mxu0
        %v1887 = vadd.f32 0.0, %v1886
        %v1888 = vpop.f32.mrb[0].mxu0
        %v1889 = vadd.f32 0.0, %v1888
        %1890 = vdwg.mxu0
        %1891 = vmatprep.subr.mxu0 %v1735
        %1892 = vmatpush1.msra.mxu0 %v1734
        %1893 = vmatprep.subr.mxu0 %v1743
        %1894 = vmatpush1.msra.mxu0 %v1742
        %1895 = vmatprep.subr.mxu0 0.0
        %1896 = vmatpush1.msra.mxu0 0.0
        %1897 = vmatprep.subr.mxu0 0.0
        %1898 = vmatpush1.msra.mxu0 0.0
        %1899 = vmatprep.subr.mxu0 0.0
        %1900 = vmatpush1.msra.mxu0 0.0
        %1901 = vmatprep.subr.mxu0 0.0
        %1902 = vmatpush1.msra.mxu0 0.0
        %1903 = vmatprep.subr.mxu0 0.0
        %1904 = vmatpush1.msra.mxu0 0.0
        %1905 = vmatprep.subr.mxu0 0.0
        %1906 = vmatpush1.msra.mxu0 0.0
        %1907 = vmatprep.subr.mxu0 0.0
        %1908 = vmatpush1.msra.mxu0 0.0
        %1909 = vmatprep.subr.mxu0 0.0
        %1910 = vmatpush1.msra.mxu0 0.0
        %1911 = vmatprep.subr.mxu0 0.0
        %1912 = vmatpush1.msra.mxu0 0.0
        %1913 = vmatprep.subr.mxu0 0.0
        %1914 = vmatpush1.msra.mxu0 0.0
        %1915 = vmatprep.subr.mxu0 0.0
        %1916 = vmatpush1.msra.mxu0 0.0
        %1917 = vmatprep.subr.mxu0 0.0
        %1918 = vmatpush1.msra.mxu0 0.0
        %1919 = vmatprep.subr.mxu0 0.0
        %1920 = vmatpush1.msra.mxu0 0.0
        %1921 = vmatprep.subr.mxu0 0.0
        %1922 = vmatpush1.msra.mxu0 0.0
        %1923 = vmatprep.subr.mxu0 0.0
        %1924 = vmatpush1.msra.mxu0 0.0
        %1925 = vmatprep.subr.mxu0 0.0
        %1926 = vmatpush1.msra.mxu0 0.0
        %1927 = vmatprep.subr.mxu0 0.0
        %1928 = vmatpush1.msra.mxu0 0.0
        %1929 = vmatprep.subr.mxu0 0.0
        %1930 = vmatpush1.msra.mxu0 0.0
        %1931 = vmatprep.subr.mxu0 0.0
        %1932 = vmatpush1.msra.mxu0 0.0
        %1933 = vmatprep.subr.mxu0 0.0
        %1934 = vmatpush1.msra.mxu0 0.0
        %1935 = vmatprep.subr.mxu0 0.0
        %1936 = vmatpush1.msra.mxu0 0.0
        %1937 = vmatprep.subr.mxu0 0.0
        %1938 = vmatpush1.msra.mxu0 0.0
        %1939 = vmatprep.subr.mxu0 0.0
        %1940 = vmatpush1.msra.mxu0 0.0
        %1941 = vmatprep.subr.mxu0 0.0
        %1942 = vmatpush1.msra.mxu0 0.0
        %1943 = vmatprep.subr.mxu0 0.0
        %1944 = vmatpush1.msra.mxu0 0.0
        %1945 = vmatprep.subr.mxu0 0.0
        %1946 = vmatpush1.msra.mxu0 0.0
        %1947 = vmatprep.subr.mxu0 0.0
        %1948 = vmatpush1.msra.mxu0 0.0
        %1949 = vmatprep.subr.mxu0 0.0
        %1950 = vmatpush1.msra.mxu0 0.0
        %1951 = vmatprep.subr.mxu0 0.0
        %1952 = vmatpush1.msra.mxu0 0.0
        %1953 = vmatprep.subr.mxu0 0.0
        %1954 = vmatpush1.msra.mxu0 0.0
        %1955 = vmatprep.mubr.f32.mxu0 0.0
        %1956 = vmatmul.mubr.f32.gmra.mrb[0].mxu0 %v1747
        %v1957 = vpop.f32.mrb[0].mxu0
        %v1958 = vadd.f32 0.0, %v1957
        %v1959 = vpop.f32.mrb[0].mxu0
        %v1960 = vadd.f32 0.0, %v1959
        %1961 = vdwg.mxu0
        %1962 = vmatprep.subr.mxu0 %v1737
        %1963 = vmatpush1.msra.mxu0 %v1736
        %1964 = vmatprep.subr.mxu0 %v1745
        %1965 = vmatpush1.msra.mxu0 %v1744
        %1966 = vmatprep.subr.mxu0 0.0
        %1967 = vmatpush1.msra.mxu0 0.0
        %1968 = vmatprep.subr.mxu0 0.0
        %1969 = vmatpush1.msra.mxu0 0.0
        %1970 = vmatprep.subr.mxu0 0.0
        %1971 = vmatpush1.msra.mxu0 0.0
        %1972 = vmatprep.subr.mxu0 0.0
        %1973 = vmatpush1.msra.mxu0 0.0
        %1974 = vmatprep.subr.mxu0 0.0
        %1975 = vmatpush1.msra.mxu0 0.0
        %1976 = vmatprep.subr.mxu0 0.0
        %1977 = vmatpush1.msra.mxu0 0.0
        %1978 = vmatprep.subr.mxu0 0.0
        %1979 = vmatpush1.msra.mxu0 0.0
        %1980 = vmatprep.subr.mxu0 0.0
        %1981 = vmatpush1.msra.mxu0 0.0
        %1982 = vmatprep.subr.mxu0 0.0
        %1983 = vmatpush1.msra.mxu0 0.0
        %1984 = vmatprep.subr.mxu0 0.0
        %1985 = vmatpush1.msra.mxu0 0.0
        %1986 = vmatprep.subr.mxu0 0.0
        %1987 = vmatpush1.msra.mxu0 0.0
        %1988 = vmatprep.subr.mxu0 0.0
        %1989 = vmatpush1.msra.mxu0 0.0
        %1990 = vmatprep.subr.mxu0 0.0
        %1991 = vmatpush1.msra.mxu0 0.0
        %1992 = vmatprep.subr.mxu0 0.0
        %1993 = vmatpush1.msra.mxu0 0.0
        %1994 = vmatprep.subr.mxu0 0.0
        %1995 = vmatpush1.msra.mxu0 0.0
        %1996 = vmatprep.subr.mxu0 0.0
        %1997 = vmatpush1.msra.mxu0 0.0
        %1998 = vmatprep.subr.mxu0 0.0
        %1999 = vmatpush1.msra.mxu0 0.0
        %2000 = vmatprep.subr.mxu0 0.0
        %2001 = vmatpush1.msra.mxu0 0.0
        %2002 = vmatprep.subr.mxu0 0.0
        %2003 = vmatpush1.msra.mxu0 0.0
        %2004 = vmatprep.subr.mxu0 0.0
        %2005 = vmatpush1.msra.mxu0 0.0
        %2006 = vmatprep.subr.mxu0 0.0
        %2007 = vmatpush1.msra.mxu0 0.0
        %2008 = vmatprep.subr.mxu0 0.0
        %2009 = vmatpush1.msra.mxu0 0.0
        %2010 = vmatprep.subr.mxu0 0.0
        %2011 = vmatpush1.msra.mxu0 0.0
        %2012 = vmatprep.subr.mxu0 0.0
        %2013 = vmatpush1.msra.mxu0 0.0
        %2014 = vmatprep.subr.mxu0 0.0
        %2015 = vmatpush1.msra.mxu0 0.0
        %2016 = vmatprep.subr.mxu0 0.0
        %2017 = vmatpush1.msra.mxu0 0.0
        %2018 = vmatprep.subr.mxu0 0.0
        %2019 = vmatpush1.msra.mxu0 0.0
        %2020 = vmatprep.subr.mxu0 0.0
        %2021 = vmatpush1.msra.mxu0 0.0
        %2022 = vmatprep.subr.mxu0 0.0
        %2023 = vmatpush1.msra.mxu0 0.0
        %2024 = vmatprep.subr.mxu0 0.0
        %2025 = vmatpush1.msra.mxu0 0.0
        %2026 = vmatprep.mubr.f32.mxu0 0.0
        %2027 = vmatmul.mubr.f32.gmra.mrb[0].mxu0 %v1747
        %v2028 = vpop.f32.mrb[0].mxu0
        %v2029 = vadd.f32 0.0, %v2028
        %v2030 = vpop.f32.mrb[0].mxu0
        %v2031 = vadd.f32 0.0, %v2030
        %2032 = vdwg.mxu0
        %v2034 = vsel %vm1500, %v1494, 0
        %2036 = vmatprep.subr.mxu0 %v1731
        %2037 = vmatpush1.msra.mxu0 %v1730
        %2038 = vmatprep.subr.mxu0 %v1739
        %2039 = vmatpush1.msra.mxu0 %v1738
        %2040 = vmatprep.subr.mxu0 0.0
        %2041 = vmatpush1.msra.mxu0 0.0
        %2042 = vmatprep.subr.mxu0 0.0
        %2043 = vmatpush1.msra.mxu0 0.0
        %2044 = vmatprep.subr.mxu0 0.0
        %2045 = vmatpush1.msra.mxu0 0.0
        %2046 = vmatprep.subr.mxu0 0.0
        %2047 = vmatpush1.msra.mxu0 0.0
        %2048 = vmatprep.subr.mxu0 0.0
        %2049 = vmatpush1.msra.mxu0 0.0
        %2050 = vmatprep.subr.mxu0 0.0
        %2051 = vmatpush1.msra.mxu0 0.0
        %2052 = vmatprep.subr.mxu0 0.0
        %2053 = vmatpush1.msra.mxu0 0.0
        %2054 = vmatprep.subr.mxu0 0.0
        %2055 = vmatpush1.msra.mxu0 0.0
        %2056 = vmatprep.subr.mxu0 0.0
        %2057 = vmatpush1.msra.mxu0 0.0
        %2058 = vmatprep.subr.mxu0 0.0
        %2059 = vmatpush1.msra.mxu0 0.0
        %2060 = vmatprep.subr.mxu0 0.0
        %2061 = vmatpush1.msra.mxu0 0.0
        %2062 = vmatprep.subr.mxu0 0.0
        %2063 = vmatpush1.msra.mxu0 0.0
        %2064 = vmatprep.subr.mxu0 0.0
        %2065 = vmatpush1.msra.mxu0 0.0
        %2066 = vmatprep.subr.mxu0 0.0
        %2067 = vmatpush1.msra.mxu0 0.0
        %2068 = vmatprep.subr.mxu0 0.0
        %2069 = vmatpush1.msra.mxu0 0.0
        %2070 = vmatprep.subr.mxu0 0.0
        %2071 = vmatpush1.msra.mxu0 0.0
        %2072 = vmatprep.subr.mxu0 0.0
        %2073 = vmatpush1.msra.mxu0 0.0
        %2074 = vmatprep.subr.mxu0 0.0
        %2075 = vmatpush1.msra.mxu0 0.0
        %2076 = vmatprep.subr.mxu0 0.0
        %2077 = vmatpush1.msra.mxu0 0.0
        %2078 = vmatprep.subr.mxu0 0.0
        %2079 = vmatpush1.msra.mxu0 0.0
        %2080 = vmatprep.subr.mxu0 0.0
        %2081 = vmatpush1.msra.mxu0 0.0
        %2082 = vmatprep.subr.mxu0 0.0
        %2083 = vmatpush1.msra.mxu0 0.0
        %2084 = vmatprep.subr.mxu0 0.0
        %2085 = vmatpush1.msra.mxu0 0.0
        %2086 = vmatprep.subr.mxu0 0.0
        %2087 = vmatpush1.msra.mxu0 0.0
        %2088 = vmatprep.subr.mxu0 0.0
        %2089 = vmatpush1.msra.mxu0 0.0
        %2090 = vmatprep.subr.mxu0 0.0
        %2091 = vmatpush1.msra.mxu0 0.0
        %2092 = vmatprep.subr.mxu0 0.0
        %2093 = vmatpush1.msra.mxu0 0.0
        %2094 = vmatprep.subr.mxu0 0.0
        %2095 = vmatpush1.msra.mxu0 0.0
        %2096 = vmatprep.subr.mxu0 0.0
        %2097 = vmatpush1.msra.mxu0 0.0
        %2098 = vmatprep.subr.mxu0 0.0
        %2099 = vmatpush1.msra.mxu0 0.0
        %2100 = vmatprep.mubr.f32.mxu0 0.0
        %2101 = vmatmul.mubr.f32.gmra.mrb[0].mxu0 %v2034
        %v2102 = vpop.f32.mrb[0].mxu0
        %v2103 = vadd.f32 0.0, %v2102
        %v2104 = vpop.f32.mrb[0].mxu0
        %v2105 = vadd.f32 0.0, %v2104
        %2106 = vdwg.mxu0
        %2107 = vmatprep.subr.mxu0 %v1733
        %2108 = vmatpush1.msra.mxu0 %v1732
        %2109 = vmatprep.subr.mxu0 %v1741
        %2110 = vmatpush1.msra.mxu0 %v1740
        %2111 = vmatprep.subr.mxu0 0.0
        %2112 = vmatpush1.msra.mxu0 0.0
        %2113 = vmatprep.subr.mxu0 0.0
        %2114 = vmatpush1.msra.mxu0 0.0
        %2115 = vmatprep.subr.mxu0 0.0
        %2116 = vmatpush1.msra.mxu0 0.0
        %2117 = vmatprep.subr.mxu0 0.0
        %2118 = vmatpush1.msra.mxu0 0.0
        %2119 = vmatprep.subr.mxu0 0.0
        %2120 = vmatpush1.msra.mxu0 0.0
        %2121 = vmatprep.subr.mxu0 0.0
        %2122 = vmatpush1.msra.mxu0 0.0
        %2123 = vmatprep.subr.mxu0 0.0
        %2124 = vmatpush1.msra.mxu0 0.0
        %2125 = vmatprep.subr.mxu0 0.0
        %2126 = vmatpush1.msra.mxu0 0.0
        %2127 = vmatprep.subr.mxu0 0.0
        %2128 = vmatpush1.msra.mxu0 0.0
        %2129 = vmatprep.subr.mxu0 0.0
        %2130 = vmatpush1.msra.mxu0 0.0
        %2131 = vmatprep.subr.mxu0 0.0
        %2132 = vmatpush1.msra.mxu0 0.0
        %2133 = vmatprep.subr.mxu0 0.0
        %2134 = vmatpush1.msra.mxu0 0.0
        %2135 = vmatprep.subr.mxu0 0.0
        %2136 = vmatpush1.msra.mxu0 0.0
        %2137 = vmatprep.subr.mxu0 0.0
        %2138 = vmatpush1.msra.mxu0 0.0
        %2139 = vmatprep.subr.mxu0 0.0
        %2140 = vmatpush1.msra.mxu0 0.0
        %2141 = vmatprep.subr.mxu0 0.0
        %2142 = vmatpush1.msra.mxu0 0.0
        %2143 = vmatprep.subr.mxu0 0.0
        %2144 = vmatpush1.msra.mxu0 0.0
        %2145 = vmatprep.subr.mxu0 0.0
        %2146 = vmatpush1.msra.mxu0 0.0
        %2147 = vmatprep.subr.mxu0 0.0
        %2148 = vmatpush1.msra.mxu0 0.0
        %2149 = vmatprep.subr.mxu0 0.0
        %2150 = vmatpush1.msra.mxu0 0.0
        %2151 = vmatprep.subr.mxu0 0.0
        %2152 = vmatpush1.msra.mxu0 0.0
        %2153 = vmatprep.subr.mxu0 0.0
        %2154 = vmatpush1.msra.mxu0 0.0
        %2155 = vmatprep.subr.mxu0 0.0
        %2156 = vmatpush1.msra.mxu0 0.0
        %2157 = vmatprep.subr.mxu0 0.0
        %2158 = vmatpush1.msra.mxu0 0.0
        %2159 = vmatprep.subr.mxu0 0.0
        %2160 = vmatpush1.msra.mxu0 0.0
        %2161 = vmatprep.subr.mxu0 0.0
        %2162 = vmatpush1.msra.mxu0 0.0
        %2163 = vmatprep.subr.mxu0 0.0
        %2164 = vmatpush1.msra.mxu0 0.0
        %2165 = vmatprep.subr.mxu0 0.0
        %2166 = vmatpush1.msra.mxu0 0.0
        %2167 = vmatprep.subr.mxu0 0.0
        %2168 = vmatpush1.msra.mxu0 0.0
        %2169 = vmatprep.subr.mxu0 0.0
        %2170 = vmatpush1.msra.mxu0 0.0
        %2171 = vmatprep.mubr.f32.mxu0 0.0
        %2172 = vmatmul.mubr.f32.gmra.mrb[0].mxu0 %v2034
        %v2173 = vpop.f32.mrb[0].mxu0
        %v2174 = vadd.f32 0.0, %v2173
        %v2175 = vpop.f32.mrb[0].mxu0
        %v2176 = vadd.f32 0.0, %v2175
        %2177 = vdwg.mxu0
        %2178 = vmatprep.subr.mxu0 %v1735
        %2179 = vmatpush1.msra.mxu0 %v1734
        %2180 = vmatprep.subr.mxu0 %v1743
        %2181 = vmatpush1.msra.mxu0 %v1742
        %2182 = vmatprep.subr.mxu0 0.0
        %2183 = vmatpush1.msra.mxu0 0.0
        %2184 = vmatprep.subr.mxu0 0.0
        %2185 = vmatpush1.msra.mxu0 0.0
        %2186 = vmatprep.subr.mxu0 0.0
        %2187 = vmatpush1.msra.mxu0 0.0
        %2188 = vmatprep.subr.mxu0 0.0
        %2189 = vmatpush1.msra.mxu0 0.0
        %2190 = vmatprep.subr.mxu0 0.0
        %2191 = vmatpush1.msra.mxu0 0.0
        %2192 = vmatprep.subr.mxu0 0.0
        %2193 = vmatpush1.msra.mxu0 0.0
        %2194 = vmatprep.subr.mxu0 0.0
        %2195 = vmatpush1.msra.mxu0 0.0
        %2196 = vmatprep.subr.mxu0 0.0
        %2197 = vmatpush1.msra.mxu0 0.0
        %2198 = vmatprep.subr.mxu0 0.0
        %2199 = vmatpush1.msra.mxu0 0.0
        %2200 = vmatprep.subr.mxu0 0.0
        %2201 = vmatpush1.msra.mxu0 0.0
        %2202 = vmatprep.subr.mxu0 0.0
        %2203 = vmatpush1.msra.mxu0 0.0
        %2204 = vmatprep.subr.mxu0 0.0
        %2205 = vmatpush1.msra.mxu0 0.0
        %2206 = vmatprep.subr.mxu0 0.0
        %2207 = vmatpush1.msra.mxu0 0.0
        %2208 = vmatprep.subr.mxu0 0.0
        %2209 = vmatpush1.msra.mxu0 0.0
        %2210 = vmatprep.subr.mxu0 0.0
        %2211 = vmatpush1.msra.mxu0 0.0
        %2212 = vmatprep.subr.mxu0 0.0
        %2213 = vmatpush1.msra.mxu0 0.0
        %2214 = vmatprep.subr.mxu0 0.0
        %2215 = vmatpush1.msra.mxu0 0.0
        %2216 = vmatprep.subr.mxu0 0.0
        %2217 = vmatpush1.msra.mxu0 0.0
        %2218 = vmatprep.subr.mxu0 0.0
        %2219 = vmatpush1.msra.mxu0 0.0
        %2220 = vmatprep.subr.mxu0 0.0
        %2221 = vmatpush1.msra.mxu0 0.0
        %2222 = vmatprep.subr.mxu0 0.0
        %2223 = vmatpush1.msra.mxu0 0.0
        %2224 = vmatprep.subr.mxu0 0.0
        %2225 = vmatpush1.msra.mxu0 0.0
        %2226 = vmatprep.subr.mxu0 0.0
        %2227 = vmatpush1.msra.mxu0 0.0
        %2228 = vmatprep.subr.mxu0 0.0
        %2229 = vmatpush1.msra.mxu0 0.0
        %2230 = vmatprep.subr.mxu0 0.0
        %2231 = vmatpush1.msra.mxu0 0.0
        %2232 = vmatprep.subr.mxu0 0.0
        %2233 = vmatpush1.msra.mxu0 0.0
        %2234 = vmatprep.subr.mxu0 0.0
        %2235 = vmatpush1.msra.mxu0 0.0
        %2236 = vmatprep.subr.mxu0 0.0
        %2237 = vmatpush1.msra.mxu0 0.0
        %2238 = vmatprep.subr.mxu0 0.0
        %2239 = vmatpush1.msra.mxu0 0.0
        %2240 = vmatprep.subr.mxu0 0.0
        %2241 = vmatpush1.msra.mxu0 0.0
        %2242 = vmatprep.mubr.f32.mxu0 0.0
        %2243 = vmatmul.mubr.f32.gmra.mrb[0].mxu0 %v2034
        %v2244 = vpop.f32.mrb[0].mxu0
        %v2245 = vadd.f32 0.0, %v2244
        %v2246 = vpop.f32.mrb[0].mxu0
        %v2247 = vadd.f32 0.0, %v2246
        %2248 = vdwg.mxu0
        %2249 = vmatprep.subr.mxu0 %v1737
        %2250 = vmatpush1.msra.mxu0 %v1736
        %2251 = vmatprep.subr.mxu0 %v1745
        %2252 = vmatpush1.msra.mxu0 %v1744
        %2253 = vmatprep.subr.mxu0 0.0
        %2254 = vmatpush1.msra.mxu0 0.0
        %2255 = vmatprep.subr.mxu0 0.0
        %2256 = vmatpush1.msra.mxu0 0.0
        %2257 = vmatprep.subr.mxu0 0.0
        %2258 = vmatpush1.msra.mxu0 0.0
        %2259 = vmatprep.subr.mxu0 0.0
        %2260 = vmatpush1.msra.mxu0 0.0
        %2261 = vmatprep.subr.mxu0 0.0
        %2262 = vmatpush1.msra.mxu0 0.0
        %2263 = vmatprep.subr.mxu0 0.0
        %2264 = vmatpush1.msra.mxu0 0.0
        %2265 = vmatprep.subr.mxu0 0.0
        %2266 = vmatpush1.msra.mxu0 0.0
        %2267 = vmatprep.subr.mxu0 0.0
        %2268 = vmatpush1.msra.mxu0 0.0
        %2269 = vmatprep.subr.mxu0 0.0
        %2270 = vmatpush1.msra.mxu0 0.0
        %2271 = vmatprep.subr.mxu0 0.0
        %2272 = vmatpush1.msra.mxu0 0.0
        %2273 = vmatprep.subr.mxu0 0.0
        %2274 = vmatpush1.msra.mxu0 0.0
        %2275 = vmatprep.subr.mxu0 0.0
        %2276 = vmatpush1.msra.mxu0 0.0
        %2277 = vmatprep.subr.mxu0 0.0
        %2278 = vmatpush1.msra.mxu0 0.0
        %2279 = vmatprep.subr.mxu0 0.0
        %2280 = vmatpush1.msra.mxu0 0.0
        %2281 = vmatprep.subr.mxu0 0.0
        %2282 = vmatpush1.msra.mxu0 0.0
        %2283 = vmatprep.subr.mxu0 0.0
        %2284 = vmatpush1.msra.mxu0 0.0
        %2285 = vmatprep.subr.mxu0 0.0
        %2286 = vmatpush1.msra.mxu0 0.0
        %2287 = vmatprep.subr.mxu0 0.0
        %2288 = vmatpush1.msra.mxu0 0.0
        %2289 = vmatprep.subr.mxu0 0.0
        %2290 = vmatpush1.msra.mxu0 0.0
        %2291 = vmatprep.subr.mxu0 0.0
        %2292 = vmatpush1.msra.mxu0 0.0
        %2293 = vmatprep.subr.mxu0 0.0
        %2294 = vmatpush1.msra.mxu0 0.0
        %2295 = vmatprep.subr.mxu0 0.0
        %2296 = vmatpush1.msra.mxu0 0.0
        %2297 = vmatprep.subr.mxu0 0.0
        %2298 = vmatpush1.msra.mxu0 0.0
        %2299 = vmatprep.subr.mxu0 0.0
        %2300 = vmatpush1.msra.mxu0 0.0
        %2301 = vmatprep.subr.mxu0 0.0
        %2302 = vmatpush1.msra.mxu0 0.0
        %2303 = vmatprep.subr.mxu0 0.0
        %2304 = vmatpush1.msra.mxu0 0.0
        %2305 = vmatprep.subr.mxu0 0.0
        %2306 = vmatpush1.msra.mxu0 0.0
        %2307 = vmatprep.subr.mxu0 0.0
        %2308 = vmatpush1.msra.mxu0 0.0
        %2309 = vmatprep.subr.mxu0 0.0
        %2310 = vmatpush1.msra.mxu0 0.0
        %2311 = vmatprep.subr.mxu0 0.0
        %2312 = vmatpush1.msra.mxu0 0.0
        %2313 = vmatprep.mubr.f32.mxu0 0.0
        %2314 = vmatmul.mubr.f32.gmra.mrb[0].mxu0 %v2034
        %v2315 = vpop.f32.mrb[0].mxu0
        %v2316 = vadd.f32 0.0, %v2315
        %v2317 = vpop.f32.mrb[0].mxu0
        %v2318 = vadd.f32 0.0, %v2317
        %2319 = vdwg.mxu0
        %v2321 = vsel %vm1500, %v1574, 0
        %2323 = vmatprep.subr.mxu0 %v1731
        %2324 = vmatpush1.msra.mxu0 %v1730
        %2325 = vmatprep.subr.mxu0 %v1739
        %2326 = vmatpush1.msra.mxu0 %v1738
        %2327 = vmatprep.subr.mxu0 0.0
        %2328 = vmatpush1.msra.mxu0 0.0
        %2329 = vmatprep.subr.mxu0 0.0
        %2330 = vmatpush1.msra.mxu0 0.0
        %2331 = vmatprep.subr.mxu0 0.0
        %2332 = vmatpush1.msra.mxu0 0.0
        %2333 = vmatprep.subr.mxu0 0.0
        %2334 = vmatpush1.msra.mxu0 0.0
        %2335 = vmatprep.subr.mxu0 0.0
        %2336 = vmatpush1.msra.mxu0 0.0
        %2337 = vmatprep.subr.mxu0 0.0
        %2338 = vmatpush1.msra.mxu0 0.0
        %2339 = vmatprep.subr.mxu0 0.0
        %2340 = vmatpush1.msra.mxu0 0.0
        %2341 = vmatprep.subr.mxu0 0.0
        %2342 = vmatpush1.msra.mxu0 0.0
        %2343 = vmatprep.subr.mxu0 0.0
        %2344 = vmatpush1.msra.mxu0 0.0
        %2345 = vmatprep.subr.mxu0 0.0
        %2346 = vmatpush1.msra.mxu0 0.0
        %2347 = vmatprep.subr.mxu0 0.0
        %2348 = vmatpush1.msra.mxu0 0.0
        %2349 = vmatprep.subr.mxu0 0.0
        %2350 = vmatpush1.msra.mxu0 0.0
        %2351 = vmatprep.subr.mxu0 0.0
        %2352 = vmatpush1.msra.mxu0 0.0
        %2353 = vmatprep.subr.mxu0 0.0
        %2354 = vmatpush1.msra.mxu0 0.0
        %2355 = vmatprep.subr.mxu0 0.0
        %2356 = vmatpush1.msra.mxu0 0.0
        %2357 = vmatprep.subr.mxu0 0.0
        %2358 = vmatpush1.msra.mxu0 0.0
        %2359 = vmatprep.subr.mxu0 0.0
        %2360 = vmatpush1.msra.mxu0 0.0
        %2361 = vmatprep.subr.mxu0 0.0
        %2362 = vmatpush1.msra.mxu0 0.0
        %2363 = vmatprep.subr.mxu0 0.0
        %2364 = vmatpush1.msra.mxu0 0.0
        %2365 = vmatprep.subr.mxu0 0.0
        %2366 = vmatpush1.msra.mxu0 0.0
        %2367 = vmatprep.subr.mxu0 0.0
        %2368 = vmatpush1.msra.mxu0 0.0
        %2369 = vmatprep.subr.mxu0 0.0
        %2370 = vmatpush1.msra.mxu0 0.0
        %2371 = vmatprep.subr.mxu0 0.0
        %2372 = vmatpush1.msra.mxu0 0.0
        %2373 = vmatprep.subr.mxu0 0.0
        %2374 = vmatpush1.msra.mxu0 0.0
        %2375 = vmatprep.subr.mxu0 0.0
        %2376 = vmatpush1.msra.mxu0 0.0
        %2377 = vmatprep.subr.mxu0 0.0
        %2378 = vmatpush1.msra.mxu0 0.0
        %2379 = vmatprep.subr.mxu0 0.0
        %2380 = vmatpush1.msra.mxu0 0.0
        %2381 = vmatprep.subr.mxu0 0.0
        %2382 = vmatpush1.msra.mxu0 0.0
        %2383 = vmatprep.subr.mxu0 0.0
        %2384 = vmatpush1.msra.mxu0 0.0
        %2385 = vmatprep.subr.mxu0 0.0
        %2386 = vmatpush1.msra.mxu0 0.0
        %2387 = vmatprep.mubr.f32.mxu0 0.0
        %2388 = vmatmul.mubr.f32.gmra.mrb[0].mxu0 %v2321
        %v2389 = vpop.f32.mrb[0].mxu0
        %v2390 = vadd.f32 0.0, %v2389
        %v2391 = vpop.f32.mrb[0].mxu0
        %v2392 = vadd.f32 0.0, %v2391
        %2393 = vdwg.mxu0
        %2394 = vmatprep.subr.mxu0 %v1733
        %2395 = vmatpush1.msra.mxu0 %v1732
        %2396 = vmatprep.subr.mxu0 %v1741
        %2397 = vmatpush1.msra.mxu0 %v1740
        %2398 = vmatprep.subr.mxu0 0.0
        %2399 = vmatpush1.msra.mxu0 0.0
        %2400 = vmatprep.subr.mxu0 0.0
        %2401 = vmatpush1.msra.mxu0 0.0
        %2402 = vmatprep.subr.mxu0 0.0
        %2403 = vmatpush1.msra.mxu0 0.0
        %2404 = vmatprep.subr.mxu0 0.0
        %2405 = vmatpush1.msra.mxu0 0.0
        %2406 = vmatprep.subr.mxu0 0.0
        %2407 = vmatpush1.msra.mxu0 0.0
        %2408 = vmatprep.subr.mxu0 0.0
        %2409 = vmatpush1.msra.mxu0 0.0
        %2410 = vmatprep.subr.mxu0 0.0
        %2411 = vmatpush1.msra.mxu0 0.0
        %2412 = vmatprep.subr.mxu0 0.0
        %2413 = vmatpush1.msra.mxu0 0.0
        %2414 = vmatprep.subr.mxu0 0.0
        %2415 = vmatpush1.msra.mxu0 0.0
        %2416 = vmatprep.subr.mxu0 0.0
        %2417 = vmatpush1.msra.mxu0 0.0
        %2418 = vmatprep.subr.mxu0 0.0
        %2419 = vmatpush1.msra.mxu0 0.0
        %2420 = vmatprep.subr.mxu0 0.0
        %2421 = vmatpush1.msra.mxu0 0.0
        %2422 = vmatprep.subr.mxu0 0.0
        %2423 = vmatpush1.msra.mxu0 0.0
        %2424 = vmatprep.subr.mxu0 0.0
        %2425 = vmatpush1.msra.mxu0 0.0
        %2426 = vmatprep.subr.mxu0 0.0
        %2427 = vmatpush1.msra.mxu0 0.0
        %2428 = vmatprep.subr.mxu0 0.0
        %2429 = vmatpush1.msra.mxu0 0.0
        %2430 = vmatprep.subr.mxu0 0.0
        %2431 = vmatpush1.msra.mxu0 0.0
        %2432 = vmatprep.subr.mxu0 0.0
        %2433 = vmatpush1.msra.mxu0 0.0
        %2434 = vmatprep.subr.mxu0 0.0
        %2435 = vmatpush1.msra.mxu0 0.0
        %2436 = vmatprep.subr.mxu0 0.0
        %2437 = vmatpush1.msra.mxu0 0.0
        %2438 = vmatprep.subr.mxu0 0.0
        %2439 = vmatpush1.msra.mxu0 0.0
        %2440 = vmatprep.subr.mxu0 0.0
        %2441 = vmatpush1.msra.mxu0 0.0
        %2442 = vmatprep.subr.mxu0 0.0
        %2443 = vmatpush1.msra.mxu0 0.0
        %2444 = vmatprep.subr.mxu0 0.0
        %2445 = vmatpush1.msra.mxu0 0.0
        %2446 = vmatprep.subr.mxu0 0.0
        %2447 = vmatpush1.msra.mxu0 0.0
        %2448 = vmatprep.subr.mxu0 0.0
        %2449 = vmatpush1.msra.mxu0 0.0
        %2450 = vmatprep.subr.mxu0 0.0
        %2451 = vmatpush1.msra.mxu0 0.0
        %2452 = vmatprep.subr.mxu0 0.0
        %2453 = vmatpush1.msra.mxu0 0.0
        %2454 = vmatprep.subr.mxu0 0.0
        %2455 = vmatpush1.msra.mxu0 0.0
        %2456 = vmatprep.subr.mxu0 0.0
        %2457 = vmatpush1.msra.mxu0 0.0
        %2458 = vmatprep.mubr.f32.mxu0 0.0
        %2459 = vmatmul.mubr.f32.gmra.mrb[0].mxu0 %v2321
        %v2460 = vpop.f32.mrb[0].mxu0
        %v2461 = vadd.f32 0.0, %v2460
        %v2462 = vpop.f32.mrb[0].mxu0
        %v2463 = vadd.f32 0.0, %v2462
        %2464 = vdwg.mxu0
        %2465 = vmatprep.subr.mxu0 %v1735
        %2466 = vmatpush1.msra.mxu0 %v1734
        %2467 = vmatprep.subr.mxu0 %v1743
        %2468 = vmatpush1.msra.mxu0 %v1742
        %2469 = vmatprep.subr.mxu0 0.0
        %2470 = vmatpush1.msra.mxu0 0.0
        %2471 = vmatprep.subr.mxu0 0.0
        %2472 = vmatpush1.msra.mxu0 0.0
        %2473 = vmatprep.subr.mxu0 0.0
        %2474 = vmatpush1.msra.mxu0 0.0
        %2475 = vmatprep.subr.mxu0 0.0
        %2476 = vmatpush1.msra.mxu0 0.0
        %2477 = vmatprep.subr.mxu0 0.0
        %2478 = vmatpush1.msra.mxu0 0.0
        %2479 = vmatprep.subr.mxu0 0.0
        %2480 = vmatpush1.msra.mxu0 0.0
        %2481 = vmatprep.subr.mxu0 0.0
        %2482 = vmatpush1.msra.mxu0 0.0
        %2483 = vmatprep.subr.mxu0 0.0
        %2484 = vmatpush1.msra.mxu0 0.0
        %2485 = vmatprep.subr.mxu0 0.0
        %2486 = vmatpush1.msra.mxu0 0.0
        %2487 = vmatprep.subr.mxu0 0.0
        %2488 = vmatpush1.msra.mxu0 0.0
        %2489 = vmatprep.subr.mxu0 0.0
        %2490 = vmatpush1.msra.mxu0 0.0
        %2491 = vmatprep.subr.mxu0 0.0
        %2492 = vmatpush1.msra.mxu0 0.0
        %2493 = vmatprep.subr.mxu0 0.0
        %2494 = vmatpush1.msra.mxu0 0.0
        %2495 = vmatprep.subr.mxu0 0.0
        %2496 = vmatpush1.msra.mxu0 0.0
        %2497 = vmatprep.subr.mxu0 0.0
        %2498 = vmatpush1.msra.mxu0 0.0
        %2499 = vmatprep.subr.mxu0 0.0
        %2500 = vmatpush1.msra.mxu0 0.0
        %2501 = vmatprep.subr.mxu0 0.0
        %2502 = vmatpush1.msra.mxu0 0.0
        %2503 = vmatprep.subr.mxu0 0.0
        %2504 = vmatpush1.msra.mxu0 0.0
        %2505 = vmatprep.subr.mxu0 0.0
        %2506 = vmatpush1.msra.mxu0 0.0
        %2507 = vmatprep.subr.mxu0 0.0
        %2508 = vmatpush1.msra.mxu0 0.0
        %2509 = vmatprep.subr.mxu0 0.0
        %2510 = vmatpush1.msra.mxu0 0.0
        %2511 = vmatprep.subr.mxu0 0.0
        %2512 = vmatpush1.msra.mxu0 0.0
        %2513 = vmatprep.subr.mxu0 0.0
        %2514 = vmatpush1.msra.mxu0 0.0
        %2515 = vmatprep.subr.mxu0 0.0
        %2516 = vmatpush1.msra.mxu0 0.0
        %2517 = vmatprep.subr.mxu0 0.0
        %2518 = vmatpush1.msra.mxu0 0.0
        %2519 = vmatprep.subr.mxu0 0.0
        %2520 = vmatpush1.msra.mxu0 0.0
        %2521 = vmatprep.subr.mxu0 0.0
        %2522 = vmatpush1.msra.mxu0 0.0
        %2523 = vmatprep.subr.mxu0 0.0
        %2524 = vmatpush1.msra.mxu0 0.0
        %2525 = vmatprep.subr.mxu0 0.0
        %2526 = vmatpush1.msra.mxu0 0.0
        %2527 = vmatprep.subr.mxu0 0.0
        %2528 = vmatpush1.msra.mxu0 0.0
        %2529 = vmatprep.mubr.f32.mxu0 0.0
        %2530 = vmatmul.mubr.f32.gmra.mrb[0].mxu0 %v2321
        %v2531 = vpop.f32.mrb[0].mxu0
        %v2532 = vadd.f32 0.0, %v2531
        %v2533 = vpop.f32.mrb[0].mxu0
        %v2534 = vadd.f32 0.0, %v2533
        %2535 = vdwg.mxu0
        %2536 = vmatprep.subr.mxu0 %v1737
        %2537 = vmatpush1.msra.mxu0 %v1736
        %2538 = vmatprep.subr.mxu0 %v1745
        %2539 = vmatpush1.msra.mxu0 %v1744
        %2540 = vmatprep.subr.mxu0 0.0
        %2541 = vmatpush1.msra.mxu0 0.0
        %2542 = vmatprep.subr.mxu0 0.0
        %2543 = vmatpush1.msra.mxu0 0.0
        %2544 = vmatprep.subr.mxu0 0.0
        %2545 = vmatpush1.msra.mxu0 0.0
        %2546 = vmatprep.subr.mxu0 0.0
        %2547 = vmatpush1.msra.mxu0 0.0
        %2548 = vmatprep.subr.mxu0 0.0
        %2549 = vmatpush1.msra.mxu0 0.0
        %2550 = vmatprep.subr.mxu0 0.0
        %2551 = vmatpush1.msra.mxu0 0.0
        %2552 = vmatprep.subr.mxu0 0.0
        %2553 = vmatpush1.msra.mxu0 0.0
        %2554 = vmatprep.subr.mxu0 0.0
        %2555 = vmatpush1.msra.mxu0 0.0
        %2556 = vmatprep.subr.mxu0 0.0
        %2557 = vmatpush1.msra.mxu0 0.0
        %2558 = vmatprep.subr.mxu0 0.0
        %2559 = vmatpush1.msra.mxu0 0.0
        %2560 = vmatprep.subr.mxu0 0.0
        %2561 = vmatpush1.msra.mxu0 0.0
        %2562 = vmatprep.subr.mxu0 0.0
        %2563 = vmatpush1.msra.mxu0 0.0
        %2564 = vmatprep.subr.mxu0 0.0
        %2565 = vmatpush1.msra.mxu0 0.0
        %2566 = vmatprep.subr.mxu0 0.0
        %2567 = vmatpush1.msra.mxu0 0.0
        %2568 = vmatprep.subr.mxu0 0.0
        %2569 = vmatpush1.msra.mxu0 0.0
        %2570 = vmatprep.subr.mxu0 0.0
        %2571 = vmatpush1.msra.mxu0 0.0
        %2572 = vmatprep.subr.mxu0 0.0
        %2573 = vmatpush1.msra.mxu0 0.0
        %2574 = vmatprep.subr.mxu0 0.0
        %2575 = vmatpush1.msra.mxu0 0.0
        %2576 = vmatprep.subr.mxu0 0.0
        %2577 = vmatpush1.msra.mxu0 0.0
        %2578 = vmatprep.subr.mxu0 0.0
        %2579 = vmatpush1.msra.mxu0 0.0
        %2580 = vmatprep.subr.mxu0 0.0
        %2581 = vmatpush1.msra.mxu0 0.0
        %2582 = vmatprep.subr.mxu0 0.0
        %2583 = vmatpush1.msra.mxu0 0.0
        %2584 = vmatprep.subr.mxu0 0.0
        %2585 = vmatpush1.msra.mxu0 0.0
        %2586 = vmatprep.subr.mxu0 0.0
        %2587 = vmatpush1.msra.mxu0 0.0
        %2588 = vmatprep.subr.mxu0 0.0
        %2589 = vmatpush1.msra.mxu0 0.0
        %2590 = vmatprep.subr.mxu0 0.0
        %2591 = vmatpush1.msra.mxu0 0.0
        %2592 = vmatprep.subr.mxu0 0.0
        %2593 = vmatpush1.msra.mxu0 0.0
        %2594 = vmatprep.subr.mxu0 0.0
        %2595 = vmatpush1.msra.mxu0 0.0
        %2596 = vmatprep.subr.mxu0 0.0
        %2597 = vmatpush1.msra.mxu0 0.0
        %2598 = vmatprep.subr.mxu0 0.0
        %2599 = vmatpush1.msra.mxu0 0.0
        %2600 = vmatprep.mubr.f32.mxu0 0.0
        %2601 = vmatmul.mubr.f32.gmra.mrb[0].mxu0 %v2321
        %v2602 = vpop.f32.mrb[0].mxu0
        %v2603 = vadd.f32 0.0, %v2602
        %v2604 = vpop.f32.mrb[0].mxu0
        %v2605 = vadd.f32 0.0, %v2604
        %2606 = vdwg.mxu0
        %v2608 = vsel %vm1500, %v1651, 0
        %2610 = vmatprep.subr.mxu0 %v1731
        %2611 = vmatpush1.msra.mxu0 %v1730
        %2612 = vmatprep.subr.mxu0 %v1739
        %2613 = vmatpush1.msra.mxu0 %v1738
        %2614 = vmatprep.subr.mxu0 0.0
        %2615 = vmatpush1.msra.mxu0 0.0
        %2616 = vmatprep.subr.mxu0 0.0
        %2617 = vmatpush1.msra.mxu0 0.0
        %2618 = vmatprep.subr.mxu0 0.0
        %2619 = vmatpush1.msra.mxu0 0.0
        %2620 = vmatprep.subr.mxu0 0.0
        %2621 = vmatpush1.msra.mxu0 0.0
        %2622 = vmatprep.subr.mxu0 0.0
        %2623 = vmatpush1.msra.mxu0 0.0
        %2624 = vmatprep.subr.mxu0 0.0
        %2625 = vmatpush1.msra.mxu0 0.0
        %2626 = vmatprep.subr.mxu0 0.0
        %2627 = vmatpush1.msra.mxu0 0.0
        %2628 = vmatprep.subr.mxu0 0.0
        %2629 = vmatpush1.msra.mxu0 0.0
        %2630 = vmatprep.subr.mxu0 0.0
        %2631 = vmatpush1.msra.mxu0 0.0
        %2632 = vmatprep.subr.mxu0 0.0
        %2633 = vmatpush1.msra.mxu0 0.0
        %2634 = vmatprep.subr.mxu0 0.0
        %2635 = vmatpush1.msra.mxu0 0.0
        %2636 = vmatprep.subr.mxu0 0.0
        %2637 = vmatpush1.msra.mxu0 0.0
        %2638 = vmatprep.subr.mxu0 0.0
        %2639 = vmatpush1.msra.mxu0 0.0
        %2640 = vmatprep.subr.mxu0 0.0
        %2641 = vmatpush1.msra.mxu0 0.0
        %2642 = vmatprep.subr.mxu0 0.0
        %2643 = vmatpush1.msra.mxu0 0.0
        %2644 = vmatprep.subr.mxu0 0.0
        %2645 = vmatpush1.msra.mxu0 0.0
        %2646 = vmatprep.subr.mxu0 0.0
        %2647 = vmatpush1.msra.mxu0 0.0
        %2648 = vmatprep.subr.mxu0 0.0
        %2649 = vmatpush1.msra.mxu0 0.0
        %2650 = vmatprep.subr.mxu0 0.0
        %2651 = vmatpush1.msra.mxu0 0.0
        %2652 = vmatprep.subr.mxu0 0.0
        %2653 = vmatpush1.msra.mxu0 0.0
        %2654 = vmatprep.subr.mxu0 0.0
        %2655 = vmatpush1.msra.mxu0 0.0
        %2656 = vmatprep.subr.mxu0 0.0
        %2657 = vmatpush1.msra.mxu0 0.0
        %2658 = vmatprep.subr.mxu0 0.0
        %2659 = vmatpush1.msra.mxu0 0.0
        %2660 = vmatprep.subr.mxu0 0.0
        %2661 = vmatpush1.msra.mxu0 0.0
        %2662 = vmatprep.subr.mxu0 0.0
        %2663 = vmatpush1.msra.mxu0 0.0
        %2664 = vmatprep.subr.mxu0 0.0
        %2665 = vmatpush1.msra.mxu0 0.0
        %2666 = vmatprep.subr.mxu0 0.0
        %2667 = vmatpush1.msra.mxu0 0.0
        %2668 = vmatprep.subr.mxu0 0.0
        %2669 = vmatpush1.msra.mxu0 0.0
        %2670 = vmatprep.subr.mxu0 0.0
        %2671 = vmatpush1.msra.mxu0 0.0
        %2672 = vmatprep.subr.mxu0 0.0
        %2673 = vmatpush1.msra.mxu0 0.0
        %2674 = vmatprep.mubr.f32.mxu0 0.0
        %2675 = vmatmul.mubr.f32.gmra.mrb[0].mxu0 %v2608
        %v2676 = vpop.f32.mrb[0].mxu0
        %v2677 = vadd.f32 0.0, %v2676
        %v2678 = vpop.f32.mrb[0].mxu0
        %v2679 = vadd.f32 0.0, %v2678
        %2680 = vdwg.mxu0
        %2681 = vmatprep.subr.mxu0 %v1733
        %2682 = vmatpush1.msra.mxu0 %v1732
        %2683 = vmatprep.subr.mxu0 %v1741
        %2684 = vmatpush1.msra.mxu0 %v1740
        %2685 = vmatprep.subr.mxu0 0.0
        %2686 = vmatpush1.msra.mxu0 0.0
        %2687 = vmatprep.subr.mxu0 0.0
        %2688 = vmatpush1.msra.mxu0 0.0
        %2689 = vmatprep.subr.mxu0 0.0
        %2690 = vmatpush1.msra.mxu0 0.0
        %2691 = vmatprep.subr.mxu0 0.0
        %2692 = vmatpush1.msra.mxu0 0.0
        %2693 = vmatprep.subr.mxu0 0.0
        %2694 = vmatpush1.msra.mxu0 0.0
        %2695 = vmatprep.subr.mxu0 0.0
        %2696 = vmatpush1.msra.mxu0 0.0
        %2697 = vmatprep.subr.mxu0 0.0
        %2698 = vmatpush1.msra.mxu0 0.0
        %2699 = vmatprep.subr.mxu0 0.0
        %2700 = vmatpush1.msra.mxu0 0.0
        %2701 = vmatprep.subr.mxu0 0.0
        %2702 = vmatpush1.msra.mxu0 0.0
        %2703 = vmatprep.subr.mxu0 0.0
        %2704 = vmatpush1.msra.mxu0 0.0
        %2705 = vmatprep.subr.mxu0 0.0
        %2706 = vmatpush1.msra.mxu0 0.0
        %2707 = vmatprep.subr.mxu0 0.0
        %2708 = vmatpush1.msra.mxu0 0.0
        %2709 = vmatprep.subr.mxu0 0.0
        %2710 = vmatpush1.msra.mxu0 0.0
        %2711 = vmatprep.subr.mxu0 0.0
        %2712 = vmatpush1.msra.mxu0 0.0
        %2713 = vmatprep.subr.mxu0 0.0
        %2714 = vmatpush1.msra.mxu0 0.0
        %2715 = vmatprep.subr.mxu0 0.0
        %2716 = vmatpush1.msra.mxu0 0.0
        %2717 = vmatprep.subr.mxu0 0.0
        %2718 = vmatpush1.msra.mxu0 0.0
        %2719 = vmatprep.subr.mxu0 0.0
        %2720 = vmatpush1.msra.mxu0 0.0
        %2721 = vmatprep.subr.mxu0 0.0
        %2722 = vmatpush1.msra.mxu0 0.0
        %2723 = vmatprep.subr.mxu0 0.0
        %2724 = vmatpush1.msra.mxu0 0.0
        %2725 = vmatprep.subr.mxu0 0.0
        %2726 = vmatpush1.msra.mxu0 0.0
        %2727 = vmatprep.subr.mxu0 0.0
        %2728 = vmatpush1.msra.mxu0 0.0
        %2729 = vmatprep.subr.mxu0 0.0
        %2730 = vmatpush1.msra.mxu0 0.0
        %2731 = vmatprep.subr.mxu0 0.0
        %2732 = vmatpush1.msra.mxu0 0.0
        %2733 = vmatprep.subr.mxu0 0.0
        %2734 = vmatpush1.msra.mxu0 0.0
        %2735 = vmatprep.subr.mxu0 0.0
        %2736 = vmatpush1.msra.mxu0 0.0
        %2737 = vmatprep.subr.mxu0 0.0
        %2738 = vmatpush1.msra.mxu0 0.0
        %2739 = vmatprep.subr.mxu0 0.0
        %2740 = vmatpush1.msra.mxu0 0.0
        %2741 = vmatprep.subr.mxu0 0.0
        %2742 = vmatpush1.msra.mxu0 0.0
        %2743 = vmatprep.subr.mxu0 0.0
        %2744 = vmatpush1.msra.mxu0 0.0
        %2745 = vmatprep.mubr.f32.mxu0 0.0
        %2746 = vmatmul.mubr.f32.gmra.mrb[0].mxu0 %v2608
        %v2747 = vpop.f32.mrb[0].mxu0
        %v2748 = vadd.f32 0.0, %v2747
        %v2749 = vpop.f32.mrb[0].mxu0
        %v2750 = vadd.f32 0.0, %v2749
        %2751 = vdwg.mxu0
        %2752 = vmatprep.subr.mxu0 %v1735
        %2753 = vmatpush1.msra.mxu0 %v1734
        %2754 = vmatprep.subr.mxu0 %v1743
        %2755 = vmatpush1.msra.mxu0 %v1742
        %2756 = vmatprep.subr.mxu0 0.0
        %2757 = vmatpush1.msra.mxu0 0.0
        %2758 = vmatprep.subr.mxu0 0.0
        %2759 = vmatpush1.msra.mxu0 0.0
        %2760 = vmatprep.subr.mxu0 0.0
        %2761 = vmatpush1.msra.mxu0 0.0
        %2762 = vmatprep.subr.mxu0 0.0
        %2763 = vmatpush1.msra.mxu0 0.0
        %2764 = vmatprep.subr.mxu0 0.0
        %2765 = vmatpush1.msra.mxu0 0.0
        %2766 = vmatprep.subr.mxu0 0.0
        %2767 = vmatpush1.msra.mxu0 0.0
        %2768 = vmatprep.subr.mxu0 0.0
        %2769 = vmatpush1.msra.mxu0 0.0
        %2770 = vmatprep.subr.mxu0 0.0
        %2771 = vmatpush1.msra.mxu0 0.0
        %2772 = vmatprep.subr.mxu0 0.0
        %2773 = vmatpush1.msra.mxu0 0.0
        %2774 = vmatprep.subr.mxu0 0.0
        %2775 = vmatpush1.msra.mxu0 0.0
        %2776 = vmatprep.subr.mxu0 0.0
        %2777 = vmatpush1.msra.mxu0 0.0
        %2778 = vmatprep.subr.mxu0 0.0
        %2779 = vmatpush1.msra.mxu0 0.0
        %2780 = vmatprep.subr.mxu0 0.0
        %2781 = vmatpush1.msra.mxu0 0.0
        %2782 = vmatprep.subr.mxu0 0.0
        %2783 = vmatpush1.msra.mxu0 0.0
        %2784 = vmatprep.subr.mxu0 0.0
        %2785 = vmatpush1.msra.mxu0 0.0
        %2786 = vmatprep.subr.mxu0 0.0
        %2787 = vmatpush1.msra.mxu0 0.0
        %2788 = vmatprep.subr.mxu0 0.0
        %2789 = vmatpush1.msra.mxu0 0.0
        %2790 = vmatprep.subr.mxu0 0.0
        %2791 = vmatpush1.msra.mxu0 0.0
        %2792 = vmatprep.subr.mxu0 0.0
        %2793 = vmatpush1.msra.mxu0 0.0
        %2794 = vmatprep.subr.mxu0 0.0
        %2795 = vmatpush1.msra.mxu0 0.0
        %2796 = vmatprep.subr.mxu0 0.0
        %2797 = vmatpush1.msra.mxu0 0.0
        %2798 = vmatprep.subr.mxu0 0.0
        %2799 = vmatpush1.msra.mxu0 0.0
        %2800 = vmatprep.subr.mxu0 0.0
        %2801 = vmatpush1.msra.mxu0 0.0
        %2802 = vmatprep.subr.mxu0 0.0
        %2803 = vmatpush1.msra.mxu0 0.0
        %2804 = vmatprep.subr.mxu0 0.0
        %2805 = vmatpush1.msra.mxu0 0.0
        %2806 = vmatprep.subr.mxu0 0.0
        %2807 = vmatpush1.msra.mxu0 0.0
        %2808 = vmatprep.subr.mxu0 0.0
        %2809 = vmatpush1.msra.mxu0 0.0
        %2810 = vmatprep.subr.mxu0 0.0
        %2811 = vmatpush1.msra.mxu0 0.0
        %2812 = vmatprep.subr.mxu0 0.0
        %2813 = vmatpush1.msra.mxu0 0.0
        %2814 = vmatprep.subr.mxu0 0.0
        %2815 = vmatpush1.msra.mxu0 0.0
        %2816 = vmatprep.mubr.f32.mxu0 0.0
        %2817 = vmatmul.mubr.f32.gmra.mrb[0].mxu0 %v2608
        %v2818 = vpop.f32.mrb[0].mxu0
        %v2819 = vadd.f32 0.0, %v2818
        %v2820 = vpop.f32.mrb[0].mxu0
        %v2821 = vadd.f32 0.0, %v2820
        %2822 = vdwg.mxu0
        %2823 = vmatprep.subr.mxu0 %v1737
        %2824 = vmatpush1.msra.mxu0 %v1736
        %2825 = vmatprep.subr.mxu0 %v1745
        %2826 = vmatpush1.msra.mxu0 %v1744
        %2827 = vmatprep.subr.mxu0 0.0
        %2828 = vmatpush1.msra.mxu0 0.0
        %2829 = vmatprep.subr.mxu0 0.0
        %2830 = vmatpush1.msra.mxu0 0.0
        %2831 = vmatprep.subr.mxu0 0.0
        %2832 = vmatpush1.msra.mxu0 0.0
        %2833 = vmatprep.subr.mxu0 0.0
        %2834 = vmatpush1.msra.mxu0 0.0
        %2835 = vmatprep.subr.mxu0 0.0
        %2836 = vmatpush1.msra.mxu0 0.0
        %2837 = vmatprep.subr.mxu0 0.0
        %2838 = vmatpush1.msra.mxu0 0.0
        %2839 = vmatprep.subr.mxu0 0.0
        %2840 = vmatpush1.msra.mxu0 0.0
        %2841 = vmatprep.subr.mxu0 0.0
        %2842 = vmatpush1.msra.mxu0 0.0
        %2843 = vmatprep.subr.mxu0 0.0
        %2844 = vmatpush1.msra.mxu0 0.0
        %2845 = vmatprep.subr.mxu0 0.0
        %2846 = vmatpush1.msra.mxu0 0.0
        %2847 = vmatprep.subr.mxu0 0.0
        %2848 = vmatpush1.msra.mxu0 0.0
        %2849 = vmatprep.subr.mxu0 0.0
        %2850 = vmatpush1.msra.mxu0 0.0
        %2851 = vmatprep.subr.mxu0 0.0
        %2852 = vmatpush1.msra.mxu0 0.0
        %2853 = vmatprep.subr.mxu0 0.0
        %2854 = vmatpush1.msra.mxu0 0.0
        %2855 = vmatprep.subr.mxu0 0.0
        %2856 = vmatpush1.msra.mxu0 0.0
        %2857 = vmatprep.subr.mxu0 0.0
        %2858 = vmatpush1.msra.mxu0 0.0
        %2859 = vmatprep.subr.mxu0 0.0
        %2860 = vmatpush1.msra.mxu0 0.0
        %2861 = vmatprep.subr.mxu0 0.0
        %2862 = vmatpush1.msra.mxu0 0.0
        %2863 = vmatprep.subr.mxu0 0.0
        %2864 = vmatpush1.msra.mxu0 0.0
        %2865 = vmatprep.subr.mxu0 0.0
        %2866 = vmatpush1.msra.mxu0 0.0
        %2867 = vmatprep.subr.mxu0 0.0
        %2868 = vmatpush1.msra.mxu0 0.0
        %2869 = vmatprep.subr.mxu0 0.0
        %2870 = vmatpush1.msra.mxu0 0.0
        %2871 = vmatprep.subr.mxu0 0.0
        %2872 = vmatpush1.msra.mxu0 0.0
        %2873 = vmatprep.subr.mxu0 0.0
        %2874 = vmatpush1.msra.mxu0 0.0
        %2875 = vmatprep.subr.mxu0 0.0
        %2876 = vmatpush1.msra.mxu0 0.0
        %2877 = vmatprep.subr.mxu0 0.0
        %2878 = vmatpush1.msra.mxu0 0.0
        %2879 = vmatprep.subr.mxu0 0.0
        %2880 = vmatpush1.msra.mxu0 0.0
        %2881 = vmatprep.subr.mxu0 0.0
        %2882 = vmatpush1.msra.mxu0 0.0
        %2883 = vmatprep.subr.mxu0 0.0
        %2884 = vmatpush1.msra.mxu0 0.0
        %2885 = vmatprep.subr.mxu0 0.0
        %2886 = vmatpush1.msra.mxu0 0.0
        %2887 = vmatprep.mubr.f32.mxu0 0.0
        %2888 = vmatmul.mubr.f32.gmra.mrb[0].mxu0 %v2608
        %v2889 = vpop.f32.mrb[0].mxu0
        %v2890 = vadd.f32 0.0, %v2889
        %v2891 = vpop.f32.mrb[0].mxu0
        %v2892 = vadd.f32 0.0, %v2891
        %2893 = vdwg.mxu0
        %v2894 = vld [vmem:[%s1070] sm:$0x3]
        %v2897 = vcombine.low %v1726, %v1728
        %v2899 = vunpack.c.l.s4 1966171168
        %v2900 = vunpack.c.0.s8 %v2899
        %v2901 = vlaneseq
        %v2902 = vshrl.u32 %v2901, 7
        %v2903 = vsub.s32 %v2900, %v2902
        %v2904 = vrot.slane %v2897, %v2903
        %v2906 = vunpack.c.l.s4 1966171168
        %v2907 = vunpack.c.0.s8 %v2906
        %v2908 = vlaneseq
        %v2909 = vshrl.u32 %v2908, 7
        %v2910 = vsub.s32 %v2907, %v2909
        %v2911 = vrot.slane %v2904, %v2910
        %v2913 = vmul.f32 %v2894, %v2911
        %v2914 = vld [vmem:[#allocation21] sm:$0xff]
        %v2915 = vld [vmem:[#allocation21 + $0x8] sm:$0xff]
        %v2916 = vld [vmem:[#allocation21 + $0x10] sm:$0xff]
        %v2917 = vld [vmem:[#allocation21 + $0x18] sm:$0xff]
        %v2918 = vld [vmem:[#allocation21 + $0x20] sm:$0xff]
        %v2919 = vld [vmem:[#allocation21 + $0x28] sm:$0xff]
        %v2920 = vld [vmem:[#allocation21 + $0x30] sm:$0xff]
        %v2921 = vld [vmem:[#allocation21 + $0x38] sm:$0xff]
        %v2922 = vld [vmem:[#allocation21 + $0x40] sm:$0xff]
        %v2923 = vld [vmem:[#allocation21 + $0x48] sm:$0xff]
        %v2924 = vld [vmem:[#allocation21 + $0x50] sm:$0xff]
        %v2925 = vld [vmem:[#allocation21 + $0x58] sm:$0xff]
        %v2926 = vld [vmem:[#allocation21 + $0x60] sm:$0xff]
        %v2927 = vld [vmem:[#allocation21 + $0x68] sm:$0xff]
        %v2928 = vld [vmem:[#allocation21 + $0x70] sm:$0xff]
        %v2929 = vld [vmem:[#allocation21 + $0x78] sm:$0xff]
        %v2930 = vld [vmem:[#allocation21 + $0x80] sm:$0xff]
        %v2931 = vld [vmem:[#allocation21 + $0x88] sm:$0xff]
        %v2932 = vld [vmem:[#allocation21 + $0x90] sm:$0xff]
        %v2933 = vld [vmem:[#allocation21 + $0x98] sm:$0xff]
        %v2934 = vld [vmem:[#allocation21 + $0xa0] sm:$0xff]
        %v2935 = vld [vmem:[#allocation21 + $0xa8] sm:$0xff]
        %v2936 = vld [vmem:[#allocation21 + $0xb0] sm:$0xff]
        %v2937 = vld [vmem:[#allocation21 + $0xb8] sm:$0xff]
        %v2938 = vld [vmem:[#allocation21 + $0xc0] sm:$0xff]
        %v2939 = vld [vmem:[#allocation21 + $0xc8] sm:$0xff]
        %v2940 = vld [vmem:[#allocation21 + $0xd0] sm:$0xff]
        %v2941 = vld [vmem:[#allocation21 + $0xd8] sm:$0xff]
        %v2942 = vld [vmem:[#allocation21 + $0xe0] sm:$0xff]
        %v2943 = vld [vmem:[#allocation21 + $0xe8] sm:$0xff]
        %v2944 = vld [vmem:[#allocation21 + $0xf0] sm:$0xff]
        %v2945 = vld [vmem:[#allocation21 + $0xf8] sm:$0xff]
        %v2946 = vld [vmem:[#allocation21 + $0x100] sm:$0xff]
        %v2947 = vld [vmem:[#allocation21 + $0x108] sm:$0xff]
        %v2948 = vld [vmem:[#allocation21 + $0x110] sm:$0xff]
        %v2949 = vld [vmem:[#allocation21 + $0x118] sm:$0xff]
        %v2950 = vld [vmem:[#allocation21 + $0x120] sm:$0xff]
        %v2951 = vld [vmem:[#allocation21 + $0x128] sm:$0xff]
        %v2952 = vld [vmem:[#allocation21 + $0x130] sm:$0xff]
        %v2953 = vld [vmem:[#allocation21 + $0x138] sm:$0xff]
        %v2954 = vld [vmem:[#allocation21 + $0x140] sm:$0xff]
        %v2955 = vld [vmem:[#allocation21 + $0x148] sm:$0xff]
        %v2956 = vld [vmem:[#allocation21 + $0x150] sm:$0xff]
        %v2957 = vld [vmem:[#allocation21 + $0x158] sm:$0xff]
        %v2958 = vld [vmem:[#allocation21 + $0x160] sm:$0xff]
        %v2959 = vld [vmem:[#allocation21 + $0x168] sm:$0xff]
        %v2960 = vld [vmem:[#allocation21 + $0x170] sm:$0xff]
        %v2961 = vld [vmem:[#allocation21 + $0x178] sm:$0xff]
        %v2962 = vld [vmem:[#allocation21 + $0x180] sm:$0xff]
        %v2963 = vld [vmem:[#allocation21 + $0x188] sm:$0xff]
        %v2964 = vld [vmem:[#allocation21 + $0x190] sm:$0xff]
        %v2965 = vld [vmem:[#allocation21 + $0x198] sm:$0xff]
        %v2966 = vld [vmem:[#allocation21 + $0x1a0] sm:$0xff]
        %v2967 = vld [vmem:[#allocation21 + $0x1a8] sm:$0xff]
        %v2968 = vld [vmem:[#allocation21 + $0x1b0] sm:$0xff]
        %v2969 = vld [vmem:[#allocation21 + $0x1b8] sm:$0xff]
        %v2970 = vld [vmem:[#allocation21 + $0x1c0] sm:$0xff]
        %v2971 = vld [vmem:[#allocation21 + $0x1c8] sm:$0xff]
        %v2972 = vld [vmem:[#allocation21 + $0x1d0] sm:$0xff]
        %v2973 = vld [vmem:[#allocation21 + $0x1d8] sm:$0xff]
        %v2974 = vld [vmem:[#allocation21 + $0x1e0] sm:$0xff]
        %v2975 = vld [vmem:[#allocation21 + $0x1e8] sm:$0xff]
        %v2976 = vld [vmem:[#allocation21 + $0x1f0] sm:$0xff]
        %v2977 = vld [vmem:[#allocation21 + $0x1f8] sm:$0xff]
        %v2978 = vld [vmem:[#allocation21 + $0x200] sm:$0xff]
        %v2979 = vld [vmem:[#allocation21 + $0x208] sm:$0xff]
        %v2980 = vld [vmem:[#allocation21 + $0x210] sm:$0xff]
        %v2981 = vld [vmem:[#allocation21 + $0x218] sm:$0xff]
        %v2982 = vld [vmem:[#allocation21 + $0x220] sm:$0xff]
        %v2983 = vld [vmem:[#allocation21 + $0x228] sm:$0xff]
        %v2984 = vld [vmem:[#allocation21 + $0x230] sm:$0xff]
        %v2985 = vld [vmem:[#allocation21 + $0x238] sm:$0xff]
        %v2986 = vld [vmem:[#allocation21 + $0x240] sm:$0xff]
        %v2987 = vld [vmem:[#allocation21 + $0x248] sm:$0xff]
        %v2988 = vld [vmem:[#allocation21 + $0x250] sm:$0xff]
        %v2989 = vld [vmem:[#allocation21 + $0x258] sm:$0xff]
        %v2990 = vld [vmem:[#allocation21 + $0x260] sm:$0xff]
        %v2991 = vld [vmem:[#allocation21 + $0x268] sm:$0xff]
        %v2992 = vld [vmem:[#allocation21 + $0x270] sm:$0xff]
        %v2993 = vld [vmem:[#allocation21 + $0x278] sm:$0xff]
        %v2994 = vld [vmem:[#allocation21 + $0x280] sm:$0xff]
        %v2995 = vld [vmem:[#allocation21 + $0x288] sm:$0xff]
        %v2996 = vld [vmem:[#allocation21 + $0x290] sm:$0xff]
        %v2997 = vld [vmem:[#allocation21 + $0x298] sm:$0xff]
        %v2998 = vld [vmem:[#allocation21 + $0x2a0] sm:$0xff]
        %v2999 = vld [vmem:[#allocation21 + $0x2a8] sm:$0xff]
        %v3000 = vld [vmem:[#allocation21 + $0x2b0] sm:$0xff]
        %v3001 = vld [vmem:[#allocation21 + $0x2b8] sm:$0xff]
        %v3002 = vld [vmem:[#allocation21 + $0x2c0] sm:$0xff]
        %v3003 = vld [vmem:[#allocation21 + $0x2c8] sm:$0xff]
        %v3004 = vld [vmem:[#allocation21 + $0x2d0] sm:$0xff]
        %v3005 = vld [vmem:[#allocation21 + $0x2d8] sm:$0xff]
        %v3006 = vld [vmem:[#allocation21 + $0x2e0] sm:$0xff]
        %v3007 = vld [vmem:[#allocation21 + $0x2e8] sm:$0xff]
        %v3008 = vld [vmem:[#allocation21 + $0x2f0] sm:$0xff]
        %v3009 = vld [vmem:[#allocation21 + $0x2f8] sm:$0xff]
        %v3010 = vld [vmem:[#allocation21 + $0x300] sm:$0xff]
        %v3011 = vld [vmem:[#allocation21 + $0x308] sm:$0xff]
        %v3012 = vld [vmem:[#allocation21 + $0x310] sm:$0xff]
        %v3013 = vld [vmem:[#allocation21 + $0x318] sm:$0xff]
        %v3014 = vld [vmem:[#allocation21 + $0x320] sm:$0xff]
        %v3015 = vld [vmem:[#allocation21 + $0x328] sm:$0xff]
        %v3016 = vld [vmem:[#allocation21 + $0x330] sm:$0xff]
        %v3017 = vld [vmem:[#allocation21 + $0x338] sm:$0xff]
        %v3018 = vld [vmem:[#allocation21 + $0x340] sm:$0xff]
        %v3019 = vld [vmem:[#allocation21 + $0x348] sm:$0xff]
        %v3020 = vld [vmem:[#allocation21 + $0x350] sm:$0xff]
        %v3021 = vld [vmem:[#allocation21 + $0x358] sm:$0xff]
        %v3022 = vld [vmem:[#allocation21 + $0x360] sm:$0xff]
        %v3023 = vld [vmem:[#allocation21 + $0x368] sm:$0xff]
        %v3024 = vld [vmem:[#allocation21 + $0x370] sm:$0xff]
        %v3025 = vld [vmem:[#allocation21 + $0x378] sm:$0xff]
        %v3026 = vld [vmem:[#allocation21 + $0x380] sm:$0xff]
        %v3027 = vld [vmem:[#allocation21 + $0x388] sm:$0xff]
        %v3028 = vld [vmem:[#allocation21 + $0x390] sm:$0xff]
        %v3029 = vld [vmem:[#allocation21 + $0x398] sm:$0xff]
        %v3030 = vld [vmem:[#allocation21 + $0x3a0] sm:$0xff]
        %v3031 = vld [vmem:[#allocation21 + $0x3a8] sm:$0xff]
        %v3032 = vld [vmem:[#allocation21 + $0x3b0] sm:$0xff]
        %v3033 = vld [vmem:[#allocation21 + $0x3b8] sm:$0xff]
        %v3034 = vld [vmem:[#allocation21 + $0x3c0] sm:$0xff]
        %v3035 = vld [vmem:[#allocation21 + $0x3c8] sm:$0xff]
        %v3036 = vld [vmem:[#allocation21 + $0x3d0] sm:$0xff]
        %v3037 = vld [vmem:[#allocation21 + $0x3d8] sm:$0xff]
        %v3038 = vld [vmem:[#allocation21 + $0x3e0] sm:$0xff]
        %v3039 = vld [vmem:[#allocation21 + $0x3e8] sm:$0xff]
        %v3040 = vld [vmem:[#allocation21 + $0x3f0] sm:$0xff]
        %v3041 = vld [vmem:[#allocation21 + $0x3f8] sm:$0xff]
        %v3042 = vld [vmem:[#allocation21 + $0x400] sm:$0xff]
        %v3043 = vld [vmem:[#allocation21 + $0x408] sm:$0xff]
        %v3044 = vld [vmem:[#allocation21 + $0x410] sm:$0xff]
        %v3045 = vld [vmem:[#allocation21 + $0x418] sm:$0xff]
        %v3046 = vld [vmem:[#allocation21 + $0x420] sm:$0xff]
        %v3047 = vld [vmem:[#allocation21 + $0x428] sm:$0xff]
        %v3048 = vld [vmem:[#allocation21 + $0x430] sm:$0xff]
        %v3049 = vld [vmem:[#allocation21 + $0x438] sm:$0xff]
        %v3050 = vld [vmem:[#allocation21 + $0x440] sm:$0xff]
        %v3051 = vld [vmem:[#allocation21 + $0x448] sm:$0xff]
        %v3052 = vld [vmem:[#allocation21 + $0x450] sm:$0xff]
        %v3053 = vld [vmem:[#allocation21 + $0x458] sm:$0xff]
        %v3054 = vld [vmem:[#allocation21 + $0x460] sm:$0xff]
        %v3055 = vld [vmem:[#allocation21 + $0x468] sm:$0xff]
        %v3056 = vld [vmem:[#allocation21 + $0x470] sm:$0xff]
        %v3057 = vld [vmem:[#allocation21 + $0x478] sm:$0xff]
        %v3058 = vld [vmem:[#allocation21 + $0x480] sm:$0xff]
        %v3059 = vld [vmem:[#allocation21 + $0x488] sm:$0xff]
        %v3060 = vld [vmem:[#allocation21 + $0x490] sm:$0xff]
        %v3061 = vld [vmem:[#allocation21 + $0x498] sm:$0xff]
        %v3062 = vld [vmem:[#allocation21 + $0x4a0] sm:$0xff]
        %v3063 = vld [vmem:[#allocation21 + $0x4a8] sm:$0xff]
        %v3064 = vld [vmem:[#allocation21 + $0x4b0] sm:$0xff]
        %v3065 = vld [vmem:[#allocation21 + $0x4b8] sm:$0xff]
        %v3066 = vld [vmem:[#allocation21 + $0x4c0] sm:$0xff]
        %v3067 = vld [vmem:[#allocation21 + $0x4c8] sm:$0xff]
        %v3068 = vld [vmem:[#allocation21 + $0x4d0] sm:$0xff]
        %v3069 = vld [vmem:[#allocation21 + $0x4d8] sm:$0xff]
        %v3070 = vld [vmem:[#allocation21 + $0x4e0] sm:$0xff]
        %v3071 = vld [vmem:[#allocation21 + $0x4e8] sm:$0xff]
        %v3072 = vld [vmem:[#allocation21 + $0x4f0] sm:$0xff]
        %v3073 = vld [vmem:[#allocation21 + $0x4f8] sm:$0xff]
        %v3074 = vld [vmem:[#allocation21 + $0x500] sm:$0xff]
        %v3075 = vld [vmem:[#allocation21 + $0x508] sm:$0xff]
        %v3076 = vld [vmem:[#allocation21 + $0x510] sm:$0xff]
        %v3077 = vld [vmem:[#allocation21 + $0x518] sm:$0xff]
        %v3078 = vld [vmem:[#allocation21 + $0x520] sm:$0xff]
        %v3079 = vld [vmem:[#allocation21 + $0x528] sm:$0xff]
        %v3080 = vld [vmem:[#allocation21 + $0x530] sm:$0xff]
        %v3081 = vld [vmem:[#allocation21 + $0x538] sm:$0xff]
        %v3082 = vld [vmem:[#allocation21 + $0x540] sm:$0xff]
        %v3083 = vld [vmem:[#allocation21 + $0x548] sm:$0xff]
        %v3084 = vld [vmem:[#allocation21 + $0x550] sm:$0xff]
        %v3085 = vld [vmem:[#allocation21 + $0x558] sm:$0xff]
        %v3086 = vld [vmem:[#allocation21 + $0x560] sm:$0xff]
        %v3087 = vld [vmem:[#allocation21 + $0x568] sm:$0xff]
        %v3088 = vld [vmem:[#allocation21 + $0x570] sm:$0xff]
        %v3089 = vld [vmem:[#allocation21 + $0x578] sm:$0xff]
        %v3090 = vld [vmem:[#allocation21 + $0x580] sm:$0xff]
        %v3091 = vld [vmem:[#allocation21 + $0x588] sm:$0xff]
        %v3092 = vld [vmem:[#allocation21 + $0x590] sm:$0xff]
        %v3093 = vld [vmem:[#allocation21 + $0x598] sm:$0xff]
        %v3094 = vld [vmem:[#allocation21 + $0x5a0] sm:$0xff]
        %v3095 = vld [vmem:[#allocation21 + $0x5a8] sm:$0xff]
        %v3096 = vld [vmem:[#allocation21 + $0x5b0] sm:$0xff]
        %v3097 = vld [vmem:[#allocation21 + $0x5b8] sm:$0xff]
        %v3098 = vld [vmem:[#allocation21 + $0x5c0] sm:$0xff]
        %v3099 = vld [vmem:[#allocation21 + $0x5c8] sm:$0xff]
        %v3100 = vld [vmem:[#allocation21 + $0x5d0] sm:$0xff]
        %v3101 = vld [vmem:[#allocation21 + $0x5d8] sm:$0xff]
        %v3102 = vld [vmem:[#allocation21 + $0x5e0] sm:$0xff]
        %v3103 = vld [vmem:[#allocation21 + $0x5e8] sm:$0xff]
        %v3104 = vld [vmem:[#allocation21 + $0x5f0] sm:$0xff]
        %v3105 = vld [vmem:[#allocation21 + $0x5f8] sm:$0xff]
        %v3106 = vld [vmem:[#allocation21 + $0x600] sm:$0xff]
        %v3107 = vld [vmem:[#allocation21 + $0x608] sm:$0xff]
        %v3108 = vld [vmem:[#allocation21 + $0x610] sm:$0xff]
        %v3109 = vld [vmem:[#allocation21 + $0x618] sm:$0xff]
        %v3110 = vld [vmem:[#allocation21 + $0x620] sm:$0xff]
        %v3111 = vld [vmem:[#allocation21 + $0x628] sm:$0xff]
        %v3112 = vld [vmem:[#allocation21 + $0x630] sm:$0xff]
        %v3113 = vld [vmem:[#allocation21 + $0x638] sm:$0xff]
        %v3114 = vld [vmem:[#allocation21 + $0x640] sm:$0xff]
        %v3115 = vld [vmem:[#allocation21 + $0x648] sm:$0xff]
        %v3116 = vld [vmem:[#allocation21 + $0x650] sm:$0xff]
        %v3117 = vld [vmem:[#allocation21 + $0x658] sm:$0xff]
        %v3118 = vld [vmem:[#allocation21 + $0x660] sm:$0xff]
        %v3119 = vld [vmem:[#allocation21 + $0x668] sm:$0xff]
        %v3120 = vld [vmem:[#allocation21 + $0x670] sm:$0xff]
        %v3121 = vld [vmem:[#allocation21 + $0x678] sm:$0xff]
        %v3122 = vld [vmem:[#allocation21 + $0x680] sm:$0xff]
        %v3123 = vld [vmem:[#allocation21 + $0x688] sm:$0xff]
        %v3124 = vld [vmem:[#allocation21 + $0x690] sm:$0xff]
        %v3125 = vld [vmem:[#allocation21 + $0x698] sm:$0xff]
        %v3126 = vld [vmem:[#allocation21 + $0x6a0] sm:$0xff]
        %v3127 = vld [vmem:[#allocation21 + $0x6a8] sm:$0xff]
        %v3128 = vld [vmem:[#allocation21 + $0x6b0] sm:$0xff]
        %v3129 = vld [vmem:[#allocation21 + $0x6b8] sm:$0xff]
        %v3130 = vld [vmem:[#allocation21 + $0x6c0] sm:$0xff]
        %v3131 = vld [vmem:[#allocation21 + $0x6c8] sm:$0xff]
        %v3132 = vld [vmem:[#allocation21 + $0x6d0] sm:$0xff]
        %v3133 = vld [vmem:[#allocation21 + $0x6d8] sm:$0xff]
        %v3134 = vld [vmem:[#allocation21 + $0x6e0] sm:$0xff]
        %v3135 = vld [vmem:[#allocation21 + $0x6e8] sm:$0xff]
        %v3136 = vld [vmem:[#allocation21 + $0x6f0] sm:$0xff]
        %v3137 = vld [vmem:[#allocation21 + $0x6f8] sm:$0xff]
        %v3138 = vld [vmem:[#allocation21 + $0x700] sm:$0xff]
        %v3139 = vld [vmem:[#allocation21 + $0x708] sm:$0xff]
        %v3140 = vld [vmem:[#allocation21 + $0x710] sm:$0xff]
        %v3141 = vld [vmem:[#allocation21 + $0x718] sm:$0xff]
        %v3142 = vld [vmem:[#allocation21 + $0x720] sm:$0xff]
        %v3143 = vld [vmem:[#allocation21 + $0x728] sm:$0xff]
        %v3144 = vld [vmem:[#allocation21 + $0x730] sm:$0xff]
        %v3145 = vld [vmem:[#allocation21 + $0x738] sm:$0xff]
        %v3146 = vld [vmem:[#allocation21 + $0x740] sm:$0xff]
        %v3147 = vld [vmem:[#allocation21 + $0x748] sm:$0xff]
        %v3148 = vld [vmem:[#allocation21 + $0x750] sm:$0xff]
        %v3149 = vld [vmem:[#allocation21 + $0x758] sm:$0xff]
        %v3150 = vld [vmem:[#allocation21 + $0x760] sm:$0xff]
        %v3151 = vld [vmem:[#allocation21 + $0x768] sm:$0xff]
        %v3152 = vld [vmem:[#allocation21 + $0x770] sm:$0xff]
        %v3153 = vld [vmem:[#allocation21 + $0x778] sm:$0xff]
        %v3154 = vld [vmem:[#allocation21 + $0x780] sm:$0xff]
        %v3155 = vld [vmem:[#allocation21 + $0x788] sm:$0xff]
        %v3156 = vld [vmem:[#allocation21 + $0x790] sm:$0xff]
        %v3157 = vld [vmem:[#allocation21 + $0x798] sm:$0xff]
        %v3158 = vld [vmem:[#allocation21 + $0x7a0] sm:$0xff]
        %v3159 = vld [vmem:[#allocation21 + $0x7a8] sm:$0xff]
        %v3160 = vld [vmem:[#allocation21 + $0x7b0] sm:$0xff]
        %v3161 = vld [vmem:[#allocation21 + $0x7b8] sm:$0xff]
        %v3162 = vld [vmem:[#allocation21 + $0x7c0] sm:$0xff]
        %v3163 = vld [vmem:[#allocation21 + $0x7c8] sm:$0xff]
        %v3164 = vld [vmem:[#allocation21 + $0x7d0] sm:$0xff]
        %v3165 = vld [vmem:[#allocation21 + $0x7d8] sm:$0xff]
        %v3166 = vld [vmem:[#allocation21 + $0x7e0] sm:$0xff]
        %v3167 = vld [vmem:[#allocation21 + $0x7e8] sm:$0xff]
        %v3168 = vld [vmem:[#allocation21 + $0x7f0] sm:$0xff]
        %v3169 = vld [vmem:[#allocation21 + $0x7f8] sm:$0xff]
        %v3171 = vlaneseq
        %v3172 = vshrl.u32 %v3171, 7
        %v3173 = vsub.s32 0, %v3172
        %v3174 = vrot.slane %v2913, %v3173
        %v3175 = vlaneseq
        %v3176 = vshrl.u32 %v3175, 7
        %v3177 = vsub.s32 1, %v3176
        %v3178 = vrot.slane %v2913, %v3177
        %3181 = vmatprep.subr.mxu0 %v2915
        %3182 = vmatpush1.msra.mxu0 %v2914
        %3183 = vmatprep.subr.mxu0 %v2923
        %3184 = vmatpush1.msra.mxu0 %v2922
        %3185 = vmatprep.subr.mxu0 %v2931
        %3186 = vmatpush1.msra.mxu0 %v2930
        %3187 = vmatprep.subr.mxu0 %v2939
        %3188 = vmatpush1.msra.mxu0 %v2938
        %3189 = vmatprep.subr.mxu0 %v2947
        %3190 = vmatpush1.msra.mxu0 %v2946
        %3191 = vmatprep.subr.mxu0 %v2955
        %3192 = vmatpush1.msra.mxu0 %v2954
        %3193 = vmatprep.subr.mxu0 %v2963
        %3194 = vmatpush1.msra.mxu0 %v2962
        %3195 = vmatprep.subr.mxu0 %v2971
        %3196 = vmatpush1.msra.mxu0 %v2970
        %3197 = vmatprep.subr.mxu0 %v2979
        %3198 = vmatpush1.msra.mxu0 %v2978
        %3199 = vmatprep.subr.mxu0 %v2987
        %3200 = vmatpush1.msra.mxu0 %v2986
        %3201 = vmatprep.subr.mxu0 %v2995
        %3202 = vmatpush1.msra.mxu0 %v2994
        %3203 = vmatprep.subr.mxu0 %v3003
        %3204 = vmatpush1.msra.mxu0 %v3002
        %3205 = vmatprep.subr.mxu0 %v3011
        %3206 = vmatpush1.msra.mxu0 %v3010
        %3207 = vmatprep.subr.mxu0 %v3019
        %3208 = vmatpush1.msra.mxu0 %v3018
        %3209 = vmatprep.subr.mxu0 %v3027
        %3210 = vmatpush1.msra.mxu0 %v3026
        %3211 = vmatprep.subr.mxu0 %v3035
        %3212 = vmatpush1.msra.mxu0 %v3034
        %3213 = vmatprep.subr.mxu0 %v3043
        %3214 = vmatpush1.msra.mxu0 %v3042
        %3215 = vmatprep.subr.mxu0 %v3051
        %3216 = vmatpush1.msra.mxu0 %v3050
        %3217 = vmatprep.subr.mxu0 %v3059
        %3218 = vmatpush1.msra.mxu0 %v3058
        %3219 = vmatprep.subr.mxu0 %v3067
        %3220 = vmatpush1.msra.mxu0 %v3066
        %3221 = vmatprep.subr.mxu0 %v3075
        %3222 = vmatpush1.msra.mxu0 %v3074
        %3223 = vmatprep.subr.mxu0 %v3083
        %3224 = vmatpush1.msra.mxu0 %v3082
        %3225 = vmatprep.subr.mxu0 %v3091
        %3226 = vmatpush1.msra.mxu0 %v3090
        %3227 = vmatprep.subr.mxu0 %v3099
        %3228 = vmatpush1.msra.mxu0 %v3098
        %3229 = vmatprep.subr.mxu0 %v3107
        %3230 = vmatpush1.msra.mxu0 %v3106
        %3231 = vmatprep.subr.mxu0 %v3115
        %3232 = vmatpush1.msra.mxu0 %v3114
        %3233 = vmatprep.subr.mxu0 %v3123
        %3234 = vmatpush1.msra.mxu0 %v3122
        %3235 = vmatprep.subr.mxu0 %v3131
        %3236 = vmatpush1.msra.mxu0 %v3130
        %3237 = vmatprep.subr.mxu0 %v3139
        %3238 = vmatpush1.msra.mxu0 %v3138
        %3239 = vmatprep.subr.mxu0 %v3147
        %3240 = vmatpush1.msra.mxu0 %v3146
        %3241 = vmatprep.subr.mxu0 %v3155
        %3242 = vmatpush1.msra.mxu0 %v3154
        %3243 = vmatprep.subr.mxu0 %v3163
        %3244 = vmatpush1.msra.mxu0 %v3162
        %3245 = vmatprep.mubr.f32.mxu0 %v3178
        %3246 = vmatmul.mubr.f32.gmra.mrb[0].mxu0 %v3174
        %v3247 = vpop.f32.mrb[0].mxu0
        %v3248 = vadd.f32 0.0, %v3247
        %v3249 = vpop.f32.mrb[0].mxu0
        %v3250 = vadd.f32 0.0, %v3249
        %3251 = vdwg.mxu0
        %3252 = vmatprep.subr.mxu0 %v2917
        %3253 = vmatpush1.msra.mxu0 %v2916
        %3254 = vmatprep.subr.mxu0 %v2925
        %3255 = vmatpush1.msra.mxu0 %v2924
        %3256 = vmatprep.subr.mxu0 %v2933
        %3257 = vmatpush1.msra.mxu0 %v2932
        %3258 = vmatprep.subr.mxu0 %v2941
        %3259 = vmatpush1.msra.mxu0 %v2940
        %3260 = vmatprep.subr.mxu0 %v2949
        %3261 = vmatpush1.msra.mxu0 %v2948
        %3262 = vmatprep.subr.mxu0 %v2957
        %3263 = vmatpush1.msra.mxu0 %v2956
        %3264 = vmatprep.subr.mxu0 %v2965
        %3265 = vmatpush1.msra.mxu0 %v2964
        %3266 = vmatprep.subr.mxu0 %v2973
        %3267 = vmatpush1.msra.mxu0 %v2972
        %3268 = vmatprep.subr.mxu0 %v2981
        %3269 = vmatpush1.msra.mxu0 %v2980
        %3270 = vmatprep.subr.mxu0 %v2989
        %3271 = vmatpush1.msra.mxu0 %v2988
        %3272 = vmatprep.subr.mxu0 %v2997
        %3273 = vmatpush1.msra.mxu0 %v2996
        %3274 = vmatprep.subr.mxu0 %v3005
        %3275 = vmatpush1.msra.mxu0 %v3004
        %3276 = vmatprep.subr.mxu0 %v3013
        %3277 = vmatpush1.msra.mxu0 %v3012
        %3278 = vmatprep.subr.mxu0 %v3021
        %3279 = vmatpush1.msra.mxu0 %v3020
        %3280 = vmatprep.subr.mxu0 %v3029
        %3281 = vmatpush1.msra.mxu0 %v3028
        %3282 = vmatprep.subr.mxu0 %v3037
        %3283 = vmatpush1.msra.mxu0 %v3036
        %3284 = vmatprep.subr.mxu0 %v3045
        %3285 = vmatpush1.msra.mxu0 %v3044
        %3286 = vmatprep.subr.mxu0 %v3053
        %3287 = vmatpush1.msra.mxu0 %v3052
        %3288 = vmatprep.subr.mxu0 %v3061
        %3289 = vmatpush1.msra.mxu0 %v3060
        %3290 = vmatprep.subr.mxu0 %v3069
        %3291 = vmatpush1.msra.mxu0 %v3068
        %3292 = vmatprep.subr.mxu0 %v3077
        %3293 = vmatpush1.msra.mxu0 %v3076
        %3294 = vmatprep.subr.mxu0 %v3085
        %3295 = vmatpush1.msra.mxu0 %v3084
        %3296 = vmatprep.subr.mxu0 %v3093
        %3297 = vmatpush1.msra.mxu0 %v3092
        %3298 = vmatprep.subr.mxu0 %v3101
        %3299 = vmatpush1.msra.mxu0 %v3100
        %3300 = vmatprep.subr.mxu0 %v3109
        %3301 = vmatpush1.msra.mxu0 %v3108
        %3302 = vmatprep.subr.mxu0 %v3117
        %3303 = vmatpush1.msra.mxu0 %v3116
        %3304 = vmatprep.subr.mxu0 %v3125
        %3305 = vmatpush1.msra.mxu0 %v3124
        %3306 = vmatprep.subr.mxu0 %v3133
        %3307 = vmatpush1.msra.mxu0 %v3132
        %3308 = vmatprep.subr.mxu0 %v3141
        %3309 = vmatpush1.msra.mxu0 %v3140
        %3310 = vmatprep.subr.mxu0 %v3149
        %3311 = vmatpush1.msra.mxu0 %v3148
        %3312 = vmatprep.subr.mxu0 %v3157
        %3313 = vmatpush1.msra.mxu0 %v3156
        %3314 = vmatprep.subr.mxu0 %v3165
        %3315 = vmatpush1.msra.mxu0 %v3164
        %3316 = vmatprep.mubr.f32.mxu0 %v3178
        %3317 = vmatmul.mubr.f32.gmra.mrb[0].mxu0 %v3174
        %v3318 = vpop.f32.mrb[0].mxu0
        %v3319 = vadd.f32 0.0, %v3318
        %v3320 = vpop.f32.mrb[0].mxu0
        %v3321 = vadd.f32 0.0, %v3320
        %3322 = vdwg.mxu0
        %3323 = vmatprep.subr.mxu0 %v2919
        %3324 = vmatpush1.msra.mxu0 %v2918
        %3325 = vmatprep.subr.mxu0 %v2927
        %3326 = vmatpush1.msra.mxu0 %v2926
        %3327 = vmatprep.subr.mxu0 %v2935
        %3328 = vmatpush1.msra.mxu0 %v2934
        %3329 = vmatprep.subr.mxu0 %v2943
        %3330 = vmatpush1.msra.mxu0 %v2942
        %3331 = vmatprep.subr.mxu0 %v2951
        %3332 = vmatpush1.msra.mxu0 %v2950
        %3333 = vmatprep.subr.mxu0 %v2959
        %3334 = vmatpush1.msra.mxu0 %v2958
        %3335 = vmatprep.subr.mxu0 %v2967
        %3336 = vmatpush1.msra.mxu0 %v2966
        %3337 = vmatprep.subr.mxu0 %v2975
        %3338 = vmatpush1.msra.mxu0 %v2974
        %3339 = vmatprep.subr.mxu0 %v2983
        %3340 = vmatpush1.msra.mxu0 %v2982
        %3341 = vmatprep.subr.mxu0 %v2991
        %3342 = vmatpush1.msra.mxu0 %v2990
        %3343 = vmatprep.subr.mxu0 %v2999
        %3344 = vmatpush1.msra.mxu0 %v2998
        %3345 = vmatprep.subr.mxu0 %v3007
        %3346 = vmatpush1.msra.mxu0 %v3006
        %3347 = vmatprep.subr.mxu0 %v3015
        %3348 = vmatpush1.msra.mxu0 %v3014
        %3349 = vmatprep.subr.mxu0 %v3023
        %3350 = vmatpush1.msra.mxu0 %v3022
        %3351 = vmatprep.subr.mxu0 %v3031
        %3352 = vmatpush1.msra.mxu0 %v3030
        %3353 = vmatprep.subr.mxu0 %v3039
        %3354 = vmatpush1.msra.mxu0 %v3038
        %3355 = vmatprep.subr.mxu0 %v3047
        %3356 = vmatpush1.msra.mxu0 %v3046
        %3357 = vmatprep.subr.mxu0 %v3055
        %3358 = vmatpush1.msra.mxu0 %v3054
        %3359 = vmatprep.subr.mxu0 %v3063
        %3360 = vmatpush1.msra.mxu0 %v3062
        %3361 = vmatprep.subr.mxu0 %v3071
        %3362 = vmatpush1.msra.mxu0 %v3070
        %3363 = vmatprep.subr.mxu0 %v3079
        %3364 = vmatpush1.msra.mxu0 %v3078
        %3365 = vmatprep.subr.mxu0 %v3087
        %3366 = vmatpush1.msra.mxu0 %v3086
        %3367 = vmatprep.subr.mxu0 %v3095
        %3368 = vmatpush1.msra.mxu0 %v3094
        %3369 = vmatprep.subr.mxu0 %v3103
        %3370 = vmatpush1.msra.mxu0 %v3102
        %3371 = vmatprep.subr.mxu0 %v3111
        %3372 = vmatpush1.msra.mxu0 %v3110
        %3373 = vmatprep.subr.mxu0 %v3119
        %3374 = vmatpush1.msra.mxu0 %v3118
        %3375 = vmatprep.subr.mxu0 %v3127
        %3376 = vmatpush1.msra.mxu0 %v3126
        %3377 = vmatprep.subr.mxu0 %v3135
        %3378 = vmatpush1.msra.mxu0 %v3134
        %3379 = vmatprep.subr.mxu0 %v3143
        %3380 = vmatpush1.msra.mxu0 %v3142
        %3381 = vmatprep.subr.mxu0 %v3151
        %3382 = vmatpush1.msra.mxu0 %v3150
        %3383 = vmatprep.subr.mxu0 %v3159
        %3384 = vmatpush1.msra.mxu0 %v3158
        %3385 = vmatprep.subr.mxu0 %v3167
        %3386 = vmatpush1.msra.mxu0 %v3166
        %3387 = vmatprep.mubr.f32.mxu0 %v3178
        %3388 = vmatmul.mubr.f32.gmra.mrb[0].mxu0 %v3174
        %v3389 = vpop.f32.mrb[0].mxu0
        %v3390 = vadd.f32 0.0, %v3389
        %v3391 = vpop.f32.mrb[0].mxu0
        %v3392 = vadd.f32 0.0, %v3391
        %3393 = vdwg.mxu0
        %3394 = vmatprep.subr.mxu0 %v2921
        %3395 = vmatpush1.msra.mxu0 %v2920
        %3396 = vmatprep.subr.mxu0 %v2929
        %3397 = vmatpush1.msra.mxu0 %v2928
        %3398 = vmatprep.subr.mxu0 %v2937
        %3399 = vmatpush1.msra.mxu0 %v2936
        %3400 = vmatprep.subr.mxu0 %v2945
        %3401 = vmatpush1.msra.mxu0 %v2944
        %3402 = vmatprep.subr.mxu0 %v2953
        %3403 = vmatpush1.msra.mxu0 %v2952
        %3404 = vmatprep.subr.mxu0 %v2961
        %3405 = vmatpush1.msra.mxu0 %v2960
        %3406 = vmatprep.subr.mxu0 %v2969
        %3407 = vmatpush1.msra.mxu0 %v2968
        %3408 = vmatprep.subr.mxu0 %v2977
        %3409 = vmatpush1.msra.mxu0 %v2976
        %3410 = vmatprep.subr.mxu0 %v2985
        %3411 = vmatpush1.msra.mxu0 %v2984
        %3412 = vmatprep.subr.mxu0 %v2993
        %3413 = vmatpush1.msra.mxu0 %v2992
        %3414 = vmatprep.subr.mxu0 %v3001
        %3415 = vmatpush1.msra.mxu0 %v3000
        %3416 = vmatprep.subr.mxu0 %v3009
        %3417 = vmatpush1.msra.mxu0 %v3008
        %3418 = vmatprep.subr.mxu0 %v3017
        %3419 = vmatpush1.msra.mxu0 %v3016
        %3420 = vmatprep.subr.mxu0 %v3025
        %3421 = vmatpush1.msra.mxu0 %v3024
        %3422 = vmatprep.subr.mxu0 %v3033
        %3423 = vmatpush1.msra.mxu0 %v3032
        %3424 = vmatprep.subr.mxu0 %v3041
        %3425 = vmatpush1.msra.mxu0 %v3040
        %3426 = vmatprep.subr.mxu0 %v3049
        %3427 = vmatpush1.msra.mxu0 %v3048
        %3428 = vmatprep.subr.mxu0 %v3057
        %3429 = vmatpush1.msra.mxu0 %v3056
        %3430 = vmatprep.subr.mxu0 %v3065
        %3431 = vmatpush1.msra.mxu0 %v3064
        %3432 = vmatprep.subr.mxu0 %v3073
        %3433 = vmatpush1.msra.mxu0 %v3072
        %3434 = vmatprep.subr.mxu0 %v3081
        %3435 = vmatpush1.msra.mxu0 %v3080
        %3436 = vmatprep.subr.mxu0 %v3089
        %3437 = vmatpush1.msra.mxu0 %v3088
        %3438 = vmatprep.subr.mxu0 %v3097
        %3439 = vmatpush1.msra.mxu0 %v3096
        %3440 = vmatprep.subr.mxu0 %v3105
        %3441 = vmatpush1.msra.mxu0 %v3104
        %3442 = vmatprep.subr.mxu0 %v3113
        %3443 = vmatpush1.msra.mxu0 %v3112
        %3444 = vmatprep.subr.mxu0 %v3121
        %3445 = vmatpush1.msra.mxu0 %v3120
        %3446 = vmatprep.subr.mxu0 %v3129
        %3447 = vmatpush1.msra.mxu0 %v3128
        %3448 = vmatprep.subr.mxu0 %v3137
        %3449 = vmatpush1.msra.mxu0 %v3136
        %3450 = vmatprep.subr.mxu0 %v3145
        %3451 = vmatpush1.msra.mxu0 %v3144
        %3452 = vmatprep.subr.mxu0 %v3153
        %3453 = vmatpush1.msra.mxu0 %v3152
        %3454 = vmatprep.subr.mxu0 %v3161
        %3455 = vmatpush1.msra.mxu0 %v3160
        %3456 = vmatprep.subr.mxu0 %v3169
        %3457 = vmatpush1.msra.mxu0 %v3168
        %3458 = vmatprep.mubr.f32.mxu0 %v3178
        %3459 = vmatmul.mubr.f32.gmra.mrb[0].mxu0 %v3174
        %v3460 = vpop.f32.mrb[0].mxu0
        %v3461 = vadd.f32 0.0, %v3460
        %v3462 = vpop.f32.mrb[0].mxu0
        %v3463 = vadd.f32 0.0, %v3462
        %3464 = vdwg.mxu0
        %v3465 = vmul.f32 %v3248, %v2390
        %v3466 = vmul.f32 %v3250, %v2392
        %v3467 = vmul.f32 %v3319, %v2461
        %v3468 = vmul.f32 %v3321, %v2463
        %v3469 = vmul.f32 %v3390, %v2532
        %v3470 = vmul.f32 %v3392, %v2534
        %v3471 = vmul.f32 %v3461, %v2603
        %v3472 = vmul.f32 %v3463, %v2605
        %v3473 = vld [vmem:[%s1086] sm:$0x1]
        %s3474 = sld [smem:[#allocation15]]
        %v3475 = vstv %s3474
        %v3476 = vmul.f32 %v3473, %v3475
        %v3477 = vld [vmem:[#allocation33] sm:$0xff]
        %v3478 = vld [vmem:[#allocation33 + $0x8] sm:$0xff]
        %v3479 = vld [vmem:[#allocation33 + $0x10] sm:$0xff]
        %v3480 = vld [vmem:[#allocation33 + $0x18] sm:$0xff]
        %v3481 = vld [vmem:[#allocation33 + $0x20] sm:$0xff]
        %v3482 = vld [vmem:[#allocation33 + $0x28] sm:$0xff]
        %v3483 = vld [vmem:[#allocation33 + $0x30] sm:$0xff]
        %v3484 = vld [vmem:[#allocation33 + $0x38] sm:$0xff]
        %v3485 = vld [vmem:[#allocation33 + $0x40] sm:$0xff]
        %v3486 = vld [vmem:[#allocation33 + $0x48] sm:$0xff]
        %v3487 = vld [vmem:[#allocation33 + $0x50] sm:$0xff]
        %v3488 = vld [vmem:[#allocation33 + $0x58] sm:$0xff]
        %v3489 = vld [vmem:[#allocation33 + $0x60] sm:$0xff]
        %v3490 = vld [vmem:[#allocation33 + $0x68] sm:$0xff]
        %v3491 = vld [vmem:[#allocation33 + $0x70] sm:$0xff]
        %v3492 = vld [vmem:[#allocation33 + $0x78] sm:$0xff]
        %v3493 = vld [vmem:[#allocation33 + $0x80] sm:$0xff]
        %v3494 = vld [vmem:[#allocation33 + $0x88] sm:$0xff]
        %v3495 = vld [vmem:[#allocation33 + $0x90] sm:$0xff]
        %v3496 = vld [vmem:[#allocation33 + $0x98] sm:$0xff]
        %v3497 = vld [vmem:[#allocation33 + $0xa0] sm:$0xff]
        %v3498 = vld [vmem:[#allocation33 + $0xa8] sm:$0xff]
        %v3499 = vld [vmem:[#allocation33 + $0xb0] sm:$0xff]
        %v3500 = vld [vmem:[#allocation33 + $0xb8] sm:$0xff]
        %v3501 = vld [vmem:[#allocation33 + $0xc0] sm:$0xff]
        %v3502 = vld [vmem:[#allocation33 + $0xc8] sm:$0xff]
        %v3503 = vld [vmem:[#allocation33 + $0xd0] sm:$0xff]
        %v3504 = vld [vmem:[#allocation33 + $0xd8] sm:$0xff]
        %v3505 = vld [vmem:[#allocation33 + $0xe0] sm:$0xff]
        %v3506 = vld [vmem:[#allocation33 + $0xe8] sm:$0xff]
        %v3507 = vld [vmem:[#allocation33 + $0xf0] sm:$0xff]
        %v3508 = vld [vmem:[#allocation33 + $0xf8] sm:$0xff]
        %v3509 = vld [vmem:[#allocation33 + $0x100] sm:$0xff]
        %v3510 = vld [vmem:[#allocation33 + $0x108] sm:$0xff]
        %v3511 = vld [vmem:[#allocation33 + $0x110] sm:$0xff]
        %v3512 = vld [vmem:[#allocation33 + $0x118] sm:$0xff]
        %v3513 = vld [vmem:[#allocation33 + $0x120] sm:$0xff]
        %v3514 = vld [vmem:[#allocation33 + $0x128] sm:$0xff]
        %v3515 = vld [vmem:[#allocation33 + $0x130] sm:$0xff]
        %v3516 = vld [vmem:[#allocation33 + $0x138] sm:$0xff]
        %v3517 = vld [vmem:[#allocation33 + $0x140] sm:$0xff]
        %v3518 = vld [vmem:[#allocation33 + $0x148] sm:$0xff]
        %v3519 = vld [vmem:[#allocation33 + $0x150] sm:$0xff]
        %v3520 = vld [vmem:[#allocation33 + $0x158] sm:$0xff]
        %v3521 = vld [vmem:[#allocation33 + $0x160] sm:$0xff]
        %v3522 = vld [vmem:[#allocation33 + $0x168] sm:$0xff]
        %v3523 = vld [vmem:[#allocation33 + $0x170] sm:$0xff]
        %v3524 = vld [vmem:[#allocation33 + $0x178] sm:$0xff]
        %v3525 = vld [vmem:[#allocation33 + $0x180] sm:$0xff]
        %v3526 = vld [vmem:[#allocation33 + $0x188] sm:$0xff]
        %v3527 = vld [vmem:[#allocation33 + $0x190] sm:$0xff]
        %v3528 = vld [vmem:[#allocation33 + $0x198] sm:$0xff]
        %v3529 = vld [vmem:[#allocation33 + $0x1a0] sm:$0xff]
        %v3530 = vld [vmem:[#allocation33 + $0x1a8] sm:$0xff]
        %v3531 = vld [vmem:[#allocation33 + $0x1b0] sm:$0xff]
        %v3532 = vld [vmem:[#allocation33 + $0x1b8] sm:$0xff]
        %v3533 = vld [vmem:[#allocation33 + $0x1c0] sm:$0xff]
        %v3534 = vld [vmem:[#allocation33 + $0x1c8] sm:$0xff]
        %v3535 = vld [vmem:[#allocation33 + $0x1d0] sm:$0xff]
        %v3536 = vld [vmem:[#allocation33 + $0x1d8] sm:$0xff]
        %v3537 = vld [vmem:[#allocation33 + $0x1e0] sm:$0xff]
        %v3538 = vld [vmem:[#allocation33 + $0x1e8] sm:$0xff]
        %v3539 = vld [vmem:[#allocation33 + $0x1f0] sm:$0xff]
        %v3540 = vld [vmem:[#allocation33 + $0x1f8] sm:$0xff]
        %vm3541 = vcmask 523264
        %v3543 = vsel %vm3541, %v3476, 0
        %3545 = vmatprep.subr.mxu0 %v3478
        %3546 = vmatpush1.msra.mxu0 %v3477
        %3547 = vmatprep.subr.mxu0 %v3486
        %3548 = vmatpush1.msra.mxu0 %v3485
        %3549 = vmatprep.subr.mxu0 %v3494
        %3550 = vmatpush1.msra.mxu0 %v3493
        %3551 = vmatprep.subr.mxu0 %v3502
        %3552 = vmatpush1.msra.mxu0 %v3501
        %3553 = vmatprep.subr.mxu0 %v3510
        %3554 = vmatpush1.msra.mxu0 %v3509
        %3555 = vmatprep.subr.mxu0 %v3518
        %3556 = vmatpush1.msra.mxu0 %v3517
        %3557 = vmatprep.subr.mxu0 %v3526
        %3558 = vmatpush1.msra.mxu0 %v3525
        %3559 = vmatprep.subr.mxu0 %v3534
        %3560 = vmatpush1.msra.mxu0 %v3533
        %3561 = vmatprep.subr.mxu0 0.0
        %3562 = vmatpush1.msra.mxu0 0.0
        %3563 = vmatprep.subr.mxu0 0.0
        %3564 = vmatpush1.msra.mxu0 0.0
        %3565 = vmatprep.subr.mxu0 0.0
        %3566 = vmatpush1.msra.mxu0 0.0
        %3567 = vmatprep.subr.mxu0 0.0
        %3568 = vmatpush1.msra.mxu0 0.0
        %3569 = vmatprep.subr.mxu0 0.0
        %3570 = vmatpush1.msra.mxu0 0.0
        %3571 = vmatprep.subr.mxu0 0.0
        %3572 = vmatpush1.msra.mxu0 0.0
        %3573 = vmatprep.subr.mxu0 0.0
        %3574 = vmatpush1.msra.mxu0 0.0
        %3575 = vmatprep.subr.mxu0 0.0
        %3576 = vmatpush1.msra.mxu0 0.0
        %3577 = vmatprep.subr.mxu0 0.0
        %3578 = vmatpush1.msra.mxu0 0.0
        %3579 = vmatprep.subr.mxu0 0.0
        %3580 = vmatpush1.msra.mxu0 0.0
        %3581 = vmatprep.subr.mxu0 0.0
        %3582 = vmatpush1.msra.mxu0 0.0
        %3583 = vmatprep.subr.mxu0 0.0
        %3584 = vmatpush1.msra.mxu0 0.0
        %3585 = vmatprep.subr.mxu0 0.0
        %3586 = vmatpush1.msra.mxu0 0.0
        %3587 = vmatprep.subr.mxu0 0.0
        %3588 = vmatpush1.msra.mxu0 0.0
        %3589 = vmatprep.subr.mxu0 0.0
        %3590 = vmatpush1.msra.mxu0 0.0
        %3591 = vmatprep.subr.mxu0 0.0
        %3592 = vmatpush1.msra.mxu0 0.0
        %3593 = vmatprep.subr.mxu0 0.0
        %3594 = vmatpush1.msra.mxu0 0.0
        %3595 = vmatprep.subr.mxu0 0.0
        %3596 = vmatpush1.msra.mxu0 0.0
        %3597 = vmatprep.subr.mxu0 0.0
        %3598 = vmatpush1.msra.mxu0 0.0
        %3599 = vmatprep.subr.mxu0 0.0
        %3600 = vmatpush1.msra.mxu0 0.0
        %3601 = vmatprep.subr.mxu0 0.0
        %3602 = vmatpush1.msra.mxu0 0.0
        %3603 = vmatprep.subr.mxu0 0.0
        %3604 = vmatpush1.msra.mxu0 0.0
        %3605 = vmatprep.subr.mxu0 0.0
        %3606 = vmatpush1.msra.mxu0 0.0
        %3607 = vmatprep.subr.mxu0 0.0
        %3608 = vmatpush1.msra.mxu0 0.0
        %3609 = vmatprep.mubr.f32.mxu0 0.0
        %3610 = vmatmul.mubr.f32.gmra.mrb[0].mxu0 %v3543
        %v3611 = vpop.f32.mrb[0].mxu0
        %v3612 = vadd.f32 0.0, %v3611
        %v3613 = vpop.f32.mrb[0].mxu0
        %v3614 = vadd.f32 0.0, %v3613
        %3615 = vdwg.mxu0
        %3616 = vmatprep.subr.mxu0 %v3480
        %3617 = vmatpush1.msra.mxu0 %v3479
        %3618 = vmatprep.subr.mxu0 %v3488
        %3619 = vmatpush1.msra.mxu0 %v3487
        %3620 = vmatprep.subr.mxu0 %v3496
        %3621 = vmatpush1.msra.mxu0 %v3495
        %3622 = vmatprep.subr.mxu0 %v3504
        %3623 = vmatpush1.msra.mxu0 %v3503
        %3624 = vmatprep.subr.mxu0 %v3512
        %3625 = vmatpush1.msra.mxu0 %v3511
        %3626 = vmatprep.subr.mxu0 %v3520
        %3627 = vmatpush1.msra.mxu0 %v3519
        %3628 = vmatprep.subr.mxu0 %v3528
        %3629 = vmatpush1.msra.mxu0 %v3527
        %3630 = vmatprep.subr.mxu0 %v3536
        %3631 = vmatpush1.msra.mxu0 %v3535
        %3632 = vmatprep.subr.mxu0 0.0
        %3633 = vmatpush1.msra.mxu0 0.0
        %3634 = vmatprep.subr.mxu0 0.0
        %3635 = vmatpush1.msra.mxu0 0.0
        %3636 = vmatprep.subr.mxu0 0.0
        %3637 = vmatpush1.msra.mxu0 0.0
        %3638 = vmatprep.subr.mxu0 0.0
        %3639 = vmatpush1.msra.mxu0 0.0
        %3640 = vmatprep.subr.mxu0 0.0
        %3641 = vmatpush1.msra.mxu0 0.0
        %3642 = vmatprep.subr.mxu0 0.0
        %3643 = vmatpush1.msra.mxu0 0.0
        %3644 = vmatprep.subr.mxu0 0.0
        %3645 = vmatpush1.msra.mxu0 0.0
        %3646 = vmatprep.subr.mxu0 0.0
        %3647 = vmatpush1.msra.mxu0 0.0
        %3648 = vmatprep.subr.mxu0 0.0
        %3649 = vmatpush1.msra.mxu0 0.0
        %3650 = vmatprep.subr.mxu0 0.0
        %3651 = vmatpush1.msra.mxu0 0.0
        %3652 = vmatprep.subr.mxu0 0.0
        %3653 = vmatpush1.msra.mxu0 0.0
        %3654 = vmatprep.subr.mxu0 0.0
        %3655 = vmatpush1.msra.mxu0 0.0
        %3656 = vmatprep.subr.mxu0 0.0
        %3657 = vmatpush1.msra.mxu0 0.0
        %3658 = vmatprep.subr.mxu0 0.0
        %3659 = vmatpush1.msra.mxu0 0.0
        %3660 = vmatprep.subr.mxu0 0.0
        %3661 = vmatpush1.msra.mxu0 0.0
        %3662 = vmatprep.subr.mxu0 0.0
        %3663 = vmatpush1.msra.mxu0 0.0
        %3664 = vmatprep.subr.mxu0 0.0
        %3665 = vmatpush1.msra.mxu0 0.0
        %3666 = vmatprep.subr.mxu0 0.0
        %3667 = vmatpush1.msra.mxu0 0.0
        %3668 = vmatprep.subr.mxu0 0.0
        %3669 = vmatpush1.msra.mxu0 0.0
        %3670 = vmatprep.subr.mxu0 0.0
        %3671 = vmatpush1.msra.mxu0 0.0
        %3672 = vmatprep.subr.mxu0 0.0
        %3673 = vmatpush1.msra.mxu0 0.0
        %3674 = vmatprep.subr.mxu0 0.0
        %3675 = vmatpush1.msra.mxu0 0.0
        %3676 = vmatprep.subr.mxu0 0.0
        %3677 = vmatpush1.msra.mxu0 0.0
        %3678 = vmatprep.subr.mxu0 0.0
        %3679 = vmatpush1.msra.mxu0 0.0
        %3680 = vmatprep.mubr.f32.mxu0 0.0
        %3681 = vmatmul.mubr.f32.gmra.mrb[0].mxu0 %v3543
        %v3682 = vpop.f32.mrb[0].mxu0
        %v3683 = vadd.f32 0.0, %v3682
        %v3684 = vpop.f32.mrb[0].mxu0
        %v3685 = vadd.f32 0.0, %v3684
        %3686 = vdwg.mxu0
        %3687 = vmatprep.subr.mxu0 %v3482
        %3688 = vmatpush1.msra.mxu0 %v3481
        %3689 = vmatprep.subr.mxu0 %v3490
        %3690 = vmatpush1.msra.mxu0 %v3489
        %3691 = vmatprep.subr.mxu0 %v3498
        %3692 = vmatpush1.msra.mxu0 %v3497
        %3693 = vmatprep.subr.mxu0 %v3506
        %3694 = vmatpush1.msra.mxu0 %v3505
        %3695 = vmatprep.subr.mxu0 %v3514
        %3696 = vmatpush1.msra.mxu0 %v3513
        %3697 = vmatprep.subr.mxu0 %v3522
        %3698 = vmatpush1.msra.mxu0 %v3521
        %3699 = vmatprep.subr.mxu0 %v3530
        %3700 = vmatpush1.msra.mxu0 %v3529
        %3701 = vmatprep.subr.mxu0 %v3538
        %3702 = vmatpush1.msra.mxu0 %v3537
        %3703 = vmatprep.subr.mxu0 0.0
        %3704 = vmatpush1.msra.mxu0 0.0
        %3705 = vmatprep.subr.mxu0 0.0
        %3706 = vmatpush1.msra.mxu0 0.0
        %3707 = vmatprep.subr.mxu0 0.0
        %3708 = vmatpush1.msra.mxu0 0.0
        %3709 = vmatprep.subr.mxu0 0.0
        %3710 = vmatpush1.msra.mxu0 0.0
        %3711 = vmatprep.subr.mxu0 0.0
        %3712 = vmatpush1.msra.mxu0 0.0
        %3713 = vmatprep.subr.mxu0 0.0
        %3714 = vmatpush1.msra.mxu0 0.0
        %3715 = vmatprep.subr.mxu0 0.0
        %3716 = vmatpush1.msra.mxu0 0.0
        %3717 = vmatprep.subr.mxu0 0.0
        %3718 = vmatpush1.msra.mxu0 0.0
        %3719 = vmatprep.subr.mxu0 0.0
        %3720 = vmatpush1.msra.mxu0 0.0
        %3721 = vmatprep.subr.mxu0 0.0
        %3722 = vmatpush1.msra.mxu0 0.0
        %3723 = vmatprep.subr.mxu0 0.0
        %3724 = vmatpush1.msra.mxu0 0.0
        %3725 = vmatprep.subr.mxu0 0.0
        %3726 = vmatpush1.msra.mxu0 0.0
        %3727 = vmatprep.subr.mxu0 0.0
        %3728 = vmatpush1.msra.mxu0 0.0
        %3729 = vmatprep.subr.mxu0 0.0
        %3730 = vmatpush1.msra.mxu0 0.0
        %3731 = vmatprep.subr.mxu0 0.0
        %3732 = vmatpush1.msra.mxu0 0.0
        %3733 = vmatprep.subr.mxu0 0.0
        %3734 = vmatpush1.msra.mxu0 0.0
        %3735 = vmatprep.subr.mxu0 0.0
        %3736 = vmatpush1.msra.mxu0 0.0
        %3737 = vmatprep.subr.mxu0 0.0
        %3738 = vmatpush1.msra.mxu0 0.0
        %3739 = vmatprep.subr.mxu0 0.0
        %3740 = vmatpush1.msra.mxu0 0.0
        %3741 = vmatprep.subr.mxu0 0.0
        %3742 = vmatpush1.msra.mxu0 0.0
        %3743 = vmatprep.subr.mxu0 0.0
        %3744 = vmatpush1.msra.mxu0 0.0
        %3745 = vmatprep.subr.mxu0 0.0
        %3746 = vmatpush1.msra.mxu0 0.0
        %3747 = vmatprep.subr.mxu0 0.0
        %3748 = vmatpush1.msra.mxu0 0.0
        %3749 = vmatprep.subr.mxu0 0.0
        %3750 = vmatpush1.msra.mxu0 0.0
        %3751 = vmatprep.mubr.f32.mxu0 0.0
        %3752 = vmatmul.mubr.f32.gmra.mrb[0].mxu0 %v3543
        %v3753 = vpop.f32.mrb[0].mxu0
        %v3754 = vadd.f32 0.0, %v3753
        %v3755 = vpop.f32.mrb[0].mxu0
        %v3756 = vadd.f32 0.0, %v3755
        %3757 = vdwg.mxu0
        %3758 = vmatprep.subr.mxu0 %v3484
        %3759 = vmatpush1.msra.mxu0 %v3483
        %3760 = vmatprep.subr.mxu0 %v3492
        %3761 = vmatpush1.msra.mxu0 %v3491
        %3762 = vmatprep.subr.mxu0 %v3500
        %3763 = vmatpush1.msra.mxu0 %v3499
        %3764 = vmatprep.subr.mxu0 %v3508
        %3765 = vmatpush1.msra.mxu0 %v3507
        %3766 = vmatprep.subr.mxu0 %v3516
        %3767 = vmatpush1.msra.mxu0 %v3515
        %3768 = vmatprep.subr.mxu0 %v3524
        %3769 = vmatpush1.msra.mxu0 %v3523
        %3770 = vmatprep.subr.mxu0 %v3532
        %3771 = vmatpush1.msra.mxu0 %v3531
        %3772 = vmatprep.subr.mxu0 %v3540
        %3773 = vmatpush1.msra.mxu0 %v3539
        %3774 = vmatprep.subr.mxu0 0.0
        %3775 = vmatpush1.msra.mxu0 0.0
        %3776 = vmatprep.subr.mxu0 0.0
        %3777 = vmatpush1.msra.mxu0 0.0
        %3778 = vmatprep.subr.mxu0 0.0
        %3779 = vmatpush1.msra.mxu0 0.0
        %3780 = vmatprep.subr.mxu0 0.0
        %3781 = vmatpush1.msra.mxu0 0.0
        %3782 = vmatprep.subr.mxu0 0.0
        %3783 = vmatpush1.msra.mxu0 0.0
        %3784 = vmatprep.subr.mxu0 0.0
        %3785 = vmatpush1.msra.mxu0 0.0
        %3786 = vmatprep.subr.mxu0 0.0
        %3787 = vmatpush1.msra.mxu0 0.0
        %3788 = vmatprep.subr.mxu0 0.0
        %3789 = vmatpush1.msra.mxu0 0.0
        %3790 = vmatprep.subr.mxu0 0.0
        %3791 = vmatpush1.msra.mxu0 0.0
        %3792 = vmatprep.subr.mxu0 0.0
        %3793 = vmatpush1.msra.mxu0 0.0
        %3794 = vmatprep.subr.mxu0 0.0
        %3795 = vmatpush1.msra.mxu0 0.0
        %3796 = vmatprep.subr.mxu0 0.0
        %3797 = vmatpush1.msra.mxu0 0.0
        %3798 = vmatprep.subr.mxu0 0.0
        %3799 = vmatpush1.msra.mxu0 0.0
        %3800 = vmatprep.subr.mxu0 0.0
        %3801 = vmatpush1.msra.mxu0 0.0
        %3802 = vmatprep.subr.mxu0 0.0
        %3803 = vmatpush1.msra.mxu0 0.0
        %3804 = vmatprep.subr.mxu0 0.0
        %3805 = vmatpush1.msra.mxu0 0.0
        %3806 = vmatprep.subr.mxu0 0.0
        %3807 = vmatpush1.msra.mxu0 0.0
        %3808 = vmatprep.subr.mxu0 0.0
        %3809 = vmatpush1.msra.mxu0 0.0
        %3810 = vmatprep.subr.mxu0 0.0
        %3811 = vmatpush1.msra.mxu0 0.0
        %3812 = vmatprep.subr.mxu0 0.0
        %3813 = vmatpush1.msra.mxu0 0.0
        %3814 = vmatprep.subr.mxu0 0.0
        %3815 = vmatpush1.msra.mxu0 0.0
        %3816 = vmatprep.subr.mxu0 0.0
        %3817 = vmatpush1.msra.mxu0 0.0
        %3818 = vmatprep.subr.mxu0 0.0
        %3819 = vmatpush1.msra.mxu0 0.0
        %3820 = vmatprep.subr.mxu0 0.0
        %3821 = vmatpush1.msra.mxu0 0.0
        %3822 = vmatprep.mubr.f32.mxu0 0.0
        %3823 = vmatmul.mubr.f32.gmra.mrb[0].mxu0 %v3543
        %v3824 = vpop.f32.mrb[0].mxu0
        %v3825 = vadd.f32 0.0, %v3824
        %v3826 = vpop.f32.mrb[0].mxu0
        %v3827 = vadd.f32 0.0, %v3826
        %3828 = vdwg.mxu0
        %v3829 = vadd.f32 %v3465, %v3612
        %v3830 = vadd.f32 %v3466, %v3614
        %v3831 = vadd.f32 %v3467, %v3683
        %v3832 = vadd.f32 %v3468, %v3685
        %v3833 = vadd.f32 %v3469, %v3754
        %v3834 = vadd.f32 %v3470, %v3756
        %v3835 = vadd.f32 %v3471, %v3825
        %v3836 = vadd.f32 %v3472, %v3827
        %v3837 = vld [vmem:[#allocation34] sm:$0xff]
        %v3839 = vlaneseq
        %v3840 = vshrl.u32 %v3839, 7
        %v3841 = vsub.s32 0, %v3840
        %v3842 = vrot.slane %v3837, %v3841
        %v3843 = vlaneseq
        %v3844 = vshrl.u32 %v3843, 7
        %v3845 = vsub.s32 1, %v3844
        %v3846 = vrot.slane %v3837, %v3845
        %v3847 = vlaneseq
        %v3848 = vshrl.u32 %v3847, 7
        %v3849 = vsub.s32 2, %v3848
        %v3850 = vrot.slane %v3837, %v3849
        %v3851 = vlaneseq
        %v3852 = vshrl.u32 %v3851, 7
        %v3853 = vsub.s32 3, %v3852
        %v3854 = vrot.slane %v3837, %v3853
        %v3855 = vlaneseq
        %v3856 = vshrl.u32 %v3855, 7
        %v3857 = vsub.s32 4, %v3856
        %v3858 = vrot.slane %v3837, %v3857
        %v3859 = vlaneseq
        %v3860 = vshrl.u32 %v3859, 7
        %v3861 = vsub.s32 5, %v3860
        %v3862 = vrot.slane %v3837, %v3861
        %v3863 = vlaneseq
        %v3864 = vshrl.u32 %v3863, 7
        %v3865 = vsub.s32 6, %v3864
        %v3866 = vrot.slane %v3837, %v3865
        %v3867 = vlaneseq
        %v3868 = vshrl.u32 %v3867, 7
        %v3869 = vsub.s32 7, %v3868
        %v3870 = vrot.slane %v3837, %v3869
        %v3879 = vadd.f32 %v3829, %v3842
        %v3880 = vadd.f32 %v3830, %v3846
        %v3881 = vadd.f32 %v3831, %v3850
        %v3882 = vadd.f32 %v3832, %v3854
        %v3883 = vadd.f32 %v3833, %v3858
        %v3884 = vadd.f32 %v3834, %v3862
        %v3885 = vadd.f32 %v3835, %v3866
        %v3886 = vadd.f32 %v3836, %v3870
        %vm3887 = vcmp.ge.f32.partialorder %v3879, 0.0
        %vm3888 = vcmp.ge.f32.partialorder %v3880, 0.0
        %vm3889 = vcmp.ge.f32.partialorder %v3881, 0.0
        %vm3890 = vcmp.ge.f32.partialorder %v3882, 0.0
        %vm3891 = vcmp.ge.f32.partialorder %v3883, 0.0
        %vm3892 = vcmp.ge.f32.partialorder %v3884, 0.0
        %vm3893 = vcmp.ge.f32.partialorder %v3885, 0.0
        %vm3894 = vcmp.ge.f32.partialorder %v3886, 0.0
        %v3895 = vmul.f32 %v3879, 0.2
        %v3896 = vmul.f32 %v3880, 0.2
        %v3897 = vmul.f32 %v3881, 0.2
        %v3898 = vmul.f32 %v3882, 0.2
        %v3899 = vmul.f32 %v3883, 0.2
        %v3900 = vmul.f32 %v3884, 0.2
        %v3901 = vmul.f32 %v3885, 0.2
        %v3902 = vmul.f32 %v3886, 0.2
        %v3903 = vsel %vm3887, %v3879, %v3895
        %v3904 = vsel %vm3888, %v3880, %v3896
        %v3905 = vsel %vm3889, %v3881, %v3897
        %v3906 = vsel %vm3890, %v3882, %v3898
        %v3907 = vsel %vm3891, %v3883, %v3899
        %v3908 = vsel %vm3892, %v3884, %v3900
        %v3909 = vsel %vm3893, %v3885, %v3901
        %v3910 = vsel %vm3894, %v3886, %v3902
        %v3911 = vmul.f32 %v3903, 1.4142135
        %v3912 = vmul.f32 %v3904, 1.4142135
        %v3913 = vmul.f32 %v3905, 1.4142135
        %v3914 = vmul.f32 %v3906, 1.4142135
        %v3915 = vmul.f32 %v3907, 1.4142135
        %v3916 = vmul.f32 %v3908, 1.4142135
        %v3917 = vmul.f32 %v3909, 1.4142135
        %v3918 = vmul.f32 %v3910, 1.4142135
        %v3919 = vmul.f32 %v3911, %v1816
        %v3920 = vmul.f32 %v3912, %v1818
        %v3921 = vmul.f32 %v3913, %v1887
        %v3922 = vmul.f32 %v3914, %v1889
        %v3923 = vmul.f32 %v3915, %v1958
        %v3924 = vmul.f32 %v3916, %v1960
        %v3925 = vmul.f32 %v3917, %v2029
        %v3926 = vmul.f32 %v3918, %v2031
        %v3927 = vld [vmem:[#allocation24] sm:$0xff]
        %v3928 = vld [vmem:[#allocation24 + $0x8] sm:$0xff]
        %v3929 = vld [vmem:[#allocation24 + $0x10] sm:$0xff]
        %v3930 = vld [vmem:[#allocation24 + $0x18] sm:$0xff]
        %v3931 = vld [vmem:[#allocation24 + $0x20] sm:$0xff]
        %v3932 = vld [vmem:[#allocation24 + $0x28] sm:$0xff]
        %v3933 = vld [vmem:[#allocation24 + $0x30] sm:$0xff]
        %v3934 = vld [vmem:[#allocation24 + $0x38] sm:$0xff]
        %v3935 = vld [vmem:[#allocation24 + $0x40] sm:$0xff]
        %v3936 = vld [vmem:[#allocation24 + $0x48] sm:$0xff]
        %v3937 = vld [vmem:[#allocation24 + $0x50] sm:$0xff]
        %v3938 = vld [vmem:[#allocation24 + $0x58] sm:$0xff]
        %v3939 = vld [vmem:[#allocation24 + $0x60] sm:$0xff]
        %v3940 = vld [vmem:[#allocation24 + $0x68] sm:$0xff]
        %v3941 = vld [vmem:[#allocation24 + $0x70] sm:$0xff]
        %v3942 = vld [vmem:[#allocation24 + $0x78] sm:$0xff]
        %v3943 = vld [vmem:[#allocation24 + $0x80] sm:$0xff]
        %v3944 = vld [vmem:[#allocation24 + $0x88] sm:$0xff]
        %v3945 = vld [vmem:[#allocation24 + $0x90] sm:$0xff]
        %v3946 = vld [vmem:[#allocation24 + $0x98] sm:$0xff]
        %v3947 = vld [vmem:[#allocation24 + $0xa0] sm:$0xff]
        %v3948 = vld [vmem:[#allocation24 + $0xa8] sm:$0xff]
        %v3949 = vld [vmem:[#allocation24 + $0xb0] sm:$0xff]
        %v3950 = vld [vmem:[#allocation24 + $0xb8] sm:$0xff]
        %v3951 = vld [vmem:[#allocation24 + $0xc0] sm:$0xff]
        %v3952 = vld [vmem:[#allocation24 + $0xc8] sm:$0xff]
        %v3953 = vld [vmem:[#allocation24 + $0xd0] sm:$0xff]
        %v3954 = vld [vmem:[#allocation24 + $0xd8] sm:$0xff]
        %v3955 = vld [vmem:[#allocation24 + $0xe0] sm:$0xff]
        %v3956 = vld [vmem:[#allocation24 + $0xe8] sm:$0xff]
        %v3957 = vld [vmem:[#allocation24 + $0xf0] sm:$0xff]
        %v3958 = vld [vmem:[#allocation24 + $0xf8] sm:$0xff]
        %v3959 = vld [vmem:[#allocation24 + $0x100] sm:$0xff]
        %v3960 = vld [vmem:[#allocation24 + $0x108] sm:$0xff]
        %v3961 = vld [vmem:[#allocation24 + $0x110] sm:$0xff]
        %v3962 = vld [vmem:[#allocation24 + $0x118] sm:$0xff]
        %v3963 = vld [vmem:[#allocation24 + $0x120] sm:$0xff]
        %v3964 = vld [vmem:[#allocation24 + $0x128] sm:$0xff]
        %v3965 = vld [vmem:[#allocation24 + $0x130] sm:$0xff]
        %v3966 = vld [vmem:[#allocation24 + $0x138] sm:$0xff]
        %v3967 = vld [vmem:[#allocation24 + $0x140] sm:$0xff]
        %v3968 = vld [vmem:[#allocation24 + $0x148] sm:$0xff]
        %v3969 = vld [vmem:[#allocation24 + $0x150] sm:$0xff]
        %v3970 = vld [vmem:[#allocation24 + $0x158] sm:$0xff]
        %v3971 = vld [vmem:[#allocation24 + $0x160] sm:$0xff]
        %v3972 = vld [vmem:[#allocation24 + $0x168] sm:$0xff]
        %v3973 = vld [vmem:[#allocation24 + $0x170] sm:$0xff]
        %v3974 = vld [vmem:[#allocation24 + $0x178] sm:$0xff]
        %v3975 = vld [vmem:[#allocation24 + $0x180] sm:$0xff]
        %v3976 = vld [vmem:[#allocation24 + $0x188] sm:$0xff]
        %v3977 = vld [vmem:[#allocation24 + $0x190] sm:$0xff]
        %v3978 = vld [vmem:[#allocation24 + $0x198] sm:$0xff]
        %v3979 = vld [vmem:[#allocation24 + $0x1a0] sm:$0xff]
        %v3980 = vld [vmem:[#allocation24 + $0x1a8] sm:$0xff]
        %v3981 = vld [vmem:[#allocation24 + $0x1b0] sm:$0xff]
        %v3982 = vld [vmem:[#allocation24 + $0x1b8] sm:$0xff]
        %v3983 = vld [vmem:[#allocation24 + $0x1c0] sm:$0xff]
        %v3984 = vld [vmem:[#allocation24 + $0x1c8] sm:$0xff]
        %v3985 = vld [vmem:[#allocation24 + $0x1d0] sm:$0xff]
        %v3986 = vld [vmem:[#allocation24 + $0x1d8] sm:$0xff]
        %v3987 = vld [vmem:[#allocation24 + $0x1e0] sm:$0xff]
        %v3988 = vld [vmem:[#allocation24 + $0x1e8] sm:$0xff]
        %v3989 = vld [vmem:[#allocation24 + $0x1f0] sm:$0xff]
        %v3990 = vld [vmem:[#allocation24 + $0x1f8] sm:$0xff]
        %v3991 = vld [vmem:[#allocation24 + $0x200] sm:$0xff]
        %v3992 = vld [vmem:[#allocation24 + $0x208] sm:$0xff]
        %v3993 = vld [vmem:[#allocation24 + $0x210] sm:$0xff]
        %v3994 = vld [vmem:[#allocation24 + $0x218] sm:$0xff]
        %v3995 = vld [vmem:[#allocation24 + $0x220] sm:$0xff]
        %v3996 = vld [vmem:[#allocation24 + $0x228] sm:$0xff]
        %v3997 = vld [vmem:[#allocation24 + $0x230] sm:$0xff]
        %v3998 = vld [vmem:[#allocation24 + $0x238] sm:$0xff]
        %v3999 = vld [vmem:[#allocation24 + $0x240] sm:$0xff]
        %v4000 = vld [vmem:[#allocation24 + $0x248] sm:$0xff]
        %v4001 = vld [vmem:[#allocation24 + $0x250] sm:$0xff]
        %v4002 = vld [vmem:[#allocation24 + $0x258] sm:$0xff]
        %v4003 = vld [vmem:[#allocation24 + $0x260] sm:$0xff]
        %v4004 = vld [vmem:[#allocation24 + $0x268] sm:$0xff]
        %v4005 = vld [vmem:[#allocation24 + $0x270] sm:$0xff]
        %v4006 = vld [vmem:[#allocation24 + $0x278] sm:$0xff]
        %v4007 = vld [vmem:[#allocation24 + $0x280] sm:$0xff]
        %v4008 = vld [vmem:[#allocation24 + $0x288] sm:$0xff]
        %v4009 = vld [vmem:[#allocation24 + $0x290] sm:$0xff]
        %v4010 = vld [vmem:[#allocation24 + $0x298] sm:$0xff]
        %v4011 = vld [vmem:[#allocation24 + $0x2a0] sm:$0xff]
        %v4012 = vld [vmem:[#allocation24 + $0x2a8] sm:$0xff]
        %v4013 = vld [vmem:[#allocation24 + $0x2b0] sm:$0xff]
        %v4014 = vld [vmem:[#allocation24 + $0x2b8] sm:$0xff]
        %v4015 = vld [vmem:[#allocation24 + $0x2c0] sm:$0xff]
        %v4016 = vld [vmem:[#allocation24 + $0x2c8] sm:$0xff]
        %v4017 = vld [vmem:[#allocation24 + $0x2d0] sm:$0xff]
        %v4018 = vld [vmem:[#allocation24 + $0x2d8] sm:$0xff]
        %v4019 = vld [vmem:[#allocation24 + $0x2e0] sm:$0xff]
        %v4020 = vld [vmem:[#allocation24 + $0x2e8] sm:$0xff]
        %v4021 = vld [vmem:[#allocation24 + $0x2f0] sm:$0xff]
        %v4022 = vld [vmem:[#allocation24 + $0x2f8] sm:$0xff]
        %v4023 = vld [vmem:[#allocation24 + $0x300] sm:$0xff]
        %v4024 = vld [vmem:[#allocation24 + $0x308] sm:$0xff]
        %v4025 = vld [vmem:[#allocation24 + $0x310] sm:$0xff]
        %v4026 = vld [vmem:[#allocation24 + $0x318] sm:$0xff]
        %v4027 = vld [vmem:[#allocation24 + $0x320] sm:$0xff]
        %v4028 = vld [vmem:[#allocation24 + $0x328] sm:$0xff]
        %v4029 = vld [vmem:[#allocation24 + $0x330] sm:$0xff]
        %v4030 = vld [vmem:[#allocation24 + $0x338] sm:$0xff]
        %v4031 = vld [vmem:[#allocation24 + $0x340] sm:$0xff]
        %v4032 = vld [vmem:[#allocation24 + $0x348] sm:$0xff]
        %v4033 = vld [vmem:[#allocation24 + $0x350] sm:$0xff]
        %v4034 = vld [vmem:[#allocation24 + $0x358] sm:$0xff]
        %v4035 = vld [vmem:[#allocation24 + $0x360] sm:$0xff]
        %v4036 = vld [vmem:[#allocation24 + $0x368] sm:$0xff]
        %v4037 = vld [vmem:[#allocation24 + $0x370] sm:$0xff]
        %v4038 = vld [vmem:[#allocation24 + $0x378] sm:$0xff]
        %v4039 = vld [vmem:[#allocation24 + $0x380] sm:$0xff]
        %v4040 = vld [vmem:[#allocation24 + $0x388] sm:$0xff]
        %v4041 = vld [vmem:[#allocation24 + $0x390] sm:$0xff]
        %v4042 = vld [vmem:[#allocation24 + $0x398] sm:$0xff]
        %v4043 = vld [vmem:[#allocation24 + $0x3a0] sm:$0xff]
        %v4044 = vld [vmem:[#allocation24 + $0x3a8] sm:$0xff]
        %v4045 = vld [vmem:[#allocation24 + $0x3b0] sm:$0xff]
        %v4046 = vld [vmem:[#allocation24 + $0x3b8] sm:$0xff]
        %v4047 = vld [vmem:[#allocation24 + $0x3c0] sm:$0xff]
        %v4048 = vld [vmem:[#allocation24 + $0x3c8] sm:$0xff]
        %v4049 = vld [vmem:[#allocation24 + $0x3d0] sm:$0xff]
        %v4050 = vld [vmem:[#allocation24 + $0x3d8] sm:$0xff]
        %v4051 = vld [vmem:[#allocation24 + $0x3e0] sm:$0xff]
        %v4052 = vld [vmem:[#allocation24 + $0x3e8] sm:$0xff]
        %v4053 = vld [vmem:[#allocation24 + $0x3f0] sm:$0xff]
        %v4054 = vld [vmem:[#allocation24 + $0x3f8] sm:$0xff]
        %v4055 = vld [vmem:[#allocation24 + $0x400] sm:$0xff]
        %v4056 = vld [vmem:[#allocation24 + $0x408] sm:$0xff]
        %v4057 = vld [vmem:[#allocation24 + $0x410] sm:$0xff]
        %v4058 = vld [vmem:[#allocation24 + $0x418] sm:$0xff]
        %v4059 = vld [vmem:[#allocation24 + $0x420] sm:$0xff]
        %v4060 = vld [vmem:[#allocation24 + $0x428] sm:$0xff]
        %v4061 = vld [vmem:[#allocation24 + $0x430] sm:$0xff]
        %v4062 = vld [vmem:[#allocation24 + $0x438] sm:$0xff]
        %v4063 = vld [vmem:[#allocation24 + $0x440] sm:$0xff]
        %v4064 = vld [vmem:[#allocation24 + $0x448] sm:$0xff]
        %v4065 = vld [vmem:[#allocation24 + $0x450] sm:$0xff]
        %v4066 = vld [vmem:[#allocation24 + $0x458] sm:$0xff]
        %v4067 = vld [vmem:[#allocation24 + $0x460] sm:$0xff]
        %v4068 = vld [vmem:[#allocation24 + $0x468] sm:$0xff]
        %v4069 = vld [vmem:[#allocation24 + $0x470] sm:$0xff]
        %v4070 = vld [vmem:[#allocation24 + $0x478] sm:$0xff]
        %v4071 = vld [vmem:[#allocation24 + $0x480] sm:$0xff]
        %v4072 = vld [vmem:[#allocation24 + $0x488] sm:$0xff]
        %v4073 = vld [vmem:[#allocation24 + $0x490] sm:$0xff]
        %v4074 = vld [vmem:[#allocation24 + $0x498] sm:$0xff]
        %v4075 = vld [vmem:[#allocation24 + $0x4a0] sm:$0xff]
        %v4076 = vld [vmem:[#allocation24 + $0x4a8] sm:$0xff]
        %v4077 = vld [vmem:[#allocation24 + $0x4b0] sm:$0xff]
        %v4078 = vld [vmem:[#allocation24 + $0x4b8] sm:$0xff]
        %v4079 = vld [vmem:[#allocation24 + $0x4c0] sm:$0xff]
        %v4080 = vld [vmem:[#allocation24 + $0x4c8] sm:$0xff]
        %v4081 = vld [vmem:[#allocation24 + $0x4d0] sm:$0xff]
        %v4082 = vld [vmem:[#allocation24 + $0x4d8] sm:$0xff]
        %v4083 = vld [vmem:[#allocation24 + $0x4e0] sm:$0xff]
        %v4084 = vld [vmem:[#allocation24 + $0x4e8] sm:$0xff]
        %v4085 = vld [vmem:[#allocation24 + $0x4f0] sm:$0xff]
        %v4086 = vld [vmem:[#allocation24 + $0x4f8] sm:$0xff]
        %v4087 = vld [vmem:[#allocation24 + $0x500] sm:$0xff]
        %v4088 = vld [vmem:[#allocation24 + $0x508] sm:$0xff]
        %v4089 = vld [vmem:[#allocation24 + $0x510] sm:$0xff]
        %v4090 = vld [vmem:[#allocation24 + $0x518] sm:$0xff]
        %v4091 = vld [vmem:[#allocation24 + $0x520] sm:$0xff]
        %v4092 = vld [vmem:[#allocation24 + $0x528] sm:$0xff]
        %v4093 = vld [vmem:[#allocation24 + $0x530] sm:$0xff]
        %v4094 = vld [vmem:[#allocation24 + $0x538] sm:$0xff]
        %v4095 = vld [vmem:[#allocation24 + $0x540] sm:$0xff]
        %v4096 = vld [vmem:[#allocation24 + $0x548] sm:$0xff]
        %v4097 = vld [vmem:[#allocation24 + $0x550] sm:$0xff]
        %v4098 = vld [vmem:[#allocation24 + $0x558] sm:$0xff]
        %v4099 = vld [vmem:[#allocation24 + $0x560] sm:$0xff]
        %v4100 = vld [vmem:[#allocation24 + $0x568] sm:$0xff]
        %v4101 = vld [vmem:[#allocation24 + $0x570] sm:$0xff]
        %v4102 = vld [vmem:[#allocation24 + $0x578] sm:$0xff]
        %v4103 = vld [vmem:[#allocation24 + $0x580] sm:$0xff]
        %v4104 = vld [vmem:[#allocation24 + $0x588] sm:$0xff]
        %v4105 = vld [vmem:[#allocation24 + $0x590] sm:$0xff]
        %v4106 = vld [vmem:[#allocation24 + $0x598] sm:$0xff]
        %v4107 = vld [vmem:[#allocation24 + $0x5a0] sm:$0xff]
        %v4108 = vld [vmem:[#allocation24 + $0x5a8] sm:$0xff]
        %v4109 = vld [vmem:[#allocation24 + $0x5b0] sm:$0xff]
        %v4110 = vld [vmem:[#allocation24 + $0x5b8] sm:$0xff]
        %v4111 = vld [vmem:[#allocation24 + $0x5c0] sm:$0xff]
        %v4112 = vld [vmem:[#allocation24 + $0x5c8] sm:$0xff]
        %v4113 = vld [vmem:[#allocation24 + $0x5d0] sm:$0xff]
        %v4114 = vld [vmem:[#allocation24 + $0x5d8] sm:$0xff]
        %v4115 = vld [vmem:[#allocation24 + $0x5e0] sm:$0xff]
        %v4116 = vld [vmem:[#allocation24 + $0x5e8] sm:$0xff]
        %v4117 = vld [vmem:[#allocation24 + $0x5f0] sm:$0xff]
        %v4118 = vld [vmem:[#allocation24 + $0x5f8] sm:$0xff]
        %v4119 = vld [vmem:[#allocation24 + $0x600] sm:$0xff]
        %v4120 = vld [vmem:[#allocation24 + $0x608] sm:$0xff]
        %v4121 = vld [vmem:[#allocation24 + $0x610] sm:$0xff]
        %v4122 = vld [vmem:[#allocation24 + $0x618] sm:$0xff]
        %v4123 = vld [vmem:[#allocation24 + $0x620] sm:$0xff]
        %v4124 = vld [vmem:[#allocation24 + $0x628] sm:$0xff]
        %v4125 = vld [vmem:[#allocation24 + $0x630] sm:$0xff]
        %v4126 = vld [vmem:[#allocation24 + $0x638] sm:$0xff]
        %v4127 = vld [vmem:[#allocation24 + $0x640] sm:$0xff]
        %v4128 = vld [vmem:[#allocation24 + $0x648] sm:$0xff]
        %v4129 = vld [vmem:[#allocation24 + $0x650] sm:$0xff]
        %v4130 = vld [vmem:[#allocation24 + $0x658] sm:$0xff]
        %v4131 = vld [vmem:[#allocation24 + $0x660] sm:$0xff]
        %v4132 = vld [vmem:[#allocation24 + $0x668] sm:$0xff]
        %v4133 = vld [vmem:[#allocation24 + $0x670] sm:$0xff]
        %v4134 = vld [vmem:[#allocation24 + $0x678] sm:$0xff]
        %v4135 = vld [vmem:[#allocation24 + $0x680] sm:$0xff]
        %v4136 = vld [vmem:[#allocation24 + $0x688] sm:$0xff]
        %v4137 = vld [vmem:[#allocation24 + $0x690] sm:$0xff]
        %v4138 = vld [vmem:[#allocation24 + $0x698] sm:$0xff]
        %v4139 = vld [vmem:[#allocation24 + $0x6a0] sm:$0xff]
        %v4140 = vld [vmem:[#allocation24 + $0x6a8] sm:$0xff]
        %v4141 = vld [vmem:[#allocation24 + $0x6b0] sm:$0xff]
        %v4142 = vld [vmem:[#allocation24 + $0x6b8] sm:$0xff]
        %v4143 = vld [vmem:[#allocation24 + $0x6c0] sm:$0xff]
        %v4144 = vld [vmem:[#allocation24 + $0x6c8] sm:$0xff]
        %v4145 = vld [vmem:[#allocation24 + $0x6d0] sm:$0xff]
        %v4146 = vld [vmem:[#allocation24 + $0x6d8] sm:$0xff]
        %v4147 = vld [vmem:[#allocation24 + $0x6e0] sm:$0xff]
        %v4148 = vld [vmem:[#allocation24 + $0x6e8] sm:$0xff]
        %v4149 = vld [vmem:[#allocation24 + $0x6f0] sm:$0xff]
        %v4150 = vld [vmem:[#allocation24 + $0x6f8] sm:$0xff]
        %v4151 = vld [vmem:[#allocation24 + $0x700] sm:$0xff]
        %v4152 = vld [vmem:[#allocation24 + $0x708] sm:$0xff]
        %v4153 = vld [vmem:[#allocation24 + $0x710] sm:$0xff]
        %v4154 = vld [vmem:[#allocation24 + $0x718] sm:$0xff]
        %v4155 = vld [vmem:[#allocation24 + $0x720] sm:$0xff]
        %v4156 = vld [vmem:[#allocation24 + $0x728] sm:$0xff]
        %v4157 = vld [vmem:[#allocation24 + $0x730] sm:$0xff]
        %v4158 = vld [vmem:[#allocation24 + $0x738] sm:$0xff]
        %v4159 = vld [vmem:[#allocation24 + $0x740] sm:$0xff]
        %v4160 = vld [vmem:[#allocation24 + $0x748] sm:$0xff]
        %v4161 = vld [vmem:[#allocation24 + $0x750] sm:$0xff]
        %v4162 = vld [vmem:[#allocation24 + $0x758] sm:$0xff]
        %v4163 = vld [vmem:[#allocation24 + $0x760] sm:$0xff]
        %v4164 = vld [vmem:[#allocation24 + $0x768] sm:$0xff]
        %v4165 = vld [vmem:[#allocation24 + $0x770] sm:$0xff]
        %v4166 = vld [vmem:[#allocation24 + $0x778] sm:$0xff]
        %v4167 = vld [vmem:[#allocation24 + $0x780] sm:$0xff]
        %v4168 = vld [vmem:[#allocation24 + $0x788] sm:$0xff]
        %v4169 = vld [vmem:[#allocation24 + $0x790] sm:$0xff]
        %v4170 = vld [vmem:[#allocation24 + $0x798] sm:$0xff]
        %v4171 = vld [vmem:[#allocation24 + $0x7a0] sm:$0xff]
        %v4172 = vld [vmem:[#allocation24 + $0x7a8] sm:$0xff]
        %v4173 = vld [vmem:[#allocation24 + $0x7b0] sm:$0xff]
        %v4174 = vld [vmem:[#allocation24 + $0x7b8] sm:$0xff]
        %v4175 = vld [vmem:[#allocation24 + $0x7c0] sm:$0xff]
        %v4176 = vld [vmem:[#allocation24 + $0x7c8] sm:$0xff]
        %v4177 = vld [vmem:[#allocation24 + $0x7d0] sm:$0xff]
        %v4178 = vld [vmem:[#allocation24 + $0x7d8] sm:$0xff]
        %v4179 = vld [vmem:[#allocation24 + $0x7e0] sm:$0xff]
        %v4180 = vld [vmem:[#allocation24 + $0x7e8] sm:$0xff]
        %v4181 = vld [vmem:[#allocation24 + $0x7f0] sm:$0xff]
        %v4182 = vld [vmem:[#allocation24 + $0x7f8] sm:$0xff]
        %v4183 = vld [vmem:[#allocation24 + $0x800] sm:$0xff]
        %v4184 = vld [vmem:[#allocation24 + $0x808] sm:$0xff]
        %v4185 = vld [vmem:[#allocation24 + $0x810] sm:$0xff]
        %v4186 = vld [vmem:[#allocation24 + $0x818] sm:$0xff]
        %v4187 = vld [vmem:[#allocation24 + $0x820] sm:$0xff]
        %v4188 = vld [vmem:[#allocation24 + $0x828] sm:$0xff]
        %v4189 = vld [vmem:[#allocation24 + $0x830] sm:$0xff]
        %v4190 = vld [vmem:[#allocation24 + $0x838] sm:$0xff]
        %v4191 = vld [vmem:[#allocation24 + $0x840] sm:$0xff]
        %v4192 = vld [vmem:[#allocation24 + $0x848] sm:$0xff]
        %v4193 = vld [vmem:[#allocation24 + $0x850] sm:$0xff]
        %v4194 = vld [vmem:[#allocation24 + $0x858] sm:$0xff]
        %v4195 = vld [vmem:[#allocation24 + $0x860] sm:$0xff]
        %v4196 = vld [vmem:[#allocation24 + $0x868] sm:$0xff]
        %v4197 = vld [vmem:[#allocation24 + $0x870] sm:$0xff]
        %v4198 = vld [vmem:[#allocation24 + $0x878] sm:$0xff]
        %v4199 = vld [vmem:[#allocation24 + $0x880] sm:$0xff]
        %v4200 = vld [vmem:[#allocation24 + $0x888] sm:$0xff]
        %v4201 = vld [vmem:[#allocation24 + $0x890] sm:$0xff]
        %v4202 = vld [vmem:[#allocation24 + $0x898] sm:$0xff]
        %v4203 = vld [vmem:[#allocation24 + $0x8a0] sm:$0xff]
        %v4204 = vld [vmem:[#allocation24 + $0x8a8] sm:$0xff]
        %v4205 = vld [vmem:[#allocation24 + $0x8b0] sm:$0xff]
        %v4206 = vld [vmem:[#allocation24 + $0x8b8] sm:$0xff]
        %v4207 = vld [vmem:[#allocation24 + $0x8c0] sm:$0xff]
        %v4208 = vld [vmem:[#allocation24 + $0x8c8] sm:$0xff]
        %v4209 = vld [vmem:[#allocation24 + $0x8d0] sm:$0xff]
        %v4210 = vld [vmem:[#allocation24 + $0x8d8] sm:$0xff]
        %v4211 = vld [vmem:[#allocation24 + $0x8e0] sm:$0xff]
        %v4212 = vld [vmem:[#allocation24 + $0x8e8] sm:$0xff]
        %v4213 = vld [vmem:[#allocation24 + $0x8f0] sm:$0xff]
        %v4214 = vld [vmem:[#allocation24 + $0x8f8] sm:$0xff]
        %v4215 = vld [vmem:[#allocation24 + $0x900] sm:$0xff]
        %v4216 = vld [vmem:[#allocation24 + $0x908] sm:$0xff]
        %v4217 = vld [vmem:[#allocation24 + $0x910] sm:$0xff]
        %v4218 = vld [vmem:[#allocation24 + $0x918] sm:$0xff]
        %v4219 = vld [vmem:[#allocation24 + $0x920] sm:$0xff]
        %v4220 = vld [vmem:[#allocation24 + $0x928] sm:$0xff]
        %v4221 = vld [vmem:[#allocation24 + $0x930] sm:$0xff]
        %v4222 = vld [vmem:[#allocation24 + $0x938] sm:$0xff]
        %v4223 = vld [vmem:[#allocation24 + $0x940] sm:$0xff]
        %v4224 = vld [vmem:[#allocation24 + $0x948] sm:$0xff]
        %v4225 = vld [vmem:[#allocation24 + $0x950] sm:$0xff]
        %v4226 = vld [vmem:[#allocation24 + $0x958] sm:$0xff]
        %v4227 = vld [vmem:[#allocation24 + $0x960] sm:$0xff]
        %v4228 = vld [vmem:[#allocation24 + $0x968] sm:$0xff]
        %v4229 = vld [vmem:[#allocation24 + $0x970] sm:$0xff]
        %v4230 = vld [vmem:[#allocation24 + $0x978] sm:$0xff]
        %v4231 = vld [vmem:[#allocation24 + $0x980] sm:$0xff]
        %v4232 = vld [vmem:[#allocation24 + $0x988] sm:$0xff]
        %v4233 = vld [vmem:[#allocation24 + $0x990] sm:$0xff]
        %v4234 = vld [vmem:[#allocation24 + $0x998] sm:$0xff]
        %v4235 = vld [vmem:[#allocation24 + $0x9a0] sm:$0xff]
        %v4236 = vld [vmem:[#allocation24 + $0x9a8] sm:$0xff]
        %v4237 = vld [vmem:[#allocation24 + $0x9b0] sm:$0xff]
        %v4238 = vld [vmem:[#allocation24 + $0x9b8] sm:$0xff]
        %v4239 = vld [vmem:[#allocation24 + $0x9c0] sm:$0xff]
        %v4240 = vld [vmem:[#allocation24 + $0x9c8] sm:$0xff]
        %v4241 = vld [vmem:[#allocation24 + $0x9d0] sm:$0xff]
        %v4242 = vld [vmem:[#allocation24 + $0x9d8] sm:$0xff]
        %v4243 = vld [vmem:[#allocation24 + $0x9e0] sm:$0xff]
        %v4244 = vld [vmem:[#allocation24 + $0x9e8] sm:$0xff]
        %v4245 = vld [vmem:[#allocation24 + $0x9f0] sm:$0xff]
        %v4246 = vld [vmem:[#allocation24 + $0x9f8] sm:$0xff]
        %v4247 = vld [vmem:[#allocation24 + $0xa00] sm:$0xff]
        %v4248 = vld [vmem:[#allocation24 + $0xa08] sm:$0xff]
        %v4249 = vld [vmem:[#allocation24 + $0xa10] sm:$0xff]
        %v4250 = vld [vmem:[#allocation24 + $0xa18] sm:$0xff]
        %v4251 = vld [vmem:[#allocation24 + $0xa20] sm:$0xff]
        %v4252 = vld [vmem:[#allocation24 + $0xa28] sm:$0xff]
        %v4253 = vld [vmem:[#allocation24 + $0xa30] sm:$0xff]
        %v4254 = vld [vmem:[#allocation24 + $0xa38] sm:$0xff]
        %v4255 = vld [vmem:[#allocation24 + $0xa40] sm:$0xff]
        %v4256 = vld [vmem:[#allocation24 + $0xa48] sm:$0xff]
        %v4257 = vld [vmem:[#allocation24 + $0xa50] sm:$0xff]
        %v4258 = vld [vmem:[#allocation24 + $0xa58] sm:$0xff]
        %v4259 = vld [vmem:[#allocation24 + $0xa60] sm:$0xff]
        %v4260 = vld [vmem:[#allocation24 + $0xa68] sm:$0xff]
        %v4261 = vld [vmem:[#allocation24 + $0xa70] sm:$0xff]
        %v4262 = vld [vmem:[#allocation24 + $0xa78] sm:$0xff]
        %v4263 = vld [vmem:[#allocation24 + $0xa80] sm:$0xff]
        %v4264 = vld [vmem:[#allocation24 + $0xa88] sm:$0xff]
        %v4265 = vld [vmem:[#allocation24 + $0xa90] sm:$0xff]
        %v4266 = vld [vmem:[#allocation24 + $0xa98] sm:$0xff]
        %v4267 = vld [vmem:[#allocation24 + $0xaa0] sm:$0xff]
        %v4268 = vld [vmem:[#allocation24 + $0xaa8] sm:$0xff]
        %v4269 = vld [vmem:[#allocation24 + $0xab0] sm:$0xff]
        %v4270 = vld [vmem:[#allocation24 + $0xab8] sm:$0xff]
        %v4271 = vld [vmem:[#allocation24 + $0xac0] sm:$0xff]
        %v4272 = vld [vmem:[#allocation24 + $0xac8] sm:$0xff]
        %v4273 = vld [vmem:[#allocation24 + $0xad0] sm:$0xff]
        %v4274 = vld [vmem:[#allocation24 + $0xad8] sm:$0xff]
        %v4275 = vld [vmem:[#allocation24 + $0xae0] sm:$0xff]
        %v4276 = vld [vmem:[#allocation24 + $0xae8] sm:$0xff]
        %v4277 = vld [vmem:[#allocation24 + $0xaf0] sm:$0xff]
        %v4278 = vld [vmem:[#allocation24 + $0xaf8] sm:$0xff]
        %v4279 = vld [vmem:[#allocation24 + $0xb00] sm:$0xff]
        %v4280 = vld [vmem:[#allocation24 + $0xb08] sm:$0xff]
        %v4281 = vld [vmem:[#allocation24 + $0xb10] sm:$0xff]
        %v4282 = vld [vmem:[#allocation24 + $0xb18] sm:$0xff]
        %v4283 = vld [vmem:[#allocation24 + $0xb20] sm:$0xff]
        %v4284 = vld [vmem:[#allocation24 + $0xb28] sm:$0xff]
        %v4285 = vld [vmem:[#allocation24 + $0xb30] sm:$0xff]
        %v4286 = vld [vmem:[#allocation24 + $0xb38] sm:$0xff]
        %v4287 = vld [vmem:[#allocation24 + $0xb40] sm:$0xff]
        %v4288 = vld [vmem:[#allocation24 + $0xb48] sm:$0xff]
        %v4289 = vld [vmem:[#allocation24 + $0xb50] sm:$0xff]
        %v4290 = vld [vmem:[#allocation24 + $0xb58] sm:$0xff]
        %v4291 = vld [vmem:[#allocation24 + $0xb60] sm:$0xff]
        %v4292 = vld [vmem:[#allocation24 + $0xb68] sm:$0xff]
        %v4293 = vld [vmem:[#allocation24 + $0xb70] sm:$0xff]
        %v4294 = vld [vmem:[#allocation24 + $0xb78] sm:$0xff]
        %v4295 = vld [vmem:[#allocation24 + $0xb80] sm:$0xff]
        %v4296 = vld [vmem:[#allocation24 + $0xb88] sm:$0xff]
        %v4297 = vld [vmem:[#allocation24 + $0xb90] sm:$0xff]
        %v4298 = vld [vmem:[#allocation24 + $0xb98] sm:$0xff]
        %v4299 = vld [vmem:[#allocation24 + $0xba0] sm:$0xff]
        %v4300 = vld [vmem:[#allocation24 + $0xba8] sm:$0xff]
        %v4301 = vld [vmem:[#allocation24 + $0xbb0] sm:$0xff]
        %v4302 = vld [vmem:[#allocation24 + $0xbb8] sm:$0xff]
        %v4303 = vld [vmem:[#allocation24 + $0xbc0] sm:$0xff]
        %v4304 = vld [vmem:[#allocation24 + $0xbc8] sm:$0xff]
        %v4305 = vld [vmem:[#allocation24 + $0xbd0] sm:$0xff]
        %v4306 = vld [vmem:[#allocation24 + $0xbd8] sm:$0xff]
        %v4307 = vld [vmem:[#allocation24 + $0xbe0] sm:$0xff]
        %v4308 = vld [vmem:[#allocation24 + $0xbe8] sm:$0xff]
        %v4309 = vld [vmem:[#allocation24 + $0xbf0] sm:$0xff]
        %v4310 = vld [vmem:[#allocation24 + $0xbf8] sm:$0xff]
        %v4311 = vld [vmem:[#allocation24 + $0xc00] sm:$0xff]
        %v4312 = vld [vmem:[#allocation24 + $0xc08] sm:$0xff]
        %v4313 = vld [vmem:[#allocation24 + $0xc10] sm:$0xff]
        %v4314 = vld [vmem:[#allocation24 + $0xc18] sm:$0xff]
        %v4315 = vld [vmem:[#allocation24 + $0xc20] sm:$0xff]
        %v4316 = vld [vmem:[#allocation24 + $0xc28] sm:$0xff]
        %v4317 = vld [vmem:[#allocation24 + $0xc30] sm:$0xff]
        %v4318 = vld [vmem:[#allocation24 + $0xc38] sm:$0xff]
        %v4319 = vld [vmem:[#allocation24 + $0xc40] sm:$0xff]
        %v4320 = vld [vmem:[#allocation24 + $0xc48] sm:$0xff]
        %v4321 = vld [vmem:[#allocation24 + $0xc50] sm:$0xff]
        %v4322 = vld [vmem:[#allocation24 + $0xc58] sm:$0xff]
        %v4323 = vld [vmem:[#allocation24 + $0xc60] sm:$0xff]
        %v4324 = vld [vmem:[#allocation24 + $0xc68] sm:$0xff]
        %v4325 = vld [vmem:[#allocation24 + $0xc70] sm:$0xff]
        %v4326 = vld [vmem:[#allocation24 + $0xc78] sm:$0xff]
        %v4327 = vld [vmem:[#allocation24 + $0xc80] sm:$0xff]
        %v4328 = vld [vmem:[#allocation24 + $0xc88] sm:$0xff]
        %v4329 = vld [vmem:[#allocation24 + $0xc90] sm:$0xff]
        %v4330 = vld [vmem:[#allocation24 + $0xc98] sm:$0xff]
        %v4331 = vld [vmem:[#allocation24 + $0xca0] sm:$0xff]
        %v4332 = vld [vmem:[#allocation24 + $0xca8] sm:$0xff]
        %v4333 = vld [vmem:[#allocation24 + $0xcb0] sm:$0xff]
        %v4334 = vld [vmem:[#allocation24 + $0xcb8] sm:$0xff]
        %v4335 = vld [vmem:[#allocation24 + $0xcc0] sm:$0xff]
        %v4336 = vld [vmem:[#allocation24 + $0xcc8] sm:$0xff]
        %v4337 = vld [vmem:[#allocation24 + $0xcd0] sm:$0xff]
        %v4338 = vld [vmem:[#allocation24 + $0xcd8] sm:$0xff]
        %v4339 = vld [vmem:[#allocation24 + $0xce0] sm:$0xff]
        %v4340 = vld [vmem:[#allocation24 + $0xce8] sm:$0xff]
        %v4341 = vld [vmem:[#allocation24 + $0xcf0] sm:$0xff]
        %v4342 = vld [vmem:[#allocation24 + $0xcf8] sm:$0xff]
        %v4343 = vld [vmem:[#allocation24 + $0xd00] sm:$0xff]
        %v4344 = vld [vmem:[#allocation24 + $0xd08] sm:$0xff]
        %v4345 = vld [vmem:[#allocation24 + $0xd10] sm:$0xff]
        %v4346 = vld [vmem:[#allocation24 + $0xd18] sm:$0xff]
        %v4347 = vld [vmem:[#allocation24 + $0xd20] sm:$0xff]
        %v4348 = vld [vmem:[#allocation24 + $0xd28] sm:$0xff]
        %v4349 = vld [vmem:[#allocation24 + $0xd30] sm:$0xff]
        %v4350 = vld [vmem:[#allocation24 + $0xd38] sm:$0xff]
        %v4351 = vld [vmem:[#allocation24 + $0xd40] sm:$0xff]
        %v4352 = vld [vmem:[#allocation24 + $0xd48] sm:$0xff]
        %v4353 = vld [vmem:[#allocation24 + $0xd50] sm:$0xff]
        %v4354 = vld [vmem:[#allocation24 + $0xd58] sm:$0xff]
        %v4355 = vld [vmem:[#allocation24 + $0xd60] sm:$0xff]
        %v4356 = vld [vmem:[#allocation24 + $0xd68] sm:$0xff]
        %v4357 = vld [vmem:[#allocation24 + $0xd70] sm:$0xff]
        %v4358 = vld [vmem:[#allocation24 + $0xd78] sm:$0xff]
        %v4359 = vld [vmem:[#allocation24 + $0xd80] sm:$0xff]
        %v4360 = vld [vmem:[#allocation24 + $0xd88] sm:$0xff]
        %v4361 = vld [vmem:[#allocation24 + $0xd90] sm:$0xff]
        %v4362 = vld [vmem:[#allocation24 + $0xd98] sm:$0xff]
        %v4363 = vld [vmem:[#allocation24 + $0xda0] sm:$0xff]
        %v4364 = vld [vmem:[#allocation24 + $0xda8] sm:$0xff]
        %v4365 = vld [vmem:[#allocation24 + $0xdb0] sm:$0xff]
        %v4366 = vld [vmem:[#allocation24 + $0xdb8] sm:$0xff]
        %v4367 = vld [vmem:[#allocation24 + $0xdc0] sm:$0xff]
        %v4368 = vld [vmem:[#allocation24 + $0xdc8] sm:$0xff]
        %v4369 = vld [vmem:[#allocation24 + $0xdd0] sm:$0xff]
        %v4370 = vld [vmem:[#allocation24 + $0xdd8] sm:$0xff]
        %v4371 = vld [vmem:[#allocation24 + $0xde0] sm:$0xff]
        %v4372 = vld [vmem:[#allocation24 + $0xde8] sm:$0xff]
        %v4373 = vld [vmem:[#allocation24 + $0xdf0] sm:$0xff]
        %v4374 = vld [vmem:[#allocation24 + $0xdf8] sm:$0xff]
        %v4375 = vld [vmem:[#allocation24 + $0xe00] sm:$0xff]
        %v4376 = vld [vmem:[#allocation24 + $0xe08] sm:$0xff]
        %v4377 = vld [vmem:[#allocation24 + $0xe10] sm:$0xff]
        %v4378 = vld [vmem:[#allocation24 + $0xe18] sm:$0xff]
        %v4379 = vld [vmem:[#allocation24 + $0xe20] sm:$0xff]
        %v4380 = vld [vmem:[#allocation24 + $0xe28] sm:$0xff]
        %v4381 = vld [vmem:[#allocation24 + $0xe30] sm:$0xff]
        %v4382 = vld [vmem:[#allocation24 + $0xe38] sm:$0xff]
        %v4383 = vld [vmem:[#allocation24 + $0xe40] sm:$0xff]
        %v4384 = vld [vmem:[#allocation24 + $0xe48] sm:$0xff]
        %v4385 = vld [vmem:[#allocation24 + $0xe50] sm:$0xff]
        %v4386 = vld [vmem:[#allocation24 + $0xe58] sm:$0xff]
        %v4387 = vld [vmem:[#allocation24 + $0xe60] sm:$0xff]
        %v4388 = vld [vmem:[#allocation24 + $0xe68] sm:$0xff]
        %v4389 = vld [vmem:[#allocation24 + $0xe70] sm:$0xff]
        %v4390 = vld [vmem:[#allocation24 + $0xe78] sm:$0xff]
        %v4391 = vld [vmem:[#allocation24 + $0xe80] sm:$0xff]
        %v4392 = vld [vmem:[#allocation24 + $0xe88] sm:$0xff]
        %v4393 = vld [vmem:[#allocation24 + $0xe90] sm:$0xff]
        %v4394 = vld [vmem:[#allocation24 + $0xe98] sm:$0xff]
        %v4395 = vld [vmem:[#allocation24 + $0xea0] sm:$0xff]
        %v4396 = vld [vmem:[#allocation24 + $0xea8] sm:$0xff]
        %v4397 = vld [vmem:[#allocation24 + $0xeb0] sm:$0xff]
        %v4398 = vld [vmem:[#allocation24 + $0xeb8] sm:$0xff]
        %v4399 = vld [vmem:[#allocation24 + $0xec0] sm:$0xff]
        %v4400 = vld [vmem:[#allocation24 + $0xec8] sm:$0xff]
        %v4401 = vld [vmem:[#allocation24 + $0xed0] sm:$0xff]
        %v4402 = vld [vmem:[#allocation24 + $0xed8] sm:$0xff]
        %v4403 = vld [vmem:[#allocation24 + $0xee0] sm:$0xff]
        %v4404 = vld [vmem:[#allocation24 + $0xee8] sm:$0xff]
        %v4405 = vld [vmem:[#allocation24 + $0xef0] sm:$0xff]
        %v4406 = vld [vmem:[#allocation24 + $0xef8] sm:$0xff]
        %v4407 = vld [vmem:[#allocation24 + $0xf00] sm:$0xff]
        %v4408 = vld [vmem:[#allocation24 + $0xf08] sm:$0xff]
        %v4409 = vld [vmem:[#allocation24 + $0xf10] sm:$0xff]
        %v4410 = vld [vmem:[#allocation24 + $0xf18] sm:$0xff]
        %v4411 = vld [vmem:[#allocation24 + $0xf20] sm:$0xff]
        %v4412 = vld [vmem:[#allocation24 + $0xf28] sm:$0xff]
        %v4413 = vld [vmem:[#allocation24 + $0xf30] sm:$0xff]
        %v4414 = vld [vmem:[#allocation24 + $0xf38] sm:$0xff]
        %v4415 = vld [vmem:[#allocation24 + $0xf40] sm:$0xff]
        %v4416 = vld [vmem:[#allocation24 + $0xf48] sm:$0xff]
        %v4417 = vld [vmem:[#allocation24 + $0xf50] sm:$0xff]
        %v4418 = vld [vmem:[#allocation24 + $0xf58] sm:$0xff]
        %v4419 = vld [vmem:[#allocation24 + $0xf60] sm:$0xff]
        %v4420 = vld [vmem:[#allocation24 + $0xf68] sm:$0xff]
        %v4421 = vld [vmem:[#allocation24 + $0xf70] sm:$0xff]
        %v4422 = vld [vmem:[#allocation24 + $0xf78] sm:$0xff]
        %v4423 = vld [vmem:[#allocation24 + $0xf80] sm:$0xff]
        %v4424 = vld [vmem:[#allocation24 + $0xf88] sm:$0xff]
        %v4425 = vld [vmem:[#allocation24 + $0xf90] sm:$0xff]
        %v4426 = vld [vmem:[#allocation24 + $0xf98] sm:$0xff]
        %v4427 = vld [vmem:[#allocation24 + $0xfa0] sm:$0xff]
        %v4428 = vld [vmem:[#allocation24 + $0xfa8] sm:$0xff]
        %v4429 = vld [vmem:[#allocation24 + $0xfb0] sm:$0xff]
        %v4430 = vld [vmem:[#allocation24 + $0xfb8] sm:$0xff]
        %v4431 = vld [vmem:[#allocation24 + $0xfc0] sm:$0xff]
        %v4432 = vld [vmem:[#allocation24 + $0xfc8] sm:$0xff]
        %v4433 = vld [vmem:[#allocation24 + $0xfd0] sm:$0xff]
        %v4434 = vld [vmem:[#allocation24 + $0xfd8] sm:$0xff]
        %v4435 = vld [vmem:[#allocation24 + $0xfe0] sm:$0xff]
        %v4436 = vld [vmem:[#allocation24 + $0xfe8] sm:$0xff]
        %v4437 = vld [vmem:[#allocation24 + $0xff0] sm:$0xff]
        %v4438 = vld [vmem:[#allocation24 + $0xff8] sm:$0xff]
        %v4439 = vld [vmem:[#allocation24 + $0x1000] sm:$0xff]
        %v4440 = vld [vmem:[#allocation24 + $0x1008] sm:$0xff]
        %v4441 = vld [vmem:[#allocation24 + $0x1010] sm:$0xff]
        %v4442 = vld [vmem:[#allocation24 + $0x1018] sm:$0xff]
        %v4443 = vld [vmem:[#allocation24 + $0x1020] sm:$0xff]
        %v4444 = vld [vmem:[#allocation24 + $0x1028] sm:$0xff]
        %v4445 = vld [vmem:[#allocation24 + $0x1030] sm:$0xff]
        %v4446 = vld [vmem:[#allocation24 + $0x1038] sm:$0xff]
        %v4447 = vld [vmem:[#allocation24 + $0x1040] sm:$0xff]
        %v4448 = vld [vmem:[#allocation24 + $0x1048] sm:$0xff]
        %v4449 = vld [vmem:[#allocation24 + $0x1050] sm:$0xff]
        %v4450 = vld [vmem:[#allocation24 + $0x1058] sm:$0xff]
        %v4451 = vld [vmem:[#allocation24 + $0x1060] sm:$0xff]
        %v4452 = vld [vmem:[#allocation24 + $0x1068] sm:$0xff]
        %v4453 = vld [vmem:[#allocation24 + $0x1070] sm:$0xff]
        %v4454 = vld [vmem:[#allocation24 + $0x1078] sm:$0xff]
        %v4455 = vld [vmem:[#allocation24 + $0x1080] sm:$0xff]
        %v4456 = vld [vmem:[#allocation24 + $0x1088] sm:$0xff]
        %v4457 = vld [vmem:[#allocation24 + $0x1090] sm:$0xff]
        %v4458 = vld [vmem:[#allocation24 + $0x1098] sm:$0xff]
        %v4459 = vld [vmem:[#allocation24 + $0x10a0] sm:$0xff]
        %v4460 = vld [vmem:[#allocation24 + $0x10a8] sm:$0xff]
        %v4461 = vld [vmem:[#allocation24 + $0x10b0] sm:$0xff]
        %v4462 = vld [vmem:[#allocation24 + $0x10b8] sm:$0xff]
        %v4463 = vld [vmem:[#allocation24 + $0x10c0] sm:$0xff]
        %v4464 = vld [vmem:[#allocation24 + $0x10c8] sm:$0xff]
        %v4465 = vld [vmem:[#allocation24 + $0x10d0] sm:$0xff]
        %v4466 = vld [vmem:[#allocation24 + $0x10d8] sm:$0xff]
        %v4467 = vld [vmem:[#allocation24 + $0x10e0] sm:$0xff]
        %v4468 = vld [vmem:[#allocation24 + $0x10e8] sm:$0xff]
        %v4469 = vld [vmem:[#allocation24 + $0x10f0] sm:$0xff]
        %v4470 = vld [vmem:[#allocation24 + $0x10f8] sm:$0xff]
        %v4471 = vld [vmem:[#allocation24 + $0x1100] sm:$0xff]
        %v4472 = vld [vmem:[#allocation24 + $0x1108] sm:$0xff]
        %v4473 = vld [vmem:[#allocation24 + $0x1110] sm:$0xff]
        %v4474 = vld [vmem:[#allocation24 + $0x1118] sm:$0xff]
        %v4475 = vld [vmem:[#allocation24 + $0x1120] sm:$0xff]
        %v4476 = vld [vmem:[#allocation24 + $0x1128] sm:$0xff]
        %v4477 = vld [vmem:[#allocation24 + $0x1130] sm:$0xff]
        %v4478 = vld [vmem:[#allocation24 + $0x1138] sm:$0xff]
        %v4479 = vld [vmem:[#allocation24 + $0x1140] sm:$0xff]
        %v4480 = vld [vmem:[#allocation24 + $0x1148] sm:$0xff]
        %v4481 = vld [vmem:[#allocation24 + $0x1150] sm:$0xff]
        %v4482 = vld [vmem:[#allocation24 + $0x1158] sm:$0xff]
        %v4483 = vld [vmem:[#allocation24 + $0x1160] sm:$0xff]
        %v4484 = vld [vmem:[#allocation24 + $0x1168] sm:$0xff]
        %v4485 = vld [vmem:[#allocation24 + $0x1170] sm:$0xff]
        %v4486 = vld [vmem:[#allocation24 + $0x1178] sm:$0xff]
        %v4487 = vld [vmem:[#allocation24 + $0x1180] sm:$0xff]
        %v4488 = vld [vmem:[#allocation24 + $0x1188] sm:$0xff]
        %v4489 = vld [vmem:[#allocation24 + $0x1190] sm:$0xff]
        %v4490 = vld [vmem:[#allocation24 + $0x1198] sm:$0xff]
        %v4491 = vld [vmem:[#allocation24 + $0x11a0] sm:$0xff]
        %v4492 = vld [vmem:[#allocation24 + $0x11a8] sm:$0xff]
        %v4493 = vld [vmem:[#allocation24 + $0x11b0] sm:$0xff]
        %v4494 = vld [vmem:[#allocation24 + $0x11b8] sm:$0xff]
        %v4495 = vld [vmem:[#allocation24 + $0x11c0] sm:$0xff]
        %v4496 = vld [vmem:[#allocation24 + $0x11c8] sm:$0xff]
        %v4497 = vld [vmem:[#allocation24 + $0x11d0] sm:$0xff]
        %v4498 = vld [vmem:[#allocation24 + $0x11d8] sm:$0xff]
        %v4499 = vld [vmem:[#allocation24 + $0x11e0] sm:$0xff]
        %v4500 = vld [vmem:[#allocation24 + $0x11e8] sm:$0xff]
        %v4501 = vld [vmem:[#allocation24 + $0x11f0] sm:$0xff]
        %v4502 = vld [vmem:[#allocation24 + $0x11f8] sm:$0xff]
        %v4503 = vld [vmem:[#allocation24 + $0x1200] sm:$0xff]
        %v4504 = vld [vmem:[#allocation24 + $0x1208] sm:$0xff]
        %v4505 = vld [vmem:[#allocation24 + $0x1210] sm:$0xff]
        %v4506 = vld [vmem:[#allocation24 + $0x1218] sm:$0xff]
        %v4507 = vld [vmem:[#allocation24 + $0x1220] sm:$0xff]
        %v4508 = vld [vmem:[#allocation24 + $0x1228] sm:$0xff]
        %v4509 = vld [vmem:[#allocation24 + $0x1230] sm:$0xff]
        %v4510 = vld [vmem:[#allocation24 + $0x1238] sm:$0xff]
        %v4511 = vld [vmem:[#allocation24 + $0x1240] sm:$0xff]
        %v4512 = vld [vmem:[#allocation24 + $0x1248] sm:$0xff]
        %v4513 = vld [vmem:[#allocation24 + $0x1250] sm:$0xff]
        %v4514 = vld [vmem:[#allocation24 + $0x1258] sm:$0xff]
        %v4515 = vld [vmem:[#allocation24 + $0x1260] sm:$0xff]
        %v4516 = vld [vmem:[#allocation24 + $0x1268] sm:$0xff]
        %v4517 = vld [vmem:[#allocation24 + $0x1270] sm:$0xff]
        %v4518 = vld [vmem:[#allocation24 + $0x1278] sm:$0xff]
        %v4519 = vld [vmem:[#allocation24 + $0x1280] sm:$0xff]
        %v4520 = vld [vmem:[#allocation24 + $0x1288] sm:$0xff]
        %v4521 = vld [vmem:[#allocation24 + $0x1290] sm:$0xff]
        %v4522 = vld [vmem:[#allocation24 + $0x1298] sm:$0xff]
        %v4523 = vld [vmem:[#allocation24 + $0x12a0] sm:$0xff]
        %v4524 = vld [vmem:[#allocation24 + $0x12a8] sm:$0xff]
        %v4525 = vld [vmem:[#allocation24 + $0x12b0] sm:$0xff]
        %v4526 = vld [vmem:[#allocation24 + $0x12b8] sm:$0xff]
        %v4527 = vld [vmem:[#allocation24 + $0x12c0] sm:$0xff]
        %v4528 = vld [vmem:[#allocation24 + $0x12c8] sm:$0xff]
        %v4529 = vld [vmem:[#allocation24 + $0x12d0] sm:$0xff]
        %v4530 = vld [vmem:[#allocation24 + $0x12d8] sm:$0xff]
        %v4531 = vld [vmem:[#allocation24 + $0x12e0] sm:$0xff]
        %v4532 = vld [vmem:[#allocation24 + $0x12e8] sm:$0xff]
        %v4533 = vld [vmem:[#allocation24 + $0x12f0] sm:$0xff]
        %v4534 = vld [vmem:[#allocation24 + $0x12f8] sm:$0xff]
        %v4535 = vld [vmem:[#allocation24 + $0x1300] sm:$0xff]
        %v4536 = vld [vmem:[#allocation24 + $0x1308] sm:$0xff]
        %v4537 = vld [vmem:[#allocation24 + $0x1310] sm:$0xff]
        %v4538 = vld [vmem:[#allocation24 + $0x1318] sm:$0xff]
        %v4539 = vld [vmem:[#allocation24 + $0x1320] sm:$0xff]
        %v4540 = vld [vmem:[#allocation24 + $0x1328] sm:$0xff]
        %v4541 = vld [vmem:[#allocation24 + $0x1330] sm:$0xff]
        %v4542 = vld [vmem:[#allocation24 + $0x1338] sm:$0xff]
        %v4543 = vld [vmem:[#allocation24 + $0x1340] sm:$0xff]
        %v4544 = vld [vmem:[#allocation24 + $0x1348] sm:$0xff]
        %v4545 = vld [vmem:[#allocation24 + $0x1350] sm:$0xff]
        %v4546 = vld [vmem:[#allocation24 + $0x1358] sm:$0xff]
        %v4547 = vld [vmem:[#allocation24 + $0x1360] sm:$0xff]
        %v4548 = vld [vmem:[#allocation24 + $0x1368] sm:$0xff]
        %v4549 = vld [vmem:[#allocation24 + $0x1370] sm:$0xff]
        %v4550 = vld [vmem:[#allocation24 + $0x1378] sm:$0xff]
        %v4551 = vld [vmem:[#allocation24 + $0x1380] sm:$0xff]
        %v4552 = vld [vmem:[#allocation24 + $0x1388] sm:$0xff]
        %v4553 = vld [vmem:[#allocation24 + $0x1390] sm:$0xff]
        %v4554 = vld [vmem:[#allocation24 + $0x1398] sm:$0xff]
        %v4555 = vld [vmem:[#allocation24 + $0x13a0] sm:$0xff]
        %v4556 = vld [vmem:[#allocation24 + $0x13a8] sm:$0xff]
        %v4557 = vld [vmem:[#allocation24 + $0x13b0] sm:$0xff]
        %v4558 = vld [vmem:[#allocation24 + $0x13b8] sm:$0xff]
        %v4559 = vld [vmem:[#allocation24 + $0x13c0] sm:$0xff]
        %v4560 = vld [vmem:[#allocation24 + $0x13c8] sm:$0xff]
        %v4561 = vld [vmem:[#allocation24 + $0x13d0] sm:$0xff]
        %v4562 = vld [vmem:[#allocation24 + $0x13d8] sm:$0xff]
        %v4563 = vld [vmem:[#allocation24 + $0x13e0] sm:$0xff]
        %v4564 = vld [vmem:[#allocation24 + $0x13e8] sm:$0xff]
        %v4565 = vld [vmem:[#allocation24 + $0x13f0] sm:$0xff]
        %v4566 = vld [vmem:[#allocation24 + $0x13f8] sm:$0xff]
        %v4567 = vld [vmem:[#allocation24 + $0x1400] sm:$0xff]
        %v4568 = vld [vmem:[#allocation24 + $0x1408] sm:$0xff]
        %v4569 = vld [vmem:[#allocation24 + $0x1410] sm:$0xff]
        %v4570 = vld [vmem:[#allocation24 + $0x1418] sm:$0xff]
        %v4571 = vld [vmem:[#allocation24 + $0x1420] sm:$0xff]
        %v4572 = vld [vmem:[#allocation24 + $0x1428] sm:$0xff]
        %v4573 = vld [vmem:[#allocation24 + $0x1430] sm:$0xff]
        %v4574 = vld [vmem:[#allocation24 + $0x1438] sm:$0xff]
        %v4575 = vld [vmem:[#allocation24 + $0x1440] sm:$0xff]
        %v4576 = vld [vmem:[#allocation24 + $0x1448] sm:$0xff]
        %v4577 = vld [vmem:[#allocation24 + $0x1450] sm:$0xff]
        %v4578 = vld [vmem:[#allocation24 + $0x1458] sm:$0xff]
        %v4579 = vld [vmem:[#allocation24 + $0x1460] sm:$0xff]
        %v4580 = vld [vmem:[#allocation24 + $0x1468] sm:$0xff]
        %v4581 = vld [vmem:[#allocation24 + $0x1470] sm:$0xff]
        %v4582 = vld [vmem:[#allocation24 + $0x1478] sm:$0xff]
        %v4583 = vld [vmem:[#allocation24 + $0x1480] sm:$0xff]
        %v4584 = vld [vmem:[#allocation24 + $0x1488] sm:$0xff]
        %v4585 = vld [vmem:[#allocation24 + $0x1490] sm:$0xff]
        %v4586 = vld [vmem:[#allocation24 + $0x1498] sm:$0xff]
        %v4587 = vld [vmem:[#allocation24 + $0x14a0] sm:$0xff]
        %v4588 = vld [vmem:[#allocation24 + $0x14a8] sm:$0xff]
        %v4589 = vld [vmem:[#allocation24 + $0x14b0] sm:$0xff]
        %v4590 = vld [vmem:[#allocation24 + $0x14b8] sm:$0xff]
        %v4591 = vld [vmem:[#allocation24 + $0x14c0] sm:$0xff]
        %v4592 = vld [vmem:[#allocation24 + $0x14c8] sm:$0xff]
        %v4593 = vld [vmem:[#allocation24 + $0x14d0] sm:$0xff]
        %v4594 = vld [vmem:[#allocation24 + $0x14d8] sm:$0xff]
        %v4595 = vld [vmem:[#allocation24 + $0x14e0] sm:$0xff]
        %v4596 = vld [vmem:[#allocation24 + $0x14e8] sm:$0xff]
        %v4597 = vld [vmem:[#allocation24 + $0x14f0] sm:$0xff]
        %v4598 = vld [vmem:[#allocation24 + $0x14f8] sm:$0xff]
        %v4599 = vld [vmem:[#allocation24 + $0x1500] sm:$0xff]
        %v4600 = vld [vmem:[#allocation24 + $0x1508] sm:$0xff]
        %v4601 = vld [vmem:[#allocation24 + $0x1510] sm:$0xff]
        %v4602 = vld [vmem:[#allocation24 + $0x1518] sm:$0xff]
        %v4603 = vld [vmem:[#allocation24 + $0x1520] sm:$0xff]
        %v4604 = vld [vmem:[#allocation24 + $0x1528] sm:$0xff]
        %v4605 = vld [vmem:[#allocation24 + $0x1530] sm:$0xff]
        %v4606 = vld [vmem:[#allocation24 + $0x1538] sm:$0xff]
        %v4607 = vld [vmem:[#allocation24 + $0x1540] sm:$0xff]
        %v4608 = vld [vmem:[#allocation24 + $0x1548] sm:$0xff]
        %v4609 = vld [vmem:[#allocation24 + $0x1550] sm:$0xff]
        %v4610 = vld [vmem:[#allocation24 + $0x1558] sm:$0xff]
        %v4611 = vld [vmem:[#allocation24 + $0x1560] sm:$0xff]
        %v4612 = vld [vmem:[#allocation24 + $0x1568] sm:$0xff]
        %v4613 = vld [vmem:[#allocation24 + $0x1570] sm:$0xff]
        %v4614 = vld [vmem:[#allocation24 + $0x1578] sm:$0xff]
        %v4615 = vld [vmem:[#allocation24 + $0x1580] sm:$0xff]
        %v4616 = vld [vmem:[#allocation24 + $0x1588] sm:$0xff]
        %v4617 = vld [vmem:[#allocation24 + $0x1590] sm:$0xff]
        %v4618 = vld [vmem:[#allocation24 + $0x1598] sm:$0xff]
        %v4619 = vld [vmem:[#allocation24 + $0x15a0] sm:$0xff]
        %v4620 = vld [vmem:[#allocation24 + $0x15a8] sm:$0xff]
        %v4621 = vld [vmem:[#allocation24 + $0x15b0] sm:$0xff]
        %v4622 = vld [vmem:[#allocation24 + $0x15b8] sm:$0xff]
        %v4623 = vld [vmem:[#allocation24 + $0x15c0] sm:$0xff]
        %v4624 = vld [vmem:[#allocation24 + $0x15c8] sm:$0xff]
        %v4625 = vld [vmem:[#allocation24 + $0x15d0] sm:$0xff]
        %v4626 = vld [vmem:[#allocation24 + $0x15d8] sm:$0xff]
        %v4627 = vld [vmem:[#allocation24 + $0x15e0] sm:$0xff]
        %v4628 = vld [vmem:[#allocation24 + $0x15e8] sm:$0xff]
        %v4629 = vld [vmem:[#allocation24 + $0x15f0] sm:$0xff]
        %v4630 = vld [vmem:[#allocation24 + $0x15f8] sm:$0xff]
        %v4631 = vld [vmem:[#allocation24 + $0x1600] sm:$0xff]
        %v4632 = vld [vmem:[#allocation24 + $0x1608] sm:$0xff]
        %v4633 = vld [vmem:[#allocation24 + $0x1610] sm:$0xff]
        %v4634 = vld [vmem:[#allocation24 + $0x1618] sm:$0xff]
        %v4635 = vld [vmem:[#allocation24 + $0x1620] sm:$0xff]
        %v4636 = vld [vmem:[#allocation24 + $0x1628] sm:$0xff]
        %v4637 = vld [vmem:[#allocation24 + $0x1630] sm:$0xff]
        %v4638 = vld [vmem:[#allocation24 + $0x1638] sm:$0xff]
        %v4639 = vld [vmem:[#allocation24 + $0x1640] sm:$0xff]
        %v4640 = vld [vmem:[#allocation24 + $0x1648] sm:$0xff]
        %v4641 = vld [vmem:[#allocation24 + $0x1650] sm:$0xff]
        %v4642 = vld [vmem:[#allocation24 + $0x1658] sm:$0xff]
        %v4643 = vld [vmem:[#allocation24 + $0x1660] sm:$0xff]
        %v4644 = vld [vmem:[#allocation24 + $0x1668] sm:$0xff]
        %v4645 = vld [vmem:[#allocation24 + $0x1670] sm:$0xff]
        %v4646 = vld [vmem:[#allocation24 + $0x1678] sm:$0xff]
        %v4647 = vld [vmem:[#allocation24 + $0x1680] sm:$0xff]
        %v4648 = vld [vmem:[#allocation24 + $0x1688] sm:$0xff]
        %v4649 = vld [vmem:[#allocation24 + $0x1690] sm:$0xff]
        %v4650 = vld [vmem:[#allocation24 + $0x1698] sm:$0xff]
        %v4651 = vld [vmem:[#allocation24 + $0x16a0] sm:$0xff]
        %v4652 = vld [vmem:[#allocation24 + $0x16a8] sm:$0xff]
        %v4653 = vld [vmem:[#allocation24 + $0x16b0] sm:$0xff]
        %v4654 = vld [vmem:[#allocation24 + $0x16b8] sm:$0xff]
        %v4655 = vld [vmem:[#allocation24 + $0x16c0] sm:$0xff]
        %v4656 = vld [vmem:[#allocation24 + $0x16c8] sm:$0xff]
        %v4657 = vld [vmem:[#allocation24 + $0x16d0] sm:$0xff]
        %v4658 = vld [vmem:[#allocation24 + $0x16d8] sm:$0xff]
        %v4659 = vld [vmem:[#allocation24 + $0x16e0] sm:$0xff]
        %v4660 = vld [vmem:[#allocation24 + $0x16e8] sm:$0xff]
        %v4661 = vld [vmem:[#allocation24 + $0x16f0] sm:$0xff]
        %v4662 = vld [vmem:[#allocation24 + $0x16f8] sm:$0xff]
        %v4663 = vld [vmem:[#allocation24 + $0x1700] sm:$0xff]
        %v4664 = vld [vmem:[#allocation24 + $0x1708] sm:$0xff]
        %v4665 = vld [vmem:[#allocation24 + $0x1710] sm:$0xff]
        %v4666 = vld [vmem:[#allocation24 + $0x1718] sm:$0xff]
        %v4667 = vld [vmem:[#allocation24 + $0x1720] sm:$0xff]
        %v4668 = vld [vmem:[#allocation24 + $0x1728] sm:$0xff]
        %v4669 = vld [vmem:[#allocation24 + $0x1730] sm:$0xff]
        %v4670 = vld [vmem:[#allocation24 + $0x1738] sm:$0xff]
        %v4671 = vld [vmem:[#allocation24 + $0x1740] sm:$0xff]
        %v4672 = vld [vmem:[#allocation24 + $0x1748] sm:$0xff]
        %v4673 = vld [vmem:[#allocation24 + $0x1750] sm:$0xff]
        %v4674 = vld [vmem:[#allocation24 + $0x1758] sm:$0xff]
        %v4675 = vld [vmem:[#allocation24 + $0x1760] sm:$0xff]
        %v4676 = vld [vmem:[#allocation24 + $0x1768] sm:$0xff]
        %v4677 = vld [vmem:[#allocation24 + $0x1770] sm:$0xff]
        %v4678 = vld [vmem:[#allocation24 + $0x1778] sm:$0xff]
        %v4679 = vld [vmem:[#allocation24 + $0x1780] sm:$0xff]
        %v4680 = vld [vmem:[#allocation24 + $0x1788] sm:$0xff]
        %v4681 = vld [vmem:[#allocation24 + $0x1790] sm:$0xff]
        %v4682 = vld [vmem:[#allocation24 + $0x1798] sm:$0xff]
        %v4683 = vld [vmem:[#allocation24 + $0x17a0] sm:$0xff]
        %v4684 = vld [vmem:[#allocation24 + $0x17a8] sm:$0xff]
        %v4685 = vld [vmem:[#allocation24 + $0x17b0] sm:$0xff]
        %v4686 = vld [vmem:[#allocation24 + $0x17b8] sm:$0xff]
        %v4687 = vld [vmem:[#allocation24 + $0x17c0] sm:$0xff]
        %v4688 = vld [vmem:[#allocation24 + $0x17c8] sm:$0xff]
        %v4689 = vld [vmem:[#allocation24 + $0x17d0] sm:$0xff]
        %v4690 = vld [vmem:[#allocation24 + $0x17d8] sm:$0xff]
        %v4691 = vld [vmem:[#allocation24 + $0x17e0] sm:$0xff]
        %v4692 = vld [vmem:[#allocation24 + $0x17e8] sm:$0xff]
        %v4693 = vld [vmem:[#allocation24 + $0x17f0] sm:$0xff]
        %v4694 = vld [vmem:[#allocation24 + $0x17f8] sm:$0xff]
        %v4695 = vld [vmem:[#allocation24 + $0x1800] sm:$0xff]
        %v4696 = vld [vmem:[#allocation24 + $0x1808] sm:$0xff]
        %v4697 = vld [vmem:[#allocation24 + $0x1810] sm:$0xff]
        %v4698 = vld [vmem:[#allocation24 + $0x1818] sm:$0xff]
        %v4699 = vld [vmem:[#allocation24 + $0x1820] sm:$0xff]
        %v4700 = vld [vmem:[#allocation24 + $0x1828] sm:$0xff]
        %v4701 = vld [vmem:[#allocation24 + $0x1830] sm:$0xff]
        %v4702 = vld [vmem:[#allocation24 + $0x1838] sm:$0xff]
        %v4703 = vld [vmem:[#allocation24 + $0x1840] sm:$0xff]
        %v4704 = vld [vmem:[#allocation24 + $0x1848] sm:$0xff]
        %v4705 = vld [vmem:[#allocation24 + $0x1850] sm:$0xff]
        %v4706 = vld [vmem:[#allocation24 + $0x1858] sm:$0xff]
        %v4707 = vld [vmem:[#allocation24 + $0x1860] sm:$0xff]
        %v4708 = vld [vmem:[#allocation24 + $0x1868] sm:$0xff]
        %v4709 = vld [vmem:[#allocation24 + $0x1870] sm:$0xff]
        %v4710 = vld [vmem:[#allocation24 + $0x1878] sm:$0xff]
        %v4711 = vld [vmem:[#allocation24 + $0x1880] sm:$0xff]
        %v4712 = vld [vmem:[#allocation24 + $0x1888] sm:$0xff]
        %v4713 = vld [vmem:[#allocation24 + $0x1890] sm:$0xff]
        %v4714 = vld [vmem:[#allocation24 + $0x1898] sm:$0xff]
        %v4715 = vld [vmem:[#allocation24 + $0x18a0] sm:$0xff]
        %v4716 = vld [vmem:[#allocation24 + $0x18a8] sm:$0xff]
        %v4717 = vld [vmem:[#allocation24 + $0x18b0] sm:$0xff]
        %v4718 = vld [vmem:[#allocation24 + $0x18b8] sm:$0xff]
        %v4719 = vld [vmem:[#allocation24 + $0x18c0] sm:$0xff]
        %v4720 = vld [vmem:[#allocation24 + $0x18c8] sm:$0xff]
        %v4721 = vld [vmem:[#allocation24 + $0x18d0] sm:$0xff]
        %v4722 = vld [vmem:[#allocation24 + $0x18d8] sm:$0xff]
        %v4723 = vld [vmem:[#allocation24 + $0x18e0] sm:$0xff]
        %v4724 = vld [vmem:[#allocation24 + $0x18e8] sm:$0xff]
        %v4725 = vld [vmem:[#allocation24 + $0x18f0] sm:$0xff]
        %v4726 = vld [vmem:[#allocation24 + $0x18f8] sm:$0xff]
        %v4727 = vld [vmem:[#allocation24 + $0x1900] sm:$0xff]
        %v4728 = vld [vmem:[#allocation24 + $0x1908] sm:$0xff]
        %v4729 = vld [vmem:[#allocation24 + $0x1910] sm:$0xff]
        %v4730 = vld [vmem:[#allocation24 + $0x1918] sm:$0xff]
        %v4731 = vld [vmem:[#allocation24 + $0x1920] sm:$0xff]
        %v4732 = vld [vmem:[#allocation24 + $0x1928] sm:$0xff]
        %v4733 = vld [vmem:[#allocation24 + $0x1930] sm:$0xff]
        %v4734 = vld [vmem:[#allocation24 + $0x1938] sm:$0xff]
        %v4735 = vld [vmem:[#allocation24 + $0x1940] sm:$0xff]
        %v4736 = vld [vmem:[#allocation24 + $0x1948] sm:$0xff]
        %v4737 = vld [vmem:[#allocation24 + $0x1950] sm:$0xff]
        %v4738 = vld [vmem:[#allocation24 + $0x1958] sm:$0xff]
        %v4739 = vld [vmem:[#allocation24 + $0x1960] sm:$0xff]
        %v4740 = vld [vmem:[#allocation24 + $0x1968] sm:$0xff]
        %v4741 = vld [vmem:[#allocation24 + $0x1970] sm:$0xff]
        %v4742 = vld [vmem:[#allocation24 + $0x1978] sm:$0xff]
        %v4743 = vld [vmem:[#allocation24 + $0x1980] sm:$0xff]
        %v4744 = vld [vmem:[#allocation24 + $0x1988] sm:$0xff]
        %v4745 = vld [vmem:[#allocation24 + $0x1990] sm:$0xff]
        %v4746 = vld [vmem:[#allocation24 + $0x1998] sm:$0xff]
        %v4747 = vld [vmem:[#allocation24 + $0x19a0] sm:$0xff]
        %v4748 = vld [vmem:[#allocation24 + $0x19a8] sm:$0xff]
        %v4749 = vld [vmem:[#allocation24 + $0x19b0] sm:$0xff]
        %v4750 = vld [vmem:[#allocation24 + $0x19b8] sm:$0xff]
        %v4751 = vld [vmem:[#allocation24 + $0x19c0] sm:$0xff]
        %v4752 = vld [vmem:[#allocation24 + $0x19c8] sm:$0xff]
        %v4753 = vld [vmem:[#allocation24 + $0x19d0] sm:$0xff]
        %v4754 = vld [vmem:[#allocation24 + $0x19d8] sm:$0xff]
        %v4755 = vld [vmem:[#allocation24 + $0x19e0] sm:$0xff]
        %v4756 = vld [vmem:[#allocation24 + $0x19e8] sm:$0xff]
        %v4757 = vld [vmem:[#allocation24 + $0x19f0] sm:$0xff]
        %v4758 = vld [vmem:[#allocation24 + $0x19f8] sm:$0xff]
        %v4759 = vld [vmem:[#allocation24 + $0x1a00] sm:$0xff]
        %v4760 = vld [vmem:[#allocation24 + $0x1a08] sm:$0xff]
        %v4761 = vld [vmem:[#allocation24 + $0x1a10] sm:$0xff]
        %v4762 = vld [vmem:[#allocation24 + $0x1a18] sm:$0xff]
        %v4763 = vld [vmem:[#allocation24 + $0x1a20] sm:$0xff]
        %v4764 = vld [vmem:[#allocation24 + $0x1a28] sm:$0xff]
        %v4765 = vld [vmem:[#allocation24 + $0x1a30] sm:$0xff]
        %v4766 = vld [vmem:[#allocation24 + $0x1a38] sm:$0xff]
        %v4767 = vld [vmem:[#allocation24 + $0x1a40] sm:$0xff]
        %v4768 = vld [vmem:[#allocation24 + $0x1a48] sm:$0xff]
        %v4769 = vld [vmem:[#allocation24 + $0x1a50] sm:$0xff]
        %v4770 = vld [vmem:[#allocation24 + $0x1a58] sm:$0xff]
        %v4771 = vld [vmem:[#allocation24 + $0x1a60] sm:$0xff]
        %v4772 = vld [vmem:[#allocation24 + $0x1a68] sm:$0xff]
        %v4773 = vld [vmem:[#allocation24 + $0x1a70] sm:$0xff]
        %v4774 = vld [vmem:[#allocation24 + $0x1a78] sm:$0xff]
        %v4775 = vld [vmem:[#allocation24 + $0x1a80] sm:$0xff]
        %v4776 = vld [vmem:[#allocation24 + $0x1a88] sm:$0xff]
        %v4777 = vld [vmem:[#allocation24 + $0x1a90] sm:$0xff]
        %v4778 = vld [vmem:[#allocation24 + $0x1a98] sm:$0xff]
        %v4779 = vld [vmem:[#allocation24 + $0x1aa0] sm:$0xff]
        %v4780 = vld [vmem:[#allocation24 + $0x1aa8] sm:$0xff]
        %v4781 = vld [vmem:[#allocation24 + $0x1ab0] sm:$0xff]
        %v4782 = vld [vmem:[#allocation24 + $0x1ab8] sm:$0xff]
        %v4783 = vld [vmem:[#allocation24 + $0x1ac0] sm:$0xff]
        %v4784 = vld [vmem:[#allocation24 + $0x1ac8] sm:$0xff]
        %v4785 = vld [vmem:[#allocation24 + $0x1ad0] sm:$0xff]
        %v4786 = vld [vmem:[#allocation24 + $0x1ad8] sm:$0xff]
        %v4787 = vld [vmem:[#allocation24 + $0x1ae0] sm:$0xff]
        %v4788 = vld [vmem:[#allocation24 + $0x1ae8] sm:$0xff]
        %v4789 = vld [vmem:[#allocation24 + $0x1af0] sm:$0xff]
        %v4790 = vld [vmem:[#allocation24 + $0x1af8] sm:$0xff]
        %v4791 = vld [vmem:[#allocation24 + $0x1b00] sm:$0xff]
        %v4792 = vld [vmem:[#allocation24 + $0x1b08] sm:$0xff]
        %v4793 = vld [vmem:[#allocation24 + $0x1b10] sm:$0xff]
        %v4794 = vld [vmem:[#allocation24 + $0x1b18] sm:$0xff]
        %v4795 = vld [vmem:[#allocation24 + $0x1b20] sm:$0xff]
        %v4796 = vld [vmem:[#allocation24 + $0x1b28] sm:$0xff]
        %v4797 = vld [vmem:[#allocation24 + $0x1b30] sm:$0xff]
        %v4798 = vld [vmem:[#allocation24 + $0x1b38] sm:$0xff]
        %v4799 = vld [vmem:[#allocation24 + $0x1b40] sm:$0xff]
        %v4800 = vld [vmem:[#allocation24 + $0x1b48] sm:$0xff]
        %v4801 = vld [vmem:[#allocation24 + $0x1b50] sm:$0xff]
        %v4802 = vld [vmem:[#allocation24 + $0x1b58] sm:$0xff]
        %v4803 = vld [vmem:[#allocation24 + $0x1b60] sm:$0xff]
        %v4804 = vld [vmem:[#allocation24 + $0x1b68] sm:$0xff]
        %v4805 = vld [vmem:[#allocation24 + $0x1b70] sm:$0xff]
        %v4806 = vld [vmem:[#allocation24 + $0x1b78] sm:$0xff]
        %v4807 = vld [vmem:[#allocation24 + $0x1b80] sm:$0xff]
        %v4808 = vld [vmem:[#allocation24 + $0x1b88] sm:$0xff]
        %v4809 = vld [vmem:[#allocation24 + $0x1b90] sm:$0xff]
        %v4810 = vld [vmem:[#allocation24 + $0x1b98] sm:$0xff]
        %v4811 = vld [vmem:[#allocation24 + $0x1ba0] sm:$0xff]
        %v4812 = vld [vmem:[#allocation24 + $0x1ba8] sm:$0xff]
        %v4813 = vld [vmem:[#allocation24 + $0x1bb0] sm:$0xff]
        %v4814 = vld [vmem:[#allocation24 + $0x1bb8] sm:$0xff]
        %v4815 = vld [vmem:[#allocation24 + $0x1bc0] sm:$0xff]
        %v4816 = vld [vmem:[#allocation24 + $0x1bc8] sm:$0xff]
        %v4817 = vld [vmem:[#allocation24 + $0x1bd0] sm:$0xff]
        %v4818 = vld [vmem:[#allocation24 + $0x1bd8] sm:$0xff]
        %v4819 = vld [vmem:[#allocation24 + $0x1be0] sm:$0xff]
        %v4820 = vld [vmem:[#allocation24 + $0x1be8] sm:$0xff]
        %v4821 = vld [vmem:[#allocation24 + $0x1bf0] sm:$0xff]
        %v4822 = vld [vmem:[#allocation24 + $0x1bf8] sm:$0xff]
        %v4823 = vld [vmem:[#allocation24 + $0x1c00] sm:$0xff]
        %v4824 = vld [vmem:[#allocation24 + $0x1c08] sm:$0xff]
        %v4825 = vld [vmem:[#allocation24 + $0x1c10] sm:$0xff]
        %v4826 = vld [vmem:[#allocation24 + $0x1c18] sm:$0xff]
        %v4827 = vld [vmem:[#allocation24 + $0x1c20] sm:$0xff]
        %v4828 = vld [vmem:[#allocation24 + $0x1c28] sm:$0xff]
        %v4829 = vld [vmem:[#allocation24 + $0x1c30] sm:$0xff]
        %v4830 = vld [vmem:[#allocation24 + $0x1c38] sm:$0xff]
        %v4831 = vld [vmem:[#allocation24 + $0x1c40] sm:$0xff]
        %v4832 = vld [vmem:[#allocation24 + $0x1c48] sm:$0xff]
        %v4833 = vld [vmem:[#allocation24 + $0x1c50] sm:$0xff]
        %v4834 = vld [vmem:[#allocation24 + $0x1c58] sm:$0xff]
        %v4835 = vld [vmem:[#allocation24 + $0x1c60] sm:$0xff]
        %v4836 = vld [vmem:[#allocation24 + $0x1c68] sm:$0xff]
        %v4837 = vld [vmem:[#allocation24 + $0x1c70] sm:$0xff]
        %v4838 = vld [vmem:[#allocation24 + $0x1c78] sm:$0xff]
        %v4839 = vld [vmem:[#allocation24 + $0x1c80] sm:$0xff]
        %v4840 = vld [vmem:[#allocation24 + $0x1c88] sm:$0xff]
        %v4841 = vld [vmem:[#allocation24 + $0x1c90] sm:$0xff]
        %v4842 = vld [vmem:[#allocation24 + $0x1c98] sm:$0xff]
        %v4843 = vld [vmem:[#allocation24 + $0x1ca0] sm:$0xff]
        %v4844 = vld [vmem:[#allocation24 + $0x1ca8] sm:$0xff]
        %v4845 = vld [vmem:[#allocation24 + $0x1cb0] sm:$0xff]
        %v4846 = vld [vmem:[#allocation24 + $0x1cb8] sm:$0xff]
        %v4847 = vld [vmem:[#allocation24 + $0x1cc0] sm:$0xff]
        %v4848 = vld [vmem:[#allocation24 + $0x1cc8] sm:$0xff]
        %v4849 = vld [vmem:[#allocation24 + $0x1cd0] sm:$0xff]
        %v4850 = vld [vmem:[#allocation24 + $0x1cd8] sm:$0xff]
        %v4851 = vld [vmem:[#allocation24 + $0x1ce0] sm:$0xff]
        %v4852 = vld [vmem:[#allocation24 + $0x1ce8] sm:$0xff]
        %v4853 = vld [vmem:[#allocation24 + $0x1cf0] sm:$0xff]
        %v4854 = vld [vmem:[#allocation24 + $0x1cf8] sm:$0xff]
        %v4855 = vld [vmem:[#allocation24 + $0x1d00] sm:$0xff]
        %v4856 = vld [vmem:[#allocation24 + $0x1d08] sm:$0xff]
        %v4857 = vld [vmem:[#allocation24 + $0x1d10] sm:$0xff]
        %v4858 = vld [vmem:[#allocation24 + $0x1d18] sm:$0xff]
        %v4859 = vld [vmem:[#allocation24 + $0x1d20] sm:$0xff]
        %v4860 = vld [vmem:[#allocation24 + $0x1d28] sm:$0xff]
        %v4861 = vld [vmem:[#allocation24 + $0x1d30] sm:$0xff]
        %v4862 = vld [vmem:[#allocation24 + $0x1d38] sm:$0xff]
        %v4863 = vld [vmem:[#allocation24 + $0x1d40] sm:$0xff]
        %v4864 = vld [vmem:[#allocation24 + $0x1d48] sm:$0xff]
        %v4865 = vld [vmem:[#allocation24 + $0x1d50] sm:$0xff]
        %v4866 = vld [vmem:[#allocation24 + $0x1d58] sm:$0xff]
        %v4867 = vld [vmem:[#allocation24 + $0x1d60] sm:$0xff]
        %v4868 = vld [vmem:[#allocation24 + $0x1d68] sm:$0xff]
        %v4869 = vld [vmem:[#allocation24 + $0x1d70] sm:$0xff]
        %v4870 = vld [vmem:[#allocation24 + $0x1d78] sm:$0xff]
        %v4871 = vld [vmem:[#allocation24 + $0x1d80] sm:$0xff]
        %v4872 = vld [vmem:[#allocation24 + $0x1d88] sm:$0xff]
        %v4873 = vld [vmem:[#allocation24 + $0x1d90] sm:$0xff]
        %v4874 = vld [vmem:[#allocation24 + $0x1d98] sm:$0xff]
        %v4875 = vld [vmem:[#allocation24 + $0x1da0] sm:$0xff]
        %v4876 = vld [vmem:[#allocation24 + $0x1da8] sm:$0xff]
        %v4877 = vld [vmem:[#allocation24 + $0x1db0] sm:$0xff]
        %v4878 = vld [vmem:[#allocation24 + $0x1db8] sm:$0xff]
        %v4879 = vld [vmem:[#allocation24 + $0x1dc0] sm:$0xff]
        %v4880 = vld [vmem:[#allocation24 + $0x1dc8] sm:$0xff]
        %v4881 = vld [vmem:[#allocation24 + $0x1dd0] sm:$0xff]
        %v4882 = vld [vmem:[#allocation24 + $0x1dd8] sm:$0xff]
        %v4883 = vld [vmem:[#allocation24 + $0x1de0] sm:$0xff]
        %v4884 = vld [vmem:[#allocation24 + $0x1de8] sm:$0xff]
        %v4885 = vld [vmem:[#allocation24 + $0x1df0] sm:$0xff]
        %v4886 = vld [vmem:[#allocation24 + $0x1df8] sm:$0xff]
        %v4887 = vld [vmem:[#allocation24 + $0x1e00] sm:$0xff]
        %v4888 = vld [vmem:[#allocation24 + $0x1e08] sm:$0xff]
        %v4889 = vld [vmem:[#allocation24 + $0x1e10] sm:$0xff]
        %v4890 = vld [vmem:[#allocation24 + $0x1e18] sm:$0xff]
        %v4891 = vld [vmem:[#allocation24 + $0x1e20] sm:$0xff]
        %v4892 = vld [vmem:[#allocation24 + $0x1e28] sm:$0xff]
        %v4893 = vld [vmem:[#allocation24 + $0x1e30] sm:$0xff]
        %v4894 = vld [vmem:[#allocation24 + $0x1e38] sm:$0xff]
        %v4895 = vld [vmem:[#allocation24 + $0x1e40] sm:$0xff]
        %v4896 = vld [vmem:[#allocation24 + $0x1e48] sm:$0xff]
        %v4897 = vld [vmem:[#allocation24 + $0x1e50] sm:$0xff]
        %v4898 = vld [vmem:[#allocation24 + $0x1e58] sm:$0xff]
        %v4899 = vld [vmem:[#allocation24 + $0x1e60] sm:$0xff]
        %v4900 = vld [vmem:[#allocation24 + $0x1e68] sm:$0xff]
        %v4901 = vld [vmem:[#allocation24 + $0x1e70] sm:$0xff]
        %v4902 = vld [vmem:[#allocation24 + $0x1e78] sm:$0xff]
        %v4903 = vld [vmem:[#allocation24 + $0x1e80] sm:$0xff]
        %v4904 = vld [vmem:[#allocation24 + $0x1e88] sm:$0xff]
        %v4905 = vld [vmem:[#allocation24 + $0x1e90] sm:$0xff]
        %v4906 = vld [vmem:[#allocation24 + $0x1e98] sm:$0xff]
        %v4907 = vld [vmem:[#allocation24 + $0x1ea0] sm:$0xff]
        %v4908 = vld [vmem:[#allocation24 + $0x1ea8] sm:$0xff]
        %v4909 = vld [vmem:[#allocation24 + $0x1eb0] sm:$0xff]
        %v4910 = vld [vmem:[#allocation24 + $0x1eb8] sm:$0xff]
        %v4911 = vld [vmem:[#allocation24 + $0x1ec0] sm:$0xff]
        %v4912 = vld [vmem:[#allocation24 + $0x1ec8] sm:$0xff]
        %v4913 = vld [vmem:[#allocation24 + $0x1ed0] sm:$0xff]
        %v4914 = vld [vmem:[#allocation24 + $0x1ed8] sm:$0xff]
        %v4915 = vld [vmem:[#allocation24 + $0x1ee0] sm:$0xff]
        %v4916 = vld [vmem:[#allocation24 + $0x1ee8] sm:$0xff]
        %v4917 = vld [vmem:[#allocation24 + $0x1ef0] sm:$0xff]
        %v4918 = vld [vmem:[#allocation24 + $0x1ef8] sm:$0xff]
        %v4919 = vld [vmem:[#allocation24 + $0x1f00] sm:$0xff]
        %v4920 = vld [vmem:[#allocation24 + $0x1f08] sm:$0xff]
        %v4921 = vld [vmem:[#allocation24 + $0x1f10] sm:$0xff]
        %v4922 = vld [vmem:[#allocation24 + $0x1f18] sm:$0xff]
        %v4923 = vld [vmem:[#allocation24 + $0x1f20] sm:$0xff]
        %v4924 = vld [vmem:[#allocation24 + $0x1f28] sm:$0xff]
        %v4925 = vld [vmem:[#allocation24 + $0x1f30] sm:$0xff]
        %v4926 = vld [vmem:[#allocation24 + $0x1f38] sm:$0xff]
        %v4927 = vld [vmem:[#allocation24 + $0x1f40] sm:$0xff]
        %v4928 = vld [vmem:[#allocation24 + $0x1f48] sm:$0xff]
        %v4929 = vld [vmem:[#allocation24 + $0x1f50] sm:$0xff]
        %v4930 = vld [vmem:[#allocation24 + $0x1f58] sm:$0xff]
        %v4931 = vld [vmem:[#allocation24 + $0x1f60] sm:$0xff]
        %v4932 = vld [vmem:[#allocation24 + $0x1f68] sm:$0xff]
        %v4933 = vld [vmem:[#allocation24 + $0x1f70] sm:$0xff]
        %v4934 = vld [vmem:[#allocation24 + $0x1f78] sm:$0xff]
        %v4935 = vld [vmem:[#allocation24 + $0x1f80] sm:$0xff]
        %v4936 = vld [vmem:[#allocation24 + $0x1f88] sm:$0xff]
        %v4937 = vld [vmem:[#allocation24 + $0x1f90] sm:$0xff]
        %v4938 = vld [vmem:[#allocation24 + $0x1f98] sm:$0xff]
        %v4939 = vld [vmem:[#allocation24 + $0x1fa0] sm:$0xff]
        %v4940 = vld [vmem:[#allocation24 + $0x1fa8] sm:$0xff]
        %v4941 = vld [vmem:[#allocation24 + $0x1fb0] sm:$0xff]
        %v4942 = vld [vmem:[#allocation24 + $0x1fb8] sm:$0xff]
        %v4943 = vld [vmem:[#allocation24 + $0x1fc0] sm:$0xff]
        %v4944 = vld [vmem:[#allocation24 + $0x1fc8] sm:$0xff]
        %v4945 = vld [vmem:[#allocation24 + $0x1fd0] sm:$0xff]
        %v4946 = vld [vmem:[#allocation24 + $0x1fd8] sm:$0xff]
        %v4947 = vld [vmem:[#allocation24 + $0x1fe0] sm:$0xff]
        %v4948 = vld [vmem:[#allocation24 + $0x1fe8] sm:$0xff]
        %v4949 = vld [vmem:[#allocation24 + $0x1ff0] sm:$0xff]
        %v4950 = vld [vmem:[#allocation24 + $0x1ff8] sm:$0xff]
        %4951 = vmatprep.subr.mxu0 %v3928
        %4952 = vmatpush1.msra.mxu0 %v3927
        %4953 = vmatprep.subr.mxu0 %v3936
        %4954 = vmatpush1.msra.mxu0 %v3935
        %4955 = vmatprep.subr.mxu0 %v3944
        %4956 = vmatpush1.msra.mxu0 %v3943
        %4957 = vmatprep.subr.mxu0 %v3952
        %4958 = vmatpush1.msra.mxu0 %v3951
        %4959 = vmatprep.subr.mxu0 %v3960
        %4960 = vmatpush1.msra.mxu0 %v3959
        %4961 = vmatprep.subr.mxu0 %v3968
        %4962 = vmatpush1.msra.mxu0 %v3967
        %4963 = vmatprep.subr.mxu0 %v3976
        %4964 = vmatpush1.msra.mxu0 %v3975
        %4965 = vmatprep.subr.mxu0 %v3984
        %4966 = vmatpush1.msra.mxu0 %v3983
        %4967 = vmatprep.subr.mxu0 %v3992
        %4968 = vmatpush1.msra.mxu0 %v3991
        %4969 = vmatprep.subr.mxu0 %v4000
        %4970 = vmatpush1.msra.mxu0 %v3999
        %4971 = vmatprep.subr.mxu0 %v4008
        %4972 = vmatpush1.msra.mxu0 %v4007
        %4973 = vmatprep.subr.mxu0 %v4016
        %4974 = vmatpush1.msra.mxu0 %v4015
        %4975 = vmatprep.subr.mxu0 %v4024
        %4976 = vmatpush1.msra.mxu0 %v4023
        %4977 = vmatprep.subr.mxu0 %v4032
        %4978 = vmatpush1.msra.mxu0 %v4031
        %4979 = vmatprep.subr.mxu0 %v4040
        %4980 = vmatpush1.msra.mxu0 %v4039
        %4981 = vmatprep.subr.mxu0 %v4048
        %4982 = vmatpush1.msra.mxu0 %v4047
        %4983 = vmatprep.subr.mxu0 %v4056
        %4984 = vmatpush1.msra.mxu0 %v4055
        %4985 = vmatprep.subr.mxu0 %v4064
        %4986 = vmatpush1.msra.mxu0 %v4063
        %4987 = vmatprep.subr.mxu0 %v4072
        %4988 = vmatpush1.msra.mxu0 %v4071
        %4989 = vmatprep.subr.mxu0 %v4080
        %4990 = vmatpush1.msra.mxu0 %v4079
        %4991 = vmatprep.subr.mxu0 %v4088
        %4992 = vmatpush1.msra.mxu0 %v4087
        %4993 = vmatprep.subr.mxu0 %v4096
        %4994 = vmatpush1.msra.mxu0 %v4095
        %4995 = vmatprep.subr.mxu0 %v4104
        %4996 = vmatpush1.msra.mxu0 %v4103
        %4997 = vmatprep.subr.mxu0 %v4112
        %4998 = vmatpush1.msra.mxu0 %v4111
        %4999 = vmatprep.subr.mxu0 %v4120
        %5000 = vmatpush1.msra.mxu0 %v4119
        %5001 = vmatprep.subr.mxu0 %v4128
        %5002 = vmatpush1.msra.mxu0 %v4127
        %5003 = vmatprep.subr.mxu0 %v4136
        %5004 = vmatpush1.msra.mxu0 %v4135
        %5005 = vmatprep.subr.mxu0 %v4144
        %5006 = vmatpush1.msra.mxu0 %v4143
        %5007 = vmatprep.subr.mxu0 %v4152
        %5008 = vmatpush1.msra.mxu0 %v4151
        %5009 = vmatprep.subr.mxu0 %v4160
        %5010 = vmatpush1.msra.mxu0 %v4159
        %5011 = vmatprep.subr.mxu0 %v4168
        %5012 = vmatpush1.msra.mxu0 %v4167
        %5013 = vmatprep.subr.mxu0 %v4176
        %5014 = vmatpush1.msra.mxu0 %v4175
        %5015 = vmatprep.mubr.f32.mxu0 %v3920
        %5016 = vmatmul.mubr.f32.gmra.mrb[0].mxu0 %v3919
        %v5017 = vpop.f32.mrb[0].mxu0
        %v5018 = vadd.f32 0.0, %v5017
        %v5019 = vpop.f32.mrb[0].mxu0
        %v5020 = vadd.f32 0.0, %v5019
        %5021 = vdwg.mxu0
        %5022 = vmatprep.subr.mxu0 %v4184
        %5023 = vmatpush1.msra.mxu0 %v4183
        %5024 = vmatprep.subr.mxu0 %v4192
        %5025 = vmatpush1.msra.mxu0 %v4191
        %5026 = vmatprep.subr.mxu0 %v4200
        %5027 = vmatpush1.msra.mxu0 %v4199
        %5028 = vmatprep.subr.mxu0 %v4208
        %5029 = vmatpush1.msra.mxu0 %v4207
        %5030 = vmatprep.subr.mxu0 %v4216
        %5031 = vmatpush1.msra.mxu0 %v4215
        %5032 = vmatprep.subr.mxu0 %v4224
        %5033 = vmatpush1.msra.mxu0 %v4223
        %5034 = vmatprep.subr.mxu0 %v4232
        %5035 = vmatpush1.msra.mxu0 %v4231
        %5036 = vmatprep.subr.mxu0 %v4240
        %5037 = vmatpush1.msra.mxu0 %v4239
        %5038 = vmatprep.subr.mxu0 %v4248
        %5039 = vmatpush1.msra.mxu0 %v4247
        %5040 = vmatprep.subr.mxu0 %v4256
        %5041 = vmatpush1.msra.mxu0 %v4255
        %5042 = vmatprep.subr.mxu0 %v4264
        %5043 = vmatpush1.msra.mxu0 %v4263
        %5044 = vmatprep.subr.mxu0 %v4272
        %5045 = vmatpush1.msra.mxu0 %v4271
        %5046 = vmatprep.subr.mxu0 %v4280
        %5047 = vmatpush1.msra.mxu0 %v4279
        %5048 = vmatprep.subr.mxu0 %v4288
        %5049 = vmatpush1.msra.mxu0 %v4287
        %5050 = vmatprep.subr.mxu0 %v4296
        %5051 = vmatpush1.msra.mxu0 %v4295
        %5052 = vmatprep.subr.mxu0 %v4304
        %5053 = vmatpush1.msra.mxu0 %v4303
        %5054 = vmatprep.subr.mxu0 %v4312
        %5055 = vmatpush1.msra.mxu0 %v4311
        %5056 = vmatprep.subr.mxu0 %v4320
        %5057 = vmatpush1.msra.mxu0 %v4319
        %5058 = vmatprep.subr.mxu0 %v4328
        %5059 = vmatpush1.msra.mxu0 %v4327
        %5060 = vmatprep.subr.mxu0 %v4336
        %5061 = vmatpush1.msra.mxu0 %v4335
        %5062 = vmatprep.subr.mxu0 %v4344
        %5063 = vmatpush1.msra.mxu0 %v4343
        %5064 = vmatprep.subr.mxu0 %v4352
        %5065 = vmatpush1.msra.mxu0 %v4351
        %5066 = vmatprep.subr.mxu0 %v4360
        %5067 = vmatpush1.msra.mxu0 %v4359
        %5068 = vmatprep.subr.mxu0 %v4368
        %5069 = vmatpush1.msra.mxu0 %v4367
        %5070 = vmatprep.subr.mxu0 %v4376
        %5071 = vmatpush1.msra.mxu0 %v4375
        %5072 = vmatprep.subr.mxu0 %v4384
        %5073 = vmatpush1.msra.mxu0 %v4383
        %5074 = vmatprep.subr.mxu0 %v4392
        %5075 = vmatpush1.msra.mxu0 %v4391
        %5076 = vmatprep.subr.mxu0 %v4400
        %5077 = vmatpush1.msra.mxu0 %v4399
        %5078 = vmatprep.subr.mxu0 %v4408
        %5079 = vmatpush1.msra.mxu0 %v4407
        %5080 = vmatprep.subr.mxu0 %v4416
        %5081 = vmatpush1.msra.mxu0 %v4415
        %5082 = vmatprep.subr.mxu0 %v4424
        %5083 = vmatpush1.msra.mxu0 %v4423
        %5084 = vmatprep.subr.mxu0 %v4432
        %5085 = vmatpush1.msra.mxu0 %v4431
        %5086 = vmatprep.mubr.f32.mxu0 %v3922
        %5087 = vmatmul.mubr.f32.gmra.mrb[0].mxu0 %v3921
        %v5088 = vpop.f32.mrb[0].mxu0
        %v5089 = vadd.f32 %v5018, %v5088
        %v5090 = vpop.f32.mrb[0].mxu0
        %v5091 = vadd.f32 %v5020, %v5090
        %5092 = vdwg.mxu0
        %5093 = vmatprep.subr.mxu0 %v4440
        %5094 = vmatpush1.msra.mxu0 %v4439
        %5095 = vmatprep.subr.mxu0 %v4448
        %5096 = vmatpush1.msra.mxu0 %v4447
        %5097 = vmatprep.subr.mxu0 %v4456
        %5098 = vmatpush1.msra.mxu0 %v4455
        %5099 = vmatprep.subr.mxu0 %v4464
        %5100 = vmatpush1.msra.mxu0 %v4463
        %5101 = vmatprep.subr.mxu0 %v4472
        %5102 = vmatpush1.msra.mxu0 %v4471
        %5103 = vmatprep.subr.mxu0 %v4480
        %5104 = vmatpush1.msra.mxu0 %v4479
        %5105 = vmatprep.subr.mxu0 %v4488
        %5106 = vmatpush1.msra.mxu0 %v4487
        %5107 = vmatprep.subr.mxu0 %v4496
        %5108 = vmatpush1.msra.mxu0 %v4495
        %5109 = vmatprep.subr.mxu0 %v4504
        %5110 = vmatpush1.msra.mxu0 %v4503
        %5111 = vmatprep.subr.mxu0 %v4512
        %5112 = vmatpush1.msra.mxu0 %v4511
        %5113 = vmatprep.subr.mxu0 %v4520
        %5114 = vmatpush1.msra.mxu0 %v4519
        %5115 = vmatprep.subr.mxu0 %v4528
        %5116 = vmatpush1.msra.mxu0 %v4527
        %5117 = vmatprep.subr.mxu0 %v4536
        %5118 = vmatpush1.msra.mxu0 %v4535
        %5119 = vmatprep.subr.mxu0 %v4544
        %5120 = vmatpush1.msra.mxu0 %v4543
        %5121 = vmatprep.subr.mxu0 %v4552
        %5122 = vmatpush1.msra.mxu0 %v4551
        %5123 = vmatprep.subr.mxu0 %v4560
        %5124 = vmatpush1.msra.mxu0 %v4559
        %5125 = vmatprep.subr.mxu0 %v4568
        %5126 = vmatpush1.msra.mxu0 %v4567
        %5127 = vmatprep.subr.mxu0 %v4576
        %5128 = vmatpush1.msra.mxu0 %v4575
        %5129 = vmatprep.subr.mxu0 %v4584
        %5130 = vmatpush1.msra.mxu0 %v4583
        %5131 = vmatprep.subr.mxu0 %v4592
        %5132 = vmatpush1.msra.mxu0 %v4591
        %5133 = vmatprep.subr.mxu0 %v4600
        %5134 = vmatpush1.msra.mxu0 %v4599
        %5135 = vmatprep.subr.mxu0 %v4608
        %5136 = vmatpush1.msra.mxu0 %v4607
        %5137 = vmatprep.subr.mxu0 %v4616
        %5138 = vmatpush1.msra.mxu0 %v4615
        %5139 = vmatprep.subr.mxu0 %v4624
        %5140 = vmatpush1.msra.mxu0 %v4623
        %5141 = vmatprep.subr.mxu0 %v4632
        %5142 = vmatpush1.msra.mxu0 %v4631
        %5143 = vmatprep.subr.mxu0 %v4640
        %5144 = vmatpush1.msra.mxu0 %v4639
        %5145 = vmatprep.subr.mxu0 %v4648
        %5146 = vmatpush1.msra.mxu0 %v4647
        %5147 = vmatprep.subr.mxu0 %v4656
        %5148 = vmatpush1.msra.mxu0 %v4655
        %5149 = vmatprep.subr.mxu0 %v4664
        %5150 = vmatpush1.msra.mxu0 %v4663
        %5151 = vmatprep.subr.mxu0 %v4672
        %5152 = vmatpush1.msra.mxu0 %v4671
        %5153 = vmatprep.subr.mxu0 %v4680
        %5154 = vmatpush1.msra.mxu0 %v4679
        %5155 = vmatprep.subr.mxu0 %v4688
        %5156 = vmatpush1.msra.mxu0 %v4687
        %5157 = vmatprep.mubr.f32.mxu0 %v3924
        %5158 = vmatmul.mubr.f32.gmra.mrb[0].mxu0 %v3923
        %v5159 = vpop.f32.mrb[0].mxu0
        %v5160 = vadd.f32 %v5089, %v5159
        %v5161 = vpop.f32.mrb[0].mxu0
        %v5162 = vadd.f32 %v5091, %v5161
        %5163 = vdwg.mxu0
        %5164 = vmatprep.subr.mxu0 %v4696
        %5165 = vmatpush1.msra.mxu0 %v4695
        %5166 = vmatprep.subr.mxu0 %v4704
        %5167 = vmatpush1.msra.mxu0 %v4703
        %5168 = vmatprep.subr.mxu0 %v4712
        %5169 = vmatpush1.msra.mxu0 %v4711
        %5170 = vmatprep.subr.mxu0 %v4720
        %5171 = vmatpush1.msra.mxu0 %v4719
        %5172 = vmatprep.subr.mxu0 %v4728
        %5173 = vmatpush1.msra.mxu0 %v4727
        %5174 = vmatprep.subr.mxu0 %v4736
        %5175 = vmatpush1.msra.mxu0 %v4735
        %5176 = vmatprep.subr.mxu0 %v4744
        %5177 = vmatpush1.msra.mxu0 %v4743
        %5178 = vmatprep.subr.mxu0 %v4752
        %5179 = vmatpush1.msra.mxu0 %v4751
        %5180 = vmatprep.subr.mxu0 %v4760
        %5181 = vmatpush1.msra.mxu0 %v4759
        %5182 = vmatprep.subr.mxu0 %v4768
        %5183 = vmatpush1.msra.mxu0 %v4767
        %5184 = vmatprep.subr.mxu0 %v4776
        %5185 = vmatpush1.msra.mxu0 %v4775
        %5186 = vmatprep.subr.mxu0 %v4784
        %5187 = vmatpush1.msra.mxu0 %v4783
        %5188 = vmatprep.subr.mxu0 %v4792
        %5189 = vmatpush1.msra.mxu0 %v4791
        %5190 = vmatprep.subr.mxu0 %v4800
        %5191 = vmatpush1.msra.mxu0 %v4799
        %5192 = vmatprep.subr.mxu0 %v4808
        %5193 = vmatpush1.msra.mxu0 %v4807
        %5194 = vmatprep.subr.mxu0 %v4816
        %5195 = vmatpush1.msra.mxu0 %v4815
        %5196 = vmatprep.subr.mxu0 %v4824
        %5197 = vmatpush1.msra.mxu0 %v4823
        %5198 = vmatprep.subr.mxu0 %v4832
        %5199 = vmatpush1.msra.mxu0 %v4831
        %5200 = vmatprep.subr.mxu0 %v4840
        %5201 = vmatpush1.msra.mxu0 %v4839
        %5202 = vmatprep.subr.mxu0 %v4848
        %5203 = vmatpush1.msra.mxu0 %v4847
        %5204 = vmatprep.subr.mxu0 %v4856
        %5205 = vmatpush1.msra.mxu0 %v4855
        %5206 = vmatprep.subr.mxu0 %v4864
        %5207 = vmatpush1.msra.mxu0 %v4863
        %5208 = vmatprep.subr.mxu0 %v4872
        %5209 = vmatpush1.msra.mxu0 %v4871
        %5210 = vmatprep.subr.mxu0 %v4880
        %5211 = vmatpush1.msra.mxu0 %v4879
        %5212 = vmatprep.subr.mxu0 %v4888
        %5213 = vmatpush1.msra.mxu0 %v4887
        %5214 = vmatprep.subr.mxu0 %v4896
        %5215 = vmatpush1.msra.mxu0 %v4895
        %5216 = vmatprep.subr.mxu0 %v4904
        %5217 = vmatpush1.msra.mxu0 %v4903
        %5218 = vmatprep.subr.mxu0 %v4912
        %5219 = vmatpush1.msra.mxu0 %v4911
        %5220 = vmatprep.subr.mxu0 %v4920
        %5221 = vmatpush1.msra.mxu0 %v4919
        %5222 = vmatprep.subr.mxu0 %v4928
        %5223 = vmatpush1.msra.mxu0 %v4927
        %5224 = vmatprep.subr.mxu0 %v4936
        %5225 = vmatpush1.msra.mxu0 %v4935
        %5226 = vmatprep.subr.mxu0 %v4944
        %5227 = vmatpush1.msra.mxu0 %v4943
        %5228 = vmatprep.mubr.f32.mxu0 %v3926
        %5229 = vmatmul.mubr.f32.gmra.mrb[0].mxu0 %v3925
        %v5230 = vpop.f32.mrb[0].mxu0
        %v5231 = vadd.f32 %v5160, %v5230
        %v5232 = vpop.f32.mrb[0].mxu0
        %v5233 = vadd.f32 %v5162, %v5232
        %5234 = vdwg.mxu0
        %5235 = vmatprep.subr.mxu0 %v3930
        %5236 = vmatpush1.msra.mxu0 %v3929
        %5237 = vmatprep.subr.mxu0 %v3938
        %5238 = vmatpush1.msra.mxu0 %v3937
        %5239 = vmatprep.subr.mxu0 %v3946
        %5240 = vmatpush1.msra.mxu0 %v3945
        %5241 = vmatprep.subr.mxu0 %v3954
        %5242 = vmatpush1.msra.mxu0 %v3953
        %5243 = vmatprep.subr.mxu0 %v3962
        %5244 = vmatpush1.msra.mxu0 %v3961
        %5245 = vmatprep.subr.mxu0 %v3970
        %5246 = vmatpush1.msra.mxu0 %v3969
        %5247 = vmatprep.subr.mxu0 %v3978
        %5248 = vmatpush1.msra.mxu0 %v3977
        %5249 = vmatprep.subr.mxu0 %v3986
        %5250 = vmatpush1.msra.mxu0 %v3985
        %5251 = vmatprep.subr.mxu0 %v3994
        %5252 = vmatpush1.msra.mxu0 %v3993
        %5253 = vmatprep.subr.mxu0 %v4002
        %5254 = vmatpush1.msra.mxu0 %v4001
        %5255 = vmatprep.subr.mxu0 %v4010
        %5256 = vmatpush1.msra.mxu0 %v4009
        %5257 = vmatprep.subr.mxu0 %v4018
        %5258 = vmatpush1.msra.mxu0 %v4017
        %5259 = vmatprep.subr.mxu0 %v4026
        %5260 = vmatpush1.msra.mxu0 %v4025
        %5261 = vmatprep.subr.mxu0 %v4034
        %5262 = vmatpush1.msra.mxu0 %v4033
        %5263 = vmatprep.subr.mxu0 %v4042
        %5264 = vmatpush1.msra.mxu0 %v4041
        %5265 = vmatprep.subr.mxu0 %v4050
        %5266 = vmatpush1.msra.mxu0 %v4049
        %5267 = vmatprep.subr.mxu0 %v4058
        %5268 = vmatpush1.msra.mxu0 %v4057
        %5269 = vmatprep.subr.mxu0 %v4066
        %5270 = vmatpush1.msra.mxu0 %v4065
        %5271 = vmatprep.subr.mxu0 %v4074
        %5272 = vmatpush1.msra.mxu0 %v4073
        %5273 = vmatprep.subr.mxu0 %v4082
        %5274 = vmatpush1.msra.mxu0 %v4081
        %5275 = vmatprep.subr.mxu0 %v4090
        %5276 = vmatpush1.msra.mxu0 %v4089
        %5277 = vmatprep.subr.mxu0 %v4098
        %5278 = vmatpush1.msra.mxu0 %v4097
        %5279 = vmatprep.subr.mxu0 %v4106
        %5280 = vmatpush1.msra.mxu0 %v4105
        %5281 = vmatprep.subr.mxu0 %v4114
        %5282 = vmatpush1.msra.mxu0 %v4113
        %5283 = vmatprep.subr.mxu0 %v4122
        %5284 = vmatpush1.msra.mxu0 %v4121
        %5285 = vmatprep.subr.mxu0 %v4130
        %5286 = vmatpush1.msra.mxu0 %v4129
        %5287 = vmatprep.subr.mxu0 %v4138
        %5288 = vmatpush1.msra.mxu0 %v4137
        %5289 = vmatprep.subr.mxu0 %v4146
        %5290 = vmatpush1.msra.mxu0 %v4145
        %5291 = vmatprep.subr.mxu0 %v4154
        %5292 = vmatpush1.msra.mxu0 %v4153
        %5293 = vmatprep.subr.mxu0 %v4162
        %5294 = vmatpush1.msra.mxu0 %v4161
        %5295 = vmatprep.subr.mxu0 %v4170
        %5296 = vmatpush1.msra.mxu0 %v4169
        %5297 = vmatprep.subr.mxu0 %v4178
        %5298 = vmatpush1.msra.mxu0 %v4177
        %5299 = vmatprep.mubr.f32.mxu0 %v3920
        %5300 = vmatmul.mubr.f32.gmra.mrb[0].mxu0 %v3919
        %v5301 = vpop.f32.mrb[0].mxu0
        %v5302 = vadd.f32 0.0, %v5301
        %v5303 = vpop.f32.mrb[0].mxu0
        %v5304 = vadd.f32 0.0, %v5303
        %5305 = vdwg.mxu0
        %5306 = vmatprep.subr.mxu0 %v4186
        %5307 = vmatpush1.msra.mxu0 %v4185
        %5308 = vmatprep.subr.mxu0 %v4194
        %5309 = vmatpush1.msra.mxu0 %v4193
        %5310 = vmatprep.subr.mxu0 %v4202
        %5311 = vmatpush1.msra.mxu0 %v4201
        %5312 = vmatprep.subr.mxu0 %v4210
        %5313 = vmatpush1.msra.mxu0 %v4209
        %5314 = vmatprep.subr.mxu0 %v4218
        %5315 = vmatpush1.msra.mxu0 %v4217
        %5316 = vmatprep.subr.mxu0 %v4226
        %5317 = vmatpush1.msra.mxu0 %v4225
        %5318 = vmatprep.subr.mxu0 %v4234
        %5319 = vmatpush1.msra.mxu0 %v4233
        %5320 = vmatprep.subr.mxu0 %v4242
        %5321 = vmatpush1.msra.mxu0 %v4241
        %5322 = vmatprep.subr.mxu0 %v4250
        %5323 = vmatpush1.msra.mxu0 %v4249
        %5324 = vmatprep.subr.mxu0 %v4258
        %5325 = vmatpush1.msra.mxu0 %v4257
        %5326 = vmatprep.subr.mxu0 %v4266
        %5327 = vmatpush1.msra.mxu0 %v4265
        %5328 = vmatprep.subr.mxu0 %v4274
        %5329 = vmatpush1.msra.mxu0 %v4273
        %5330 = vmatprep.subr.mxu0 %v4282
        %5331 = vmatpush1.msra.mxu0 %v4281
        %5332 = vmatprep.subr.mxu0 %v4290
        %5333 = vmatpush1.msra.mxu0 %v4289
        %5334 = vmatprep.subr.mxu0 %v4298
        %5335 = vmatpush1.msra.mxu0 %v4297
        %5336 = vmatprep.subr.mxu0 %v4306
        %5337 = vmatpush1.msra.mxu0 %v4305
        %5338 = vmatprep.subr.mxu0 %v4314
        %5339 = vmatpush1.msra.mxu0 %v4313
        %5340 = vmatprep.subr.mxu0 %v4322
        %5341 = vmatpush1.msra.mxu0 %v4321
        %5342 = vmatprep.subr.mxu0 %v4330
        %5343 = vmatpush1.msra.mxu0 %v4329
        %5344 = vmatprep.subr.mxu0 %v4338
        %5345 = vmatpush1.msra.mxu0 %v4337
        %5346 = vmatprep.subr.mxu0 %v4346
        %5347 = vmatpush1.msra.mxu0 %v4345
        %5348 = vmatprep.subr.mxu0 %v4354
        %5349 = vmatpush1.msra.mxu0 %v4353
        %5350 = vmatprep.subr.mxu0 %v4362
        %5351 = vmatpush1.msra.mxu0 %v4361
        %5352 = vmatprep.subr.mxu0 %v4370
        %5353 = vmatpush1.msra.mxu0 %v4369
        %5354 = vmatprep.subr.mxu0 %v4378
        %5355 = vmatpush1.msra.mxu0 %v4377
        %5356 = vmatprep.subr.mxu0 %v4386
        %5357 = vmatpush1.msra.mxu0 %v4385
        %5358 = vmatprep.subr.mxu0 %v4394
        %5359 = vmatpush1.msra.mxu0 %v4393
        %5360 = vmatprep.subr.mxu0 %v4402
        %5361 = vmatpush1.msra.mxu0 %v4401
        %5362 = vmatprep.subr.mxu0 %v4410
        %5363 = vmatpush1.msra.mxu0 %v4409
        %5364 = vmatprep.subr.mxu0 %v4418
        %5365 = vmatpush1.msra.mxu0 %v4417
        %5366 = vmatprep.subr.mxu0 %v4426
        %5367 = vmatpush1.msra.mxu0 %v4425
        %5368 = vmatprep.subr.mxu0 %v4434
        %5369 = vmatpush1.msra.mxu0 %v4433
        %5370 = vmatprep.mubr.f32.mxu0 %v3922
        %5371 = vmatmul.mubr.f32.gmra.mrb[0].mxu0 %v3921
        %v5372 = vpop.f32.mrb[0].mxu0
        %v5373 = vadd.f32 %v5302, %v5372
        %v5374 = vpop.f32.mrb[0].mxu0
        %v5375 = vadd.f32 %v5304, %v5374
        %5376 = vdwg.mxu0
        %5377 = vmatprep.subr.mxu0 %v4442
        %5378 = vmatpush1.msra.mxu0 %v4441
        %5379 = vmatprep.subr.mxu0 %v4450
        %5380 = vmatpush1.msra.mxu0 %v4449
        %5381 = vmatprep.subr.mxu0 %v4458
        %5382 = vmatpush1.msra.mxu0 %v4457
        %5383 = vmatprep.subr.mxu0 %v4466
        %5384 = vmatpush1.msra.mxu0 %v4465
        %5385 = vmatprep.subr.mxu0 %v4474
        %5386 = vmatpush1.msra.mxu0 %v4473
        %5387 = vmatprep.subr.mxu0 %v4482
        %5388 = vmatpush1.msra.mxu0 %v4481
        %5389 = vmatprep.subr.mxu0 %v4490
        %5390 = vmatpush1.msra.mxu0 %v4489
        %5391 = vmatprep.subr.mxu0 %v4498
        %5392 = vmatpush1.msra.mxu0 %v4497
        %5393 = vmatprep.subr.mxu0 %v4506
        %5394 = vmatpush1.msra.mxu0 %v4505
        %5395 = vmatprep.subr.mxu0 %v4514
        %5396 = vmatpush1.msra.mxu0 %v4513
        %5397 = vmatprep.subr.mxu0 %v4522
        %5398 = vmatpush1.msra.mxu0 %v4521
        %5399 = vmatprep.subr.mxu0 %v4530
        %5400 = vmatpush1.msra.mxu0 %v4529
        %5401 = vmatprep.subr.mxu0 %v4538
        %5402 = vmatpush1.msra.mxu0 %v4537
        %5403 = vmatprep.subr.mxu0 %v4546
        %5404 = vmatpush1.msra.mxu0 %v4545
        %5405 = vmatprep.subr.mxu0 %v4554
        %5406 = vmatpush1.msra.mxu0 %v4553
        %5407 = vmatprep.subr.mxu0 %v4562
        %5408 = vmatpush1.msra.mxu0 %v4561
        %5409 = vmatprep.subr.mxu0 %v4570
        %5410 = vmatpush1.msra.mxu0 %v4569
        %5411 = vmatprep.subr.mxu0 %v4578
        %5412 = vmatpush1.msra.mxu0 %v4577
        %5413 = vmatprep.subr.mxu0 %v4586
        %5414 = vmatpush1.msra.mxu0 %v4585
        %5415 = vmatprep.subr.mxu0 %v4594
        %5416 = vmatpush1.msra.mxu0 %v4593
        %5417 = vmatprep.subr.mxu0 %v4602
        %5418 = vmatpush1.msra.mxu0 %v4601
        %5419 = vmatprep.subr.mxu0 %v4610
        %5420 = vmatpush1.msra.mxu0 %v4609
        %5421 = vmatprep.subr.mxu0 %v4618
        %5422 = vmatpush1.msra.mxu0 %v4617
        %5423 = vmatprep.subr.mxu0 %v4626
        %5424 = vmatpush1.msra.mxu0 %v4625
        %5425 = vmatprep.subr.mxu0 %v4634
        %5426 = vmatpush1.msra.mxu0 %v4633
        %5427 = vmatprep.subr.mxu0 %v4642
        %5428 = vmatpush1.msra.mxu0 %v4641
        %5429 = vmatprep.subr.mxu0 %v4650
        %5430 = vmatpush1.msra.mxu0 %v4649
        %5431 = vmatprep.subr.mxu0 %v4658
        %5432 = vmatpush1.msra.mxu0 %v4657
        %5433 = vmatprep.subr.mxu0 %v4666
        %5434 = vmatpush1.msra.mxu0 %v4665
        %5435 = vmatprep.subr.mxu0 %v4674
        %5436 = vmatpush1.msra.mxu0 %v4673
        %5437 = vmatprep.subr.mxu0 %v4682
        %5438 = vmatpush1.msra.mxu0 %v4681
        %5439 = vmatprep.subr.mxu0 %v4690
        %5440 = vmatpush1.msra.mxu0 %v4689
        %5441 = vmatprep.mubr.f32.mxu0 %v3924
        %5442 = vmatmul.mubr.f32.gmra.mrb[0].mxu0 %v3923
        %v5443 = vpop.f32.mrb[0].mxu0
        %v5444 = vadd.f32 %v5373, %v5443
        %v5445 = vpop.f32.mrb[0].mxu0
        %v5446 = vadd.f32 %v5375, %v5445
        %5447 = vdwg.mxu0
        %5448 = vmatprep.subr.mxu0 %v4698
        %5449 = vmatpush1.msra.mxu0 %v4697
        %5450 = vmatprep.subr.mxu0 %v4706
        %5451 = vmatpush1.msra.mxu0 %v4705
        %5452 = vmatprep.subr.mxu0 %v4714
        %5453 = vmatpush1.msra.mxu0 %v4713
        %5454 = vmatprep.subr.mxu0 %v4722
        %5455 = vmatpush1.msra.mxu0 %v4721
        %5456 = vmatprep.subr.mxu0 %v4730
        %5457 = vmatpush1.msra.mxu0 %v4729
        %5458 = vmatprep.subr.mxu0 %v4738
        %5459 = vmatpush1.msra.mxu0 %v4737
        %5460 = vmatprep.subr.mxu0 %v4746
        %5461 = vmatpush1.msra.mxu0 %v4745
        %5462 = vmatprep.subr.mxu0 %v4754
        %5463 = vmatpush1.msra.mxu0 %v4753
        %5464 = vmatprep.subr.mxu0 %v4762
        %5465 = vmatpush1.msra.mxu0 %v4761
        %5466 = vmatprep.subr.mxu0 %v4770
        %5467 = vmatpush1.msra.mxu0 %v4769
        %5468 = vmatprep.subr.mxu0 %v4778
        %5469 = vmatpush1.msra.mxu0 %v4777
        %5470 = vmatprep.subr.mxu0 %v4786
        %5471 = vmatpush1.msra.mxu0 %v4785
        %5472 = vmatprep.subr.mxu0 %v4794
        %5473 = vmatpush1.msra.mxu0 %v4793
        %5474 = vmatprep.subr.mxu0 %v4802
        %5475 = vmatpush1.msra.mxu0 %v4801
        %5476 = vmatprep.subr.mxu0 %v4810
        %5477 = vmatpush1.msra.mxu0 %v4809
        %5478 = vmatprep.subr.mxu0 %v4818
        %5479 = vmatpush1.msra.mxu0 %v4817
        %5480 = vmatprep.subr.mxu0 %v4826
        %5481 = vmatpush1.msra.mxu0 %v4825
        %5482 = vmatprep.subr.mxu0 %v4834
        %5483 = vmatpush1.msra.mxu0 %v4833
        %5484 = vmatprep.subr.mxu0 %v4842
        %5485 = vmatpush1.msra.mxu0 %v4841
        %5486 = vmatprep.subr.mxu0 %v4850
        %5487 = vmatpush1.msra.mxu0 %v4849
        %5488 = vmatprep.subr.mxu0 %v4858
        %5489 = vmatpush1.msra.mxu0 %v4857
        %5490 = vmatprep.subr.mxu0 %v4866
        %5491 = vmatpush1.msra.mxu0 %v4865
        %5492 = vmatprep.subr.mxu0 %v4874
        %5493 = vmatpush1.msra.mxu0 %v4873
        %5494 = vmatprep.subr.mxu0 %v4882
        %5495 = vmatpush1.msra.mxu0 %v4881
        %5496 = vmatprep.subr.mxu0 %v4890
        %5497 = vmatpush1.msra.mxu0 %v4889
        %5498 = vmatprep.subr.mxu0 %v4898
        %5499 = vmatpush1.msra.mxu0 %v4897
        %5500 = vmatprep.subr.mxu0 %v4906
        %5501 = vmatpush1.msra.mxu0 %v4905
        %5502 = vmatprep.subr.mxu0 %v4914
        %5503 = vmatpush1.msra.mxu0 %v4913
        %5504 = vmatprep.subr.mxu0 %v4922
        %5505 = vmatpush1.msra.mxu0 %v4921
        %5506 = vmatprep.subr.mxu0 %v4930
        %5507 = vmatpush1.msra.mxu0 %v4929
        %5508 = vmatprep.subr.mxu0 %v4938
        %5509 = vmatpush1.msra.mxu0 %v4937
        %5510 = vmatprep.subr.mxu0 %v4946
        %5511 = vmatpush1.msra.mxu0 %v4945
        %5512 = vmatprep.mubr.f32.mxu0 %v3926
        %5513 = vmatmul.mubr.f32.gmra.mrb[0].mxu0 %v3925
        %v5514 = vpop.f32.mrb[0].mxu0
        %v5515 = vadd.f32 %v5444, %v5514
        %v5516 = vpop.f32.mrb[0].mxu0
        %v5517 = vadd.f32 %v5446, %v5516
        %5518 = vdwg.mxu0
        %5519 = vmatprep.subr.mxu0 %v3932
        %5520 = vmatpush1.msra.mxu0 %v3931
        %5521 = vmatprep.subr.mxu0 %v3940
        %5522 = vmatpush1.msra.mxu0 %v3939
        %5523 = vmatprep.subr.mxu0 %v3948
        %5524 = vmatpush1.msra.mxu0 %v3947
        %5525 = vmatprep.subr.mxu0 %v3956
        %5526 = vmatpush1.msra.mxu0 %v3955
        %5527 = vmatprep.subr.mxu0 %v3964
        %5528 = vmatpush1.msra.mxu0 %v3963
        %5529 = vmatprep.subr.mxu0 %v3972
        %5530 = vmatpush1.msra.mxu0 %v3971
        %5531 = vmatprep.subr.mxu0 %v3980
        %5532 = vmatpush1.msra.mxu0 %v3979
        %5533 = vmatprep.subr.mxu0 %v3988
        %5534 = vmatpush1.msra.mxu0 %v3987
        %5535 = vmatprep.subr.mxu0 %v3996
        %5536 = vmatpush1.msra.mxu0 %v3995
        %5537 = vmatprep.subr.mxu0 %v4004
        %5538 = vmatpush1.msra.mxu0 %v4003
        %5539 = vmatprep.subr.mxu0 %v4012
        %5540 = vmatpush1.msra.mxu0 %v4011
        %5541 = vmatprep.subr.mxu0 %v4020
        %5542 = vmatpush1.msra.mxu0 %v4019
        %5543 = vmatprep.subr.mxu0 %v4028
        %5544 = vmatpush1.msra.mxu0 %v4027
        %5545 = vmatprep.subr.mxu0 %v4036
        %5546 = vmatpush1.msra.mxu0 %v4035
        %5547 = vmatprep.subr.mxu0 %v4044
        %5548 = vmatpush1.msra.mxu0 %v4043
        %5549 = vmatprep.subr.mxu0 %v4052
        %5550 = vmatpush1.msra.mxu0 %v4051
        %5551 = vmatprep.subr.mxu0 %v4060
        %5552 = vmatpush1.msra.mxu0 %v4059
        %5553 = vmatprep.subr.mxu0 %v4068
        %5554 = vmatpush1.msra.mxu0 %v4067
        %5555 = vmatprep.subr.mxu0 %v4076
        %5556 = vmatpush1.msra.mxu0 %v4075
        %5557 = vmatprep.subr.mxu0 %v4084
        %5558 = vmatpush1.msra.mxu0 %v4083
        %5559 = vmatprep.subr.mxu0 %v4092
        %5560 = vmatpush1.msra.mxu0 %v4091
        %5561 = vmatprep.subr.mxu0 %v4100
        %5562 = vmatpush1.msra.mxu0 %v4099
        %5563 = vmatprep.subr.mxu0 %v4108
        %5564 = vmatpush1.msra.mxu0 %v4107
        %5565 = vmatprep.subr.mxu0 %v4116
        %5566 = vmatpush1.msra.mxu0 %v4115
        %5567 = vmatprep.subr.mxu0 %v4124
        %5568 = vmatpush1.msra.mxu0 %v4123
        %5569 = vmatprep.subr.mxu0 %v4132
        %5570 = vmatpush1.msra.mxu0 %v4131
        %5571 = vmatprep.subr.mxu0 %v4140
        %5572 = vmatpush1.msra.mxu0 %v4139
        %5573 = vmatprep.subr.mxu0 %v4148
        %5574 = vmatpush1.msra.mxu0 %v4147
        %5575 = vmatprep.subr.mxu0 %v4156
        %5576 = vmatpush1.msra.mxu0 %v4155
        %5577 = vmatprep.subr.mxu0 %v4164
        %5578 = vmatpush1.msra.mxu0 %v4163
        %5579 = vmatprep.subr.mxu0 %v4172
        %5580 = vmatpush1.msra.mxu0 %v4171
        %5581 = vmatprep.subr.mxu0 %v4180
        %5582 = vmatpush1.msra.mxu0 %v4179
        %5583 = vmatprep.mubr.f32.mxu0 %v3920
        %5584 = vmatmul.mubr.f32.gmra.mrb[0].mxu0 %v3919
        %v5585 = vpop.f32.mrb[0].mxu0
        %v5586 = vadd.f32 0.0, %v5585
        %v5587 = vpop.f32.mrb[0].mxu0
        %v5588 = vadd.f32 0.0, %v5587
        %5589 = vdwg.mxu0
        %5590 = vmatprep.subr.mxu0 %v4188
        %5591 = vmatpush1.msra.mxu0 %v4187
        %5592 = vmatprep.subr.mxu0 %v4196
        %5593 = vmatpush1.msra.mxu0 %v4195
        %5594 = vmatprep.subr.mxu0 %v4204
        %5595 = vmatpush1.msra.mxu0 %v4203
        %5596 = vmatprep.subr.mxu0 %v4212
        %5597 = vmatpush1.msra.mxu0 %v4211
        %5598 = vmatprep.subr.mxu0 %v4220
        %5599 = vmatpush1.msra.mxu0 %v4219
        %5600 = vmatprep.subr.mxu0 %v4228
        %5601 = vmatpush1.msra.mxu0 %v4227
        %5602 = vmatprep.subr.mxu0 %v4236
        %5603 = vmatpush1.msra.mxu0 %v4235
        %5604 = vmatprep.subr.mxu0 %v4244
        %5605 = vmatpush1.msra.mxu0 %v4243
        %5606 = vmatprep.subr.mxu0 %v4252
        %5607 = vmatpush1.msra.mxu0 %v4251
        %5608 = vmatprep.subr.mxu0 %v4260
        %5609 = vmatpush1.msra.mxu0 %v4259
        %5610 = vmatprep.subr.mxu0 %v4268
        %5611 = vmatpush1.msra.mxu0 %v4267
        %5612 = vmatprep.subr.mxu0 %v4276
        %5613 = vmatpush1.msra.mxu0 %v4275
        %5614 = vmatprep.subr.mxu0 %v4284
        %5615 = vmatpush1.msra.mxu0 %v4283
        %5616 = vmatprep.subr.mxu0 %v4292
        %5617 = vmatpush1.msra.mxu0 %v4291
        %5618 = vmatprep.subr.mxu0 %v4300
        %5619 = vmatpush1.msra.mxu0 %v4299
        %5620 = vmatprep.subr.mxu0 %v4308
        %5621 = vmatpush1.msra.mxu0 %v4307
        %5622 = vmatprep.subr.mxu0 %v4316
        %5623 = vmatpush1.msra.mxu0 %v4315
        %5624 = vmatprep.subr.mxu0 %v4324
        %5625 = vmatpush1.msra.mxu0 %v4323
        %5626 = vmatprep.subr.mxu0 %v4332
        %5627 = vmatpush1.msra.mxu0 %v4331
        %5628 = vmatprep.subr.mxu0 %v4340
        %5629 = vmatpush1.msra.mxu0 %v4339
        %5630 = vmatprep.subr.mxu0 %v4348
        %5631 = vmatpush1.msra.mxu0 %v4347
        %5632 = vmatprep.subr.mxu0 %v4356
        %5633 = vmatpush1.msra.mxu0 %v4355
        %5634 = vmatprep.subr.mxu0 %v4364
        %5635 = vmatpush1.msra.mxu0 %v4363
        %5636 = vmatprep.subr.mxu0 %v4372
        %5637 = vmatpush1.msra.mxu0 %v4371
        %5638 = vmatprep.subr.mxu0 %v4380
        %5639 = vmatpush1.msra.mxu0 %v4379
        %5640 = vmatprep.subr.mxu0 %v4388
        %5641 = vmatpush1.msra.mxu0 %v4387
        %5642 = vmatprep.subr.mxu0 %v4396
        %5643 = vmatpush1.msra.mxu0 %v4395
        %5644 = vmatprep.subr.mxu0 %v4404
        %5645 = vmatpush1.msra.mxu0 %v4403
        %5646 = vmatprep.subr.mxu0 %v4412
        %5647 = vmatpush1.msra.mxu0 %v4411
        %5648 = vmatprep.subr.mxu0 %v4420
        %5649 = vmatpush1.msra.mxu0 %v4419
        %5650 = vmatprep.subr.mxu0 %v4428
        %5651 = vmatpush1.msra.mxu0 %v4427
        %5652 = vmatprep.subr.mxu0 %v4436
        %5653 = vmatpush1.msra.mxu0 %v4435
        %5654 = vmatprep.mubr.f32.mxu0 %v3922
        %5655 = vmatmul.mubr.f32.gmra.mrb[0].mxu0 %v3921
        %v5656 = vpop.f32.mrb[0].mxu0
        %v5657 = vadd.f32 %v5586, %v5656
        %v5658 = vpop.f32.mrb[0].mxu0
        %v5659 = vadd.f32 %v5588, %v5658
        %5660 = vdwg.mxu0
        %5661 = vmatprep.subr.mxu0 %v4444
        %5662 = vmatpush1.msra.mxu0 %v4443
        %5663 = vmatprep.subr.mxu0 %v4452
        %5664 = vmatpush1.msra.mxu0 %v4451
        %5665 = vmatprep.subr.mxu0 %v4460
        %5666 = vmatpush1.msra.mxu0 %v4459
        %5667 = vmatprep.subr.mxu0 %v4468
        %5668 = vmatpush1.msra.mxu0 %v4467
        %5669 = vmatprep.subr.mxu0 %v4476
        %5670 = vmatpush1.msra.mxu0 %v4475
        %5671 = vmatprep.subr.mxu0 %v4484
        %5672 = vmatpush1.msra.mxu0 %v4483
        %5673 = vmatprep.subr.mxu0 %v4492
        %5674 = vmatpush1.msra.mxu0 %v4491
        %5675 = vmatprep.subr.mxu0 %v4500
        %5676 = vmatpush1.msra.mxu0 %v4499
        %5677 = vmatprep.subr.mxu0 %v4508
        %5678 = vmatpush1.msra.mxu0 %v4507
        %5679 = vmatprep.subr.mxu0 %v4516
        %5680 = vmatpush1.msra.mxu0 %v4515
        %5681 = vmatprep.subr.mxu0 %v4524
        %5682 = vmatpush1.msra.mxu0 %v4523
        %5683 = vmatprep.subr.mxu0 %v4532
        %5684 = vmatpush1.msra.mxu0 %v4531
        %5685 = vmatprep.subr.mxu0 %v4540
        %5686 = vmatpush1.msra.mxu0 %v4539
        %5687 = vmatprep.subr.mxu0 %v4548
        %5688 = vmatpush1.msra.mxu0 %v4547
        %5689 = vmatprep.subr.mxu0 %v4556
        %5690 = vmatpush1.msra.mxu0 %v4555
        %5691 = vmatprep.subr.mxu0 %v4564
        %5692 = vmatpush1.msra.mxu0 %v4563
        %5693 = vmatprep.subr.mxu0 %v4572
        %5694 = vmatpush1.msra.mxu0 %v4571
        %5695 = vmatprep.subr.mxu0 %v4580
        %5696 = vmatpush1.msra.mxu0 %v4579
        %5697 = vmatprep.subr.mxu0 %v4588
        %5698 = vmatpush1.msra.mxu0 %v4587
        %5699 = vmatprep.subr.mxu0 %v4596
        %5700 = vmatpush1.msra.mxu0 %v4595
        %5701 = vmatprep.subr.mxu0 %v4604
        %5702 = vmatpush1.msra.mxu0 %v4603
        %5703 = vmatprep.subr.mxu0 %v4612
        %5704 = vmatpush1.msra.mxu0 %v4611
        %5705 = vmatprep.subr.mxu0 %v4620
        %5706 = vmatpush1.msra.mxu0 %v4619
        %5707 = vmatprep.subr.mxu0 %v4628
        %5708 = vmatpush1.msra.mxu0 %v4627
        %5709 = vmatprep.subr.mxu0 %v4636
        %5710 = vmatpush1.msra.mxu0 %v4635
        %5711 = vmatprep.subr.mxu0 %v4644
        %5712 = vmatpush1.msra.mxu0 %v4643
        %5713 = vmatprep.subr.mxu0 %v4652
        %5714 = vmatpush1.msra.mxu0 %v4651
        %5715 = vmatprep.subr.mxu0 %v4660
        %5716 = vmatpush1.msra.mxu0 %v4659
        %5717 = vmatprep.subr.mxu0 %v4668
        %5718 = vmatpush1.msra.mxu0 %v4667
        %5719 = vmatprep.subr.mxu0 %v4676
        %5720 = vmatpush1.msra.mxu0 %v4675
        %5721 = vmatprep.subr.mxu0 %v4684
        %5722 = vmatpush1.msra.mxu0 %v4683
        %5723 = vmatprep.subr.mxu0 %v4692
        %5724 = vmatpush1.msra.mxu0 %v4691
        %5725 = vmatprep.mubr.f32.mxu0 %v3924
        %5726 = vmatmul.mubr.f32.gmra.mrb[0].mxu0 %v3923
        %v5727 = vpop.f32.mrb[0].mxu0
        %v5728 = vadd.f32 %v5657, %v5727
        %v5729 = vpop.f32.mrb[0].mxu0
        %v5730 = vadd.f32 %v5659, %v5729
        %5731 = vdwg.mxu0
        %5732 = vmatprep.subr.mxu0 %v4700
        %5733 = vmatpush1.msra.mxu0 %v4699
        %5734 = vmatprep.subr.mxu0 %v4708
        %5735 = vmatpush1.msra.mxu0 %v4707
        %5736 = vmatprep.subr.mxu0 %v4716
        %5737 = vmatpush1.msra.mxu0 %v4715
        %5738 = vmatprep.subr.mxu0 %v4724
        %5739 = vmatpush1.msra.mxu0 %v4723
        %5740 = vmatprep.subr.mxu0 %v4732
        %5741 = vmatpush1.msra.mxu0 %v4731
        %5742 = vmatprep.subr.mxu0 %v4740
        %5743 = vmatpush1.msra.mxu0 %v4739
        %5744 = vmatprep.subr.mxu0 %v4748
        %5745 = vmatpush1.msra.mxu0 %v4747
        %5746 = vmatprep.subr.mxu0 %v4756
        %5747 = vmatpush1.msra.mxu0 %v4755
        %5748 = vmatprep.subr.mxu0 %v4764
        %5749 = vmatpush1.msra.mxu0 %v4763
        %5750 = vmatprep.subr.mxu0 %v4772
        %5751 = vmatpush1.msra.mxu0 %v4771
        %5752 = vmatprep.subr.mxu0 %v4780
        %5753 = vmatpush1.msra.mxu0 %v4779
        %5754 = vmatprep.subr.mxu0 %v4788
        %5755 = vmatpush1.msra.mxu0 %v4787
        %5756 = vmatprep.subr.mxu0 %v4796
        %5757 = vmatpush1.msra.mxu0 %v4795
        %5758 = vmatprep.subr.mxu0 %v4804
        %5759 = vmatpush1.msra.mxu0 %v4803
        %5760 = vmatprep.subr.mxu0 %v4812
        %5761 = vmatpush1.msra.mxu0 %v4811
        %5762 = vmatprep.subr.mxu0 %v4820
        %5763 = vmatpush1.msra.mxu0 %v4819
        %5764 = vmatprep.subr.mxu0 %v4828
        %5765 = vmatpush1.msra.mxu0 %v4827
        %5766 = vmatprep.subr.mxu0 %v4836
        %5767 = vmatpush1.msra.mxu0 %v4835
        %5768 = vmatprep.subr.mxu0 %v4844
        %5769 = vmatpush1.msra.mxu0 %v4843
        %5770 = vmatprep.subr.mxu0 %v4852
        %5771 = vmatpush1.msra.mxu0 %v4851
        %5772 = vmatprep.subr.mxu0 %v4860
        %5773 = vmatpush1.msra.mxu0 %v4859
        %5774 = vmatprep.subr.mxu0 %v4868
        %5775 = vmatpush1.msra.mxu0 %v4867
        %5776 = vmatprep.subr.mxu0 %v4876
        %5777 = vmatpush1.msra.mxu0 %v4875
        %5778 = vmatprep.subr.mxu0 %v4884
        %5779 = vmatpush1.msra.mxu0 %v4883
        %5780 = vmatprep.subr.mxu0 %v4892
        %5781 = vmatpush1.msra.mxu0 %v4891
        %5782 = vmatprep.subr.mxu0 %v4900
        %5783 = vmatpush1.msra.mxu0 %v4899
        %5784 = vmatprep.subr.mxu0 %v4908
        %5785 = vmatpush1.msra.mxu0 %v4907
        %5786 = vmatprep.subr.mxu0 %v4916
        %5787 = vmatpush1.msra.mxu0 %v4915
        %5788 = vmatprep.subr.mxu0 %v4924
        %5789 = vmatpush1.msra.mxu0 %v4923
        %5790 = vmatprep.subr.mxu0 %v4932
        %5791 = vmatpush1.msra.mxu0 %v4931
        %5792 = vmatprep.subr.mxu0 %v4940
        %5793 = vmatpush1.msra.mxu0 %v4939
        %5794 = vmatprep.subr.mxu0 %v4948
        %5795 = vmatpush1.msra.mxu0 %v4947
        %5796 = vmatprep.mubr.f32.mxu0 %v3926
        %5797 = vmatmul.mubr.f32.gmra.mrb[0].mxu0 %v3925
        %v5798 = vpop.f32.mrb[0].mxu0
        %v5799 = vadd.f32 %v5728, %v5798
        %v5800 = vpop.f32.mrb[0].mxu0
        %v5801 = vadd.f32 %v5730, %v5800
        %5802 = vdwg.mxu0
        %5803 = vmatprep.subr.mxu0 %v3934
        %5804 = vmatpush1.msra.mxu0 %v3933
        %5805 = vmatprep.subr.mxu0 %v3942
        %5806 = vmatpush1.msra.mxu0 %v3941
        %5807 = vmatprep.subr.mxu0 %v3950
        %5808 = vmatpush1.msra.mxu0 %v3949
        %5809 = vmatprep.subr.mxu0 %v3958
        %5810 = vmatpush1.msra.mxu0 %v3957
        %5811 = vmatprep.subr.mxu0 %v3966
        %5812 = vmatpush1.msra.mxu0 %v3965
        %5813 = vmatprep.subr.mxu0 %v3974
        %5814 = vmatpush1.msra.mxu0 %v3973
        %5815 = vmatprep.subr.mxu0 %v3982
        %5816 = vmatpush1.msra.mxu0 %v3981
        %5817 = vmatprep.subr.mxu0 %v3990
        %5818 = vmatpush1.msra.mxu0 %v3989
        %5819 = vmatprep.subr.mxu0 %v3998
        %5820 = vmatpush1.msra.mxu0 %v3997
        %5821 = vmatprep.subr.mxu0 %v4006
        %5822 = vmatpush1.msra.mxu0 %v4005
        %5823 = vmatprep.subr.mxu0 %v4014
        %5824 = vmatpush1.msra.mxu0 %v4013
        %5825 = vmatprep.subr.mxu0 %v4022
        %5826 = vmatpush1.msra.mxu0 %v4021
        %5827 = vmatprep.subr.mxu0 %v4030
        %5828 = vmatpush1.msra.mxu0 %v4029
        %5829 = vmatprep.subr.mxu0 %v4038
        %5830 = vmatpush1.msra.mxu0 %v4037
        %5831 = vmatprep.subr.mxu0 %v4046
        %5832 = vmatpush1.msra.mxu0 %v4045
        %5833 = vmatprep.subr.mxu0 %v4054
        %5834 = vmatpush1.msra.mxu0 %v4053
        %5835 = vmatprep.subr.mxu0 %v4062
        %5836 = vmatpush1.msra.mxu0 %v4061
        %5837 = vmatprep.subr.mxu0 %v4070
        %5838 = vmatpush1.msra.mxu0 %v4069
        %5839 = vmatprep.subr.mxu0 %v4078
        %5840 = vmatpush1.msra.mxu0 %v4077
        %5841 = vmatprep.subr.mxu0 %v4086
        %5842 = vmatpush1.msra.mxu0 %v4085
        %5843 = vmatprep.subr.mxu0 %v4094
        %5844 = vmatpush1.msra.mxu0 %v4093
        %5845 = vmatprep.subr.mxu0 %v4102
        %5846 = vmatpush1.msra.mxu0 %v4101
        %5847 = vmatprep.subr.mxu0 %v4110
        %5848 = vmatpush1.msra.mxu0 %v4109
        %5849 = vmatprep.subr.mxu0 %v4118
        %5850 = vmatpush1.msra.mxu0 %v4117
        %5851 = vmatprep.subr.mxu0 %v4126
        %5852 = vmatpush1.msra.mxu0 %v4125
        %5853 = vmatprep.subr.mxu0 %v4134
        %5854 = vmatpush1.msra.mxu0 %v4133
        %5855 = vmatprep.subr.mxu0 %v4142
        %5856 = vmatpush1.msra.mxu0 %v4141
        %5857 = vmatprep.subr.mxu0 %v4150
        %5858 = vmatpush1.msra.mxu0 %v4149
        %5859 = vmatprep.subr.mxu0 %v4158
        %5860 = vmatpush1.msra.mxu0 %v4157
        %5861 = vmatprep.subr.mxu0 %v4166
        %5862 = vmatpush1.msra.mxu0 %v4165
        %5863 = vmatprep.subr.mxu0 %v4174
        %5864 = vmatpush1.msra.mxu0 %v4173
        %5865 = vmatprep.subr.mxu0 %v4182
        %5866 = vmatpush1.msra.mxu0 %v4181
        %5867 = vmatprep.mubr.f32.mxu0 %v3920
        %5868 = vmatmul.mubr.f32.gmra.mrb[0].mxu0 %v3919
        %v5869 = vpop.f32.mrb[0].mxu0
        %v5870 = vadd.f32 0.0, %v5869
        %v5871 = vpop.f32.mrb[0].mxu0
        %v5872 = vadd.f32 0.0, %v5871
        %5873 = vdwg.mxu0
        %5874 = vmatprep.subr.mxu0 %v4190
        %5875 = vmatpush1.msra.mxu0 %v4189
        %5876 = vmatprep.subr.mxu0 %v4198
        %5877 = vmatpush1.msra.mxu0 %v4197
        %5878 = vmatprep.subr.mxu0 %v4206
        %5879 = vmatpush1.msra.mxu0 %v4205
        %5880 = vmatprep.subr.mxu0 %v4214
        %5881 = vmatpush1.msra.mxu0 %v4213
        %5882 = vmatprep.subr.mxu0 %v4222
        %5883 = vmatpush1.msra.mxu0 %v4221
        %5884 = vmatprep.subr.mxu0 %v4230
        %5885 = vmatpush1.msra.mxu0 %v4229
        %5886 = vmatprep.subr.mxu0 %v4238
        %5887 = vmatpush1.msra.mxu0 %v4237
        %5888 = vmatprep.subr.mxu0 %v4246
        %5889 = vmatpush1.msra.mxu0 %v4245
        %5890 = vmatprep.subr.mxu0 %v4254
        %5891 = vmatpush1.msra.mxu0 %v4253
        %5892 = vmatprep.subr.mxu0 %v4262
        %5893 = vmatpush1.msra.mxu0 %v4261
        %5894 = vmatprep.subr.mxu0 %v4270
        %5895 = vmatpush1.msra.mxu0 %v4269
        %5896 = vmatprep.subr.mxu0 %v4278
        %5897 = vmatpush1.msra.mxu0 %v4277
        %5898 = vmatprep.subr.mxu0 %v4286
        %5899 = vmatpush1.msra.mxu0 %v4285
        %5900 = vmatprep.subr.mxu0 %v4294
        %5901 = vmatpush1.msra.mxu0 %v4293
        %5902 = vmatprep.subr.mxu0 %v4302
        %5903 = vmatpush1.msra.mxu0 %v4301
        %5904 = vmatprep.subr.mxu0 %v4310
        %5905 = vmatpush1.msra.mxu0 %v4309
        %5906 = vmatprep.subr.mxu0 %v4318
        %5907 = vmatpush1.msra.mxu0 %v4317
        %5908 = vmatprep.subr.mxu0 %v4326
        %5909 = vmatpush1.msra.mxu0 %v4325
        %5910 = vmatprep.subr.mxu0 %v4334
        %5911 = vmatpush1.msra.mxu0 %v4333
        %5912 = vmatprep.subr.mxu0 %v4342
        %5913 = vmatpush1.msra.mxu0 %v4341
        %5914 = vmatprep.subr.mxu0 %v4350
        %5915 = vmatpush1.msra.mxu0 %v4349
        %5916 = vmatprep.subr.mxu0 %v4358
        %5917 = vmatpush1.msra.mxu0 %v4357
        %5918 = vmatprep.subr.mxu0 %v4366
        %5919 = vmatpush1.msra.mxu0 %v4365
        %5920 = vmatprep.subr.mxu0 %v4374
        %5921 = vmatpush1.msra.mxu0 %v4373
        %5922 = vmatprep.subr.mxu0 %v4382
        %5923 = vmatpush1.msra.mxu0 %v4381
        %5924 = vmatprep.subr.mxu0 %v4390
        %5925 = vmatpush1.msra.mxu0 %v4389
        %5926 = vmatprep.subr.mxu0 %v4398
        %5927 = vmatpush1.msra.mxu0 %v4397
        %5928 = vmatprep.subr.mxu0 %v4406
        %5929 = vmatpush1.msra.mxu0 %v4405
        %5930 = vmatprep.subr.mxu0 %v4414
        %5931 = vmatpush1.msra.mxu0 %v4413
        %5932 = vmatprep.subr.mxu0 %v4422
        %5933 = vmatpush1.msra.mxu0 %v4421
        %5934 = vmatprep.subr.mxu0 %v4430
        %5935 = vmatpush1.msra.mxu0 %v4429
        %5936 = vmatprep.subr.mxu0 %v4438
        %5937 = vmatpush1.msra.mxu0 %v4437
        %5938 = vmatprep.mubr.f32.mxu0 %v3922
        %5939 = vmatmul.mubr.f32.gmra.mrb[0].mxu0 %v3921
        %v5940 = vpop.f32.mrb[0].mxu0
        %v5941 = vadd.f32 %v5870, %v5940
        %v5942 = vpop.f32.mrb[0].mxu0
        %v5943 = vadd.f32 %v5872, %v5942
        %5944 = vdwg.mxu0
        %5945 = vmatprep.subr.mxu0 %v4446
        %5946 = vmatpush1.msra.mxu0 %v4445
        %5947 = vmatprep.subr.mxu0 %v4454
        %5948 = vmatpush1.msra.mxu0 %v4453
        %5949 = vmatprep.subr.mxu0 %v4462
        %5950 = vmatpush1.msra.mxu0 %v4461
        %5951 = vmatprep.subr.mxu0 %v4470
        %5952 = vmatpush1.msra.mxu0 %v4469
        %5953 = vmatprep.subr.mxu0 %v4478
        %5954 = vmatpush1.msra.mxu0 %v4477
        %5955 = vmatprep.subr.mxu0 %v4486
        %5956 = vmatpush1.msra.mxu0 %v4485
        %5957 = vmatprep.subr.mxu0 %v4494
        %5958 = vmatpush1.msra.mxu0 %v4493
        %5959 = vmatprep.subr.mxu0 %v4502
        %5960 = vmatpush1.msra.mxu0 %v4501
        %5961 = vmatprep.subr.mxu0 %v4510
        %5962 = vmatpush1.msra.mxu0 %v4509
        %5963 = vmatprep.subr.mxu0 %v4518
        %5964 = vmatpush1.msra.mxu0 %v4517
        %5965 = vmatprep.subr.mxu0 %v4526
        %5966 = vmatpush1.msra.mxu0 %v4525
        %5967 = vmatprep.subr.mxu0 %v4534
        %5968 = vmatpush1.msra.mxu0 %v4533
        %5969 = vmatprep.subr.mxu0 %v4542
        %5970 = vmatpush1.msra.mxu0 %v4541
        %5971 = vmatprep.subr.mxu0 %v4550
        %5972 = vmatpush1.msra.mxu0 %v4549
        %5973 = vmatprep.subr.mxu0 %v4558
        %5974 = vmatpush1.msra.mxu0 %v4557
        %5975 = vmatprep.subr.mxu0 %v4566
        %5976 = vmatpush1.msra.mxu0 %v4565
        %5977 = vmatprep.subr.mxu0 %v4574
        %5978 = vmatpush1.msra.mxu0 %v4573
        %5979 = vmatprep.subr.mxu0 %v4582
        %5980 = vmatpush1.msra.mxu0 %v4581
        %5981 = vmatprep.subr.mxu0 %v4590
        %5982 = vmatpush1.msra.mxu0 %v4589
        %5983 = vmatprep.subr.mxu0 %v4598
        %5984 = vmatpush1.msra.mxu0 %v4597
        %5985 = vmatprep.subr.mxu0 %v4606
        %5986 = vmatpush1.msra.mxu0 %v4605
        %5987 = vmatprep.subr.mxu0 %v4614
        %5988 = vmatpush1.msra.mxu0 %v4613
        %5989 = vmatprep.subr.mxu0 %v4622
        %5990 = vmatpush1.msra.mxu0 %v4621
        %5991 = vmatprep.subr.mxu0 %v4630
        %5992 = vmatpush1.msra.mxu0 %v4629
        %5993 = vmatprep.subr.mxu0 %v4638
        %5994 = vmatpush1.msra.mxu0 %v4637
        %5995 = vmatprep.subr.mxu0 %v4646
        %5996 = vmatpush1.msra.mxu0 %v4645
        %5997 = vmatprep.subr.mxu0 %v4654
        %5998 = vmatpush1.msra.mxu0 %v4653
        %5999 = vmatprep.subr.mxu0 %v4662
        %6000 = vmatpush1.msra.mxu0 %v4661
        %6001 = vmatprep.subr.mxu0 %v4670
        %6002 = vmatpush1.msra.mxu0 %v4669
        %6003 = vmatprep.subr.mxu0 %v4678
        %6004 = vmatpush1.msra.mxu0 %v4677
        %6005 = vmatprep.subr.mxu0 %v4686
        %6006 = vmatpush1.msra.mxu0 %v4685
        %6007 = vmatprep.subr.mxu0 %v4694
        %6008 = vmatpush1.msra.mxu0 %v4693
        %6009 = vmatprep.mubr.f32.mxu0 %v3924
        %6010 = vmatmul.mubr.f32.gmra.mrb[0].mxu0 %v3923
        %v6011 = vpop.f32.mrb[0].mxu0
        %v6012 = vadd.f32 %v5941, %v6011
        %v6013 = vpop.f32.mrb[0].mxu0
        %v6014 = vadd.f32 %v5943, %v6013
        %6015 = vdwg.mxu0
        %6016 = vmatprep.subr.mxu0 %v4702
        %6017 = vmatpush1.msra.mxu0 %v4701
        %6018 = vmatprep.subr.mxu0 %v4710
        %6019 = vmatpush1.msra.mxu0 %v4709
        %6020 = vmatprep.subr.mxu0 %v4718
        %6021 = vmatpush1.msra.mxu0 %v4717
        %6022 = vmatprep.subr.mxu0 %v4726
        %6023 = vmatpush1.msra.mxu0 %v4725
        %6024 = vmatprep.subr.mxu0 %v4734
        %6025 = vmatpush1.msra.mxu0 %v4733
        %6026 = vmatprep.subr.mxu0 %v4742
        %6027 = vmatpush1.msra.mxu0 %v4741
        %6028 = vmatprep.subr.mxu0 %v4750
        %6029 = vmatpush1.msra.mxu0 %v4749
        %6030 = vmatprep.subr.mxu0 %v4758
        %6031 = vmatpush1.msra.mxu0 %v4757
        %6032 = vmatprep.subr.mxu0 %v4766
        %6033 = vmatpush1.msra.mxu0 %v4765
        %6034 = vmatprep.subr.mxu0 %v4774
        %6035 = vmatpush1.msra.mxu0 %v4773
        %6036 = vmatprep.subr.mxu0 %v4782
        %6037 = vmatpush1.msra.mxu0 %v4781
        %6038 = vmatprep.subr.mxu0 %v4790
        %6039 = vmatpush1.msra.mxu0 %v4789
        %6040 = vmatprep.subr.mxu0 %v4798
        %6041 = vmatpush1.msra.mxu0 %v4797
        %6042 = vmatprep.subr.mxu0 %v4806
        %6043 = vmatpush1.msra.mxu0 %v4805
        %6044 = vmatprep.subr.mxu0 %v4814
        %6045 = vmatpush1.msra.mxu0 %v4813
        %6046 = vmatprep.subr.mxu0 %v4822
        %6047 = vmatpush1.msra.mxu0 %v4821
        %6048 = vmatprep.subr.mxu0 %v4830
        %6049 = vmatpush1.msra.mxu0 %v4829
        %6050 = vmatprep.subr.mxu0 %v4838
        %6051 = vmatpush1.msra.mxu0 %v4837
        %6052 = vmatprep.subr.mxu0 %v4846
        %6053 = vmatpush1.msra.mxu0 %v4845
        %6054 = vmatprep.subr.mxu0 %v4854
        %6055 = vmatpush1.msra.mxu0 %v4853
        %6056 = vmatprep.subr.mxu0 %v4862
        %6057 = vmatpush1.msra.mxu0 %v4861
        %6058 = vmatprep.subr.mxu0 %v4870
        %6059 = vmatpush1.msra.mxu0 %v4869
        %6060 = vmatprep.subr.mxu0 %v4878
        %6061 = vmatpush1.msra.mxu0 %v4877
        %6062 = vmatprep.subr.mxu0 %v4886
        %6063 = vmatpush1.msra.mxu0 %v4885
        %6064 = vmatprep.subr.mxu0 %v4894
        %6065 = vmatpush1.msra.mxu0 %v4893
        %6066 = vmatprep.subr.mxu0 %v4902
        %6067 = vmatpush1.msra.mxu0 %v4901
        %6068 = vmatprep.subr.mxu0 %v4910
        %6069 = vmatpush1.msra.mxu0 %v4909
        %6070 = vmatprep.subr.mxu0 %v4918
        %6071 = vmatpush1.msra.mxu0 %v4917
        %6072 = vmatprep.subr.mxu0 %v4926
        %6073 = vmatpush1.msra.mxu0 %v4925
        %6074 = vmatprep.subr.mxu0 %v4934
        %6075 = vmatpush1.msra.mxu0 %v4933
        %6076 = vmatprep.subr.mxu0 %v4942
        %6077 = vmatpush1.msra.mxu0 %v4941
        %6078 = vmatprep.subr.mxu0 %v4950
        %6079 = vmatpush1.msra.mxu0 %v4949
        %6080 = vmatprep.mubr.f32.mxu0 %v3926
        %6081 = vmatmul.mubr.f32.gmra.mrb[0].mxu0 %v3925
        %v6082 = vpop.f32.mrb[0].mxu0
        %v6083 = vadd.f32 %v6012, %v6082
        %v6084 = vpop.f32.mrb[0].mxu0
        %v6085 = vadd.f32 %v6014, %v6084
        %6086 = vdwg.mxu0
        %v6087 = vmul.f32 %v5231, %v2677
        %v6088 = vmul.f32 %v5233, %v2679
        %v6089 = vmul.f32 %v5515, %v2748
        %v6090 = vmul.f32 %v5517, %v2750
        %v6091 = vmul.f32 %v5799, %v2819
        %v6092 = vmul.f32 %v5801, %v2821
        %v6093 = vmul.f32 %v6083, %v2890
        %v6094 = vmul.f32 %v6085, %v2892
        %v6095 = vld [vmem:[%s1094] sm:$0x1]
        %s6096 = sld [smem:[#allocation15 + $0x1]]
        %v6097 = vstv %s6096
        %v6098 = vmul.f32 %v6095, %v6097
        %v6100 = vsel %vm3541, %v6098, 0
        %6102 = vmatprep.subr.mxu0 %v3478
        %6103 = vmatpush1.msra.mxu0 %v3477
        %6104 = vmatprep.subr.mxu0 %v3486
        %6105 = vmatpush1.msra.mxu0 %v3485
        %6106 = vmatprep.subr.mxu0 %v3494
        %6107 = vmatpush1.msra.mxu0 %v3493
        %6108 = vmatprep.subr.mxu0 %v3502
        %6109 = vmatpush1.msra.mxu0 %v3501
        %6110 = vmatprep.subr.mxu0 %v3510
        %6111 = vmatpush1.msra.mxu0 %v3509
        %6112 = vmatprep.subr.mxu0 %v3518
        %6113 = vmatpush1.msra.mxu0 %v3517
        %6114 = vmatprep.subr.mxu0 %v3526
        %6115 = vmatpush1.msra.mxu0 %v3525
        %6116 = vmatprep.subr.mxu0 %v3534
        %6117 = vmatpush1.msra.mxu0 %v3533
        %6118 = vmatprep.subr.mxu0 0.0
        %6119 = vmatpush1.msra.mxu0 0.0
        %6120 = vmatprep.subr.mxu0 0.0
        %6121 = vmatpush1.msra.mxu0 0.0
        %6122 = vmatprep.subr.mxu0 0.0
        %6123 = vmatpush1.msra.mxu0 0.0
        %6124 = vmatprep.subr.mxu0 0.0
        %6125 = vmatpush1.msra.mxu0 0.0
        %6126 = vmatprep.subr.mxu0 0.0
        %6127 = vmatpush1.msra.mxu0 0.0
        %6128 = vmatprep.subr.mxu0 0.0
        %6129 = vmatpush1.msra.mxu0 0.0
        %6130 = vmatprep.subr.mxu0 0.0
        %6131 = vmatpush1.msra.mxu0 0.0
        %6132 = vmatprep.subr.mxu0 0.0
        %6133 = vmatpush1.msra.mxu0 0.0
        %6134 = vmatprep.subr.mxu0 0.0
        %6135 = vmatpush1.msra.mxu0 0.0
        %6136 = vmatprep.subr.mxu0 0.0
        %6137 = vmatpush1.msra.mxu0 0.0
        %6138 = vmatprep.subr.mxu0 0.0
        %6139 = vmatpush1.msra.mxu0 0.0
        %6140 = vmatprep.subr.mxu0 0.0
        %6141 = vmatpush1.msra.mxu0 0.0
        %6142 = vmatprep.subr.mxu0 0.0
        %6143 = vmatpush1.msra.mxu0 0.0
        %6144 = vmatprep.subr.mxu0 0.0
        %6145 = vmatpush1.msra.mxu0 0.0
        %6146 = vmatprep.subr.mxu0 0.0
        %6147 = vmatpush1.msra.mxu0 0.0
        %6148 = vmatprep.subr.mxu0 0.0
        %6149 = vmatpush1.msra.mxu0 0.0
        %6150 = vmatprep.subr.mxu0 0.0
        %6151 = vmatpush1.msra.mxu0 0.0
        %6152 = vmatprep.subr.mxu0 0.0
        %6153 = vmatpush1.msra.mxu0 0.0
        %6154 = vmatprep.subr.mxu0 0.0
        %6155 = vmatpush1.msra.mxu0 0.0
        %6156 = vmatprep.subr.mxu0 0.0
        %6157 = vmatpush1.msra.mxu0 0.0
        %6158 = vmatprep.subr.mxu0 0.0
        %6159 = vmatpush1.msra.mxu0 0.0
        %6160 = vmatprep.subr.mxu0 0.0
        %6161 = vmatpush1.msra.mxu0 0.0
        %6162 = vmatprep.subr.mxu0 0.0
        %6163 = vmatpush1.msra.mxu0 0.0
        %6164 = vmatprep.subr.mxu0 0.0
        %6165 = vmatpush1.msra.mxu0 0.0
        %6166 = vmatprep.mubr.f32.mxu0 0.0
        %6167 = vmatmul.mubr.f32.gmra.mrb[0].mxu0 %v6100
        %v6168 = vpop.f32.mrb[0].mxu0
        %v6169 = vadd.f32 0.0, %v6168
        %v6170 = vpop.f32.mrb[0].mxu0
        %v6171 = vadd.f32 0.0, %v6170
        %6172 = vdwg.mxu0
        %6173 = vmatprep.subr.mxu0 %v3480
        %6174 = vmatpush1.msra.mxu0 %v3479
        %6175 = vmatprep.subr.mxu0 %v3488
        %6176 = vmatpush1.msra.mxu0 %v3487
        %6177 = vmatprep.subr.mxu0 %v3496
        %6178 = vmatpush1.msra.mxu0 %v3495
        %6179 = vmatprep.subr.mxu0 %v3504
        %6180 = vmatpush1.msra.mxu0 %v3503
        %6181 = vmatprep.subr.mxu0 %v3512
        %6182 = vmatpush1.msra.mxu0 %v3511
        %6183 = vmatprep.subr.mxu0 %v3520
        %6184 = vmatpush1.msra.mxu0 %v3519
        %6185 = vmatprep.subr.mxu0 %v3528
        %6186 = vmatpush1.msra.mxu0 %v3527
        %6187 = vmatprep.subr.mxu0 %v3536
        %6188 = vmatpush1.msra.mxu0 %v3535
        %6189 = vmatprep.subr.mxu0 0.0
        %6190 = vmatpush1.msra.mxu0 0.0
        %6191 = vmatprep.subr.mxu0 0.0
        %6192 = vmatpush1.msra.mxu0 0.0
        %6193 = vmatprep.subr.mxu0 0.0
        %6194 = vmatpush1.msra.mxu0 0.0
        %6195 = vmatprep.subr.mxu0 0.0
        %6196 = vmatpush1.msra.mxu0 0.0
        %6197 = vmatprep.subr.mxu0 0.0
        %6198 = vmatpush1.msra.mxu0 0.0
        %6199 = vmatprep.subr.mxu0 0.0
        %6200 = vmatpush1.msra.mxu0 0.0
        %6201 = vmatprep.subr.mxu0 0.0
        %6202 = vmatpush1.msra.mxu0 0.0
        %6203 = vmatprep.subr.mxu0 0.0
        %6204 = vmatpush1.msra.mxu0 0.0
        %6205 = vmatprep.subr.mxu0 0.0
        %6206 = vmatpush1.msra.mxu0 0.0
        %6207 = vmatprep.subr.mxu0 0.0
        %6208 = vmatpush1.msra.mxu0 0.0
        %6209 = vmatprep.subr.mxu0 0.0
        %6210 = vmatpush1.msra.mxu0 0.0
        %6211 = vmatprep.subr.mxu0 0.0
        %6212 = vmatpush1.msra.mxu0 0.0
        %6213 = vmatprep.subr.mxu0 0.0
        %6214 = vmatpush1.msra.mxu0 0.0
        %6215 = vmatprep.subr.mxu0 0.0
        %6216 = vmatpush1.msra.mxu0 0.0
        %6217 = vmatprep.subr.mxu0 0.0
        %6218 = vmatpush1.msra.mxu0 0.0
        %6219 = vmatprep.subr.mxu0 0.0
        %6220 = vmatpush1.msra.mxu0 0.0
        %6221 = vmatprep.subr.mxu0 0.0
        %6222 = vmatpush1.msra.mxu0 0.0
        %6223 = vmatprep.subr.mxu0 0.0
        %6224 = vmatpush1.msra.mxu0 0.0
        %6225 = vmatprep.subr.mxu0 0.0
        %6226 = vmatpush1.msra.mxu0 0.0
        %6227 = vmatprep.subr.mxu0 0.0
        %6228 = vmatpush1.msra.mxu0 0.0
        %6229 = vmatprep.subr.mxu0 0.0
        %6230 = vmatpush1.msra.mxu0 0.0
        %6231 = vmatprep.subr.mxu0 0.0
        %6232 = vmatpush1.msra.mxu0 0.0
        %6233 = vmatprep.subr.mxu0 0.0
        %6234 = vmatpush1.msra.mxu0 0.0
        %6235 = vmatprep.subr.mxu0 0.0
        %6236 = vmatpush1.msra.mxu0 0.0
        %6237 = vmatprep.mubr.f32.mxu0 0.0
        %6238 = vmatmul.mubr.f32.gmra.mrb[0].mxu0 %v6100
        %v6239 = vpop.f32.mrb[0].mxu0
        %v6240 = vadd.f32 0.0, %v6239
        %v6241 = vpop.f32.mrb[0].mxu0
        %v6242 = vadd.f32 0.0, %v6241
        %6243 = vdwg.mxu0
        %6244 = vmatprep.subr.mxu0 %v3482
        %6245 = vmatpush1.msra.mxu0 %v3481
        %6246 = vmatprep.subr.mxu0 %v3490
        %6247 = vmatpush1.msra.mxu0 %v3489
        %6248 = vmatprep.subr.mxu0 %v3498
        %6249 = vmatpush1.msra.mxu0 %v3497
        %6250 = vmatprep.subr.mxu0 %v3506
        %6251 = vmatpush1.msra.mxu0 %v3505
        %6252 = vmatprep.subr.mxu0 %v3514
        %6253 = vmatpush1.msra.mxu0 %v3513
        %6254 = vmatprep.subr.mxu0 %v3522
        %6255 = vmatpush1.msra.mxu0 %v3521
        %6256 = vmatprep.subr.mxu0 %v3530
        %6257 = vmatpush1.msra.mxu0 %v3529
        %6258 = vmatprep.subr.mxu0 %v3538
        %6259 = vmatpush1.msra.mxu0 %v3537
        %6260 = vmatprep.subr.mxu0 0.0
        %6261 = vmatpush1.msra.mxu0 0.0
        %6262 = vmatprep.subr.mxu0 0.0
        %6263 = vmatpush1.msra.mxu0 0.0
        %6264 = vmatprep.subr.mxu0 0.0
        %6265 = vmatpush1.msra.mxu0 0.0
        %6266 = vmatprep.subr.mxu0 0.0
        %6267 = vmatpush1.msra.mxu0 0.0
        %6268 = vmatprep.subr.mxu0 0.0
        %6269 = vmatpush1.msra.mxu0 0.0
        %6270 = vmatprep.subr.mxu0 0.0
        %6271 = vmatpush1.msra.mxu0 0.0
        %6272 = vmatprep.subr.mxu0 0.0
        %6273 = vmatpush1.msra.mxu0 0.0
        %6274 = vmatprep.subr.mxu0 0.0
        %6275 = vmatpush1.msra.mxu0 0.0
        %6276 = vmatprep.subr.mxu0 0.0
        %6277 = vmatpush1.msra.mxu0 0.0
        %6278 = vmatprep.subr.mxu0 0.0
        %6279 = vmatpush1.msra.mxu0 0.0
        %6280 = vmatprep.subr.mxu0 0.0
        %6281 = vmatpush1.msra.mxu0 0.0
        %6282 = vmatprep.subr.mxu0 0.0
        %6283 = vmatpush1.msra.mxu0 0.0
        %6284 = vmatprep.subr.mxu0 0.0
        %6285 = vmatpush1.msra.mxu0 0.0
        %6286 = vmatprep.subr.mxu0 0.0
        %6287 = vmatpush1.msra.mxu0 0.0
        %6288 = vmatprep.subr.mxu0 0.0
        %6289 = vmatpush1.msra.mxu0 0.0
        %6290 = vmatprep.subr.mxu0 0.0
        %6291 = vmatpush1.msra.mxu0 0.0
        %6292 = vmatprep.subr.mxu0 0.0
        %6293 = vmatpush1.msra.mxu0 0.0
        %6294 = vmatprep.subr.mxu0 0.0
        %6295 = vmatpush1.msra.mxu0 0.0
        %6296 = vmatprep.subr.mxu0 0.0
        %6297 = vmatpush1.msra.mxu0 0.0
        %6298 = vmatprep.subr.mxu0 0.0
        %6299 = vmatpush1.msra.mxu0 0.0
        %6300 = vmatprep.subr.mxu0 0.0
        %6301 = vmatpush1.msra.mxu0 0.0
        %6302 = vmatprep.subr.mxu0 0.0
        %6303 = vmatpush1.msra.mxu0 0.0
        %6304 = vmatprep.subr.mxu0 0.0
        %6305 = vmatpush1.msra.mxu0 0.0
        %6306 = vmatprep.subr.mxu0 0.0
        %6307 = vmatpush1.msra.mxu0 0.0
        %6308 = vmatprep.mubr.f32.mxu0 0.0
        %6309 = vmatmul.mubr.f32.gmra.mrb[0].mxu0 %v6100
        %v6310 = vpop.f32.mrb[0].mxu0
        %v6311 = vadd.f32 0.0, %v6310
        %v6312 = vpop.f32.mrb[0].mxu0
        %v6313 = vadd.f32 0.0, %v6312
        %6314 = vdwg.mxu0
        %6315 = vmatprep.subr.mxu0 %v3484
        %6316 = vmatpush1.msra.mxu0 %v3483
        %6317 = vmatprep.subr.mxu0 %v3492
        %6318 = vmatpush1.msra.mxu0 %v3491
        %6319 = vmatprep.subr.mxu0 %v3500
        %6320 = vmatpush1.msra.mxu0 %v3499
        %6321 = vmatprep.subr.mxu0 %v3508
        %6322 = vmatpush1.msra.mxu0 %v3507
        %6323 = vmatprep.subr.mxu0 %v3516
        %6324 = vmatpush1.msra.mxu0 %v3515
        %6325 = vmatprep.subr.mxu0 %v3524
        %6326 = vmatpush1.msra.mxu0 %v3523
        %6327 = vmatprep.subr.mxu0 %v3532
        %6328 = vmatpush1.msra.mxu0 %v3531
        %6329 = vmatprep.subr.mxu0 %v3540
        %6330 = vmatpush1.msra.mxu0 %v3539
        %6331 = vmatprep.subr.mxu0 0.0
        %6332 = vmatpush1.msra.mxu0 0.0
        %6333 = vmatprep.subr.mxu0 0.0
        %6334 = vmatpush1.msra.mxu0 0.0
        %6335 = vmatprep.subr.mxu0 0.0
        %6336 = vmatpush1.msra.mxu0 0.0
        %6337 = vmatprep.subr.mxu0 0.0
        %6338 = vmatpush1.msra.mxu0 0.0
        %6339 = vmatprep.subr.mxu0 0.0
        %6340 = vmatpush1.msra.mxu0 0.0
        %6341 = vmatprep.subr.mxu0 0.0
        %6342 = vmatpush1.msra.mxu0 0.0
        %6343 = vmatprep.subr.mxu0 0.0
        %6344 = vmatpush1.msra.mxu0 0.0
        %6345 = vmatprep.subr.mxu0 0.0
        %6346 = vmatpush1.msra.mxu0 0.0
        %6347 = vmatprep.subr.mxu0 0.0
        %6348 = vmatpush1.msra.mxu0 0.0
        %6349 = vmatprep.subr.mxu0 0.0
        %6350 = vmatpush1.msra.mxu0 0.0
        %6351 = vmatprep.subr.mxu0 0.0
        %6352 = vmatpush1.msra.mxu0 0.0
        %6353 = vmatprep.subr.mxu0 0.0
        %6354 = vmatpush1.msra.mxu0 0.0
        %6355 = vmatprep.subr.mxu0 0.0
        %6356 = vmatpush1.msra.mxu0 0.0
        %6357 = vmatprep.subr.mxu0 0.0
        %6358 = vmatpush1.msra.mxu0 0.0
        %6359 = vmatprep.subr.mxu0 0.0
        %6360 = vmatpush1.msra.mxu0 0.0
        %6361 = vmatprep.subr.mxu0 0.0
        %6362 = vmatpush1.msra.mxu0 0.0
        %6363 = vmatprep.subr.mxu0 0.0
        %6364 = vmatpush1.msra.mxu0 0.0
        %6365 = vmatprep.subr.mxu0 0.0
        %6366 = vmatpush1.msra.mxu0 0.0
        %6367 = vmatprep.subr.mxu0 0.0
        %6368 = vmatpush1.msra.mxu0 0.0
        %6369 = vmatprep.subr.mxu0 0.0
        %6370 = vmatpush1.msra.mxu0 0.0
        %6371 = vmatprep.subr.mxu0 0.0
        %6372 = vmatpush1.msra.mxu0 0.0
        %6373 = vmatprep.subr.mxu0 0.0
        %6374 = vmatpush1.msra.mxu0 0.0
        %6375 = vmatprep.subr.mxu0 0.0
        %6376 = vmatpush1.msra.mxu0 0.0
        %6377 = vmatprep.subr.mxu0 0.0
        %6378 = vmatpush1.msra.mxu0 0.0
        %6379 = vmatprep.mubr.f32.mxu0 0.0
        %6380 = vmatmul.mubr.f32.gmra.mrb[0].mxu0 %v6100
        %v6381 = vpop.f32.mrb[0].mxu0
        %v6382 = vadd.f32 0.0, %v6381
        %v6383 = vpop.f32.mrb[0].mxu0
        %v6384 = vadd.f32 0.0, %v6383
        %6385 = vdwg.mxu0
        %v6386 = vadd.f32 %v6087, %v6169
        %v6387 = vadd.f32 %v6088, %v6171
        %v6388 = vadd.f32 %v6089, %v6240
        %v6389 = vadd.f32 %v6090, %v6242
        %v6390 = vadd.f32 %v6091, %v6311
        %v6391 = vadd.f32 %v6092, %v6313
        %v6392 = vadd.f32 %v6093, %v6382
        %v6393 = vadd.f32 %v6094, %v6384
        %v6394 = vld [vmem:[#allocation36] sm:$0xff]
        %v6396 = vlaneseq
        %v6397 = vshrl.u32 %v6396, 7
        %v6398 = vsub.s32 0, %v6397
        %v6399 = vrot.slane %v6394, %v6398
        %v6400 = vlaneseq
        %v6401 = vshrl.u32 %v6400, 7
        %v6402 = vsub.s32 1, %v6401
        %v6403 = vrot.slane %v6394, %v6402
        %v6404 = vlaneseq
        %v6405 = vshrl.u32 %v6404, 7
        %v6406 = vsub.s32 2, %v6405
        %v6407 = vrot.slane %v6394, %v6406
        %v6408 = vlaneseq
        %v6409 = vshrl.u32 %v6408, 7
        %v6410 = vsub.s32 3, %v6409
        %v6411 = vrot.slane %v6394, %v6410
        %v6412 = vlaneseq
        %v6413 = vshrl.u32 %v6412, 7
        %v6414 = vsub.s32 4, %v6413
        %v6415 = vrot.slane %v6394, %v6414
        %v6416 = vlaneseq
        %v6417 = vshrl.u32 %v6416, 7
        %v6418 = vsub.s32 5, %v6417
        %v6419 = vrot.slane %v6394, %v6418
        %v6420 = vlaneseq
        %v6421 = vshrl.u32 %v6420, 7
        %v6422 = vsub.s32 6, %v6421
        %v6423 = vrot.slane %v6394, %v6422
        %v6424 = vlaneseq
        %v6425 = vshrl.u32 %v6424, 7
        %v6426 = vsub.s32 7, %v6425
        %v6427 = vrot.slane %v6394, %v6426
        %v6436 = vadd.f32 %v6386, %v6399
        %v6437 = vadd.f32 %v6387, %v6403
        %v6438 = vadd.f32 %v6388, %v6407
        %v6439 = vadd.f32 %v6389, %v6411
        %v6440 = vadd.f32 %v6390, %v6415
        %v6441 = vadd.f32 %v6391, %v6419
        %v6442 = vadd.f32 %v6392, %v6423
        %v6443 = vadd.f32 %v6393, %v6427
        %vm6444 = vcmp.ge.f32.partialorder %v6436, 0.0
        %vm6445 = vcmp.ge.f32.partialorder %v6437, 0.0
        %vm6446 = vcmp.ge.f32.partialorder %v6438, 0.0
        %vm6447 = vcmp.ge.f32.partialorder %v6439, 0.0
        %vm6448 = vcmp.ge.f32.partialorder %v6440, 0.0
        %vm6449 = vcmp.ge.f32.partialorder %v6441, 0.0
        %vm6450 = vcmp.ge.f32.partialorder %v6442, 0.0
        %vm6451 = vcmp.ge.f32.partialorder %v6443, 0.0
        %v6452 = vmul.f32 %v6436, 0.2
        %v6453 = vmul.f32 %v6437, 0.2
        %v6454 = vmul.f32 %v6438, 0.2
        %v6455 = vmul.f32 %v6439, 0.2
        %v6456 = vmul.f32 %v6440, 0.2
        %v6457 = vmul.f32 %v6441, 0.2
        %v6458 = vmul.f32 %v6442, 0.2
        %v6459 = vmul.f32 %v6443, 0.2
        %v6460 = vsel %vm6444, %v6436, %v6452
        %v6461 = vsel %vm6445, %v6437, %v6453
        %v6462 = vsel %vm6446, %v6438, %v6454
        %v6463 = vsel %vm6447, %v6439, %v6455
        %v6464 = vsel %vm6448, %v6440, %v6456
        %v6465 = vsel %vm6449, %v6441, %v6457
        %v6466 = vsel %vm6450, %v6442, %v6458
        %v6467 = vsel %vm6451, %v6443, %v6459
        %v6468 = vmul.f32 %v6460, 1.4142135
        %v6469 = vmul.f32 %v6461, 1.4142135
        %v6470 = vmul.f32 %v6462, 1.4142135
        %v6471 = vmul.f32 %v6463, 1.4142135
        %v6472 = vmul.f32 %v6464, 1.4142135
        %v6473 = vmul.f32 %v6465, 1.4142135
        %v6474 = vmul.f32 %v6466, 1.4142135
        %v6475 = vmul.f32 %v6467, 1.4142135
        %v6484 = vcombine.low %v6468, %v6469
        %v6485 = vcombine.low %v6470, %v6471
        %v6486 = vcombine.low %v6472, %v6473
        %v6487 = vcombine.low %v6474, %v6475
        %v6489 = vunpack.c.l.s4 1966171168
        %v6490 = vunpack.c.0.s8 %v6489
        %v6491 = vlaneseq
        %v6492 = vshrl.u32 %v6491, 7
        %v6493 = vsub.s32 %v6490, %v6492
        %v6494 = vrot.slane %v6484, %v6493
        %v6496 = vunpack.c.l.s4 1966171168
        %v6497 = vunpack.c.0.s8 %v6496
        %v6498 = vlaneseq
        %v6499 = vshrl.u32 %v6498, 7
        %v6500 = vsub.s32 %v6497, %v6499
        %v6501 = vrot.slane %v6485, %v6500
        %v6503 = vunpack.c.l.s4 1966171168
        %v6504 = vunpack.c.0.s8 %v6503
        %v6505 = vlaneseq
        %v6506 = vshrl.u32 %v6505, 7
        %v6507 = vsub.s32 %v6504, %v6506
        %v6508 = vrot.slane %v6486, %v6507
        %v6510 = vunpack.c.l.s4 1966171168
        %v6511 = vunpack.c.0.s8 %v6510
        %v6512 = vlaneseq
        %v6513 = vshrl.u32 %v6512, 7
        %v6514 = vsub.s32 %v6511, %v6513
        %v6515 = vrot.slane %v6487, %v6514
        %v6516 = vcombine.low %v6494, %v6501
        %v6517 = vcombine.low %v6508, %v6515
        %v6519 = vunpack.c.l.s4 1966171168
        %v6520 = vunpack.c.0.s8 %v6519
        %v6521 = vlaneseq
        %v6522 = vshrl.u32 %v6521, 7
        %v6523 = vsub.s32 %v6520, %v6522
        %v6524 = vrot.slane %v6516, %v6523
        %v6526 = vunpack.c.l.s4 1966171168
        %v6527 = vunpack.c.0.s8 %v6526
        %v6528 = vlaneseq
        %v6529 = vshrl.u32 %v6528, 7
        %v6530 = vsub.s32 %v6527, %v6529
        %v6531 = vrot.slane %v6517, %v6530
        %v6532 = vcombine.low %v6524, %v6531
        %6534 = vst [vmem:[%s1251] sm:$0xff] %v6532
        %v6535 = vmul.f32 %v6468, %v2103
        %v6536 = vmul.f32 %v6469, %v2105
        %v6537 = vmul.f32 %v6470, %v2174
        %v6538 = vmul.f32 %v6471, %v2176
        %v6539 = vmul.f32 %v6472, %v2245
        %v6540 = vmul.f32 %v6473, %v2247
        %v6541 = vmul.f32 %v6474, %v2316
        %v6542 = vmul.f32 %v6475, %v2318
        %v6543 = vld [vmem:[#allocation27] sm:$0xff]
        %v6544 = vld [vmem:[#allocation27 + $0x8] sm:$0xff]
        %v6545 = vld [vmem:[#allocation27 + $0x10] sm:$0xff]
        %v6546 = vld [vmem:[#allocation27 + $0x18] sm:$0xff]
        %v6547 = vld [vmem:[#allocation27 + $0x20] sm:$0xff]
        %v6548 = vld [vmem:[#allocation27 + $0x28] sm:$0xff]
        %v6549 = vld [vmem:[#allocation27 + $0x30] sm:$0xff]
        %v6550 = vld [vmem:[#allocation27 + $0x38] sm:$0xff]
        %v6551 = vld [vmem:[#allocation27 + $0x40] sm:$0xff]
        %v6552 = vld [vmem:[#allocation27 + $0x48] sm:$0xff]
        %v6553 = vld [vmem:[#allocation27 + $0x50] sm:$0xff]
        %v6554 = vld [vmem:[#allocation27 + $0x58] sm:$0xff]
        %v6555 = vld [vmem:[#allocation27 + $0x60] sm:$0xff]
        %v6556 = vld [vmem:[#allocation27 + $0x68] sm:$0xff]
        %v6557 = vld [vmem:[#allocation27 + $0x70] sm:$0xff]
        %v6558 = vld [vmem:[#allocation27 + $0x78] sm:$0xff]
        %v6559 = vld [vmem:[#allocation27 + $0x80] sm:$0xff]
        %v6560 = vld [vmem:[#allocation27 + $0x88] sm:$0xff]
        %v6561 = vld [vmem:[#allocation27 + $0x90] sm:$0xff]
        %v6562 = vld [vmem:[#allocation27 + $0x98] sm:$0xff]
        %v6563 = vld [vmem:[#allocation27 + $0xa0] sm:$0xff]
        %v6564 = vld [vmem:[#allocation27 + $0xa8] sm:$0xff]
        %v6565 = vld [vmem:[#allocation27 + $0xb0] sm:$0xff]
        %v6566 = vld [vmem:[#allocation27 + $0xb8] sm:$0xff]
        %v6567 = vld [vmem:[#allocation27 + $0xc0] sm:$0xff]
        %v6568 = vld [vmem:[#allocation27 + $0xc8] sm:$0xff]
        %v6569 = vld [vmem:[#allocation27 + $0xd0] sm:$0xff]
        %v6570 = vld [vmem:[#allocation27 + $0xd8] sm:$0xff]
        %v6571 = vld [vmem:[#allocation27 + $0xe0] sm:$0xff]
        %v6572 = vld [vmem:[#allocation27 + $0xe8] sm:$0xff]
        %v6573 = vld [vmem:[#allocation27 + $0xf0] sm:$0xff]
        %v6574 = vld [vmem:[#allocation27 + $0xf8] sm:$0xff]
        %v6575 = vld [vmem:[#allocation27 + $0x100] sm:$0xff]
        %v6576 = vld [vmem:[#allocation27 + $0x108] sm:$0xff]
        %v6577 = vld [vmem:[#allocation27 + $0x110] sm:$0xff]
        %v6578 = vld [vmem:[#allocation27 + $0x118] sm:$0xff]
        %v6579 = vld [vmem:[#allocation27 + $0x120] sm:$0xff]
        %v6580 = vld [vmem:[#allocation27 + $0x128] sm:$0xff]
        %v6581 = vld [vmem:[#allocation27 + $0x130] sm:$0xff]
        %v6582 = vld [vmem:[#allocation27 + $0x138] sm:$0xff]
        %v6583 = vld [vmem:[#allocation27 + $0x140] sm:$0xff]
        %v6584 = vld [vmem:[#allocation27 + $0x148] sm:$0xff]
        %v6585 = vld [vmem:[#allocation27 + $0x150] sm:$0xff]
        %v6586 = vld [vmem:[#allocation27 + $0x158] sm:$0xff]
        %v6587 = vld [vmem:[#allocation27 + $0x160] sm:$0xff]
        %v6588 = vld [vmem:[#allocation27 + $0x168] sm:$0xff]
        %v6589 = vld [vmem:[#allocation27 + $0x170] sm:$0xff]
        %v6590 = vld [vmem:[#allocation27 + $0x178] sm:$0xff]
        %v6591 = vld [vmem:[#allocation27 + $0x180] sm:$0xff]
        %v6592 = vld [vmem:[#allocation27 + $0x188] sm:$0xff]
        %v6593 = vld [vmem:[#allocation27 + $0x190] sm:$0xff]
        %v6594 = vld [vmem:[#allocation27 + $0x198] sm:$0xff]
        %v6595 = vld [vmem:[#allocation27 + $0x1a0] sm:$0xff]
        %v6596 = vld [vmem:[#allocation27 + $0x1a8] sm:$0xff]
        %v6597 = vld [vmem:[#allocation27 + $0x1b0] sm:$0xff]
        %v6598 = vld [vmem:[#allocation27 + $0x1b8] sm:$0xff]
        %v6599 = vld [vmem:[#allocation27 + $0x1c0] sm:$0xff]
        %v6600 = vld [vmem:[#allocation27 + $0x1c8] sm:$0xff]
        %v6601 = vld [vmem:[#allocation27 + $0x1d0] sm:$0xff]
        %v6602 = vld [vmem:[#allocation27 + $0x1d8] sm:$0xff]
        %v6603 = vld [vmem:[#allocation27 + $0x1e0] sm:$0xff]
        %v6604 = vld [vmem:[#allocation27 + $0x1e8] sm:$0xff]
        %v6605 = vld [vmem:[#allocation27 + $0x1f0] sm:$0xff]
        %v6606 = vld [vmem:[#allocation27 + $0x1f8] sm:$0xff]
        %v6607 = vld [vmem:[#allocation27 + $0x200] sm:$0xff]
        %v6608 = vld [vmem:[#allocation27 + $0x208] sm:$0xff]
        %v6609 = vld [vmem:[#allocation27 + $0x210] sm:$0xff]
        %v6610 = vld [vmem:[#allocation27 + $0x218] sm:$0xff]
        %v6611 = vld [vmem:[#allocation27 + $0x220] sm:$0xff]
        %v6612 = vld [vmem:[#allocation27 + $0x228] sm:$0xff]
        %v6613 = vld [vmem:[#allocation27 + $0x230] sm:$0xff]
        %v6614 = vld [vmem:[#allocation27 + $0x238] sm:$0xff]
        %v6615 = vld [vmem:[#allocation27 + $0x240] sm:$0xff]
        %v6616 = vld [vmem:[#allocation27 + $0x248] sm:$0xff]
        %v6617 = vld [vmem:[#allocation27 + $0x250] sm:$0xff]
        %v6618 = vld [vmem:[#allocation27 + $0x258] sm:$0xff]
        %v6619 = vld [vmem:[#allocation27 + $0x260] sm:$0xff]
        %v6620 = vld [vmem:[#allocation27 + $0x268] sm:$0xff]
        %v6621 = vld [vmem:[#allocation27 + $0x270] sm:$0xff]
        %v6622 = vld [vmem:[#allocation27 + $0x278] sm:$0xff]
        %v6623 = vld [vmem:[#allocation27 + $0x280] sm:$0xff]
        %v6624 = vld [vmem:[#allocation27 + $0x288] sm:$0xff]
        %v6625 = vld [vmem:[#allocation27 + $0x290] sm:$0xff]
        %v6626 = vld [vmem:[#allocation27 + $0x298] sm:$0xff]
        %v6627 = vld [vmem:[#allocation27 + $0x2a0] sm:$0xff]
        %v6628 = vld [vmem:[#allocation27 + $0x2a8] sm:$0xff]
        %v6629 = vld [vmem:[#allocation27 + $0x2b0] sm:$0xff]
        %v6630 = vld [vmem:[#allocation27 + $0x2b8] sm:$0xff]
        %v6631 = vld [vmem:[#allocation27 + $0x2c0] sm:$0xff]
        %v6632 = vld [vmem:[#allocation27 + $0x2c8] sm:$0xff]
        %v6633 = vld [vmem:[#allocation27 + $0x2d0] sm:$0xff]
        %v6634 = vld [vmem:[#allocation27 + $0x2d8] sm:$0xff]
        %v6635 = vld [vmem:[#allocation27 + $0x2e0] sm:$0xff]
        %v6636 = vld [vmem:[#allocation27 + $0x2e8] sm:$0xff]
        %v6637 = vld [vmem:[#allocation27 + $0x2f0] sm:$0xff]
        %v6638 = vld [vmem:[#allocation27 + $0x2f8] sm:$0xff]
        %v6639 = vld [vmem:[#allocation27 + $0x300] sm:$0xff]
        %v6640 = vld [vmem:[#allocation27 + $0x308] sm:$0xff]
        %v6641 = vld [vmem:[#allocation27 + $0x310] sm:$0xff]
        %v6642 = vld [vmem:[#allocation27 + $0x318] sm:$0xff]
        %v6643 = vld [vmem:[#allocation27 + $0x320] sm:$0xff]
        %v6644 = vld [vmem:[#allocation27 + $0x328] sm:$0xff]
        %v6645 = vld [vmem:[#allocation27 + $0x330] sm:$0xff]
        %v6646 = vld [vmem:[#allocation27 + $0x338] sm:$0xff]
        %v6647 = vld [vmem:[#allocation27 + $0x340] sm:$0xff]
        %v6648 = vld [vmem:[#allocation27 + $0x348] sm:$0xff]
        %v6649 = vld [vmem:[#allocation27 + $0x350] sm:$0xff]
        %v6650 = vld [vmem:[#allocation27 + $0x358] sm:$0xff]
        %v6651 = vld [vmem:[#allocation27 + $0x360] sm:$0xff]
        %v6652 = vld [vmem:[#allocation27 + $0x368] sm:$0xff]
        %v6653 = vld [vmem:[#allocation27 + $0x370] sm:$0xff]
        %v6654 = vld [vmem:[#allocation27 + $0x378] sm:$0xff]
        %v6655 = vld [vmem:[#allocation27 + $0x380] sm:$0xff]
        %v6656 = vld [vmem:[#allocation27 + $0x388] sm:$0xff]
        %v6657 = vld [vmem:[#allocation27 + $0x390] sm:$0xff]
        %v6658 = vld [vmem:[#allocation27 + $0x398] sm:$0xff]
        %v6659 = vld [vmem:[#allocation27 + $0x3a0] sm:$0xff]
        %v6660 = vld [vmem:[#allocation27 + $0x3a8] sm:$0xff]
        %v6661 = vld [vmem:[#allocation27 + $0x3b0] sm:$0xff]
        %v6662 = vld [vmem:[#allocation27 + $0x3b8] sm:$0xff]
        %v6663 = vld [vmem:[#allocation27 + $0x3c0] sm:$0xff]
        %v6664 = vld [vmem:[#allocation27 + $0x3c8] sm:$0xff]
        %v6665 = vld [vmem:[#allocation27 + $0x3d0] sm:$0xff]
        %v6666 = vld [vmem:[#allocation27 + $0x3d8] sm:$0xff]
        %v6667 = vld [vmem:[#allocation27 + $0x3e0] sm:$0xff]
        %v6668 = vld [vmem:[#allocation27 + $0x3e8] sm:$0xff]
        %v6669 = vld [vmem:[#allocation27 + $0x3f0] sm:$0xff]
        %v6670 = vld [vmem:[#allocation27 + $0x3f8] sm:$0xff]
        %v6671 = vld [vmem:[#allocation27 + $0x400] sm:$0xff]
        %v6672 = vld [vmem:[#allocation27 + $0x408] sm:$0xff]
        %v6673 = vld [vmem:[#allocation27 + $0x410] sm:$0xff]
        %v6674 = vld [vmem:[#allocation27 + $0x418] sm:$0xff]
        %v6675 = vld [vmem:[#allocation27 + $0x420] sm:$0xff]
        %v6676 = vld [vmem:[#allocation27 + $0x428] sm:$0xff]
        %v6677 = vld [vmem:[#allocation27 + $0x430] sm:$0xff]
        %v6678 = vld [vmem:[#allocation27 + $0x438] sm:$0xff]
        %v6679 = vld [vmem:[#allocation27 + $0x440] sm:$0xff]
        %v6680 = vld [vmem:[#allocation27 + $0x448] sm:$0xff]
        %v6681 = vld [vmem:[#allocation27 + $0x450] sm:$0xff]
        %v6682 = vld [vmem:[#allocation27 + $0x458] sm:$0xff]
        %v6683 = vld [vmem:[#allocation27 + $0x460] sm:$0xff]
        %v6684 = vld [vmem:[#allocation27 + $0x468] sm:$0xff]
        %v6685 = vld [vmem:[#allocation27 + $0x470] sm:$0xff]
        %v6686 = vld [vmem:[#allocation27 + $0x478] sm:$0xff]
        %v6687 = vld [vmem:[#allocation27 + $0x480] sm:$0xff]
        %v6688 = vld [vmem:[#allocation27 + $0x488] sm:$0xff]
        %v6689 = vld [vmem:[#allocation27 + $0x490] sm:$0xff]
        %v6690 = vld [vmem:[#allocation27 + $0x498] sm:$0xff]
        %v6691 = vld [vmem:[#allocation27 + $0x4a0] sm:$0xff]
        %v6692 = vld [vmem:[#allocation27 + $0x4a8] sm:$0xff]
        %v6693 = vld [vmem:[#allocation27 + $0x4b0] sm:$0xff]
        %v6694 = vld [vmem:[#allocation27 + $0x4b8] sm:$0xff]
        %v6695 = vld [vmem:[#allocation27 + $0x4c0] sm:$0xff]
        %v6696 = vld [vmem:[#allocation27 + $0x4c8] sm:$0xff]
        %v6697 = vld [vmem:[#allocation27 + $0x4d0] sm:$0xff]
        %v6698 = vld [vmem:[#allocation27 + $0x4d8] sm:$0xff]
        %v6699 = vld [vmem:[#allocation27 + $0x4e0] sm:$0xff]
        %v6700 = vld [vmem:[#allocation27 + $0x4e8] sm:$0xff]
        %v6701 = vld [vmem:[#allocation27 + $0x4f0] sm:$0xff]
        %v6702 = vld [vmem:[#allocation27 + $0x4f8] sm:$0xff]
        %v6703 = vld [vmem:[#allocation27 + $0x500] sm:$0xff]
        %v6704 = vld [vmem:[#allocation27 + $0x508] sm:$0xff]
        %v6705 = vld [vmem:[#allocation27 + $0x510] sm:$0xff]
        %v6706 = vld [vmem:[#allocation27 + $0x518] sm:$0xff]
        %v6707 = vld [vmem:[#allocation27 + $0x520] sm:$0xff]
        %v6708 = vld [vmem:[#allocation27 + $0x528] sm:$0xff]
        %v6709 = vld [vmem:[#allocation27 + $0x530] sm:$0xff]
        %v6710 = vld [vmem:[#allocation27 + $0x538] sm:$0xff]
        %v6711 = vld [vmem:[#allocation27 + $0x540] sm:$0xff]
        %v6712 = vld [vmem:[#allocation27 + $0x548] sm:$0xff]
        %v6713 = vld [vmem:[#allocation27 + $0x550] sm:$0xff]
        %v6714 = vld [vmem:[#allocation27 + $0x558] sm:$0xff]
        %v6715 = vld [vmem:[#allocation27 + $0x560] sm:$0xff]
        %v6716 = vld [vmem:[#allocation27 + $0x568] sm:$0xff]
        %v6717 = vld [vmem:[#allocation27 + $0x570] sm:$0xff]
        %v6718 = vld [vmem:[#allocation27 + $0x578] sm:$0xff]
        %v6719 = vld [vmem:[#allocation27 + $0x580] sm:$0xff]
        %v6720 = vld [vmem:[#allocation27 + $0x588] sm:$0xff]
        %v6721 = vld [vmem:[#allocation27 + $0x590] sm:$0xff]
        %v6722 = vld [vmem:[#allocation27 + $0x598] sm:$0xff]
        %v6723 = vld [vmem:[#allocation27 + $0x5a0] sm:$0xff]
        %v6724 = vld [vmem:[#allocation27 + $0x5a8] sm:$0xff]
        %v6725 = vld [vmem:[#allocation27 + $0x5b0] sm:$0xff]
        %v6726 = vld [vmem:[#allocation27 + $0x5b8] sm:$0xff]
        %v6727 = vld [vmem:[#allocation27 + $0x5c0] sm:$0xff]
        %v6728 = vld [vmem:[#allocation27 + $0x5c8] sm:$0xff]
        %v6729 = vld [vmem:[#allocation27 + $0x5d0] sm:$0xff]
        %v6730 = vld [vmem:[#allocation27 + $0x5d8] sm:$0xff]
        %v6731 = vld [vmem:[#allocation27 + $0x5e0] sm:$0xff]
        %v6732 = vld [vmem:[#allocation27 + $0x5e8] sm:$0xff]
        %v6733 = vld [vmem:[#allocation27 + $0x5f0] sm:$0xff]
        %v6734 = vld [vmem:[#allocation27 + $0x5f8] sm:$0xff]
        %v6735 = vld [vmem:[#allocation27 + $0x600] sm:$0xff]
        %v6736 = vld [vmem:[#allocation27 + $0x608] sm:$0xff]
        %v6737 = vld [vmem:[#allocation27 + $0x610] sm:$0xff]
        %v6738 = vld [vmem:[#allocation27 + $0x618] sm:$0xff]
        %v6739 = vld [vmem:[#allocation27 + $0x620] sm:$0xff]
        %v6740 = vld [vmem:[#allocation27 + $0x628] sm:$0xff]
        %v6741 = vld [vmem:[#allocation27 + $0x630] sm:$0xff]
        %v6742 = vld [vmem:[#allocation27 + $0x638] sm:$0xff]
        %v6743 = vld [vmem:[#allocation27 + $0x640] sm:$0xff]
        %v6744 = vld [vmem:[#allocation27 + $0x648] sm:$0xff]
        %v6745 = vld [vmem:[#allocation27 + $0x650] sm:$0xff]
        %v6746 = vld [vmem:[#allocation27 + $0x658] sm:$0xff]
        %v6747 = vld [vmem:[#allocation27 + $0x660] sm:$0xff]
        %v6748 = vld [vmem:[#allocation27 + $0x668] sm:$0xff]
        %v6749 = vld [vmem:[#allocation27 + $0x670] sm:$0xff]
        %v6750 = vld [vmem:[#allocation27 + $0x678] sm:$0xff]
        %v6751 = vld [vmem:[#allocation27 + $0x680] sm:$0xff]
        %v6752 = vld [vmem:[#allocation27 + $0x688] sm:$0xff]
        %v6753 = vld [vmem:[#allocation27 + $0x690] sm:$0xff]
        %v6754 = vld [vmem:[#allocation27 + $0x698] sm:$0xff]
        %v6755 = vld [vmem:[#allocation27 + $0x6a0] sm:$0xff]
        %v6756 = vld [vmem:[#allocation27 + $0x6a8] sm:$0xff]
        %v6757 = vld [vmem:[#allocation27 + $0x6b0] sm:$0xff]
        %v6758 = vld [vmem:[#allocation27 + $0x6b8] sm:$0xff]
        %v6759 = vld [vmem:[#allocation27 + $0x6c0] sm:$0xff]
        %v6760 = vld [vmem:[#allocation27 + $0x6c8] sm:$0xff]
        %v6761 = vld [vmem:[#allocation27 + $0x6d0] sm:$0xff]
        %v6762 = vld [vmem:[#allocation27 + $0x6d8] sm:$0xff]
        %v6763 = vld [vmem:[#allocation27 + $0x6e0] sm:$0xff]
        %v6764 = vld [vmem:[#allocation27 + $0x6e8] sm:$0xff]
        %v6765 = vld [vmem:[#allocation27 + $0x6f0] sm:$0xff]
        %v6766 = vld [vmem:[#allocation27 + $0x6f8] sm:$0xff]
        %v6767 = vld [vmem:[#allocation27 + $0x700] sm:$0xff]
        %v6768 = vld [vmem:[#allocation27 + $0x708] sm:$0xff]
        %v6769 = vld [vmem:[#allocation27 + $0x710] sm:$0xff]
        %v6770 = vld [vmem:[#allocation27 + $0x718] sm:$0xff]
        %v6771 = vld [vmem:[#allocation27 + $0x720] sm:$0xff]
        %v6772 = vld [vmem:[#allocation27 + $0x728] sm:$0xff]
        %v6773 = vld [vmem:[#allocation27 + $0x730] sm:$0xff]
        %v6774 = vld [vmem:[#allocation27 + $0x738] sm:$0xff]
        %v6775 = vld [vmem:[#allocation27 + $0x740] sm:$0xff]
        %v6776 = vld [vmem:[#allocation27 + $0x748] sm:$0xff]
        %v6777 = vld [vmem:[#allocation27 + $0x750] sm:$0xff]
        %v6778 = vld [vmem:[#allocation27 + $0x758] sm:$0xff]
        %v6779 = vld [vmem:[#allocation27 + $0x760] sm:$0xff]
        %v6780 = vld [vmem:[#allocation27 + $0x768] sm:$0xff]
        %v6781 = vld [vmem:[#allocation27 + $0x770] sm:$0xff]
        %v6782 = vld [vmem:[#allocation27 + $0x778] sm:$0xff]
        %v6783 = vld [vmem:[#allocation27 + $0x780] sm:$0xff]
        %v6784 = vld [vmem:[#allocation27 + $0x788] sm:$0xff]
        %v6785 = vld [vmem:[#allocation27 + $0x790] sm:$0xff]
        %v6786 = vld [vmem:[#allocation27 + $0x798] sm:$0xff]
        %v6787 = vld [vmem:[#allocation27 + $0x7a0] sm:$0xff]
        %v6788 = vld [vmem:[#allocation27 + $0x7a8] sm:$0xff]
        %v6789 = vld [vmem:[#allocation27 + $0x7b0] sm:$0xff]
        %v6790 = vld [vmem:[#allocation27 + $0x7b8] sm:$0xff]
        %v6791 = vld [vmem:[#allocation27 + $0x7c0] sm:$0xff]
        %v6792 = vld [vmem:[#allocation27 + $0x7c8] sm:$0xff]
        %v6793 = vld [vmem:[#allocation27 + $0x7d0] sm:$0xff]
        %v6794 = vld [vmem:[#allocation27 + $0x7d8] sm:$0xff]
        %v6795 = vld [vmem:[#allocation27 + $0x7e0] sm:$0xff]
        %v6796 = vld [vmem:[#allocation27 + $0x7e8] sm:$0xff]
        %v6797 = vld [vmem:[#allocation27 + $0x7f0] sm:$0xff]
        %v6798 = vld [vmem:[#allocation27 + $0x7f8] sm:$0xff]
        %v6799 = vld [vmem:[#allocation37] sm:$0x3]
        %v6801 = vlaneseq
        %v6802 = vshrl.u32 %v6801, 7
        %v6803 = vsub.s32 0, %v6802
        %v6804 = vrot.slane %v6799, %v6803
        %v6805 = vlaneseq
        %v6806 = vshrl.u32 %v6805, 7
        %v6807 = vsub.s32 1, %v6806
        %v6808 = vrot.slane %v6799, %v6807
        %6811 = vmatprep.subr.mxu0 %v6544
        %6812 = vmatpush1.msra.mxu0 %v6543
        %6813 = vmatprep.subr.mxu0 %v6546
        %6814 = vmatpush1.msra.mxu0 %v6545
        %6815 = vmatprep.subr.mxu0 %v6548
        %6816 = vmatpush1.msra.mxu0 %v6547
        %6817 = vmatprep.subr.mxu0 %v6550
        %6818 = vmatpush1.msra.mxu0 %v6549
        %6819 = vmatprep.subr.mxu0 %v6552
        %6820 = vmatpush1.msra.mxu0 %v6551
        %6821 = vmatprep.subr.mxu0 %v6554
        %6822 = vmatpush1.msra.mxu0 %v6553
        %6823 = vmatprep.subr.mxu0 %v6556
        %6824 = vmatpush1.msra.mxu0 %v6555
        %6825 = vmatprep.subr.mxu0 %v6558
        %6826 = vmatpush1.msra.mxu0 %v6557
        %6827 = vmatprep.subr.mxu0 %v6560
        %6828 = vmatpush1.msra.mxu0 %v6559
        %6829 = vmatprep.subr.mxu0 %v6562
        %6830 = vmatpush1.msra.mxu0 %v6561
        %6831 = vmatprep.subr.mxu0 %v6564
        %6832 = vmatpush1.msra.mxu0 %v6563
        %6833 = vmatprep.subr.mxu0 %v6566
        %6834 = vmatpush1.msra.mxu0 %v6565
        %6835 = vmatprep.subr.mxu0 %v6568
        %6836 = vmatpush1.msra.mxu0 %v6567
        %6837 = vmatprep.subr.mxu0 %v6570
        %6838 = vmatpush1.msra.mxu0 %v6569
        %6839 = vmatprep.subr.mxu0 %v6572
        %6840 = vmatpush1.msra.mxu0 %v6571
        %6841 = vmatprep.subr.mxu0 %v6574
        %6842 = vmatpush1.msra.mxu0 %v6573
        %6843 = vmatprep.subr.mxu0 %v6576
        %6844 = vmatpush1.msra.mxu0 %v6575
        %6845 = vmatprep.subr.mxu0 %v6578
        %6846 = vmatpush1.msra.mxu0 %v6577
        %6847 = vmatprep.subr.mxu0 %v6580
        %6848 = vmatpush1.msra.mxu0 %v6579
        %6849 = vmatprep.subr.mxu0 %v6582
        %6850 = vmatpush1.msra.mxu0 %v6581
        %6851 = vmatprep.subr.mxu0 %v6584
        %6852 = vmatpush1.msra.mxu0 %v6583
        %6853 = vmatprep.subr.mxu0 %v6586
        %6854 = vmatpush1.msra.mxu0 %v6585
        %6855 = vmatprep.subr.mxu0 %v6588
        %6856 = vmatpush1.msra.mxu0 %v6587
        %6857 = vmatprep.subr.mxu0 %v6590
        %6858 = vmatpush1.msra.mxu0 %v6589
        %6859 = vmatprep.subr.mxu0 %v6592
        %6860 = vmatpush1.msra.mxu0 %v6591
        %6861 = vmatprep.subr.mxu0 %v6594
        %6862 = vmatpush1.msra.mxu0 %v6593
        %6863 = vmatprep.subr.mxu0 %v6596
        %6864 = vmatpush1.msra.mxu0 %v6595
        %6865 = vmatprep.subr.mxu0 %v6598
        %6866 = vmatpush1.msra.mxu0 %v6597
        %6867 = vmatprep.subr.mxu0 %v6600
        %6868 = vmatpush1.msra.mxu0 %v6599
        %6869 = vmatprep.subr.mxu0 %v6602
        %6870 = vmatpush1.msra.mxu0 %v6601
        %6871 = vmatprep.subr.mxu0 %v6604
        %6872 = vmatpush1.msra.mxu0 %v6603
        %6873 = vmatprep.subr.mxu0 %v6606
        %6874 = vmatpush1.msra.mxu0 %v6605
        %6875 = vmatprep.mubr.f32.mxu0 %v6536
        %6876 = vmatmul.mubr.f32.gmra.mrb[0].mxu0 %v6535
        %v6877 = vpop.f32.mrb[0].mxu0
        %v6878 = vadd.f32 %v6804, %v6877
        %v6879 = vpop.f32.mrb[0].mxu0
        %v6880 = vadd.f32 %v6808, %v6879
        %6881 = vdwg.mxu0
        %6882 = vmatprep.subr.mxu0 %v6608
        %6883 = vmatpush1.msra.mxu0 %v6607
        %6884 = vmatprep.subr.mxu0 %v6610
        %6885 = vmatpush1.msra.mxu0 %v6609
        %6886 = vmatprep.subr.mxu0 %v6612
        %6887 = vmatpush1.msra.mxu0 %v6611
        %6888 = vmatprep.subr.mxu0 %v6614
        %6889 = vmatpush1.msra.mxu0 %v6613
        %6890 = vmatprep.subr.mxu0 %v6616
        %6891 = vmatpush1.msra.mxu0 %v6615
        %6892 = vmatprep.subr.mxu0 %v6618
        %6893 = vmatpush1.msra.mxu0 %v6617
        %6894 = vmatprep.subr.mxu0 %v6620
        %6895 = vmatpush1.msra.mxu0 %v6619
        %6896 = vmatprep.subr.mxu0 %v6622
        %6897 = vmatpush1.msra.mxu0 %v6621
        %6898 = vmatprep.subr.mxu0 %v6624
        %6899 = vmatpush1.msra.mxu0 %v6623
        %6900 = vmatprep.subr.mxu0 %v6626
        %6901 = vmatpush1.msra.mxu0 %v6625
        %6902 = vmatprep.subr.mxu0 %v6628
        %6903 = vmatpush1.msra.mxu0 %v6627
        %6904 = vmatprep.subr.mxu0 %v6630
        %6905 = vmatpush1.msra.mxu0 %v6629
        %6906 = vmatprep.subr.mxu0 %v6632
        %6907 = vmatpush1.msra.mxu0 %v6631
        %6908 = vmatprep.subr.mxu0 %v6634
        %6909 = vmatpush1.msra.mxu0 %v6633
        %6910 = vmatprep.subr.mxu0 %v6636
        %6911 = vmatpush1.msra.mxu0 %v6635
        %6912 = vmatprep.subr.mxu0 %v6638
        %6913 = vmatpush1.msra.mxu0 %v6637
        %6914 = vmatprep.subr.mxu0 %v6640
        %6915 = vmatpush1.msra.mxu0 %v6639
        %6916 = vmatprep.subr.mxu0 %v6642
        %6917 = vmatpush1.msra.mxu0 %v6641
        %6918 = vmatprep.subr.mxu0 %v6644
        %6919 = vmatpush1.msra.mxu0 %v6643
        %6920 = vmatprep.subr.mxu0 %v6646
        %6921 = vmatpush1.msra.mxu0 %v6645
        %6922 = vmatprep.subr.mxu0 %v6648
        %6923 = vmatpush1.msra.mxu0 %v6647
        %6924 = vmatprep.subr.mxu0 %v6650
        %6925 = vmatpush1.msra.mxu0 %v6649
        %6926 = vmatprep.subr.mxu0 %v6652
        %6927 = vmatpush1.msra.mxu0 %v6651
        %6928 = vmatprep.subr.mxu0 %v6654
        %6929 = vmatpush1.msra.mxu0 %v6653
        %6930 = vmatprep.subr.mxu0 %v6656
        %6931 = vmatpush1.msra.mxu0 %v6655
        %6932 = vmatprep.subr.mxu0 %v6658
        %6933 = vmatpush1.msra.mxu0 %v6657
        %6934 = vmatprep.subr.mxu0 %v6660
        %6935 = vmatpush1.msra.mxu0 %v6659
        %6936 = vmatprep.subr.mxu0 %v6662
        %6937 = vmatpush1.msra.mxu0 %v6661
        %6938 = vmatprep.subr.mxu0 %v6664
        %6939 = vmatpush1.msra.mxu0 %v6663
        %6940 = vmatprep.subr.mxu0 %v6666
        %6941 = vmatpush1.msra.mxu0 %v6665
        %6942 = vmatprep.subr.mxu0 %v6668
        %6943 = vmatpush1.msra.mxu0 %v6667
        %6944 = vmatprep.subr.mxu0 %v6670
        %6945 = vmatpush1.msra.mxu0 %v6669
        %6946 = vmatprep.mubr.f32.mxu0 %v6538
        %6947 = vmatmul.mubr.f32.gmra.mrb[0].mxu0 %v6537
        %v6948 = vpop.f32.mrb[0].mxu0
        %v6949 = vadd.f32 %v6878, %v6948
        %v6950 = vpop.f32.mrb[0].mxu0
        %v6951 = vadd.f32 %v6880, %v6950
        %6952 = vdwg.mxu0
        %6953 = vmatprep.subr.mxu0 %v6672
        %6954 = vmatpush1.msra.mxu0 %v6671
        %6955 = vmatprep.subr.mxu0 %v6674
        %6956 = vmatpush1.msra.mxu0 %v6673
        %6957 = vmatprep.subr.mxu0 %v6676
        %6958 = vmatpush1.msra.mxu0 %v6675
        %6959 = vmatprep.subr.mxu0 %v6678
        %6960 = vmatpush1.msra.mxu0 %v6677
        %6961 = vmatprep.subr.mxu0 %v6680
        %6962 = vmatpush1.msra.mxu0 %v6679
        %6963 = vmatprep.subr.mxu0 %v6682
        %6964 = vmatpush1.msra.mxu0 %v6681
        %6965 = vmatprep.subr.mxu0 %v6684
        %6966 = vmatpush1.msra.mxu0 %v6683
        %6967 = vmatprep.subr.mxu0 %v6686
        %6968 = vmatpush1.msra.mxu0 %v6685
        %6969 = vmatprep.subr.mxu0 %v6688
        %6970 = vmatpush1.msra.mxu0 %v6687
        %6971 = vmatprep.subr.mxu0 %v6690
        %6972 = vmatpush1.msra.mxu0 %v6689
        %6973 = vmatprep.subr.mxu0 %v6692
        %6974 = vmatpush1.msra.mxu0 %v6691
        %6975 = vmatprep.subr.mxu0 %v6694
        %6976 = vmatpush1.msra.mxu0 %v6693
        %6977 = vmatprep.subr.mxu0 %v6696
        %6978 = vmatpush1.msra.mxu0 %v6695
        %6979 = vmatprep.subr.mxu0 %v6698
        %6980 = vmatpush1.msra.mxu0 %v6697
        %6981 = vmatprep.subr.mxu0 %v6700
        %6982 = vmatpush1.msra.mxu0 %v6699
        %6983 = vmatprep.subr.mxu0 %v6702
        %6984 = vmatpush1.msra.mxu0 %v6701
        %6985 = vmatprep.subr.mxu0 %v6704
        %6986 = vmatpush1.msra.mxu0 %v6703
        %6987 = vmatprep.subr.mxu0 %v6706
        %6988 = vmatpush1.msra.mxu0 %v6705
        %6989 = vmatprep.subr.mxu0 %v6708
        %6990 = vmatpush1.msra.mxu0 %v6707
        %6991 = vmatprep.subr.mxu0 %v6710
        %6992 = vmatpush1.msra.mxu0 %v6709
        %6993 = vmatprep.subr.mxu0 %v6712
        %6994 = vmatpush1.msra.mxu0 %v6711
        %6995 = vmatprep.subr.mxu0 %v6714
        %6996 = vmatpush1.msra.mxu0 %v6713
        %6997 = vmatprep.subr.mxu0 %v6716
        %6998 = vmatpush1.msra.mxu0 %v6715
        %6999 = vmatprep.subr.mxu0 %v6718
        %7000 = vmatpush1.msra.mxu0 %v6717
        %7001 = vmatprep.subr.mxu0 %v6720
        %7002 = vmatpush1.msra.mxu0 %v6719
        %7003 = vmatprep.subr.mxu0 %v6722
        %7004 = vmatpush1.msra.mxu0 %v6721
        %7005 = vmatprep.subr.mxu0 %v6724
        %7006 = vmatpush1.msra.mxu0 %v6723
        %7007 = vmatprep.subr.mxu0 %v6726
        %7008 = vmatpush1.msra.mxu0 %v6725
        %7009 = vmatprep.subr.mxu0 %v6728
        %7010 = vmatpush1.msra.mxu0 %v6727
        %7011 = vmatprep.subr.mxu0 %v6730
        %7012 = vmatpush1.msra.mxu0 %v6729
        %7013 = vmatprep.subr.mxu0 %v6732
        %7014 = vmatpush1.msra.mxu0 %v6731
        %7015 = vmatprep.subr.mxu0 %v6734
        %7016 = vmatpush1.msra.mxu0 %v6733
        %7017 = vmatprep.mubr.f32.mxu0 %v6540
        %7018 = vmatmul.mubr.f32.gmra.mrb[0].mxu0 %v6539
        %v7019 = vpop.f32.mrb[0].mxu0
        %v7020 = vadd.f32 %v6949, %v7019
        %v7021 = vpop.f32.mrb[0].mxu0
        %v7022 = vadd.f32 %v6951, %v7021
        %7023 = vdwg.mxu0
        %7024 = vmatprep.subr.mxu0 %v6736
        %7025 = vmatpush1.msra.mxu0 %v6735
        %7026 = vmatprep.subr.mxu0 %v6738
        %7027 = vmatpush1.msra.mxu0 %v6737
        %7028 = vmatprep.subr.mxu0 %v6740
        %7029 = vmatpush1.msra.mxu0 %v6739
        %7030 = vmatprep.subr.mxu0 %v6742
        %7031 = vmatpush1.msra.mxu0 %v6741
        %7032 = vmatprep.subr.mxu0 %v6744
        %7033 = vmatpush1.msra.mxu0 %v6743
        %7034 = vmatprep.subr.mxu0 %v6746
        %7035 = vmatpush1.msra.mxu0 %v6745
        %7036 = vmatprep.subr.mxu0 %v6748
        %7037 = vmatpush1.msra.mxu0 %v6747
        %7038 = vmatprep.subr.mxu0 %v6750
        %7039 = vmatpush1.msra.mxu0 %v6749
        %7040 = vmatprep.subr.mxu0 %v6752
        %7041 = vmatpush1.msra.mxu0 %v6751
        %7042 = vmatprep.subr.mxu0 %v6754
        %7043 = vmatpush1.msra.mxu0 %v6753
        %7044 = vmatprep.subr.mxu0 %v6756
        %7045 = vmatpush1.msra.mxu0 %v6755
        %7046 = vmatprep.subr.mxu0 %v6758
        %7047 = vmatpush1.msra.mxu0 %v6757
        %7048 = vmatprep.subr.mxu0 %v6760
        %7049 = vmatpush1.msra.mxu0 %v6759
        %7050 = vmatprep.subr.mxu0 %v6762
        %7051 = vmatpush1.msra.mxu0 %v6761
        %7052 = vmatprep.subr.mxu0 %v6764
        %7053 = vmatpush1.msra.mxu0 %v6763
        %7054 = vmatprep.subr.mxu0 %v6766
        %7055 = vmatpush1.msra.mxu0 %v6765
        %7056 = vmatprep.subr.mxu0 %v6768
        %7057 = vmatpush1.msra.mxu0 %v6767
        %7058 = vmatprep.subr.mxu0 %v6770
        %7059 = vmatpush1.msra.mxu0 %v6769
        %7060 = vmatprep.subr.mxu0 %v6772
        %7061 = vmatpush1.msra.mxu0 %v6771
        %7062 = vmatprep.subr.mxu0 %v6774
        %7063 = vmatpush1.msra.mxu0 %v6773
        %7064 = vmatprep.subr.mxu0 %v6776
        %7065 = vmatpush1.msra.mxu0 %v6775
        %7066 = vmatprep.subr.mxu0 %v6778
        %7067 = vmatpush1.msra.mxu0 %v6777
        %7068 = vmatprep.subr.mxu0 %v6780
        %7069 = vmatpush1.msra.mxu0 %v6779
        %7070 = vmatprep.subr.mxu0 %v6782
        %7071 = vmatpush1.msra.mxu0 %v6781
        %7072 = vmatprep.subr.mxu0 %v6784
        %7073 = vmatpush1.msra.mxu0 %v6783
        %7074 = vmatprep.subr.mxu0 %v6786
        %7075 = vmatpush1.msra.mxu0 %v6785
        %7076 = vmatprep.subr.mxu0 %v6788
        %7077 = vmatpush1.msra.mxu0 %v6787
        %7078 = vmatprep.subr.mxu0 %v6790
        %7079 = vmatpush1.msra.mxu0 %v6789
        %7080 = vmatprep.subr.mxu0 %v6792
        %7081 = vmatpush1.msra.mxu0 %v6791
        %7082 = vmatprep.subr.mxu0 %v6794
        %7083 = vmatpush1.msra.mxu0 %v6793
        %7084 = vmatprep.subr.mxu0 %v6796
        %7085 = vmatpush1.msra.mxu0 %v6795
        %7086 = vmatprep.subr.mxu0 %v6798
        %7087 = vmatpush1.msra.mxu0 %v6797
        %7088 = vmatprep.mubr.f32.mxu0 %v6542
        %7089 = vmatmul.mubr.f32.gmra.mrb[0].mxu0 %v6541
        %v7090 = vpop.f32.mrb[0].mxu0
        %v7091 = vadd.f32 %v7020, %v7090
        %v7092 = vpop.f32.mrb[0].mxu0
        %v7093 = vadd.f32 %v7022, %v7092
        %7094 = vdwg.mxu0
        %v7095 = vld [vmem:[%s1078] sm:$0x1]
        %v7096 = vld [vmem:[#allocation28] sm:$0xff]
        %v7097 = vld [vmem:[#allocation28 + $0x8] sm:$0xff]
        %v7098 = vld [vmem:[#allocation28 + $0x10] sm:$0xff]
        %v7099 = vld [vmem:[#allocation28 + $0x18] sm:$0xff]
        %v7100 = vld [vmem:[#allocation28 + $0x20] sm:$0xff]
        %v7101 = vld [vmem:[#allocation28 + $0x28] sm:$0xff]
        %v7102 = vld [vmem:[#allocation28 + $0x30] sm:$0xff]
        %v7103 = vld [vmem:[#allocation28 + $0x38] sm:$0xff]
        %v7104 = vld [vmem:[#allocation28 + $0x40] sm:$0xff]
        %v7105 = vld [vmem:[#allocation28 + $0x48] sm:$0xff]
        %v7106 = vld [vmem:[#allocation28 + $0x50] sm:$0xff]
        %v7107 = vld [vmem:[#allocation28 + $0x58] sm:$0xff]
        %v7108 = vld [vmem:[#allocation28 + $0x60] sm:$0xff]
        %v7109 = vld [vmem:[#allocation28 + $0x68] sm:$0xff]
        %v7110 = vld [vmem:[#allocation28 + $0x70] sm:$0xff]
        %v7111 = vld [vmem:[#allocation28 + $0x78] sm:$0xff]
        %v7113 = vsel %vm3541, %v7095, 0
        %7115 = vmatprep.subr.mxu0 %v7097
        %7116 = vmatpush1.msra.mxu0 %v7096
        %7117 = vmatprep.subr.mxu0 %v7099
        %7118 = vmatpush1.msra.mxu0 %v7098
        %7119 = vmatprep.subr.mxu0 %v7101
        %7120 = vmatpush1.msra.mxu0 %v7100
        %7121 = vmatprep.subr.mxu0 %v7103
        %7122 = vmatpush1.msra.mxu0 %v7102
        %7123 = vmatprep.subr.mxu0 %v7105
        %7124 = vmatpush1.msra.mxu0 %v7104
        %7125 = vmatprep.subr.mxu0 %v7107
        %7126 = vmatpush1.msra.mxu0 %v7106
        %7127 = vmatprep.subr.mxu0 %v7109
        %7128 = vmatpush1.msra.mxu0 %v7108
        %7129 = vmatprep.subr.mxu0 %v7111
        %7130 = vmatpush1.msra.mxu0 %v7110
        %7131 = vmatprep.subr.mxu0 0.0
        %7132 = vmatpush1.msra.mxu0 0.0
        %7133 = vmatprep.subr.mxu0 0.0
        %7134 = vmatpush1.msra.mxu0 0.0
        %7135 = vmatprep.subr.mxu0 0.0
        %7136 = vmatpush1.msra.mxu0 0.0
        %7137 = vmatprep.subr.mxu0 0.0
        %7138 = vmatpush1.msra.mxu0 0.0
        %7139 = vmatprep.subr.mxu0 0.0
        %7140 = vmatpush1.msra.mxu0 0.0
        %7141 = vmatprep.subr.mxu0 0.0
        %7142 = vmatpush1.msra.mxu0 0.0
        %7143 = vmatprep.subr.mxu0 0.0
        %7144 = vmatpush1.msra.mxu0 0.0
        %7145 = vmatprep.subr.mxu0 0.0
        %7146 = vmatpush1.msra.mxu0 0.0
        %7147 = vmatprep.subr.mxu0 0.0
        %7148 = vmatpush1.msra.mxu0 0.0
        %7149 = vmatprep.subr.mxu0 0.0
        %7150 = vmatpush1.msra.mxu0 0.0
        %7151 = vmatprep.subr.mxu0 0.0
        %7152 = vmatpush1.msra.mxu0 0.0
        %7153 = vmatprep.subr.mxu0 0.0
        %7154 = vmatpush1.msra.mxu0 0.0
        %7155 = vmatprep.subr.mxu0 0.0
        %7156 = vmatpush1.msra.mxu0 0.0
        %7157 = vmatprep.subr.mxu0 0.0
        %7158 = vmatpush1.msra.mxu0 0.0
        %7159 = vmatprep.subr.mxu0 0.0
        %7160 = vmatpush1.msra.mxu0 0.0
        %7161 = vmatprep.subr.mxu0 0.0
        %7162 = vmatpush1.msra.mxu0 0.0
        %7163 = vmatprep.subr.mxu0 0.0
        %7164 = vmatpush1.msra.mxu0 0.0
        %7165 = vmatprep.subr.mxu0 0.0
        %7166 = vmatpush1.msra.mxu0 0.0
        %7167 = vmatprep.subr.mxu0 0.0
        %7168 = vmatpush1.msra.mxu0 0.0
        %7169 = vmatprep.subr.mxu0 0.0
        %7170 = vmatpush1.msra.mxu0 0.0
        %7171 = vmatprep.subr.mxu0 0.0
        %7172 = vmatpush1.msra.mxu0 0.0
        %7173 = vmatprep.subr.mxu0 0.0
        %7174 = vmatpush1.msra.mxu0 0.0
        %7175 = vmatprep.subr.mxu0 0.0
        %7176 = vmatpush1.msra.mxu0 0.0
        %7177 = vmatprep.subr.mxu0 0.0
        %7178 = vmatpush1.msra.mxu0 0.0
        %7179 = vmatprep.mubr.f32.mxu0 0.0
        %7180 = vmatmul.mubr.f32.gmra.mrb[0].mxu0 %v7113
        %v7181 = vpop.f32.mrb[0].mxu0
        %v7182 = vadd.f32 0.0, %v7181
        %v7183 = vpop.f32.mrb[0].mxu0
        %v7184 = vadd.f32 0.0, %v7183
        %7185 = vdwg.mxu0
        %v7186 = vadd.f32 %v7091, %v7182
        %v7187 = vadd.f32 %v7093, %v7184
        %v7190 = vcombine.low %v7186, %v7187
        %v7192 = vunpack.c.l.s4 1966171168
        %v7193 = vunpack.c.0.s8 %v7192
        %v7194 = vlaneseq
        %v7195 = vshrl.u32 %v7194, 7
        %v7196 = vsub.s32 %v7193, %v7195
        %v7197 = vrot.slane %v7190, %v7196
        %v7199 = vunpack.c.l.s4 1966171168
        %v7200 = vunpack.c.0.s8 %v7199
        %v7201 = vlaneseq
        %v7202 = vshrl.u32 %v7201, 7
        %v7203 = vsub.s32 %v7200, %v7202
        %v7204 = vrot.slane %v7197, %v7203
        %v7206 = vlaneseq
        %vm7207 = vcmp.ge.s32.totalorder %v7206, 0
        %vm7208 = vcmp.lt.s32.totalorder %v7206, 256
        %vm7209 = vmand %vm7207, %vm7208
        %7210 = vst.msk [vmem:[%s1258] sm:$0x3] %vm7209, %v7204
        %s7211 = sand.u32 %s655, 1
        %s7212 = scalar_lea.sflag [#allocation4], %s7211
        %s7213 = sand.u32 %s655, 1
        %s7214 = smul.addr %s7213, 8
        %s7215 = scalar_lea.vmem [#allocation39], %s7214
        %s7216 = sand.u32 %s681, 1
        %s7217 = scalar_lea.sflag [#allocation41], %s7216
        %s7218 = sand.u32 %s681, 1
        %s7219 = smul.addr %s7218, 2
        %s7220 = scalar_lea.vmem [#allocation40], %s7219
        // Predicated region
        $region217: #{tpu_custom_call.1} parent=123 // pred_check
          %p7221 = pneg %p665
        $region218: #{tpu_custom_call.1} parent=123 // pred_check_branch
          %7223 = sbr.rel (%p7221) target = $region220
        $region219: #{tpu_custom_call.1} parent=123 // pred_region
          %s7225 = ssub.s32 128, 128
          %7226 = vsyncadd %s7212, %s7225
          %s7227 = smul.addr %s66, 8
          %s7228 = smul.addr %s7227, 16
          %s7229 = scalar_lea.hbm %s26, %s7228
          %s7231 = sshll.u32 %s7215, 4
          %s7232 = int_to_ptr.vmem [resolvable:$true] %s7231
          %7234 = dma.vmem_to_hbm [thread:$0]  %s7232, 128, %s7229, %s7212
        $region220: #{tpu_custom_call.1} parent=123 // pred_fallthru
          _
        // Predicated region
        $region221: #{tpu_custom_call.1} parent=123 // pred_check
          %p7235 = pneg %p691
        $region222: #{tpu_custom_call.1} parent=123 // pred_check_branch
          %7237 = sbr.rel (%p7235) target = $region224
        $region223: #{tpu_custom_call.1} parent=123 // pred_region
          %s7239 = ssub.s32 32, 32
          %7240 = vsyncadd %s7217, %s7239
          %s7241 = smul.addr %s66, 2
          %s7242 = smul.addr %s7241, 16
          %s7243 = scalar_lea.hbm %s27, %s7242
          %s7245 = sshll.u32 %s7220, 4
          %s7246 = int_to_ptr.vmem [resolvable:$true] %s7245
          %7248 = dma.vmem_to_hbm [thread:$0]  %s7246, 32, %s7243, %s7217
        $region224: #{tpu_custom_call.1} parent=123 // pred_fallthru
          _
      $region124: #{tpu_custom_call.1} parent=5 // pred_fallthru
        _
      %p7249 = scmp.le.s32.totalorder 2, %s61
      // Predicated region
      $region225: #{tpu_custom_call.1} parent=5 // pred_check
        %p7250 = pneg %p7249
      $region226: #{tpu_custom_call.1} parent=5 // pred_check_branch
        %7252 = sbr.rel (%p7250) target = $region228
      $region227: #{tpu_custom_call.1} parent=5 // pred_region
        %s7253 = ssub.s32 %s61, 2
        // Predicated region
        $region229: #{tpu_custom_call.1} parent=227 // pred_check
          %p7254 = pneg %p671
        $region230: #{tpu_custom_call.1} parent=227 // pred_check_branch
          %7256 = sbr.rel (%p7254) target = $region232
        $region231: #{tpu_custom_call.1} parent=227 // pred_region
          %s7257 = sand.u32 %s656, 1
          %s7258 = scalar_lea.sflag [#allocation4], %s7257
          %s7259 = sand.u32 %s656, 1
          %s7260 = smul.addr %s7259, 8
          %s7261 = scalar_lea.vmem [#allocation39], %s7260
          %7262 = dma.done %s7258, 128
        $region232: #{tpu_custom_call.1} parent=227 // pred_fallthru
          _
        // Predicated region
        $region233: #{tpu_custom_call.1} parent=227 // pred_check
          %p7263 = pneg %p697
        $region234: #{tpu_custom_call.1} parent=227 // pred_check_branch
          %7265 = sbr.rel (%p7263) target = $region236
        $region235: #{tpu_custom_call.1} parent=227 // pred_region
          %s7266 = sand.u32 %s682, 1
          %s7267 = scalar_lea.sflag [#allocation41], %s7266
          %s7268 = sand.u32 %s682, 1
          %s7269 = smul.addr %s7268, 2
          %s7270 = scalar_lea.vmem [#allocation40], %s7269
          %7271 = dma.done %s7267, 32
        $region236: #{tpu_custom_call.1} parent=227 // pred_fallthru
          _
      $region228: #{tpu_custom_call.1} parent=5 // pred_fallthru
        _
    $region6: #{tpu_custom_call.1} parent=1 // loop_footer
      %s65 = sadd.s32 1, %s61
    $region7: #{tpu_custom_call.1} parent=1 // loop_footer_branch
      %60 = sbr.rel target = $region3
    $region8: #{tpu_custom_call.1} parent=1 // loop_exit
      _
    %7272 = vsyncpa [#allocation3], 1
    %s7273 = scalar_lea.sflag [#allocation3], 1
    %7274 = vsyncpa %s7273, 1
    %7275 = vsyncpa [#allocation7], 1
    %s7276 = scalar_lea.sflag [#allocation7], 1
    %7277 = vsyncpa %s7276, 1
    %7278 = vsyncpa [#allocation10], 1
    %s7279 = scalar_lea.sflag [#allocation10], 1
    %7280 = vsyncpa %s7279, 1
    %7281 = vsyncpa [#allocation13], 1
    %s7282 = scalar_lea.sflag [#allocation13], 1
    %7283 = vsyncpa %s7282, 1
    %7284 = vsyncpa [#allocation17], 1
    %7285 = vsyncpa [#allocation20], 1
    %7286 = vsyncpa [#allocation23], 1
    %7287 = vsyncpa [#allocation26], 1
    %7288 = vsyncpa [#allocation29], 1
    %7289 = vsyncpa [#allocation32], 1
    %7290 = vsyncpa [#allocation35], 1
    %7291 = vsyncpa [#allocation38], 1
    %7292 = vsyncpa [#allocation4], 1
    %s7293 = scalar_lea.sflag [#allocation4], 1
    %7294 = vsyncpa %s7293, 1
    %7295 = vsyncpa [#allocation41], 1
    %s7296 = scalar_lea.sflag [#allocation41], 1
    %7297 = vsyncpa %s7296, 1
    %7298 = vsyncpa [#allocation5], 1
    %s7299 = scalar_lea.sflag [#allocation5], 1
    %7300 = vsyncpa %s7299, 1

</llo_original>
